<compile_context>
chip_gen: v7x
topology: tpu7x:2x2x1
jax: 0.10.0
libtpu: 0.0.40
codegen_flags: <defaults>
</compile_context>

<pallas_src>
import functools
import math

import jax
import jax.numpy as jnp
from jax.experimental import pallas as pl
from jax.experimental.pallas import tpu as pltpu


# ----------------------------------------------------------------------------
# Generation-aware knobs (v7x: 64 MiB physical VMEM; v5e/v6e: 128 MiB).
# ----------------------------------------------------------------------------
def _vmem_limit_bytes():
    try:
        cap = int(getattr(pltpu.get_tpu_info(), "vmem_capacity_bytes",
                          64 * 1024 * 1024))
    except Exception:  # query unavailable -> conservative, fits all gens
        cap = 64 * 1024 * 1024
    return int(min(cap // 2, 64 * 1024 * 1024))


def _fc_tile_n():
    # v7x (64 MiB VMEM, ~3.2 TB/s HBM): bigger weight tiles amortize the
    # ~0.35us per-grid-step overhead.  v5e/v6e: per-tile DMA already dominates.
    try:
        cap = int(getattr(pltpu.get_tpu_info(), "vmem_capacity_bytes", 0))
    except Exception:
        cap = 0
    return 512 if 0 < cap <= 64 * 1024 * 1024 else 256


_VMEM_LIMIT = _vmem_limit_bytes()
_FC_TILE_N = _fc_tile_n()


# ----------------------------------------------------------------------------
# Kernels
# ----------------------------------------------------------------------------
def conv_pool_kernel(p_ref, w_ref, b_ref, o_ref, *, m_pad):
    """One image: conv (as a single pooled-im2col dot) + 2x2 max-pool + bias
    + ReLU, all in registers, single store.

    p_ref : (1, 4*m_pad, K) bf16  pooled im2col; rows [p*m_pad, p*m_pad+Hp*Wp)
            hold conv-output positions (2i+r, 2j+c) for parity p = 2r+c;
            padding rows are zeros.
    w_ref : (K, Cout) bf16    K = kh*kw*Cin, row = (di*kw+dj)*Cin + ch.
    b_ref : (1, Cout) f32
    o_ref : (1, m_pad, Cout) bf16   rows >= Hp*Wp are junk (sliced off in XLA).
    """
    acc = jnp.dot(p_ref[0], w_ref[...],
                  preferred_element_type=jnp.float32)        # (4*m_pad, Cout)
    # 2x2 max-pool = max over the 4 sublane-aligned parity row-groups.
    pooled = jnp.maximum(jnp.maximum(acc[0:m_pad], acc[m_pad:2 * m_pad]),
                         jnp.maximum(acc[2 * m_pad:3 * m_pad],
                                     acc[3 * m_pad:4 * m_pad]))
    o_ref[0] = jnp.maximum(pooled + b_ref[...], 0.0).astype(o_ref.dtype)


def fc_fused_kernel(x_ref, w1_ref, b1_ref, w2_ref, b2_ref, wc_ref, bc_ref,
                    o_ref, acc_ref):
    """Fused fc1 -> relu -> fc2 -> relu -> classifier.

    Grid axis j runs over fc1 output tiles (== fc2 contraction tiles).
    x_ref : (N, 3200) bf16          (constant block)
    w1_ref: (3200, tn) bf16         (fc1 column tile j)
    b1_ref: (1, tn) f32
    w2_ref: (tn, 1024) bf16         (fc2 row tile j)
    b2_ref: (1, 1024) f32           (constant)
    wc_ref: (1024, 128) bf16        (classifier, 10 padded to 128 lanes)
    bc_ref: (1, 128) f32
    o_ref : (N, 128) f32            written only at the last step
    acc_ref: (N, 1024) f32 scratch  running fc2 pre-activation
    """
    j = pl.program_id(0)

    @pl.when(j == 0)
    def _():
        acc_ref[...] = jnp.zeros_like(acc_ref)

    h = jnp.dot(x_ref[...], w1_ref[...], preferred_element_type=jnp.float32)
    h = jnp.maximum(h + b1_ref[...], 0.0).astype(jnp.bfloat16)      # (N, tn)
    acc_ref[...] += jnp.dot(h, w2_ref[...],
                            preferred_element_type=jnp.float32)

    @pl.when(j == pl.num_programs(0) - 1)
    def _():
        out4 = jnp.maximum(acc_ref[...] + b2_ref[...], 0.0)
        out4 = out4.astype(jnp.bfloat16)                            # (N, 1024)
        logits = jnp.dot(out4, wc_ref[...],
                         preferred_element_type=jnp.float32)
        o_ref[...] = (logits + bc_ref[...]).astype(o_ref.dtype)


# ----------------------------------------------------------------------------
# XLA-side layout plumbing: pooled im2col (tiny inputs, built once per stage).
# ----------------------------------------------------------------------------
def _pooled_conv_patches(x, kh, kw):
    """x: (N, H, W, C) -> (patches, hp, wp, m_pad).

    patches: (N, 4*m_pad, kh*kw*C); parity p = 2r+c occupies rows
    [p*m_pad, p*m_pad + hp*wp): row i*wp + j is the 5x5 patch of conv output
    position (2i+r, 2j+c); feature index = (di*kw+dj)*C + ch; rows beyond
    hp*wp in each parity group are zero padding (never read downstream).
    """
    n, h, w, c = x.shape
    ho, wo = h - kh + 1, w - kw + 1
    hp, wp = ho // 2, wo // 2
    m_pad = ((hp * wp + 7) // 8) * 8
    groups = []
    for r in range(2):
        for s in range(2):
            taps = [x[:, r + di: r + di + 2 * hp: 2,
                      s + dj: s + dj + 2 * wp: 2, :]
                    for di in range(kh) for dj in range(kw)]
            g = jnp.stack(taps, axis=-2).reshape(n, hp * wp, kh * kw * c)
            g = jnp.pad(g, ((0, 0), (0, m_pad - hp * wp), (0, 0)))
            groups.append(g)
    patches = jnp.concatenate(groups, axis=1)
    return patches, hp, wp, m_pad


# ----------------------------------------------------------------------------
# pallas_call wrappers
# ----------------------------------------------------------------------------
def conv_relu_pool(patches, w, b, *, m_pad):
    """patches: (N, 4*m_pad, K) bf16; w: (K, Cout) bf16; b: (Cout,) f32.
    Returns (N, m_pad, Cout) bf16 (rows >= Hp*Wp are junk)."""
    n, m4, k = patches.shape
    cout = w.shape[1]
    kernel = functools.partial(conv_pool_kernel, m_pad=m_pad)
    flops = 2 * n * m4 * k * cout
    bytes_acc = int(patches.size * 2 + w.size * 2 + b.size * 4
                    + n * m_pad * cout * 2)
    return pl.pallas_call(
        kernel,
        out_shape=jax.ShapeDtypeStruct((n, m_pad, cout), jnp.bfloat16),
        grid=(n,),
        in_specs=[
            pl.BlockSpec((1, m4, k), lambda i: (i, 0, 0)),
            pl.BlockSpec((k, cout), lambda i: (0, 0)),
            pl.BlockSpec((1, cout), lambda i: (0, 0)),
        ],
        out_specs=pl.BlockSpec((1, m_pad, cout), lambda i: (i, 0, 0)),
        compiler_params=pltpu.CompilerParams(
            dimension_semantics=("parallel",),   # batch across v7x's 2 TCs
            vmem_limit_bytes=_VMEM_LIMIT),
        cost_estimate=pl.CostEstimate(flops=int(flops), transcendentals=0,
                                      bytes_accessed=bytes_acc),
    )(patches, w, b.reshape(1, cout))


def fc_fused(x, w1, b1, w2, b2, wc, bc, *, tile_n):
    """Fused fc1(relu) -> fc2(relu) -> classifier.  x: (N, 3200) bf16."""
    n, k1 = x.shape
    d1 = w1.shape[1]
    d2 = w2.shape[1]
    dc = wc.shape[1]
    tn = min(tile_n, d1)
    while d1 % tn:
        tn //= 2
    flops = 2 * n * (k1 * d1 + d1 * d2 + d2 * dc)
    bytes_acc = int(x.size * 2 + w1.size * 2 + w2.size * 2 + wc.size * 2
                    + (b1.size + b2.size + bc.size) * 4 + n * dc * 4)
    return pl.pallas_call(
        fc_fused_kernel,
        out_shape=jax.ShapeDtypeStruct((n, dc), jnp.float32),
        grid=(d1 // tn,),
        in_specs=[
            pl.BlockSpec((n, k1), lambda j: (0, 0)),
            pl.BlockSpec((k1, tn), lambda j: (0, j)),
            pl.BlockSpec((1, tn), lambda j: (0, j)),
            pl.BlockSpec((tn, d2), lambda j: (j, 0)),
            pl.BlockSpec((1, d2), lambda j: (0, 0)),
            pl.BlockSpec((d2, dc), lambda j: (0, 0)),
            pl.BlockSpec((1, dc), lambda j: (0, 0)),
        ],
        out_specs=pl.BlockSpec((n, dc), lambda j: (0, 0)),
        scratch_shapes=[pltpu.VMEM((n, d2), jnp.float32)],
        compiler_params=pltpu.CompilerParams(
            dimension_semantics=("arbitrary",),   # reduction over fc1 tiles
            vmem_limit_bytes=_VMEM_LIMIT),
        cost_estimate=pl.CostEstimate(flops=int(flops), transcendentals=0,
                                      bytes_accessed=bytes_acc),
    )(x, w1, b1.reshape(1, d1), w2, b2.reshape(1, d2), wc, bc.reshape(1, dc))


# ----------------------------------------------------------------------------
# Parameter init (PyTorch-style U(-1/sqrt(fan_in), 1/sqrt(fan_in)); weights
# are re-laid-out and cast to bf16 ONCE here so the forward pass needs no
# runtime transposes or casts of weights).
# ----------------------------------------------------------------------------
def _uniform(key, shape, fan_in):
    bound = 1.0 / math.sqrt(fan_in)
    return jax.random.uniform(key, shape, jnp.float32, -bound, bound)


def init_params(key, imdim=3):
    ks = jax.random.split(key, 10)
    p = {}
    # conv weights: torch (Cout, Cin, kh, kw) -> (kh*kw*Cin, Cout) with row
    # index (di*kw + dj)*Cin + ch (matches the pooled-im2col feature order).
    w1 = _uniform(ks[0], (64, imdim, 5, 5), imdim * 25)
    p["conv1_w"] = (jnp.transpose(w1, (2, 3, 1, 0))
                    .reshape(25 * imdim, 64).astype(jnp.bfloat16))
    p["conv1_b"] = _uniform(ks[1], (64,), imdim * 25)
    w2 = _uniform(ks[2], (128, 64, 5, 5), 64 * 25)
    p["conv2_w"] = (jnp.transpose(w2, (2, 3, 1, 0))
                    .reshape(25 * 64, 128).astype(jnp.bfloat16))
    p["conv2_b"] = _uniform(ks[3], (128,), 64 * 25)
    # fc1: torch layout (1024, 3200) with input index c*25 + h*5 + w.  Permute
    # its columns once so the kernels' natural (h, w, c) flatten feeds it
    # directly (removes the per-forward activation transpose).
    w_fc1_t = _uniform(ks[4], (1024, 128 * 5 * 5), 128 * 5 * 5)
    idx = jnp.arange(128 * 5 * 5)
    h_i, rem = idx // (5 * 128), idx % (5 * 128)
    w_i, c_i = rem // 128, rem % 128
    p["fc1_w"] = (w_fc1_t[:, c_i * 25 + h_i * 5 + w_i].T
                  .astype(jnp.bfloat16))                      # (3200, 1024)
    p["fc1_b"] = _uniform(ks[5], (1024,), 128 * 5 * 5)
    p["fc2_w"] = _uniform(ks[6], (1024, 1024), 1024).astype(jnp.bfloat16)
    p["fc2_b"] = _uniform(ks[7], (1024,), 1024)
    # classifier head padded 10 -> 128 output lanes (lane-dense stores).
    w_cls = _uniform(ks[8], (1024, 10), 1024)
    b_cls = _uniform(ks[9], (10,), 1024)
    p["cls_w_pad"] = jnp.pad(w_cls, ((0, 0), (0, 118))).astype(jnp.bfloat16)
    p["cls_b_pad"] = jnp.pad(b_cls, ((0, 118),))
    # TODO(synk): heads for mode='train'/'L2D' (cls_head_tgt, pro_head + L2
    # normalize, p_mu/p_logvar, reparametrize RNG, classifier_l, softmax)
    # would reuse the same fused-linear kernel; the mode='test' path omits them.
    return p


# ----------------------------------------------------------------------------
# Forward pass (mode='test' of ConvNet.forward)
# ----------------------------------------------------------------------------
@jax.jit
def convnet_forward(params, x_nchw):
    n = x_nchw.shape[0]
    x = jnp.transpose(x_nchw, (0, 2, 3, 1)).astype(jnp.bfloat16)  # NHWC bf16

    # Stage 1: conv1 + bias + ReLU + 2x2 max-pool.  32x32x3 -> 14x14x64.
    p1, hp1, wp1, mp1 = _pooled_conv_patches(x, 5, 5)
    h1 = conv_relu_pool(p1, params["conv1_w"], params["conv1_b"], m_pad=mp1)
    h1 = h1[:, :hp1 * wp1, :].reshape(n, hp1, wp1, 64)

    # Stage 2: conv2 + bias + ReLU + 2x2 max-pool.  14x14x64 -> 5x5x128.
    p2, hp2, wp2, mp2 = _pooled_conv_patches(h1, 5, 5)
    h2 = conv_relu_pool(p2, params["conv2_w"], params["conv2_b"], m_pad=mp2)
    flat = h2[:, :hp2 * wp2, :].reshape(n, hp2 * wp2 * 128)    # (N, 3200) bf16

    # Stage 3: fused fc1 -> relu -> fc2 -> relu -> classifier.
    logits_pad = fc_fused(flat, params["fc1_w"], params["fc1_b"],
                          params["fc2_w"], params["fc2_b"],
                          params["cls_w_pad"], params["cls_b_pad"],
                          tile_n=_FC_TILE_N)
    return logits_pad[:, :10]


if __name__ == "__main__":
    key = jax.random.PRNGKey(0)
    k_x, k_p = jax.random.split(key)
    # 32x32 input is required so the flatten equals 128*5*5 (as in the module)
    x = jax.random.normal(k_x, (2, 3, 32, 32), dtype=jnp.float32)
    params = init_params(k_p, imdim=3)
    out = convnet_forward(params, x)
    jax.block_until_ready(out)
    assert out.shape == (2, 10) and out.dtype == jnp.float32
    assert bool(jnp.all(jnp.isfinite(out)))
    print("KERNEL_OK")
</pallas_src>

<mosaic_0001>
module attributes {stable_mosaic.version = 11 : i64} {
  func.func @conv_pool_kernel(%arg0: i32, %arg1: memref<1x800x75xbf16, #tpu.memory_space<vmem>>, %arg2: memref<75x64xbf16, #tpu.memory_space<vmem>>, %arg3: memref<1x64xf32, #tpu.memory_space<vmem>>, %arg4: memref<1x200x64xbf16, #tpu.memory_space<vmem>>) attributes {dimension_semantics = [#tpu.dimension_semantics<parallel>], iteration_bounds = array<i64: 2>, scalar_prefetch = 0 : i64, scratch_operands = 0 : i64, tpu.core_type = #tpu.core_type<tc>, window_params = [{transform_indices = @transform_0, window_bounds = array<i64: 1, 800, 75>}, {pipeline_mode = #tpu.pipeline_mode<synchronous>, transform_indices = @transform_1, window_bounds = array<i64: 75, 64>}, {pipeline_mode = #tpu.pipeline_mode<synchronous>, transform_indices = @transform_2, window_bounds = array<i64: 1, 64>}, {transform_indices = @transform_3, window_bounds = array<i64: 1, 200, 64>}]} {
    %c0 = arith.constant 0 : index
    %c0_0 = arith.constant 0 : index
    %c0_1 = arith.constant 0 : index
    %0 = vector.load %arg1[%c0, %c0_0, %c0_1] : memref<1x800x75xbf16, #tpu.memory_space<vmem>>, vector<1x800x75xbf16>
    %1 = vector.shape_cast %0 : vector<1x800x75xbf16> to vector<800x75xbf16>
    %c0_2 = arith.constant 0 : index
    %c0_3 = arith.constant 0 : index
    %2 = vector.load %arg2[%c0_2, %c0_3] : memref<75x64xbf16, #tpu.memory_space<vmem>>, vector<75x64xbf16>
    %cst = arith.constant dense<0.000000e+00> : vector<800x64xf32>
    %3 = tpu.matmul %1, %2, %cst {dimension_numbers = #tpu.dot_dimension_numbers<[1], [0], [0], [1], [0, 0, 1, 1], [], []>} : vector<800x75xbf16>, vector<75x64xbf16>, vector<800x64xf32> -> vector<800x64xf32>
    %4 = vector.extract_strided_slice %3 {offsets = [0, 0], sizes = [200, 64], strides = [1, 1]} : vector<800x64xf32> to vector<200x64xf32>
    %5 = vector.extract_strided_slice %3 {offsets = [200, 0], sizes = [200, 64], strides = [1, 1]} : vector<800x64xf32> to vector<200x64xf32>
    %6 = arith.maximumf %4, %5 : vector<200x64xf32>
    %7 = vector.extract_strided_slice %3 {offsets = [400, 0], sizes = [200, 64], strides = [1, 1]} : vector<800x64xf32> to vector<200x64xf32>
    %8 = vector.extract_strided_slice %3 {offsets = [600, 0], sizes = [200, 64], strides = [1, 1]} : vector<800x64xf32> to vector<200x64xf32>
    %9 = arith.maximumf %7, %8 : vector<200x64xf32>
    %10 = arith.maximumf %6, %9 : vector<200x64xf32>
    %c0_4 = arith.constant 0 : index
    %c0_5 = arith.constant 0 : index
    %11 = vector.load %arg3[%c0_4, %c0_5] : memref<1x64xf32, #tpu.memory_space<vmem>>, vector<1x64xf32>
    %12 = vector.broadcast %11 : vector<1x64xf32> to vector<200x64xf32>
    %13 = arith.addf %10, %12 : vector<200x64xf32>
    %cst_6 = arith.constant 0.000000e+00 : f32
    %14 = vector.broadcast %cst_6 : f32 to vector<200x64xf32>
    %15 = arith.maximumf %13, %14 : vector<200x64xf32>
    %16 = arith.truncf %15 : vector<200x64xf32> to vector<200x64xbf16>
    %c0_7 = arith.constant 0 : index
    %c0_8 = arith.constant 0 : index
    %c0_9 = arith.constant 0 : index
    %17 = vector.load %arg4[%c0_7, %c0_8, %c0_9] : memref<1x200x64xbf16, #tpu.memory_space<vmem>>, vector<1x200x64xbf16>
    %18 = vector.shape_cast %17 : vector<1x200x64xbf16> to vector<200x64xbf16>
    %19 = vector.shape_cast %16 : vector<200x64xbf16> to vector<1x200x64xbf16>
    tpu.vector_store %arg4[%c0_7, %c0_8, %c0_9], %19 {strides = array<i32>} : memref<1x200x64xbf16, #tpu.memory_space<vmem>>, vector<1x200x64xbf16>,
    return
  }
  func.func @transform_0(%arg0: i32) -> (i32, i32, i32) {
    %c0_i32 = arith.constant 0 : i32
    %c0_i32_0 = arith.constant 0 : i32
    %c0_i32_1 = arith.constant 0 : i32
    return %arg0, %c0_i32, %c0_i32_0 : i32, i32, i32
  }
  func.func @transform_1(%arg0: i32) -> (i32, i32) {
    %c0_i32 = arith.constant 0 : i32
    %c0_i32_0 = arith.constant 0 : i32
    %c0_i32_1 = arith.constant 0 : i32
    return %c0_i32, %c0_i32_0 : i32, i32
  }
  func.func @transform_2(%arg0: i32) -> (i32, i32) {
    %c0_i32 = arith.constant 0 : i32
    %c0_i32_0 = arith.constant 0 : i32
    %c0_i32_1 = arith.constant 0 : i32
    return %c0_i32, %c0_i32_0 : i32, i32
  }
  func.func @transform_3(%arg0: i32) -> (i32, i32, i32) {
    %c0_i32 = arith.constant 0 : i32
    %c0_i32_0 = arith.constant 0 : i32
    %c0_i32_1 = arith.constant 0 : i32
    return %arg0, %c0_i32, %c0_i32_0 : i32, i32, i32
  }
}

module attributes {stable_mosaic.version = 11 : i64} {
  func.func @conv_pool_kernel(%arg0: i32, %arg1: memref<1x128x1600xbf16, #tpu.memory_space<vmem>>, %arg2: memref<1600x128xbf16, #tpu.memory_space<vmem>>, %arg3: memref<1x128xf32, #tpu.memory_space<vmem>>, %arg4: memref<1x32x128xbf16, #tpu.memory_space<vmem>>) attributes {dimension_semantics = [#tpu.dimension_semantics<parallel>], iteration_bounds = array<i64: 2>, scalar_prefetch = 0 : i64, scratch_operands = 0 : i64, tpu.core_type = #tpu.core_type<tc>, window_params = [{transform_indices = @transform_0, window_bounds = array<i64: 1, 128, 1600>}, {pipeline_mode = #tpu.pipeline_mode<synchronous>, transform_indices = @transform_1, window_bounds = array<i64: 1600, 128>}, {pipeline_mode = #tpu.pipeline_mode<synchronous>, transform_indices = @transform_2, window_bounds = array<i64: 1, 128>}, {transform_indices = @transform_3, window_bounds = array<i64: 1, 32, 128>}]} {
    %c0 = arith.constant 0 : index
    %c0_0 = arith.constant 0 : index
    %c0_1 = arith.constant 0 : index
    %0 = vector.load %arg1[%c0, %c0_0, %c0_1] : memref<1x128x1600xbf16, #tpu.memory_space<vmem>>, vector<1x128x1600xbf16>
    %1 = vector.shape_cast %0 : vector<1x128x1600xbf16> to vector<128x1600xbf16>
    %c0_2 = arith.constant 0 : index
    %c0_3 = arith.constant 0 : index
    %2 = vector.load %arg2[%c0_2, %c0_3] : memref<1600x128xbf16, #tpu.memory_space<vmem>>, vector<1600x128xbf16>
    %cst = arith.constant dense<0.000000e+00> : vector<128x128xf32>
    %3 = tpu.matmul %1, %2, %cst {dimension_numbers = #tpu.dot_dimension_numbers<[1], [0], [0], [1], [0, 0, 1, 1], [], []>} : vector<128x1600xbf16>, vector<1600x128xbf16>, vector<128x128xf32> -> vector<128x128xf32>
    %4 = vector.extract_strided_slice %3 {offsets = [0, 0], sizes = [32, 128], strides = [1, 1]} : vector<128x128xf32> to vector<32x128xf32>
    %5 = vector.extract_strided_slice %3 {offsets = [32, 0], sizes = [32, 128], strides = [1, 1]} : vector<128x128xf32> to vector<32x128xf32>
    %6 = arith.maximumf %4, %5 : vector<32x128xf32>
    %7 = vector.extract_strided_slice %3 {offsets = [64, 0], sizes = [32, 128], strides = [1, 1]} : vector<128x128xf32> to vector<32x128xf32>
    %8 = vector.extract_strided_slice %3 {offsets = [96, 0], sizes = [32, 128], strides = [1, 1]} : vector<128x128xf32> to vector<32x128xf32>
    %9 = arith.maximumf %7, %8 : vector<32x128xf32>
    %10 = arith.maximumf %6, %9 : vector<32x128xf32>
    %c0_4 = arith.constant 0 : index
    %c0_5 = arith.constant 0 : index
    %11 = vector.load %arg3[%c0_4, %c0_5] : memref<1x128xf32, #tpu.memory_space<vmem>>, vector<1x128xf32>
    %12 = vector.broadcast %11 : vector<1x128xf32> to vector<32x128xf32>
    %13 = arith.addf %10, %12 : vector<32x128xf32>
    %cst_6 = arith.constant 0.000000e+00 : f32
    %14 = vector.broadcast %cst_6 : f32 to vector<32x128xf32>
    %15 = arith.maximumf %13, %14 : vector<32x128xf32>
    %16 = arith.truncf %15 : vector<32x128xf32> to vector<32x128xbf16>
    %c0_7 = arith.constant 0 : index
    %c0_8 = arith.constant 0 : index
    %c0_9 = arith.constant 0 : index
    %17 = vector.load %arg4[%c0_7, %c0_8, %c0_9] : memref<1x32x128xbf16, #tpu.memory_space<vmem>>, vector<1x32x128xbf16>
    %18 = vector.shape_cast %17 : vector<1x32x128xbf16> to vector<32x128xbf16>
    %19 = vector.shape_cast %16 : vector<32x128xbf16> to vector<1x32x128xbf16>
    tpu.vector_store %arg4[%c0_7, %c0_8, %c0_9], %19 {strides = array<i32>} : memref<1x32x128xbf16, #tpu.memory_space<vmem>>, vector<1x32x128xbf16>,
    return
  }
  func.func @transform_0(%arg0: i32) -> (i32, i32, i32) {
    %c0_i32 = arith.constant 0 : i32
    %c0_i32_0 = arith.constant 0 : i32
    %c0_i32_1 = arith.constant 0 : i32
    return %arg0, %c0_i32, %c0_i32_0 : i32, i32, i32
  }
  func.func @transform_1(%arg0: i32) -> (i32, i32) {
    %c0_i32 = arith.constant 0 : i32
    %c0_i32_0 = arith.constant 0 : i32
    %c0_i32_1 = arith.constant 0 : i32
    return %c0_i32, %c0_i32_0 : i32, i32
  }
  func.func @transform_2(%arg0: i32) -> (i32, i32) {
    %c0_i32 = arith.constant 0 : i32
    %c0_i32_0 = arith.constant 0 : i32
    %c0_i32_1 = arith.constant 0 : i32
    return %c0_i32, %c0_i32_0 : i32, i32
  }
  func.func @transform_3(%arg0: i32) -> (i32, i32, i32) {
    %c0_i32 = arith.constant 0 : i32
    %c0_i32_0 = arith.constant 0 : i32
    %c0_i32_1 = arith.constant 0 : i32
    return %arg0, %c0_i32, %c0_i32_0 : i32, i32, i32
  }
}

module attributes {stable_mosaic.version = 11 : i64} {
  func.func @fc_fused_kernel(%arg0: i32, %arg1: memref<2x3200xbf16, #tpu.memory_space<vmem>>, %arg2: memref<3200x256xbf16, #tpu.memory_space<vmem>>, %arg3: memref<1x256xf32, #tpu.memory_space<vmem>>, %arg4: memref<256x1024xbf16, #tpu.memory_space<vmem>>, %arg5: memref<1x1024xf32, #tpu.memory_space<vmem>>, %arg6: memref<1024x128xbf16, #tpu.memory_space<vmem>>, %arg7: memref<1x128xf32, #tpu.memory_space<vmem>>, %arg8: memref<2x128xf32, #tpu.memory_space<vmem>>, %arg9: memref<2x1024xf32, #tpu.memory_space<vmem>>) attributes {dimension_semantics = [#tpu.dimension_semantics<arbitrary>], iteration_bounds = array<i64: 4>, scalar_prefetch = 0 : i64, scratch_operands = 1 : i64, tpu.core_type = #tpu.core_type<tc>, window_params = [{pipeline_mode = #tpu.pipeline_mode<synchronous>, transform_indices = @transform_0, window_bounds = array<i64: 2, 3200>}, {transform_indices = @transform_1, window_bounds = array<i64: 3200, 256>}, {transform_indices = @transform_2, window_bounds = array<i64: 1, 256>}, {transform_indices = @transform_3, window_bounds = array<i64: 256, 1024>}, {pipeline_mode = #tpu.pipeline_mode<synchronous>, transform_indices = @transform_4, window_bounds = array<i64: 1, 1024>}, {pipeline_mode = #tpu.pipeline_mode<synchronous>, transform_indices = @transform_5, window_bounds = array<i64: 1024, 128>}, {pipeline_mode = #tpu.pipeline_mode<synchronous>, transform_indices = @transform_6, window_bounds = array<i64: 1, 128>}, {pipeline_mode = #tpu.pipeline_mode<synchronous>, transform_indices = @transform_7, window_bounds = array<i64: 2, 128>}]} {
    %c0_i32 = arith.constant 0 : i32
    %0 = arith.cmpi eq, %arg0, %c0_i32 : i32
    %1 = arith.extui %0 : i1 to i32
    %c0_i32_0 = arith.constant 0 : i32
    %2 = arith.cmpi ne, %1, %c0_i32_0 : i32
    scf.if %2 {
      %cst_15 = arith.constant 0.000000e+00 : f32
      %20 = vector.broadcast %cst_15 : f32 to vector<2x1024xf32>
      %c0_16 = arith.constant 0 : index
      %c0_17 = arith.constant 0 : index
      %21 = vector.load %arg9[%c0_16, %c0_17] : memref<2x1024xf32, #tpu.memory_space<vmem>>, vector<2x1024xf32>
      tpu.vector_store %arg9[%c0_16, %c0_17], %20 {strides = array<i32>} : memref<2x1024xf32, #tpu.memory_space<vmem>>, vector<2x1024xf32>,
    } else {
    }
    %c0 = arith.constant 0 : index
    %c0_1 = arith.constant 0 : index
    %3 = vector.load %arg1[%c0, %c0_1] : memref<2x3200xbf16, #tpu.memory_space<vmem>>, vector<2x3200xbf16>
    %c0_2 = arith.constant 0 : index
    %c0_3 = arith.constant 0 : index
    %4 = vector.load %arg2[%c0_2, %c0_3] : memref<3200x256xbf16, #tpu.memory_space<vmem>>, vector<3200x256xbf16>
    %cst = arith.constant dense<0.000000e+00> : vector<2x256xf32>
    %5 = tpu.matmul %3, %4, %cst {dimension_numbers = #tpu.dot_dimension_numbers<[1], [0], [0], [1], [0, 0, 1, 1], [], []>} : vector<2x3200xbf16>, vector<3200x256xbf16>, vector<2x256xf32> -> vector<2x256xf32>
    %c0_4 = arith.constant 0 : index
    %c0_5 = arith.constant 0 : index
    %6 = vector.load %arg3[%c0_4, %c0_5] : memref<1x256xf32, #tpu.memory_space<vmem>>, vector<1x256xf32>
    %7 = vector.broadcast %6 : vector<1x256xf32> to vector<2x256xf32>
    %8 = arith.addf %5, %7 : vector<2x256xf32>
    %cst_6 = arith.constant 0.000000e+00 : f32
    %9 = vector.broadcast %cst_6 : f32 to vector<2x256xf32>
    %10 = arith.maximumf %8, %9 : vector<2x256xf32>
    %11 = arith.truncf %10 : vector<2x256xf32> to vector<2x256xbf16>
    %c0_7 = arith.constant 0 : index
    %c0_8 = arith.constant 0 : index
    %12 = vector.load %arg9[%c0_7, %c0_8] : memref<2x1024xf32, #tpu.memory_space<vmem>>, vector<2x1024xf32>
    %c0_9 = arith.constant 0 : index
    %c0_10 = arith.constant 0 : index
    %13 = vector.load %arg4[%c0_9, %c0_10] : memref<256x1024xbf16, #tpu.memory_space<vmem>>, vector<256x1024xbf16>
    %cst_11 = arith.constant dense<0.000000e+00> : vector<2x1024xf32>
    %14 = tpu.matmul %11, %13, %cst_11 {dimension_numbers = #tpu.dot_dimension_numbers<[1], [0], [0], [1], [0, 0, 1, 1], [], []>} : vector<2x256xbf16>, vector<256x1024xbf16>, vector<2x1024xf32> -> vector<2x1024xf32>
    %15 = arith.addf %12, %14 : vector<2x1024xf32>
    %c0_12 = arith.constant 0 : index
    %c0_13 = arith.constant 0 : index
    %16 = vector.load %arg9[%c0_12, %c0_13] : memref<2x1024xf32, #tpu.memory_space<vmem>>, vector<2x1024xf32>
    tpu.vector_store %arg9[%c0_12, %c0_13], %15 {strides = array<i32>} : memref<2x1024xf32, #tpu.memory_space<vmem>>, vector<2x1024xf32>,
    %c3_i32 = arith.constant 3 : i32
    %17 = arith.cmpi eq, %arg0, %c3_i32 : i32
    %18 = arith.extui %17 : i1 to i32
    %c0_i32_14 = arith.constant 0 : i32
    %19 = arith.cmpi ne, %18, %c0_i32_14 : i32
    scf.if %19 {
      %c0_15 = arith.constant 0 : index
      %c0_16 = arith.constant 0 : index
      %20 = vector.load %arg9[%c0_15, %c0_16] : memref<2x1024xf32, #tpu.memory_space<vmem>>, vector<2x1024xf32>
      %c0_17 = arith.constant 0 : index
      %c0_18 = arith.constant 0 : index
      %21 = vector.load %arg5[%c0_17, %c0_18] : memref<1x1024xf32, #tpu.memory_space<vmem>>, vector<1x1024xf32>
      %22 = vector.broadcast %21 : vector<1x1024xf32> to vector<2x1024xf32>
      %23 = arith.addf %20, %22 : vector<2x1024xf32>
      %cst_19 = arith.constant 0.000000e+00 : f32
      %24 = vector.broadcast %cst_19 : f32 to vector<2x1024xf32>
      %25 = arith.maximumf %23, %24 : vector<2x1024xf32>
      %26 = arith.truncf %25 : vector<2x1024xf32> to vector<2x1024xbf16>
      %c0_20 = arith.constant 0 : index
      %c0_21 = arith.constant 0 : index
      %27 = vector.load %arg6[%c0_20, %c0_21] : memref<1024x128xbf16, #tpu.memory_space<vmem>>, vector<1024x128xbf16>
      %cst_22 = arith.constant dense<0.000000e+00> : vector<2x128xf32>
      %28 = tpu.matmul %26, %27, %cst_22 {dimension_numbers = #tpu.dot_dimension_numbers<[1], [0], [0], [1], [0, 0, 1, 1], [], []>} : vector<2x1024xbf16>, vector<1024x128xbf16>, vector<2x128xf32> -> vector<2x128xf32>
      %c0_23 = arith.constant 0 : index
      %c0_24 = arith.constant 0 : index
      %29 = vector.load %arg7[%c0_23, %c0_24] : memref<1x128xf32, #tpu.memory_space<vmem>>, vector<1x128xf32>
      %30 = vector.broadcast %29 : vector<1x128xf32> to vector<2x128xf32>
      %31 = arith.addf %28, %30 : vector<2x128xf32>
      %c0_25 = arith.constant 0 : index
      %c0_26 = arith.constant 0 : index
      %32 = vector.load %arg8[%c0_25, %c0_26] : memref<2x128xf32, #tpu.memory_space<vmem>>, vector<2x128xf32>
      tpu.vector_store %arg8[%c0_25, %c0_26], %31 {strides = array<i32>} : memref<2x128xf32, #tpu.memory_space<vmem>>, vector<2x128xf32>,
    } else {
    }
    return
  }
  func.func @transform_0(%arg0: i32) -> (i32, i32) {
    %c0_i32 = arith.constant 0 : i32
    %c0_i32_0 = arith.constant 0 : i32
    %c0_i32_1 = arith.constant 0 : i32
    return %c0_i32, %c0_i32_0 : i32, i32
  }
  func.func @transform_1(%arg0: i32) -> (i32, i32) {
    %c0_i32 = arith.constant 0 : i32
    %c0_i32_0 = arith.constant 0 : i32
    return %c0_i32, %arg0 : i32, i32
  }
  func.func @transform_2(%arg0: i32) -> (i32, i32) {
    %c0_i32 = arith.constant 0 : i32
    %c0_i32_0 = arith.constant 0 : i32
    return %c0_i32, %arg0 : i32, i32
  }
  func.func @transform_3(%arg0: i32) -> (i32, i32) {
    %c0_i32 = arith.constant 0 : i32
    %c0_i32_0 = arith.constant 0 : i32
    return %arg0, %c0_i32 : i32, i32
  }
  func.func @transform_4(%arg0: i32) -> (i32, i32) {
    %c0_i32 = arith.constant 0 : i32
    %c0_i32_0 = arith.constant 0 : i32
    %c0_i32_1 = arith.constant 0 : i32
    return %c0_i32, %c0_i32_0 : i32, i32
  }
  func.func @transform_5(%arg0: i32) -> (i32, i32) {
    %c0_i32 = arith.constant 0 : i32
    %c0_i32_0 = arith.constant 0 : i32
    %c0_i32_1 = arith.constant 0 : i32
    return %c0_i32, %c0_i32_0 : i32, i32
  }
  func.func @transform_6(%arg0: i32) -> (i32, i32) {
    %c0_i32 = arith.constant 0 : i32
    %c0_i32_0 = arith.constant 0 : i32
    %c0_i32_1 = arith.constant 0 : i32
    return %c0_i32, %c0_i32_0 : i32, i32
  }
  func.func @transform_7(%arg0: i32) -> (i32, i32) {
    %c0_i32 = arith.constant 0 : i32
    %c0_i32_0 = arith.constant 0 : i32
    %c0_i32_1 = arith.constant 0 : i32
    return %c0_i32, %c0_i32_0 : i32, i32
  }
}

</mosaic_0001>

<llo_original>
// kernel: convnet_forward.3
$region0: #{convnet_forward.3}
  #allocation0 [shape = 'u32[]', space=smem, size = 0x4, offset = 0x4, fixed_abs, tag = 'smem constant byte address 0x4 - core index']
  #allocation1 [shape = 'u32[144,128]{1,0:T(1,128)}', space=vmem, size = 0x12000, scoped, tag = 'internal scratch']
  %s0 = inlined_call_operand.vmem [shape: bf16[2,800,75], index: 0, kind: input, shape index: {}]
  %s1 = inlined_call_operand.vmem [shape: bf16[75,64], index: 1, kind: input, shape index: {}]
  %s2 = inlined_call_operand.vmem [shape: f32[1,64], index: 2, kind: input, shape index: {}]
  %s3 = inlined_call_operand.vmem [shape: bf16[2,200,64], index: 3, kind: output, shape index: {}]
  %s4 = sld [smem:[#allocation0]]
  $region45: #{convnet_forward.3} parent=0
    _
  %s6 = ssub.s32 1, %s4
  %s7 = scalar_select 0, %s6, %s4
  loop: start=0, step=1, limit=4
  $region2: #{convnet_forward.3} parent=0 // loop_pre_header
    _
  $region3: #{convnet_forward.3} parent=0 // loop_header
    %s9 = sphi 0, %s13
    %p10 = scmp.ge.s32.totalorder %s9, 4
    %s19 = sphi 0, %s21
    %s22 = sphi 0, %s19
    %s23 = sphi 0, %s22
    %s39 = sphi 0, %s23
    %s43 = sphi 0, %s43
    %s45 = sphi 0, %s43
    %s46 = sphi 0, %s45
    %s60 = sphi 0, %s46
    %s64 = sphi 0, %s64
    %s66 = sphi 0, %s64
    %s67 = sphi 0, %s66
    %s81 = sphi 0, %s67
    %s87 = sphi 0, %s89
    %s90 = sphi 0, %s87
    %s91 = sphi 0, %s90
    %s107 = sphi 0, %s91
  $region4: #{convnet_forward.3} parent=0 // loop_header_branch
    %12 = sbr.rel (%p10) target = $region8
  $region5: #{convnet_forward.3} parent=0 // loop_body
    %s14 = ssub.s32 %s9, 1
    %s15 = ssub.s32 %s9, 2
    %s16 = sadd.s32 %s9, 1
    %s17 = ssub.s32 %s9, %s16
    %p18 = scmp.eq.s32.totalorder %s17, 0
    %s20 = sadd.s32 %s19, 1
    %s21 = scalar_select %p18, %s19, %s20
    %p24 = pneg %p18
    %p25 = scmp.eq.s32.totalorder %s9, 1
    %p26 = por %p24, %p25
    %p27 = scmp.ne.s32.totalorder %s19, %s22
    %p28 = scmp.eq.s32.totalorder %s9, 0
    %p29 = por %p27, %p28
    %p30 = scmp.ne.s32.totalorder %s19, %s22
    %p31 = scmp.eq.s32.totalorder %s14, 1
    %p32 = por %p30, %p31
    %p33 = scmp.ne.s32.totalorder %s22, %s23
    %p34 = scmp.eq.s32.totalorder %s14, 0
    %p35 = por %p33, %p34
    %p36 = scmp.ne.s32.totalorder %s22, %s23
    %p37 = scmp.eq.s32.totalorder %s15, 1
    %p38 = por %p36, %p37
    %p40 = scmp.ne.s32.totalorder %s23, %s39
    %p41 = scmp.eq.s32.totalorder %s15, 0
    %p42 = por %p40, %p41
    %s44 = sadd.s32 %s43, 1
    %p47 = scmp.eq.s32.totalorder %s9, 1
    %p48 = scmp.ne.s32.totalorder %s43, %s45
    %p49 = scmp.eq.s32.totalorder %s9, 0
    %p50 = por %p48, %p49
    %p51 = scmp.ne.s32.totalorder %s43, %s45
    %p52 = scmp.eq.s32.totalorder %s14, 1
    %p53 = por %p51, %p52
    %p54 = scmp.ne.s32.totalorder %s45, %s46
    %p55 = scmp.eq.s32.totalorder %s14, 0
    %p56 = por %p54, %p55
    %p57 = scmp.ne.s32.totalorder %s45, %s46
    %p58 = scmp.eq.s32.totalorder %s15, 1
    %p59 = por %p57, %p58
    %p61 = scmp.ne.s32.totalorder %s46, %s60
    %p62 = scmp.eq.s32.totalorder %s15, 0
    %p63 = por %p61, %p62
    %s65 = sadd.s32 %s64, 1
    %p68 = scmp.eq.s32.totalorder %s9, 1
    %p69 = scmp.ne.s32.totalorder %s64, %s66
    %p70 = scmp.eq.s32.totalorder %s9, 0
    %p71 = por %p69, %p70
    %p72 = scmp.ne.s32.totalorder %s64, %s66
    %p73 = scmp.eq.s32.totalorder %s14, 1
    %p74 = por %p72, %p73
    %p75 = scmp.ne.s32.totalorder %s66, %s67
    %p76 = scmp.eq.s32.totalorder %s14, 0
    %p77 = por %p75, %p76
    %p78 = scmp.ne.s32.totalorder %s66, %s67
    %p79 = scmp.eq.s32.totalorder %s15, 1
    %p80 = por %p78, %p79
    %p82 = scmp.ne.s32.totalorder %s67, %s81
    %p83 = scmp.eq.s32.totalorder %s15, 0
    %p84 = por %p82, %p83
    %s85 = ssub.s32 %s9, %s16
    %p86 = scmp.eq.s32.totalorder %s85, 0
    %s88 = sadd.s32 %s87, 1
    %s89 = scalar_select %p86, %s87, %s88
    %p92 = pneg %p86
    %p93 = scmp.eq.s32.totalorder %s9, 1
    %p94 = por %p92, %p93
    %p95 = scmp.ne.s32.totalorder %s87, %s90
    %p96 = scmp.eq.s32.totalorder %s9, 0
    %p97 = por %p95, %p96
    %p98 = scmp.ne.s32.totalorder %s87, %s90
    %p99 = scmp.eq.s32.totalorder %s14, 1
    %p100 = por %p98, %p99
    %p101 = scmp.ne.s32.totalorder %s90, %s91
    %p102 = scmp.eq.s32.totalorder %s14, 0
    %p103 = por %p101, %p102
    %p104 = scmp.ne.s32.totalorder %s90, %s91
    %p105 = scmp.eq.s32.totalorder %s15, 1
    %p106 = por %p104, %p105
    %p108 = scmp.ne.s32.totalorder %s91, %s107
    %p109 = scmp.eq.s32.totalorder %s15, 0
    %p110 = por %p108, %p109
    %p111 = scmp.le.s32.totalorder 1, %s9
    %p112 = scmp.lt.s32.totalorder %s9, 3
    %p113 = pnand %p111, %p112
    %p114 = pneg %p113
    // Predicated region
    $region9: #{convnet_forward.3} parent=5 // pred_check
      _
    $region10: #{convnet_forward.3} parent=5 // pred_check_branch
      %116 = sbr.rel (%p113) target = $region12
    $region11: #{convnet_forward.3} parent=5 // pred_region
      %s117 = ssub.s32 %s9, 1
      // Predicated region
      $region13: #{convnet_forward.3} parent=11 // pred_check
        %p118 = pneg %p56
      $region14: #{convnet_forward.3} parent=11 // pred_check_branch
        %120 = sbr.rel (%p118) target = $region16
      $region15: #{convnet_forward.3} parent=11 // pred_region
        _
      $region16: #{convnet_forward.3} parent=11 // pred_fallthru
        _
      // Predicated region
      $region17: #{convnet_forward.3} parent=11 // pred_check
        %p121 = pneg %p77
      $region18: #{convnet_forward.3} parent=11 // pred_check_branch
        %123 = sbr.rel (%p121) target = $region20
      $region19: #{convnet_forward.3} parent=11 // pred_region
        _
      $region20: #{convnet_forward.3} parent=11 // pred_fallthru
        _
    $region12: #{convnet_forward.3} parent=5 // pred_fallthru
      _
    %p124 = scmp.lt.s32.totalorder %s9, 2
    // Predicated region
    $region21: #{convnet_forward.3} parent=5 // pred_check
      %p125 = pneg %p124
    $region22: #{convnet_forward.3} parent=5 // pred_check_branch
      %127 = sbr.rel (%p125) target = $region24
    $region23: #{convnet_forward.3} parent=5 // pred_region
      // Predicated region
      $region25: #{convnet_forward.3} parent=23 // pred_check
        %p128 = pneg %p29
      $region26: #{convnet_forward.3} parent=23 // pred_check_branch
        %130 = sbr.rel (%p128) target = $region28
      $region27: #{convnet_forward.3} parent=23 // pred_region
        %p131 = scmp.lt.s32.totalorder %s9, 1
        %s132 = scalar_select %p131, %s9, 1
        %s133 = smul.addr %s132, 100
        %s134 = smul.addr %s133, 4
        %s135 = scalar_lea.vmem %s0, %s134
      $region28: #{convnet_forward.3} parent=23 // pred_fallthru
        _
    $region24: #{convnet_forward.3} parent=5 // pred_fallthru
      _
    %p136 = scmp.le.s32.totalorder 1, %s9
    %p137 = scmp.lt.s32.totalorder %s9, 3
    %p138 = pnand %p136, %p137
    %p139 = pneg %p138
    // Predicated region
    $region29: #{convnet_forward.3} parent=5 // pred_check
      _
    $region30: #{convnet_forward.3} parent=5 // pred_check_branch
      %141 = sbr.rel (%p138) target = $region32
    $region31: #{convnet_forward.3} parent=5 // pred_region
      %s142 = ssub.s32 %s9, 1
      %p143 = scmp.lt.s32.totalorder %s14, 1
      %s144 = scalar_select %p143, %s14, 1
      %s145 = smul.addr %s144, 100
      %s146 = smul.addr %s145, 4
      %s147 = scalar_lea.vmem %s0, %s146
      %p148 = pneg %p35
      %p149 = pneg %p32
      %p150 = pneg %p56
      %p151 = pneg %p53
      %p152 = pneg %p77
      %p153 = pneg %p74
      %p154 = pneg %p103
      %p155 = pneg %p100
      %p156 = scmp.lt.s32.totalorder %s14, 1
      %s157 = scalar_select %p156, %s14, 1
      %s158 = smul.addr %s157, 25
      %s159 = smul.addr %s158, 4
      %s160 = scalar_lea.vmem %s3, %s159
      %p161 = scmp.lt.s32.totalorder %s14, 1
      %s162 = scalar_select %p161, %s14, 1
      %s163 = smul.addr %s162, 100
      %s164 = smul.addr %s163, 4
      %s165 = scalar_lea.vmem %s0, %s164
      %p166 = scmp.lt.s32.totalorder %s14, 1
      %s167 = scalar_select %p166, %s14, 1
      %s168 = smul.addr %s167, 25
      %s169 = smul.addr %s168, 4
      %s170 = scalar_lea.vmem %s3, %s169
      %v172 = vld [vmem:[%s165] sm:$0xf]
      %v173 = vld [vmem:[%s165 + $0x4] sm:$0xf]
      %v174 = vld [vmem:[%s165 + $0x8] sm:$0xf]
      %v175 = vld [vmem:[%s165 + $0xc] sm:$0xf]
      %v176 = vld [vmem:[%s165 + $0x10] sm:$0xf]
      %v177 = vld [vmem:[%s165 + $0x14] sm:$0xf]
      %v178 = vld [vmem:[%s165 + $0x18] sm:$0xf]
      %v179 = vld [vmem:[%s165 + $0x1c] sm:$0xf]
      %v180 = vld [vmem:[%s165 + $0x20] sm:$0xf]
      %v181 = vld [vmem:[%s165 + $0x24] sm:$0xf]
      %v182 = vld [vmem:[%s165 + $0x28] sm:$0xf]
      %v183 = vld [vmem:[%s165 + $0x2c] sm:$0xf]
      %v184 = vld [vmem:[%s165 + $0x30] sm:$0xf]
      %v185 = vld [vmem:[%s165 + $0x34] sm:$0xf]
      %v186 = vld [vmem:[%s165 + $0x38] sm:$0xf]
      %v187 = vld [vmem:[%s165 + $0x3c] sm:$0xf]
      %v188 = vld [vmem:[%s165 + $0x40] sm:$0xf]
      %v189 = vld [vmem:[%s165 + $0x44] sm:$0xf]
      %v190 = vld [vmem:[%s165 + $0x48] sm:$0xf]
      %v191 = vld [vmem:[%s165 + $0x4c] sm:$0xf]
      %v192 = vld [vmem:[%s165 + $0x50] sm:$0xf]
      %v193 = vld [vmem:[%s165 + $0x54] sm:$0xf]
      %v194 = vld [vmem:[%s165 + $0x58] sm:$0xf]
      %v195 = vld [vmem:[%s165 + $0x5c] sm:$0xf]
      %v196 = vld [vmem:[%s165 + $0x60] sm:$0xf]
      %v197 = vld [vmem:[%s165 + $0x64] sm:$0xf]
      %v198 = vld [vmem:[%s165 + $0x68] sm:$0xf]
      %v199 = vld [vmem:[%s165 + $0x6c] sm:$0xf]
      %v200 = vld [vmem:[%s165 + $0x70] sm:$0xf]
      %v201 = vld [vmem:[%s165 + $0x74] sm:$0xf]
      %v202 = vld [vmem:[%s165 + $0x78] sm:$0xf]
      %v203 = vld [vmem:[%s165 + $0x7c] sm:$0xf]
      %v204 = vld [vmem:[%s165 + $0x80] sm:$0xf]
      %v205 = vld [vmem:[%s165 + $0x84] sm:$0xf]
      %v206 = vld [vmem:[%s165 + $0x88] sm:$0xf]
      %v207 = vld [vmem:[%s165 + $0x8c] sm:$0xf]
      %v208 = vld [vmem:[%s165 + $0x90] sm:$0xf]
      %v209 = vld [vmem:[%s165 + $0x94] sm:$0xf]
      %v210 = vld [vmem:[%s165 + $0x98] sm:$0xf]
      %v211 = vld [vmem:[%s165 + $0x9c] sm:$0xf]
      %v212 = vld [vmem:[%s165 + $0xa0] sm:$0xf]
      %v213 = vld [vmem:[%s165 + $0xa4] sm:$0xf]
      %v214 = vld [vmem:[%s165 + $0xa8] sm:$0xf]
      %v215 = vld [vmem:[%s165 + $0xac] sm:$0xf]
      %v216 = vld [vmem:[%s165 + $0xb0] sm:$0xf]
      %v217 = vld [vmem:[%s165 + $0xb4] sm:$0xf]
      %v218 = vld [vmem:[%s165 + $0xb8] sm:$0xf]
      %v219 = vld [vmem:[%s165 + $0xbc] sm:$0xf]
      %v220 = vld [vmem:[%s165 + $0xc0] sm:$0xf]
      %v221 = vld [vmem:[%s165 + $0xc4] sm:$0xf]
      %v222 = vld [vmem:[%s165 + $0xc8] sm:$0xf]
      %v223 = vld [vmem:[%s165 + $0xcc] sm:$0xf]
      %v224 = vld [vmem:[%s165 + $0xd0] sm:$0xf]
      %v225 = vld [vmem:[%s165 + $0xd4] sm:$0xf]
      %v226 = vld [vmem:[%s165 + $0xd8] sm:$0xf]
      %v227 = vld [vmem:[%s165 + $0xdc] sm:$0xf]
      %v228 = vld [vmem:[%s165 + $0xe0] sm:$0xf]
      %v229 = vld [vmem:[%s165 + $0xe4] sm:$0xf]
      %v230 = vld [vmem:[%s165 + $0xe8] sm:$0xf]
      %v231 = vld [vmem:[%s165 + $0xec] sm:$0xf]
      %v232 = vld [vmem:[%s165 + $0xf0] sm:$0xf]
      %v233 = vld [vmem:[%s165 + $0xf4] sm:$0xf]
      %v234 = vld [vmem:[%s165 + $0xf8] sm:$0xf]
      %v235 = vld [vmem:[%s165 + $0xfc] sm:$0xf]
      %v236 = vld [vmem:[%s165 + $0x100] sm:$0xf]
      %v237 = vld [vmem:[%s165 + $0x104] sm:$0xf]
      %v238 = vld [vmem:[%s165 + $0x108] sm:$0xf]
      %v239 = vld [vmem:[%s165 + $0x10c] sm:$0xf]
      %v240 = vld [vmem:[%s165 + $0x110] sm:$0xf]
      %v241 = vld [vmem:[%s165 + $0x114] sm:$0xf]
      %v242 = vld [vmem:[%s165 + $0x118] sm:$0xf]
      %v243 = vld [vmem:[%s165 + $0x11c] sm:$0xf]
      %v244 = vld [vmem:[%s165 + $0x120] sm:$0xf]
      %v245 = vld [vmem:[%s165 + $0x124] sm:$0xf]
      %v246 = vld [vmem:[%s165 + $0x128] sm:$0xf]
      %v247 = vld [vmem:[%s165 + $0x12c] sm:$0xf]
      %v248 = vld [vmem:[%s165 + $0x130] sm:$0xf]
      %v249 = vld [vmem:[%s165 + $0x134] sm:$0xf]
      %v250 = vld [vmem:[%s165 + $0x138] sm:$0xf]
      %v251 = vld [vmem:[%s165 + $0x13c] sm:$0xf]
      %v252 = vld [vmem:[%s165 + $0x140] sm:$0xf]
      %v253 = vld [vmem:[%s165 + $0x144] sm:$0xf]
      %v254 = vld [vmem:[%s165 + $0x148] sm:$0xf]
      %v255 = vld [vmem:[%s165 + $0x14c] sm:$0xf]
      %v256 = vld [vmem:[%s165 + $0x150] sm:$0xf]
      %v257 = vld [vmem:[%s165 + $0x154] sm:$0xf]
      %v258 = vld [vmem:[%s165 + $0x158] sm:$0xf]
      %v259 = vld [vmem:[%s165 + $0x15c] sm:$0xf]
      %v260 = vld [vmem:[%s165 + $0x160] sm:$0xf]
      %v261 = vld [vmem:[%s165 + $0x164] sm:$0xf]
      %v262 = vld [vmem:[%s165 + $0x168] sm:$0xf]
      %v263 = vld [vmem:[%s165 + $0x16c] sm:$0xf]
      %v264 = vld [vmem:[%s165 + $0x170] sm:$0xf]
      %v265 = vld [vmem:[%s165 + $0x174] sm:$0xf]
      %v266 = vld [vmem:[%s165 + $0x178] sm:$0xf]
      %v267 = vld [vmem:[%s165 + $0x17c] sm:$0xf]
      %v268 = vld [vmem:[%s165 + $0x180] sm:$0xf]
      %v269 = vld [vmem:[%s165 + $0x184] sm:$0xf]
      %v270 = vld [vmem:[%s165 + $0x188] sm:$0xf]
      %v271 = vld [vmem:[%s165 + $0x18c] sm:$0xf]
      %v272 = vld [vmem:[%s1] sm:$0xf]
      %v273 = vld [vmem:[%s1 + $0x4] sm:$0xf]
      %v274 = vld [vmem:[%s1 + $0x8] sm:$0xf]
      %v275 = vld [vmem:[%s1 + $0xc] sm:$0xf]
      %v276 = vld [vmem:[%s1 + $0x10] sm:$0xf]
      %v277 = vld [vmem:[%s1 + $0x14] sm:$0xf]
      %v278 = vld [vmem:[%s1 + $0x18] sm:$0xf]
      %v279 = vld [vmem:[%s1 + $0x1c] sm:$0xf]
      %v280 = vld [vmem:[%s1 + $0x20] sm:$0xf]
      %v281 = vld [vmem:[%s1 + $0x24] sm:$0x3]
      %v382 = vunpack.c.l.b16 %v172
      %v383 = vunpack.c.l.b16 %v173
      %v384 = vunpack.c.l.b16 %v174
      %v385 = vunpack.c.l.b16 %v175
      %v386 = vunpack.c.l.b16 %v176
      %v387 = vunpack.c.l.b16 %v177
      %v388 = vunpack.c.l.b16 %v178
      %v389 = vunpack.c.l.b16 %v179
      %v390 = vunpack.c.l.b16 %v180
      %v391 = vunpack.c.l.b16 %v181
      %v392 = vunpack.c.l.b16 %v182
      %v393 = vunpack.c.l.b16 %v183
      %v394 = vunpack.c.l.b16 %v184
      %v395 = vunpack.c.l.b16 %v185
      %v396 = vunpack.c.l.b16 %v186
      %v397 = vunpack.c.l.b16 %v187
      %v398 = vunpack.c.l.b16 %v188
      %v399 = vunpack.c.l.b16 %v189
      %v400 = vunpack.c.l.b16 %v190
      %v401 = vunpack.c.l.b16 %v191
      %v402 = vunpack.c.l.b16 %v192
      %v403 = vunpack.c.l.b16 %v193
      %v404 = vunpack.c.l.b16 %v194
      %v405 = vunpack.c.l.b16 %v195
      %v406 = vunpack.c.l.b16 %v196
      %v407 = vunpack.c.l.b16 %v197
      %v408 = vunpack.c.l.b16 %v198
      %v409 = vunpack.c.l.b16 %v199
      %v410 = vunpack.c.l.b16 %v200
      %v411 = vunpack.c.l.b16 %v201
      %v412 = vunpack.c.l.b16 %v202
      %v413 = vunpack.c.l.b16 %v203
      %v414 = vunpack.c.l.b16 %v204
      %v415 = vunpack.c.l.b16 %v205
      %v416 = vunpack.c.l.b16 %v206
      %v417 = vunpack.c.l.b16 %v207
      %v418 = vunpack.c.l.b16 %v208
      %v419 = vunpack.c.l.b16 %v209
      %v420 = vunpack.c.l.b16 %v210
      %v421 = vunpack.c.l.b16 %v211
      %v422 = vunpack.c.l.b16 %v212
      %v423 = vunpack.c.l.b16 %v213
      %v424 = vunpack.c.l.b16 %v214
      %v425 = vunpack.c.l.b16 %v215
      %v426 = vunpack.c.l.b16 %v216
      %v427 = vunpack.c.l.b16 %v217
      %v428 = vunpack.c.l.b16 %v218
      %v429 = vunpack.c.l.b16 %v219
      %v430 = vunpack.c.l.b16 %v220
      %v431 = vunpack.c.l.b16 %v221
      %v432 = vunpack.c.l.b16 %v222
      %v433 = vunpack.c.l.b16 %v223
      %v434 = vunpack.c.l.b16 %v224
      %v435 = vunpack.c.l.b16 %v225
      %v436 = vunpack.c.l.b16 %v226
      %v437 = vunpack.c.l.b16 %v227
      %v438 = vunpack.c.l.b16 %v228
      %v439 = vunpack.c.l.b16 %v229
      %v440 = vunpack.c.l.b16 %v230
      %v441 = vunpack.c.l.b16 %v231
      %v442 = vunpack.c.l.b16 %v232
      %v443 = vunpack.c.l.b16 %v233
      %v444 = vunpack.c.l.b16 %v234
      %v445 = vunpack.c.l.b16 %v235
      %v446 = vunpack.c.l.b16 %v236
      %v447 = vunpack.c.l.b16 %v237
      %v448 = vunpack.c.l.b16 %v238
      %v449 = vunpack.c.l.b16 %v239
      %v450 = vunpack.c.l.b16 %v240
      %v451 = vunpack.c.l.b16 %v241
      %v452 = vunpack.c.l.b16 %v242
      %v453 = vunpack.c.l.b16 %v243
      %v454 = vunpack.c.l.b16 %v244
      %v455 = vunpack.c.l.b16 %v245
      %v456 = vunpack.c.l.b16 %v246
      %v457 = vunpack.c.l.b16 %v247
      %v458 = vunpack.c.l.b16 %v248
      %v459 = vunpack.c.l.b16 %v249
      %v460 = vunpack.c.l.b16 %v250
      %v461 = vunpack.c.l.b16 %v251
      %v462 = vunpack.c.l.b16 %v252
      %v463 = vunpack.c.l.b16 %v253
      %v464 = vunpack.c.l.b16 %v254
      %v465 = vunpack.c.l.b16 %v255
      %v466 = vunpack.c.l.b16 %v256
      %v467 = vunpack.c.l.b16 %v257
      %v468 = vunpack.c.l.b16 %v258
      %v469 = vunpack.c.l.b16 %v259
      %v470 = vunpack.c.l.b16 %v260
      %v471 = vunpack.c.l.b16 %v261
      %v472 = vunpack.c.l.b16 %v262
      %v473 = vunpack.c.l.b16 %v263
      %v474 = vunpack.c.l.b16 %v264
      %v475 = vunpack.c.l.b16 %v265
      %v476 = vunpack.c.l.b16 %v266
      %v477 = vunpack.c.l.b16 %v267
      %v478 = vunpack.c.l.b16 %v268
      %v479 = vunpack.c.l.b16 %v269
      %v480 = vunpack.c.l.b16 %v270
      %v481 = vunpack.c.l.b16 %v271
      %v482 = vpack.c.b16 %v383, %v382
      %v483 = vpack.c.b16 %v385, %v384
      %v484 = vpack.c.b16 %v387, %v386
      %v485 = vpack.c.b16 %v389, %v388
      %v486 = vpack.c.b16 %v391, %v390
      %v487 = vpack.c.b16 %v393, %v392
      %v488 = vpack.c.b16 %v395, %v394
      %v489 = vpack.c.b16 %v397, %v396
      %v490 = vpack.c.b16 %v399, %v398
      %v491 = vpack.c.b16 %v401, %v400
      %v492 = vpack.c.b16 %v403, %v402
      %v493 = vpack.c.b16 %v405, %v404
      %v494 = vpack.c.b16 %v407, %v406
      %v495 = vpack.c.b16 %v409, %v408
      %v496 = vpack.c.b16 %v411, %v410
      %v497 = vpack.c.b16 %v413, %v412
      %v498 = vpack.c.b16 %v415, %v414
      %v499 = vpack.c.b16 %v417, %v416
      %v500 = vpack.c.b16 %v419, %v418
      %v501 = vpack.c.b16 %v421, %v420
      %v502 = vpack.c.b16 %v423, %v422
      %v503 = vpack.c.b16 %v425, %v424
      %v504 = vpack.c.b16 %v427, %v426
      %v505 = vpack.c.b16 %v429, %v428
      %v506 = vpack.c.b16 %v431, %v430
      %v507 = vpack.c.b16 %v433, %v432
      %v508 = vpack.c.b16 %v435, %v434
      %v509 = vpack.c.b16 %v437, %v436
      %v510 = vpack.c.b16 %v439, %v438
      %v511 = vpack.c.b16 %v441, %v440
      %v512 = vpack.c.b16 %v443, %v442
      %v513 = vpack.c.b16 %v445, %v444
      %v514 = vpack.c.b16 %v447, %v446
      %v515 = vpack.c.b16 %v449, %v448
      %v516 = vpack.c.b16 %v451, %v450
      %v517 = vpack.c.b16 %v453, %v452
      %v518 = vpack.c.b16 %v455, %v454
      %v519 = vpack.c.b16 %v457, %v456
      %v520 = vpack.c.b16 %v459, %v458
      %v521 = vpack.c.b16 %v461, %v460
      %v522 = vpack.c.b16 %v463, %v462
      %v523 = vpack.c.b16 %v465, %v464
      %v524 = vpack.c.b16 %v467, %v466
      %v525 = vpack.c.b16 %v469, %v468
      %v526 = vpack.c.b16 %v471, %v470
      %v527 = vpack.c.b16 %v473, %v472
      %v528 = vpack.c.b16 %v475, %v474
      %v529 = vpack.c.b16 %v477, %v476
      %v530 = vpack.c.b16 %v479, %v478
      %v531 = vpack.c.b16 %v481, %v480
      %v542 = vunpack.c.l.b16 %v272
      %v543 = vunpack.c.l.b16 %v273
      %v544 = vunpack.c.l.b16 %v274
      %v545 = vunpack.c.l.b16 %v275
      %v546 = vunpack.c.l.b16 %v276
      %v547 = vunpack.c.l.b16 %v277
      %v548 = vunpack.c.l.b16 %v278
      %v549 = vunpack.c.l.b16 %v279
      %v550 = vunpack.c.l.b16 %v280
      %v551 = vunpack.c.l.b16 %v281
      %v552 = vpack.c.b16 %v543, %v542
      %v553 = vpack.c.b16 %v545, %v544
      %v554 = vpack.c.b16 %v547, %v546
      %v555 = vpack.c.b16 %v549, %v548
      %v556 = vpack.c.b16 %v551, %v550
      %vm561 = vcmask 613376
      %v563 = vsel %vm561, %v482, 0
      %v566 = vsel %vm561, %v483, 0
      %v569 = vsel %vm561, %v484, 0
      %v572 = vsel %vm561, %v485, 0
      %v575 = vsel %vm561, %v486, 0
      %v578 = vsel %vm561, %v487, 0
      %v581 = vsel %vm561, %v488, 0
      %v584 = vsel %vm561, %v489, 0
      %v587 = vsel %vm561, %v490, 0
      %v590 = vsel %vm561, %v491, 0
      %v593 = vsel %vm561, %v492, 0
      %v596 = vsel %vm561, %v493, 0
      %v599 = vsel %vm561, %v494, 0
      %v602 = vsel %vm561, %v495, 0
      %v605 = vsel %vm561, %v496, 0
      %v608 = vsel %vm561, %v497, 0
      %v611 = vsel %vm561, %v498, 0
      %v614 = vsel %vm561, %v499, 0
      %v617 = vsel %vm561, %v500, 0
      %v620 = vsel %vm561, %v501, 0
      %v623 = vsel %vm561, %v502, 0
      %v626 = vsel %vm561, %v503, 0
      %v629 = vsel %vm561, %v504, 0
      %v632 = vsel %vm561, %v505, 0
      %v635 = vsel %vm561, %v506, 0
      %v638 = vsel %vm561, %v507, 0
      %v641 = vsel %vm561, %v508, 0
      %v644 = vsel %vm561, %v509, 0
      %v647 = vsel %vm561, %v510, 0
      %v650 = vsel %vm561, %v511, 0
      %v653 = vsel %vm561, %v512, 0
      %v656 = vsel %vm561, %v513, 0
      %v659 = vsel %vm561, %v514, 0
      %v662 = vsel %vm561, %v515, 0
      %v665 = vsel %vm561, %v516, 0
      %v668 = vsel %vm561, %v517, 0
      %v671 = vsel %vm561, %v518, 0
      %v674 = vsel %vm561, %v519, 0
      %v677 = vsel %vm561, %v520, 0
      %v680 = vsel %vm561, %v521, 0
      %v683 = vsel %vm561, %v522, 0
      %v686 = vsel %vm561, %v523, 0
      %v689 = vsel %vm561, %v524, 0
      %v692 = vsel %vm561, %v525, 0
      %v695 = vsel %vm561, %v526, 0
      %v698 = vsel %vm561, %v527, 0
      %v701 = vsel %vm561, %v528, 0
      %v704 = vsel %vm561, %v529, 0
      %v707 = vsel %vm561, %v530, 0
      %v710 = vsel %vm561, %v531, 0
      %vm712 = vcmask 1044480
      %vm713 = vcmask 1045504
      %v714 = vsel %vm712, 4294967295, 65535
      %v715 = vsel %vm713, %v714, 0
      %v717 = vand.u32 %v556, %v715
      %719 = vmatprep.subr.bf16.mxu0 0
      %720 = vmatpush1.bf16.msra.mxu0 %v552
      %721 = vmatprep.subr.bf16.mxu0 0
      %722 = vmatpush1.bf16.msra.mxu0 %v553
      %723 = vmatprep.subr.bf16.mxu0 0
      %724 = vmatpush1.bf16.msra.mxu0 %v554
      %725 = vmatprep.subr.bf16.mxu0 0
      %726 = vmatpush1.bf16.msra.mxu0 %v555
      %727 = vmatprep.subr.bf16.mxu0 0
      %728 = vmatpush1.bf16.msra.mxu0 %v717
      %729 = vmatprep.subr.bf16.mxu0 0
      %730 = vmatpush1.bf16.msra.mxu0 0
      %731 = vmatprep.subr.bf16.mxu0 0
      %732 = vmatpush1.bf16.msra.mxu0 0
      %733 = vmatprep.subr.bf16.mxu0 0
      %734 = vmatpush1.bf16.msra.mxu0 0
      %735 = vmatprep.subr.bf16.mxu0 0
      %736 = vmatpush1.bf16.msra.mxu0 0
      %737 = vmatprep.subr.bf16.mxu0 0
      %738 = vmatpush1.bf16.msra.mxu0 0
      %739 = vmatprep.subr.bf16.mxu0 0
      %740 = vmatpush1.bf16.msra.mxu0 0
      %741 = vmatprep.subr.bf16.mxu0 0
      %742 = vmatpush1.bf16.msra.mxu0 0
      %743 = vmatprep.subr.bf16.mxu0 0
      %744 = vmatpush1.bf16.msra.mxu0 0
      %745 = vmatprep.subr.bf16.mxu0 0
      %746 = vmatpush1.bf16.msra.mxu0 0
      %747 = vmatprep.subr.bf16.mxu0 0
      %748 = vmatpush1.bf16.msra.mxu0 0
      %749 = vmatprep.subr.bf16.mxu0 0
      %750 = vmatpush1.bf16.msra.mxu0 0
      %751 = vmatprep.mubr.bf16.mxu0 0
      %752 = vmatmul.mubr.bf16.gmra.mrb[0].mxu0 %v563
      %v753 = vpop.f32.mrb[0].mxu0
      %v754 = vadd.f32 0.0, %v753
      %v755 = vpop.f32.mrb[0].mxu0
      %v756 = vpop.f32.mrb[0].mxu0
      %v757 = vadd.f32 0.0, %v756
      %v758 = vpop.f32.mrb[0].mxu0
      %759 = vmatprep.mubr.bf16.mxu0 0
      %760 = vmatmul.mubr.bf16.gmra.mrb[0].mxu0 %v566
      %v761 = vpop.f32.mrb[0].mxu0
      %v762 = vadd.f32 0.0, %v761
      %v763 = vpop.f32.mrb[0].mxu0
      %v764 = vpop.f32.mrb[0].mxu0
      %v765 = vadd.f32 0.0, %v764
      %v766 = vpop.f32.mrb[0].mxu0
      %767 = vmatprep.mubr.bf16.mxu0 0
      %768 = vmatmul.mubr.bf16.gmra.mrb[0].mxu0 %v569
      %v769 = vpop.f32.mrb[0].mxu0
      %v770 = vadd.f32 0.0, %v769
      %v771 = vpop.f32.mrb[0].mxu0
      %v772 = vpop.f32.mrb[0].mxu0
      %v773 = vadd.f32 0.0, %v772
      %v774 = vpop.f32.mrb[0].mxu0
      %775 = vmatprep.mubr.bf16.mxu0 0
      %776 = vmatmul.mubr.bf16.gmra.mrb[0].mxu0 %v572
      %v777 = vpop.f32.mrb[0].mxu0
      %v778 = vadd.f32 0.0, %v777
      %v779 = vpop.f32.mrb[0].mxu0
      %v780 = vpop.f32.mrb[0].mxu0
      %v781 = vadd.f32 0.0, %v780
      %v782 = vpop.f32.mrb[0].mxu0
      %783 = vmatprep.mubr.bf16.mxu0 0
      %784 = vmatmul.mubr.bf16.gmra.mrb[0].mxu0 %v575
      %v785 = vpop.f32.mrb[0].mxu0
      %v786 = vadd.f32 0.0, %v785
      %v787 = vpop.f32.mrb[0].mxu0
      %v788 = vpop.f32.mrb[0].mxu0
      %v789 = vadd.f32 0.0, %v788
      %v790 = vpop.f32.mrb[0].mxu0
      %791 = vmatprep.mubr.bf16.mxu0 0
      %792 = vmatmul.mubr.bf16.gmra.mrb[0].mxu0 %v578
      %v793 = vpop.f32.mrb[0].mxu0
      %v794 = vadd.f32 0.0, %v793
      %v795 = vpop.f32.mrb[0].mxu0
      %v796 = vpop.f32.mrb[0].mxu0
      %v797 = vadd.f32 0.0, %v796
      %v798 = vpop.f32.mrb[0].mxu0
      %799 = vmatprep.mubr.bf16.mxu0 0
      %800 = vmatmul.mubr.bf16.gmra.mrb[0].mxu0 %v581
      %v801 = vpop.f32.mrb[0].mxu0
      %v802 = vadd.f32 0.0, %v801
      %v803 = vpop.f32.mrb[0].mxu0
      %v804 = vpop.f32.mrb[0].mxu0
      %v805 = vadd.f32 0.0, %v804
      %v806 = vpop.f32.mrb[0].mxu0
      %807 = vmatprep.mubr.bf16.mxu0 0
      %808 = vmatmul.mubr.bf16.gmra.mrb[0].mxu0 %v584
      %v809 = vpop.f32.mrb[0].mxu0
      %v810 = vadd.f32 0.0, %v809
      %v811 = vpop.f32.mrb[0].mxu0
      %v812 = vpop.f32.mrb[0].mxu0
      %v813 = vadd.f32 0.0, %v812
      %v814 = vpop.f32.mrb[0].mxu0
      %815 = vmatprep.mubr.bf16.mxu0 0
      %816 = vmatmul.mubr.bf16.gmra.mrb[0].mxu0 %v587
      %v817 = vpop.f32.mrb[0].mxu0
      %v818 = vadd.f32 0.0, %v817
      %v819 = vpop.f32.mrb[0].mxu0
      %v820 = vpop.f32.mrb[0].mxu0
      %v821 = vadd.f32 0.0, %v820
      %v822 = vpop.f32.mrb[0].mxu0
      %823 = vmatprep.mubr.bf16.mxu0 0
      %824 = vmatmul.mubr.bf16.gmra.mrb[0].mxu0 %v590
      %v825 = vpop.f32.mrb[0].mxu0
      %v826 = vadd.f32 0.0, %v825
      %v827 = vpop.f32.mrb[0].mxu0
      %v828 = vpop.f32.mrb[0].mxu0
      %v829 = vadd.f32 0.0, %v828
      %v830 = vpop.f32.mrb[0].mxu0
      %831 = vmatprep.mubr.bf16.mxu0 0
      %832 = vmatmul.mubr.bf16.gmra.mrb[0].mxu0 %v593
      %v833 = vpop.f32.mrb[0].mxu0
      %v834 = vadd.f32 0.0, %v833
      %v835 = vpop.f32.mrb[0].mxu0
      %v836 = vpop.f32.mrb[0].mxu0
      %v837 = vadd.f32 0.0, %v836
      %v838 = vpop.f32.mrb[0].mxu0
      %839 = vmatprep.mubr.bf16.mxu0 0
      %840 = vmatmul.mubr.bf16.gmra.mrb[0].mxu0 %v596
      %v841 = vpop.f32.mrb[0].mxu0
      %v842 = vadd.f32 0.0, %v841
      %v843 = vpop.f32.mrb[0].mxu0
      %v844 = vpop.f32.mrb[0].mxu0
      %v845 = vadd.f32 0.0, %v844
      %v846 = vpop.f32.mrb[0].mxu0
      %847 = vmatprep.mubr.bf16.mxu0 0
      %848 = vmatmul.mubr.bf16.gmra.mrb[0].mxu0 %v599
      %v849 = vpop.f32.mrb[0].mxu0
      %v850 = vadd.f32 0.0, %v849
      %v851 = vpop.f32.mrb[0].mxu0
      %v852 = vpop.f32.mrb[0].mxu0
      %v853 = vadd.f32 0.0, %v852
      %v854 = vpop.f32.mrb[0].mxu0
      %855 = vmatprep.mubr.bf16.mxu0 0
      %856 = vmatmul.mubr.bf16.gmra.mrb[0].mxu0 %v602
      %v857 = vpop.f32.mrb[0].mxu0
      %v858 = vadd.f32 0.0, %v857
      %v859 = vpop.f32.mrb[0].mxu0
      %v860 = vpop.f32.mrb[0].mxu0
      %v861 = vadd.f32 0.0, %v860
      %v862 = vpop.f32.mrb[0].mxu0
      %863 = vmatprep.mubr.bf16.mxu0 0
      %864 = vmatmul.mubr.bf16.gmra.mrb[0].mxu0 %v605
      %v865 = vpop.f32.mrb[0].mxu0
      %v866 = vadd.f32 0.0, %v865
      %v867 = vpop.f32.mrb[0].mxu0
      %v868 = vpop.f32.mrb[0].mxu0
      %v869 = vadd.f32 0.0, %v868
      %v870 = vpop.f32.mrb[0].mxu0
      %871 = vmatprep.mubr.bf16.mxu0 0
      %872 = vmatmul.mubr.bf16.gmra.mrb[0].mxu0 %v608
      %v873 = vpop.f32.mrb[0].mxu0
      %v874 = vadd.f32 0.0, %v873
      %v875 = vpop.f32.mrb[0].mxu0
      %v876 = vpop.f32.mrb[0].mxu0
      %v877 = vadd.f32 0.0, %v876
      %v878 = vpop.f32.mrb[0].mxu0
      %879 = vmatprep.mubr.bf16.mxu0 0
      %880 = vmatmul.mubr.bf16.gmra.mrb[0].mxu0 %v611
      %v881 = vpop.f32.mrb[0].mxu0
      %v882 = vadd.f32 0.0, %v881
      %v883 = vpop.f32.mrb[0].mxu0
      %v884 = vpop.f32.mrb[0].mxu0
      %v885 = vadd.f32 0.0, %v884
      %v886 = vpop.f32.mrb[0].mxu0
      %887 = vmatprep.mubr.bf16.mxu0 0
      %888 = vmatmul.mubr.bf16.gmra.mrb[0].mxu0 %v614
      %v889 = vpop.f32.mrb[0].mxu0
      %v890 = vadd.f32 0.0, %v889
      %v891 = vpop.f32.mrb[0].mxu0
      %v892 = vpop.f32.mrb[0].mxu0
      %v893 = vadd.f32 0.0, %v892
      %v894 = vpop.f32.mrb[0].mxu0
      %895 = vmatprep.mubr.bf16.mxu0 0
      %896 = vmatmul.mubr.bf16.gmra.mrb[0].mxu0 %v617
      %v897 = vpop.f32.mrb[0].mxu0
      %v898 = vadd.f32 0.0, %v897
      %v899 = vpop.f32.mrb[0].mxu0
      %v900 = vpop.f32.mrb[0].mxu0
      %v901 = vadd.f32 0.0, %v900
      %v902 = vpop.f32.mrb[0].mxu0
      %903 = vmatprep.mubr.bf16.mxu0 0
      %904 = vmatmul.mubr.bf16.gmra.mrb[0].mxu0 %v620
      %v905 = vpop.f32.mrb[0].mxu0
      %v906 = vadd.f32 0.0, %v905
      %v907 = vpop.f32.mrb[0].mxu0
      %v908 = vpop.f32.mrb[0].mxu0
      %v909 = vadd.f32 0.0, %v908
      %v910 = vpop.f32.mrb[0].mxu0
      %911 = vmatprep.mubr.bf16.mxu0 0
      %912 = vmatmul.mubr.bf16.gmra.mrb[0].mxu0 %v623
      %v913 = vpop.f32.mrb[0].mxu0
      %v914 = vadd.f32 0.0, %v913
      %v915 = vpop.f32.mrb[0].mxu0
      %v916 = vpop.f32.mrb[0].mxu0
      %v917 = vadd.f32 0.0, %v916
      %v918 = vpop.f32.mrb[0].mxu0
      %919 = vmatprep.mubr.bf16.mxu0 0
      %920 = vmatmul.mubr.bf16.gmra.mrb[0].mxu0 %v626
      %v921 = vpop.f32.mrb[0].mxu0
      %v922 = vadd.f32 0.0, %v921
      %v923 = vpop.f32.mrb[0].mxu0
      %v924 = vpop.f32.mrb[0].mxu0
      %v925 = vadd.f32 0.0, %v924
      %v926 = vpop.f32.mrb[0].mxu0
      %927 = vmatprep.mubr.bf16.mxu0 0
      %928 = vmatmul.mubr.bf16.gmra.mrb[0].mxu0 %v629
      %v929 = vpop.f32.mrb[0].mxu0
      %v930 = vadd.f32 0.0, %v929
      %v931 = vpop.f32.mrb[0].mxu0
      %v932 = vpop.f32.mrb[0].mxu0
      %v933 = vadd.f32 0.0, %v932
      %v934 = vpop.f32.mrb[0].mxu0
      %935 = vmatprep.mubr.bf16.mxu0 0
      %936 = vmatmul.mubr.bf16.gmra.mrb[0].mxu0 %v632
      %v937 = vpop.f32.mrb[0].mxu0
      %v938 = vadd.f32 0.0, %v937
      %v939 = vpop.f32.mrb[0].mxu0
      %v940 = vpop.f32.mrb[0].mxu0
      %v941 = vadd.f32 0.0, %v940
      %v942 = vpop.f32.mrb[0].mxu0
      %943 = vmatprep.mubr.bf16.mxu0 0
      %944 = vmatmul.mubr.bf16.gmra.mrb[0].mxu0 %v635
      %v945 = vpop.f32.mrb[0].mxu0
      %v946 = vadd.f32 0.0, %v945
      %v947 = vpop.f32.mrb[0].mxu0
      %v948 = vpop.f32.mrb[0].mxu0
      %v949 = vadd.f32 0.0, %v948
      %v950 = vpop.f32.mrb[0].mxu0
      %951 = vmatprep.mubr.bf16.mxu0 0
      %952 = vmatmul.mubr.bf16.gmra.mrb[0].mxu0 %v638
      %v953 = vpop.f32.mrb[0].mxu0
      %v954 = vadd.f32 0.0, %v953
      %v955 = vpop.f32.mrb[0].mxu0
      %v956 = vpop.f32.mrb[0].mxu0
      %v957 = vadd.f32 0.0, %v956
      %v958 = vpop.f32.mrb[0].mxu0
      %959 = vmatprep.mubr.bf16.mxu0 0
      %960 = vmatmul.mubr.bf16.gmra.mrb[0].mxu0 %v641
      %v961 = vpop.f32.mrb[0].mxu0
      %v962 = vadd.f32 0.0, %v961
      %v963 = vpop.f32.mrb[0].mxu0
      %v964 = vpop.f32.mrb[0].mxu0
      %v965 = vadd.f32 0.0, %v964
      %v966 = vpop.f32.mrb[0].mxu0
      %967 = vmatprep.mubr.bf16.mxu0 0
      %968 = vmatmul.mubr.bf16.gmra.mrb[0].mxu0 %v644
      %v969 = vpop.f32.mrb[0].mxu0
      %v970 = vadd.f32 0.0, %v969
      %v971 = vpop.f32.mrb[0].mxu0
      %v972 = vpop.f32.mrb[0].mxu0
      %v973 = vadd.f32 0.0, %v972
      %v974 = vpop.f32.mrb[0].mxu0
      %975 = vmatprep.mubr.bf16.mxu0 0
      %976 = vmatmul.mubr.bf16.gmra.mrb[0].mxu0 %v647
      %v977 = vpop.f32.mrb[0].mxu0
      %v978 = vadd.f32 0.0, %v977
      %v979 = vpop.f32.mrb[0].mxu0
      %v980 = vpop.f32.mrb[0].mxu0
      %v981 = vadd.f32 0.0, %v980
      %v982 = vpop.f32.mrb[0].mxu0
      %983 = vmatprep.mubr.bf16.mxu0 0
      %984 = vmatmul.mubr.bf16.gmra.mrb[0].mxu0 %v650
      %v985 = vpop.f32.mrb[0].mxu0
      %v986 = vadd.f32 0.0, %v985
      %v987 = vpop.f32.mrb[0].mxu0
      %v988 = vpop.f32.mrb[0].mxu0
      %v989 = vadd.f32 0.0, %v988
      %v990 = vpop.f32.mrb[0].mxu0
      %991 = vmatprep.mubr.bf16.mxu0 0
      %992 = vmatmul.mubr.bf16.gmra.mrb[0].mxu0 %v653
      %v993 = vpop.f32.mrb[0].mxu0
      %v994 = vadd.f32 0.0, %v993
      %v995 = vpop.f32.mrb[0].mxu0
      %v996 = vpop.f32.mrb[0].mxu0
      %v997 = vadd.f32 0.0, %v996
      %v998 = vpop.f32.mrb[0].mxu0
      %999 = vmatprep.mubr.bf16.mxu0 0
      %1000 = vmatmul.mubr.bf16.gmra.mrb[0].mxu0 %v656
      %v1001 = vpop.f32.mrb[0].mxu0
      %v1002 = vadd.f32 0.0, %v1001
      %v1003 = vpop.f32.mrb[0].mxu0
      %v1004 = vpop.f32.mrb[0].mxu0
      %v1005 = vadd.f32 0.0, %v1004
      %v1006 = vpop.f32.mrb[0].mxu0
      %1007 = vmatprep.mubr.bf16.mxu0 0
      %1008 = vmatmul.mubr.bf16.gmra.mrb[0].mxu0 %v659
      %v1009 = vpop.f32.mrb[0].mxu0
      %v1010 = vadd.f32 0.0, %v1009
      %v1011 = vpop.f32.mrb[0].mxu0
      %v1012 = vpop.f32.mrb[0].mxu0
      %v1013 = vadd.f32 0.0, %v1012
      %v1014 = vpop.f32.mrb[0].mxu0
      %1015 = vmatprep.mubr.bf16.mxu0 0
      %1016 = vmatmul.mubr.bf16.gmra.mrb[0].mxu0 %v662
      %v1017 = vpop.f32.mrb[0].mxu0
      %v1018 = vadd.f32 0.0, %v1017
      %v1019 = vpop.f32.mrb[0].mxu0
      %v1020 = vpop.f32.mrb[0].mxu0
      %v1021 = vadd.f32 0.0, %v1020
      %v1022 = vpop.f32.mrb[0].mxu0
      %1023 = vmatprep.mubr.bf16.mxu0 0
      %1024 = vmatmul.mubr.bf16.gmra.mrb[0].mxu0 %v665
      %v1025 = vpop.f32.mrb[0].mxu0
      %v1026 = vadd.f32 0.0, %v1025
      %v1027 = vpop.f32.mrb[0].mxu0
      %v1028 = vpop.f32.mrb[0].mxu0
      %v1029 = vadd.f32 0.0, %v1028
      %v1030 = vpop.f32.mrb[0].mxu0
      %1031 = vmatprep.mubr.bf16.mxu0 0
      %1032 = vmatmul.mubr.bf16.gmra.mrb[0].mxu0 %v668
      %v1033 = vpop.f32.mrb[0].mxu0
      %v1034 = vadd.f32 0.0, %v1033
      %v1035 = vpop.f32.mrb[0].mxu0
      %v1036 = vpop.f32.mrb[0].mxu0
      %v1037 = vadd.f32 0.0, %v1036
      %v1038 = vpop.f32.mrb[0].mxu0
      %1039 = vmatprep.mubr.bf16.mxu0 0
      %1040 = vmatmul.mubr.bf16.gmra.mrb[0].mxu0 %v671
      %v1041 = vpop.f32.mrb[0].mxu0
      %v1042 = vadd.f32 0.0, %v1041
      %v1043 = vpop.f32.mrb[0].mxu0
      %v1044 = vpop.f32.mrb[0].mxu0
      %v1045 = vadd.f32 0.0, %v1044
      %v1046 = vpop.f32.mrb[0].mxu0
      %1047 = vmatprep.mubr.bf16.mxu0 0
      %1048 = vmatmul.mubr.bf16.gmra.mrb[0].mxu0 %v674
      %v1049 = vpop.f32.mrb[0].mxu0
      %v1050 = vadd.f32 0.0, %v1049
      %v1051 = vpop.f32.mrb[0].mxu0
      %v1052 = vpop.f32.mrb[0].mxu0
      %v1053 = vadd.f32 0.0, %v1052
      %v1054 = vpop.f32.mrb[0].mxu0
      %1055 = vmatprep.mubr.bf16.mxu0 0
      %1056 = vmatmul.mubr.bf16.gmra.mrb[0].mxu0 %v677
      %v1057 = vpop.f32.mrb[0].mxu0
      %v1058 = vadd.f32 0.0, %v1057
      %v1059 = vpop.f32.mrb[0].mxu0
      %v1060 = vpop.f32.mrb[0].mxu0
      %v1061 = vadd.f32 0.0, %v1060
      %v1062 = vpop.f32.mrb[0].mxu0
      %1063 = vmatprep.mubr.bf16.mxu0 0
      %1064 = vmatmul.mubr.bf16.gmra.mrb[0].mxu0 %v680
      %v1065 = vpop.f32.mrb[0].mxu0
      %v1066 = vadd.f32 0.0, %v1065
      %v1067 = vpop.f32.mrb[0].mxu0
      %v1068 = vpop.f32.mrb[0].mxu0
      %v1069 = vadd.f32 0.0, %v1068
      %v1070 = vpop.f32.mrb[0].mxu0
      %1071 = vmatprep.mubr.bf16.mxu0 0
      %1072 = vmatmul.mubr.bf16.gmra.mrb[0].mxu0 %v683
      %v1073 = vpop.f32.mrb[0].mxu0
      %v1074 = vadd.f32 0.0, %v1073
      %v1075 = vpop.f32.mrb[0].mxu0
      %v1076 = vpop.f32.mrb[0].mxu0
      %v1077 = vadd.f32 0.0, %v1076
      %v1078 = vpop.f32.mrb[0].mxu0
      %1079 = vmatprep.mubr.bf16.mxu0 0
      %1080 = vmatmul.mubr.bf16.gmra.mrb[0].mxu0 %v686
      %v1081 = vpop.f32.mrb[0].mxu0
      %v1082 = vadd.f32 0.0, %v1081
      %v1083 = vpop.f32.mrb[0].mxu0
      %v1084 = vpop.f32.mrb[0].mxu0
      %v1085 = vadd.f32 0.0, %v1084
      %v1086 = vpop.f32.mrb[0].mxu0
      %1087 = vmatprep.mubr.bf16.mxu0 0
      %1088 = vmatmul.mubr.bf16.gmra.mrb[0].mxu0 %v689
      %v1089 = vpop.f32.mrb[0].mxu0
      %v1090 = vadd.f32 0.0, %v1089
      %v1091 = vpop.f32.mrb[0].mxu0
      %v1092 = vpop.f32.mrb[0].mxu0
      %v1093 = vadd.f32 0.0, %v1092
      %v1094 = vpop.f32.mrb[0].mxu0
      %1095 = vmatprep.mubr.bf16.mxu0 0
      %1096 = vmatmul.mubr.bf16.gmra.mrb[0].mxu0 %v692
      %v1097 = vpop.f32.mrb[0].mxu0
      %v1098 = vadd.f32 0.0, %v1097
      %v1099 = vpop.f32.mrb[0].mxu0
      %v1100 = vpop.f32.mrb[0].mxu0
      %v1101 = vadd.f32 0.0, %v1100
      %v1102 = vpop.f32.mrb[0].mxu0
      %1103 = vmatprep.mubr.bf16.mxu0 0
      %1104 = vmatmul.mubr.bf16.gmra.mrb[0].mxu0 %v695
      %v1105 = vpop.f32.mrb[0].mxu0
      %v1106 = vadd.f32 0.0, %v1105
      %v1107 = vpop.f32.mrb[0].mxu0
      %v1108 = vpop.f32.mrb[0].mxu0
      %v1109 = vadd.f32 0.0, %v1108
      %v1110 = vpop.f32.mrb[0].mxu0
      %1111 = vmatprep.mubr.bf16.mxu0 0
      %1112 = vmatmul.mubr.bf16.gmra.mrb[0].mxu0 %v698
      %v1113 = vpop.f32.mrb[0].mxu0
      %v1114 = vadd.f32 0.0, %v1113
      %v1115 = vpop.f32.mrb[0].mxu0
      %v1116 = vpop.f32.mrb[0].mxu0
      %v1117 = vadd.f32 0.0, %v1116
      %v1118 = vpop.f32.mrb[0].mxu0
      %1119 = vmatprep.mubr.bf16.mxu0 0
      %1120 = vmatmul.mubr.bf16.gmra.mrb[0].mxu0 %v701
      %v1121 = vpop.f32.mrb[0].mxu0
      %v1122 = vadd.f32 0.0, %v1121
      %v1123 = vpop.f32.mrb[0].mxu0
      %v1124 = vpop.f32.mrb[0].mxu0
      %v1125 = vadd.f32 0.0, %v1124
      %v1126 = vpop.f32.mrb[0].mxu0
      %1127 = vmatprep.mubr.bf16.mxu0 0
      %1128 = vmatmul.mubr.bf16.gmra.mrb[0].mxu0 %v704
      %v1129 = vpop.f32.mrb[0].mxu0
      %v1130 = vadd.f32 0.0, %v1129
      %v1131 = vpop.f32.mrb[0].mxu0
      %v1132 = vpop.f32.mrb[0].mxu0
      %v1133 = vadd.f32 0.0, %v1132
      %v1134 = vpop.f32.mrb[0].mxu0
      %1135 = vmatprep.mubr.bf16.mxu0 0
      %1136 = vmatmul.mubr.bf16.gmra.mrb[0].mxu0 %v707
      %v1137 = vpop.f32.mrb[0].mxu0
      %v1138 = vadd.f32 0.0, %v1137
      %v1139 = vpop.f32.mrb[0].mxu0
      %v1140 = vpop.f32.mrb[0].mxu0
      %v1141 = vadd.f32 0.0, %v1140
      %v1142 = vpop.f32.mrb[0].mxu0
      %1143 = vmatprep.mubr.bf16.mxu0 0
      %1144 = vmatmul.mubr.bf16.gmra.mrb[0].mxu0 %v710
      %v1145 = vpop.f32.mrb[0].mxu0
      %v1146 = vadd.f32 0.0, %v1145
      %v1147 = vpop.f32.mrb[0].mxu0
      %v1148 = vpop.f32.mrb[0].mxu0
      %v1149 = vadd.f32 0.0, %v1148
      %v1150 = vpop.f32.mrb[0].mxu0
      %1151 = vdwg.mxu0
      %v1152 = vmax.f32 %v754, %v853
      %v1153 = vmax.f32 %v757, %v858
      %v1154 = vmax.f32 %v762, %v861
      %v1155 = vmax.f32 %v765, %v866
      %v1156 = vmax.f32 %v770, %v869
      %v1157 = vmax.f32 %v773, %v874
      %v1158 = vmax.f32 %v778, %v877
      %v1159 = vmax.f32 %v781, %v882
      %v1160 = vmax.f32 %v786, %v885
      %v1161 = vmax.f32 %v789, %v890
      %v1162 = vmax.f32 %v794, %v893
      %v1163 = vmax.f32 %v797, %v898
      %v1164 = vmax.f32 %v802, %v901
      %v1165 = vmax.f32 %v805, %v906
      %v1166 = vmax.f32 %v810, %v909
      %v1167 = vmax.f32 %v813, %v914
      %v1168 = vmax.f32 %v818, %v917
      %v1169 = vmax.f32 %v821, %v922
      %v1170 = vmax.f32 %v826, %v925
      %v1171 = vmax.f32 %v829, %v930
      %v1172 = vmax.f32 %v834, %v933
      %v1173 = vmax.f32 %v837, %v938
      %v1174 = vmax.f32 %v842, %v941
      %v1175 = vmax.f32 %v845, %v946
      %v1176 = vmax.f32 %v850, %v949
      %v1177 = vmax.f32 %v954, %v1053
      %v1178 = vmax.f32 %v957, %v1058
      %v1179 = vmax.f32 %v962, %v1061
      %v1180 = vmax.f32 %v965, %v1066
      %v1181 = vmax.f32 %v970, %v1069
      %v1182 = vmax.f32 %v973, %v1074
      %v1183 = vmax.f32 %v978, %v1077
      %v1184 = vmax.f32 %v981, %v1082
      %v1185 = vmax.f32 %v986, %v1085
      %v1186 = vmax.f32 %v989, %v1090
      %v1187 = vmax.f32 %v994, %v1093
      %v1188 = vmax.f32 %v997, %v1098
      %v1189 = vmax.f32 %v1002, %v1101
      %v1190 = vmax.f32 %v1005, %v1106
      %v1191 = vmax.f32 %v1010, %v1109
      %v1192 = vmax.f32 %v1013, %v1114
      %v1193 = vmax.f32 %v1018, %v1117
      %v1194 = vmax.f32 %v1021, %v1122
      %v1195 = vmax.f32 %v1026, %v1125
      %v1196 = vmax.f32 %v1029, %v1130
      %v1197 = vmax.f32 %v1034, %v1133
      %v1198 = vmax.f32 %v1037, %v1138
      %v1199 = vmax.f32 %v1042, %v1141
      %v1200 = vmax.f32 %v1045, %v1146
      %v1201 = vmax.f32 %v1050, %v1149
      %v1202 = vmax.f32 %v1152, %v1177
      %v1203 = vmax.f32 %v1153, %v1178
      %v1204 = vmax.f32 %v1154, %v1179
      %v1205 = vmax.f32 %v1155, %v1180
      %v1206 = vmax.f32 %v1156, %v1181
      %v1207 = vmax.f32 %v1157, %v1182
      %v1208 = vmax.f32 %v1158, %v1183
      %v1209 = vmax.f32 %v1159, %v1184
      %v1210 = vmax.f32 %v1160, %v1185
      %v1211 = vmax.f32 %v1161, %v1186
      %v1212 = vmax.f32 %v1162, %v1187
      %v1213 = vmax.f32 %v1163, %v1188
      %v1214 = vmax.f32 %v1164, %v1189
      %v1215 = vmax.f32 %v1165, %v1190
      %v1216 = vmax.f32 %v1166, %v1191
      %v1217 = vmax.f32 %v1167, %v1192
      %v1218 = vmax.f32 %v1168, %v1193
      %v1219 = vmax.f32 %v1169, %v1194
      %v1220 = vmax.f32 %v1170, %v1195
      %v1221 = vmax.f32 %v1171, %v1196
      %v1222 = vmax.f32 %v1172, %v1197
      %v1223 = vmax.f32 %v1173, %v1198
      %v1224 = vmax.f32 %v1174, %v1199
      %v1225 = vmax.f32 %v1175, %v1200
      %v1226 = vmax.f32 %v1176, %v1201
      %v1227 = vld [vmem:[%s2] sm:$0x1]
      %v1229 = vlaneseq
      %v1230 = vshrl.u32 %v1229, 7
      %v1231 = vsub.s32 0, %v1230
      %v1232 = vrot.slane %v1227, %v1231
      %v1234 = vadd.f32 %v1202, %v1232
      %v1235 = vadd.f32 %v1203, %v1232
      %v1236 = vadd.f32 %v1204, %v1232
      %v1237 = vadd.f32 %v1205, %v1232
      %v1238 = vadd.f32 %v1206, %v1232
      %v1239 = vadd.f32 %v1207, %v1232
      %v1240 = vadd.f32 %v1208, %v1232
      %v1241 = vadd.f32 %v1209, %v1232
      %v1242 = vadd.f32 %v1210, %v1232
      %v1243 = vadd.f32 %v1211, %v1232
      %v1244 = vadd.f32 %v1212, %v1232
      %v1245 = vadd.f32 %v1213, %v1232
      %v1246 = vadd.f32 %v1214, %v1232
      %v1247 = vadd.f32 %v1215, %v1232
      %v1248 = vadd.f32 %v1216, %v1232
      %v1249 = vadd.f32 %v1217, %v1232
      %v1250 = vadd.f32 %v1218, %v1232
      %v1251 = vadd.f32 %v1219, %v1232
      %v1252 = vadd.f32 %v1220, %v1232
      %v1253 = vadd.f32 %v1221, %v1232
      %v1254 = vadd.f32 %v1222, %v1232
      %v1255 = vadd.f32 %v1223, %v1232
      %v1256 = vadd.f32 %v1224, %v1232
      %v1257 = vadd.f32 %v1225, %v1232
      %v1258 = vadd.f32 %v1226, %v1232
      %v1259 = vmax.f32 %v1234, 0.0
      %v1260 = vmax.f32 %v1235, 0.0
      %v1261 = vmax.f32 %v1236, 0.0
      %v1262 = vmax.f32 %v1237, 0.0
      %v1263 = vmax.f32 %v1238, 0.0
      %v1264 = vmax.f32 %v1239, 0.0
      %v1265 = vmax.f32 %v1240, 0.0
      %v1266 = vmax.f32 %v1241, 0.0
      %v1267 = vmax.f32 %v1242, 0.0
      %v1268 = vmax.f32 %v1243, 0.0
      %v1269 = vmax.f32 %v1244, 0.0
      %v1270 = vmax.f32 %v1245, 0.0
      %v1271 = vmax.f32 %v1246, 0.0
      %v1272 = vmax.f32 %v1247, 0.0
      %v1273 = vmax.f32 %v1248, 0.0
      %v1274 = vmax.f32 %v1249, 0.0
      %v1275 = vmax.f32 %v1250, 0.0
      %v1276 = vmax.f32 %v1251, 0.0
      %v1277 = vmax.f32 %v1252, 0.0
      %v1278 = vmax.f32 %v1253, 0.0
      %v1279 = vmax.f32 %v1254, 0.0
      %v1280 = vmax.f32 %v1255, 0.0
      %v1281 = vmax.f32 %v1256, 0.0
      %v1282 = vmax.f32 %v1257, 0.0
      %v1283 = vmax.f32 %v1258, 0.0
      %v1284 = vpack.c.bf16 %v1260, %v1259
      %v1285 = vpack.c.bf16 %v1262, %v1261
      %v1286 = vpack.c.bf16 %v1264, %v1263
      %v1287 = vpack.c.bf16 %v1266, %v1265
      %v1288 = vpack.c.bf16 %v1268, %v1267
      %v1289 = vpack.c.bf16 %v1270, %v1269
      %v1290 = vpack.c.bf16 %v1272, %v1271
      %v1291 = vpack.c.bf16 %v1274, %v1273
      %v1292 = vpack.c.bf16 %v1276, %v1275
      %v1293 = vpack.c.bf16 %v1278, %v1277
      %v1294 = vpack.c.bf16 %v1280, %v1279
      %v1295 = vpack.c.bf16 %v1282, %v1281
      %v1296 = vpack.c.bf16 %v1283, %v1283
      %v1310 = vunpack.c.l.b16 %v1284
      %v1311 = vunpack.c.h.b16 %v1284
      %v1312 = vunpack.c.l.b16 %v1285
      %v1313 = vunpack.c.h.b16 %v1285
      %v1314 = vunpack.c.l.b16 %v1286
      %v1315 = vunpack.c.h.b16 %v1286
      %v1316 = vunpack.c.l.b16 %v1287
      %v1317 = vunpack.c.h.b16 %v1287
      %v1318 = vunpack.c.l.b16 %v1288
      %v1319 = vunpack.c.h.b16 %v1288
      %v1320 = vunpack.c.l.b16 %v1289
      %v1321 = vunpack.c.h.b16 %v1289
      %v1322 = vunpack.c.l.b16 %v1290
      %v1323 = vunpack.c.h.b16 %v1290
      %v1324 = vunpack.c.l.b16 %v1291
      %v1325 = vunpack.c.h.b16 %v1291
      %v1326 = vunpack.c.l.b16 %v1292
      %v1327 = vunpack.c.h.b16 %v1292
      %v1328 = vunpack.c.l.b16 %v1293
      %v1329 = vunpack.c.h.b16 %v1293
      %v1330 = vunpack.c.l.b16 %v1294
      %v1331 = vunpack.c.h.b16 %v1294
      %v1332 = vunpack.c.l.b16 %v1295
      %v1333 = vunpack.c.h.b16 %v1295
      %v1334 = vunpack.c.l.b16 %v1296
      %v1335 = vpack.c.b16 %v1310, %v1310
      %v1336 = vpack.c.b16 %v1311, %v1311
      %v1337 = vpack.c.b16 %v1312, %v1312
      %v1338 = vpack.c.b16 %v1313, %v1313
      %v1339 = vpack.c.b16 %v1314, %v1314
      %v1340 = vpack.c.b16 %v1315, %v1315
      %v1341 = vpack.c.b16 %v1316, %v1316
      %v1342 = vpack.c.b16 %v1317, %v1317
      %v1343 = vpack.c.b16 %v1318, %v1318
      %v1344 = vpack.c.b16 %v1319, %v1319
      %v1345 = vpack.c.b16 %v1320, %v1320
      %v1346 = vpack.c.b16 %v1321, %v1321
      %v1347 = vpack.c.b16 %v1322, %v1322
      %v1348 = vpack.c.b16 %v1323, %v1323
      %v1349 = vpack.c.b16 %v1324, %v1324
      %v1350 = vpack.c.b16 %v1325, %v1325
      %v1351 = vpack.c.b16 %v1326, %v1326
      %v1352 = vpack.c.b16 %v1327, %v1327
      %v1353 = vpack.c.b16 %v1328, %v1328
      %v1354 = vpack.c.b16 %v1329, %v1329
      %v1355 = vpack.c.b16 %v1330, %v1330
      %v1356 = vpack.c.b16 %v1331, %v1331
      %v1357 = vpack.c.b16 %v1332, %v1332
      %v1358 = vpack.c.b16 %v1333, %v1333
      %v1359 = vpack.c.b16 %v1334, %v1334
      %vm1385 = vcmask 519168
      %1386 = vst.msk [vmem:[%s170] sm:$0xf] %vm1385, %v1335
      %1387 = vst.msk [vmem:[%s170 + $0x4] sm:$0xf] %vm1385, %v1336
      %1388 = vst.msk [vmem:[%s170 + $0x8] sm:$0xf] %vm1385, %v1337
      %1389 = vst.msk [vmem:[%s170 + $0xc] sm:$0xf] %vm1385, %v1338
      %1390 = vst.msk [vmem:[%s170 + $0x10] sm:$0xf] %vm1385, %v1339
      %1391 = vst.msk [vmem:[%s170 + $0x14] sm:$0xf] %vm1385, %v1340
      %1392 = vst.msk [vmem:[%s170 + $0x18] sm:$0xf] %vm1385, %v1341
      %1393 = vst.msk [vmem:[%s170 + $0x1c] sm:$0xf] %vm1385, %v1342
      %1394 = vst.msk [vmem:[%s170 + $0x20] sm:$0xf] %vm1385, %v1343
      %1395 = vst.msk [vmem:[%s170 + $0x24] sm:$0xf] %vm1385, %v1344
      %1396 = vst.msk [vmem:[%s170 + $0x28] sm:$0xf] %vm1385, %v1345
      %1397 = vst.msk [vmem:[%s170 + $0x2c] sm:$0xf] %vm1385, %v1346
      %1398 = vst.msk [vmem:[%s170 + $0x30] sm:$0xf] %vm1385, %v1347
      %1399 = vst.msk [vmem:[%s170 + $0x34] sm:$0xf] %vm1385, %v1348
      %1400 = vst.msk [vmem:[%s170 + $0x38] sm:$0xf] %vm1385, %v1349
      %1401 = vst.msk [vmem:[%s170 + $0x3c] sm:$0xf] %vm1385, %v1350
      %1402 = vst.msk [vmem:[%s170 + $0x40] sm:$0xf] %vm1385, %v1351
      %1403 = vst.msk [vmem:[%s170 + $0x44] sm:$0xf] %vm1385, %v1352
      %1404 = vst.msk [vmem:[%s170 + $0x48] sm:$0xf] %vm1385, %v1353
      %1405 = vst.msk [vmem:[%s170 + $0x4c] sm:$0xf] %vm1385, %v1354
      %1406 = vst.msk [vmem:[%s170 + $0x50] sm:$0xf] %vm1385, %v1355
      %1407 = vst.msk [vmem:[%s170 + $0x54] sm:$0xf] %vm1385, %v1356
      %1408 = vst.msk [vmem:[%s170 + $0x58] sm:$0xf] %vm1385, %v1357
      %1409 = vst.msk [vmem:[%s170 + $0x5c] sm:$0xf] %vm1385, %v1358
      %1410 = vst.msk [vmem:[%s170 + $0x60] sm:$0xf] %vm1385, %v1359
      %p1411 = scmp.lt.s32.totalorder %s14, 1
      %s1412 = scalar_select %p1411, %s14, 1
      %s1413 = smul.addr %s1412, 25
      %s1414 = smul.addr %s1413, 4
      %s1415 = scalar_lea.vmem %s3, %s1414
      // Predicated region
      $region33: #{convnet_forward.3} parent=31 // pred_check
        %p1416 = pneg %p100
      $region34: #{convnet_forward.3} parent=31 // pred_check_branch
        %1418 = sbr.rel (%p1416) target = $region36
      $region35: #{convnet_forward.3} parent=31 // pred_region
        _
      $region36: #{convnet_forward.3} parent=31 // pred_fallthru
        _
    $region32: #{convnet_forward.3} parent=5 // pred_fallthru
      _
    %p1419 = scmp.le.s32.totalorder 2, %s9
    // Predicated region
    $region37: #{convnet_forward.3} parent=5 // pred_check
      %p1420 = pneg %p1419
    $region38: #{convnet_forward.3} parent=5 // pred_check_branch
      %1422 = sbr.rel (%p1420) target = $region40
    $region39: #{convnet_forward.3} parent=5 // pred_region
      %s1423 = ssub.s32 %s9, 2
      // Predicated region
      $region41: #{convnet_forward.3} parent=39 // pred_check
        %p1424 = pneg %p106
      $region42: #{convnet_forward.3} parent=39 // pred_check_branch
        %1426 = sbr.rel (%p1424) target = $region44
      $region43: #{convnet_forward.3} parent=39 // pred_region
        %p1427 = scmp.lt.s32.totalorder %s15, 1
        %s1428 = scalar_select %p1427, %s15, 1
        %s1429 = smul.addr %s1428, 25
        %s1430 = smul.addr %s1429, 4
        %s1431 = scalar_lea.vmem %s3, %s1430
      $region44: #{convnet_forward.3} parent=39 // pred_fallthru
        _
    $region40: #{convnet_forward.3} parent=5 // pred_fallthru
      _
  $region6: #{convnet_forward.3} parent=0 // loop_footer
    %s13 = sadd.s32 1, %s9
  $region7: #{convnet_forward.3} parent=0 // loop_footer_branch
    %8 = sbr.rel target = $region3
  $region8: #{convnet_forward.3} parent=0 // loop_exit
    _

// kernel: convnet_forward.4
$region0: #{convnet_forward.4}
  #allocation0 [shape = 'u32[]', space=smem, size = 0x4, offset = 0x4, fixed_abs, tag = 'smem constant byte address 0x4 - core index']
  #allocation1 [shape = 'u32[144,128]{1,0:T(1,128)}', space=vmem, size = 0x12000, scoped, tag = 'internal scratch']
  %s0 = inlined_call_operand.vmem [shape: bf16[2,128,1600], index: 0, kind: input, shape index: {}]
  %s1 = inlined_call_operand.vmem [shape: bf16[1600,128], index: 1, kind: input, shape index: {}]
  %s2 = inlined_call_operand.vmem [shape: f32[1,128], index: 2, kind: input, shape index: {}]
  %s3 = inlined_call_operand.vmem [shape: bf16[2,32,128], index: 3, kind: output, shape index: {}]
  %s4 = sld [smem:[#allocation0]]
  $region45: #{convnet_forward.4} parent=0
    _
  %s6 = ssub.s32 1, %s4
  %s7 = scalar_select 0, %s6, %s4
  loop: start=0, step=1, limit=4
  $region2: #{convnet_forward.4} parent=0 // loop_pre_header
    _
  $region3: #{convnet_forward.4} parent=0 // loop_header
    %s9 = sphi 0, %s13
    %p10 = scmp.ge.s32.totalorder %s9, 4
    %s19 = sphi 0, %s21
    %s22 = sphi 0, %s19
    %s23 = sphi 0, %s22
    %s39 = sphi 0, %s23
    %s43 = sphi 0, %s43
    %s45 = sphi 0, %s43
    %s46 = sphi 0, %s45
    %s60 = sphi 0, %s46
    %s64 = sphi 0, %s64
    %s66 = sphi 0, %s64
    %s67 = sphi 0, %s66
    %s81 = sphi 0, %s67
    %s87 = sphi 0, %s89
    %s90 = sphi 0, %s87
    %s91 = sphi 0, %s90
    %s107 = sphi 0, %s91
  $region4: #{convnet_forward.4} parent=0 // loop_header_branch
    %12 = sbr.rel (%p10) target = $region8
  $region5: #{convnet_forward.4} parent=0 // loop_body
    %s14 = ssub.s32 %s9, 1
    %s15 = ssub.s32 %s9, 2
    %s16 = sadd.s32 %s9, 1
    %s17 = ssub.s32 %s9, %s16
    %p18 = scmp.eq.s32.totalorder %s17, 0
    %s20 = sadd.s32 %s19, 1
    %s21 = scalar_select %p18, %s19, %s20
    %p24 = pneg %p18
    %p25 = scmp.eq.s32.totalorder %s9, 1
    %p26 = por %p24, %p25
    %p27 = scmp.ne.s32.totalorder %s19, %s22
    %p28 = scmp.eq.s32.totalorder %s9, 0
    %p29 = por %p27, %p28
    %p30 = scmp.ne.s32.totalorder %s19, %s22
    %p31 = scmp.eq.s32.totalorder %s14, 1
    %p32 = por %p30, %p31
    %p33 = scmp.ne.s32.totalorder %s22, %s23
    %p34 = scmp.eq.s32.totalorder %s14, 0
    %p35 = por %p33, %p34
    %p36 = scmp.ne.s32.totalorder %s22, %s23
    %p37 = scmp.eq.s32.totalorder %s15, 1
    %p38 = por %p36, %p37
    %p40 = scmp.ne.s32.totalorder %s23, %s39
    %p41 = scmp.eq.s32.totalorder %s15, 0
    %p42 = por %p40, %p41
    %s44 = sadd.s32 %s43, 1
    %p47 = scmp.eq.s32.totalorder %s9, 1
    %p48 = scmp.ne.s32.totalorder %s43, %s45
    %p49 = scmp.eq.s32.totalorder %s9, 0
    %p50 = por %p48, %p49
    %p51 = scmp.ne.s32.totalorder %s43, %s45
    %p52 = scmp.eq.s32.totalorder %s14, 1
    %p53 = por %p51, %p52
    %p54 = scmp.ne.s32.totalorder %s45, %s46
    %p55 = scmp.eq.s32.totalorder %s14, 0
    %p56 = por %p54, %p55
    %p57 = scmp.ne.s32.totalorder %s45, %s46
    %p58 = scmp.eq.s32.totalorder %s15, 1
    %p59 = por %p57, %p58
    %p61 = scmp.ne.s32.totalorder %s46, %s60
    %p62 = scmp.eq.s32.totalorder %s15, 0
    %p63 = por %p61, %p62
    %s65 = sadd.s32 %s64, 1
    %p68 = scmp.eq.s32.totalorder %s9, 1
    %p69 = scmp.ne.s32.totalorder %s64, %s66
    %p70 = scmp.eq.s32.totalorder %s9, 0
    %p71 = por %p69, %p70
    %p72 = scmp.ne.s32.totalorder %s64, %s66
    %p73 = scmp.eq.s32.totalorder %s14, 1
    %p74 = por %p72, %p73
    %p75 = scmp.ne.s32.totalorder %s66, %s67
    %p76 = scmp.eq.s32.totalorder %s14, 0
    %p77 = por %p75, %p76
    %p78 = scmp.ne.s32.totalorder %s66, %s67
    %p79 = scmp.eq.s32.totalorder %s15, 1
    %p80 = por %p78, %p79
    %p82 = scmp.ne.s32.totalorder %s67, %s81
    %p83 = scmp.eq.s32.totalorder %s15, 0
    %p84 = por %p82, %p83
    %s85 = ssub.s32 %s9, %s16
    %p86 = scmp.eq.s32.totalorder %s85, 0
    %s88 = sadd.s32 %s87, 1
    %s89 = scalar_select %p86, %s87, %s88
    %p92 = pneg %p86
    %p93 = scmp.eq.s32.totalorder %s9, 1
    %p94 = por %p92, %p93
    %p95 = scmp.ne.s32.totalorder %s87, %s90
    %p96 = scmp.eq.s32.totalorder %s9, 0
    %p97 = por %p95, %p96
    %p98 = scmp.ne.s32.totalorder %s87, %s90
    %p99 = scmp.eq.s32.totalorder %s14, 1
    %p100 = por %p98, %p99
    %p101 = scmp.ne.s32.totalorder %s90, %s91
    %p102 = scmp.eq.s32.totalorder %s14, 0
    %p103 = por %p101, %p102
    %p104 = scmp.ne.s32.totalorder %s90, %s91
    %p105 = scmp.eq.s32.totalorder %s15, 1
    %p106 = por %p104, %p105
    %p108 = scmp.ne.s32.totalorder %s91, %s107
    %p109 = scmp.eq.s32.totalorder %s15, 0
    %p110 = por %p108, %p109
    %p111 = scmp.le.s32.totalorder 1, %s9
    %p112 = scmp.lt.s32.totalorder %s9, 3
    %p113 = pnand %p111, %p112
    %p114 = pneg %p113
    // Predicated region
    $region9: #{convnet_forward.4} parent=5 // pred_check
      _
    $region10: #{convnet_forward.4} parent=5 // pred_check_branch
      %116 = sbr.rel (%p113) target = $region12
    $region11: #{convnet_forward.4} parent=5 // pred_region
      %s117 = ssub.s32 %s9, 1
      // Predicated region
      $region13: #{convnet_forward.4} parent=11 // pred_check
        %p118 = pneg %p56
      $region14: #{convnet_forward.4} parent=11 // pred_check_branch
        %120 = sbr.rel (%p118) target = $region16
      $region15: #{convnet_forward.4} parent=11 // pred_region
        _
      $region16: #{convnet_forward.4} parent=11 // pred_fallthru
        _
      // Predicated region
      $region17: #{convnet_forward.4} parent=11 // pred_check
        %p121 = pneg %p77
      $region18: #{convnet_forward.4} parent=11 // pred_check_branch
        %123 = sbr.rel (%p121) target = $region20
      $region19: #{convnet_forward.4} parent=11 // pred_region
        _
      $region20: #{convnet_forward.4} parent=11 // pred_fallthru
        _
    $region12: #{convnet_forward.4} parent=5 // pred_fallthru
      _
    %p124 = scmp.lt.s32.totalorder %s9, 2
    // Predicated region
    $region21: #{convnet_forward.4} parent=5 // pred_check
      %p125 = pneg %p124
    $region22: #{convnet_forward.4} parent=5 // pred_check_branch
      %127 = sbr.rel (%p125) target = $region24
    $region23: #{convnet_forward.4} parent=5 // pred_region
      // Predicated region
      $region25: #{convnet_forward.4} parent=23 // pred_check
        %p128 = pneg %p29
      $region26: #{convnet_forward.4} parent=23 // pred_check_branch
        %130 = sbr.rel (%p128) target = $region28
      $region27: #{convnet_forward.4} parent=23 // pred_region
        %p131 = scmp.lt.s32.totalorder %s9, 1
        %s132 = scalar_select %p131, %s9, 1
        %s133 = smul.addr %s132, 208
        %s134 = smul.addr %s133, 4
        %s135 = scalar_lea.vmem %s0, %s134
      $region28: #{convnet_forward.4} parent=23 // pred_fallthru
        _
    $region24: #{convnet_forward.4} parent=5 // pred_fallthru
      _
    %p136 = scmp.le.s32.totalorder 1, %s9
    %p137 = scmp.lt.s32.totalorder %s9, 3
    %p138 = pnand %p136, %p137
    %p139 = pneg %p138
    // Predicated region
    $region29: #{convnet_forward.4} parent=5 // pred_check
      _
    $region30: #{convnet_forward.4} parent=5 // pred_check_branch
      %141 = sbr.rel (%p138) target = $region32
    $region31: #{convnet_forward.4} parent=5 // pred_region
      %s142 = ssub.s32 %s9, 1
      %p143 = scmp.lt.s32.totalorder %s14, 1
      %s144 = scalar_select %p143, %s14, 1
      %s145 = smul.addr %s144, 208
      %s146 = smul.addr %s145, 4
      %s147 = scalar_lea.vmem %s0, %s146
      %p148 = pneg %p35
      %p149 = pneg %p32
      %p150 = pneg %p56
      %p151 = pneg %p53
      %p152 = pneg %p77
      %p153 = pneg %p74
      %p154 = pneg %p103
      %p155 = pneg %p100
      %p156 = scmp.lt.s32.totalorder %s14, 1
      %s157 = scalar_select %p156, %s14, 1
      %s158 = smul.addr %s157, 4
      %s159 = smul.addr %s158, 4
      %s160 = scalar_lea.vmem %s3, %s159
      %p161 = scmp.lt.s32.totalorder %s14, 1
      %s162 = scalar_select %p161, %s14, 1
      %s163 = smul.addr %s162, 208
      %s164 = smul.addr %s163, 4
      %s165 = scalar_lea.vmem %s0, %s164
      %p166 = scmp.lt.s32.totalorder %s14, 1
      %s167 = scalar_select %p166, %s14, 1
      %s168 = smul.addr %s167, 4
      %s169 = smul.addr %s168, 4
      %s170 = scalar_lea.vmem %s3, %s169
      %v172 = vld [vmem:[%s165] sm:$0xff]
      %v173 = vld [vmem:[%s165 + $0x8] sm:$0xff]
      %v174 = vld [vmem:[%s165 + $0x10] sm:$0xff]
      %v175 = vld [vmem:[%s165 + $0x18] sm:$0xff]
      %v176 = vld [vmem:[%s165 + $0x20] sm:$0xff]
      %v177 = vld [vmem:[%s165 + $0x28] sm:$0xff]
      %v178 = vld [vmem:[%s165 + $0x30] sm:$0xf]
      %v179 = vld [vmem:[%s165 + $0x34] sm:$0xff]
      %v180 = vld [vmem:[%s165 + $0x3c] sm:$0xff]
      %v181 = vld [vmem:[%s165 + $0x44] sm:$0xff]
      %v182 = vld [vmem:[%s165 + $0x4c] sm:$0xff]
      %v183 = vld [vmem:[%s165 + $0x54] sm:$0xff]
      %v184 = vld [vmem:[%s165 + $0x5c] sm:$0xff]
      %v185 = vld [vmem:[%s165 + $0x64] sm:$0xf]
      %v186 = vld [vmem:[%s165 + $0x68] sm:$0xff]
      %v187 = vld [vmem:[%s165 + $0x70] sm:$0xff]
      %v188 = vld [vmem:[%s165 + $0x78] sm:$0xff]
      %v189 = vld [vmem:[%s165 + $0x80] sm:$0xff]
      %v190 = vld [vmem:[%s165 + $0x88] sm:$0xff]
      %v191 = vld [vmem:[%s165 + $0x90] sm:$0xff]
      %v192 = vld [vmem:[%s165 + $0x98] sm:$0xf]
      %v193 = vld [vmem:[%s165 + $0x9c] sm:$0xff]
      %v194 = vld [vmem:[%s165 + $0xa4] sm:$0xff]
      %v195 = vld [vmem:[%s165 + $0xac] sm:$0xff]
      %v196 = vld [vmem:[%s165 + $0xb4] sm:$0xff]
      %v197 = vld [vmem:[%s165 + $0xbc] sm:$0xff]
      %v198 = vld [vmem:[%s165 + $0xc4] sm:$0xff]
      %v199 = vld [vmem:[%s165 + $0xcc] sm:$0xf]
      %v200 = vld [vmem:[%s165 + $0xd0] sm:$0xff]
      %v201 = vld [vmem:[%s165 + $0xd8] sm:$0xff]
      %v202 = vld [vmem:[%s165 + $0xe0] sm:$0xff]
      %v203 = vld [vmem:[%s165 + $0xe8] sm:$0xff]
      %v204 = vld [vmem:[%s165 + $0xf0] sm:$0xff]
      %v205 = vld [vmem:[%s165 + $0xf8] sm:$0xff]
      %v206 = vld [vmem:[%s165 + $0x100] sm:$0xf]
      %v207 = vld [vmem:[%s165 + $0x104] sm:$0xff]
      %v208 = vld [vmem:[%s165 + $0x10c] sm:$0xff]
      %v209 = vld [vmem:[%s165 + $0x114] sm:$0xff]
      %v210 = vld [vmem:[%s165 + $0x11c] sm:$0xff]
      %v211 = vld [vmem:[%s165 + $0x124] sm:$0xff]
      %v212 = vld [vmem:[%s165 + $0x12c] sm:$0xff]
      %v213 = vld [vmem:[%s165 + $0x134] sm:$0xf]
      %v214 = vld [vmem:[%s165 + $0x138] sm:$0xff]
      %v215 = vld [vmem:[%s165 + $0x140] sm:$0xff]
      %v216 = vld [vmem:[%s165 + $0x148] sm:$0xff]
      %v217 = vld [vmem:[%s165 + $0x150] sm:$0xff]
      %v218 = vld [vmem:[%s165 + $0x158] sm:$0xff]
      %v219 = vld [vmem:[%s165 + $0x160] sm:$0xff]
      %v220 = vld [vmem:[%s165 + $0x168] sm:$0xf]
      %v221 = vld [vmem:[%s165 + $0x16c] sm:$0xff]
      %v222 = vld [vmem:[%s165 + $0x174] sm:$0xff]
      %v223 = vld [vmem:[%s165 + $0x17c] sm:$0xff]
      %v224 = vld [vmem:[%s165 + $0x184] sm:$0xff]
      %v225 = vld [vmem:[%s165 + $0x18c] sm:$0xff]
      %v226 = vld [vmem:[%s165 + $0x194] sm:$0xff]
      %v227 = vld [vmem:[%s165 + $0x19c] sm:$0xf]
      %v228 = vld [vmem:[%s165 + $0x1a0] sm:$0xff]
      %v229 = vld [vmem:[%s165 + $0x1a8] sm:$0xff]
      %v230 = vld [vmem:[%s165 + $0x1b0] sm:$0xff]
      %v231 = vld [vmem:[%s165 + $0x1b8] sm:$0xff]
      %v232 = vld [vmem:[%s165 + $0x1c0] sm:$0xff]
      %v233 = vld [vmem:[%s165 + $0x1c8] sm:$0xff]
      %v234 = vld [vmem:[%s165 + $0x1d0] sm:$0xf]
      %v235 = vld [vmem:[%s165 + $0x1d4] sm:$0xff]
      %v236 = vld [vmem:[%s165 + $0x1dc] sm:$0xff]
      %v237 = vld [vmem:[%s165 + $0x1e4] sm:$0xff]
      %v238 = vld [vmem:[%s165 + $0x1ec] sm:$0xff]
      %v239 = vld [vmem:[%s165 + $0x1f4] sm:$0xff]
      %v240 = vld [vmem:[%s165 + $0x1fc] sm:$0xff]
      %v241 = vld [vmem:[%s165 + $0x204] sm:$0xf]
      %v242 = vld [vmem:[%s165 + $0x208] sm:$0xff]
      %v243 = vld [vmem:[%s165 + $0x210] sm:$0xff]
      %v244 = vld [vmem:[%s165 + $0x218] sm:$0xff]
      %v245 = vld [vmem:[%s165 + $0x220] sm:$0xff]
      %v246 = vld [vmem:[%s165 + $0x228] sm:$0xff]
      %v247 = vld [vmem:[%s165 + $0x230] sm:$0xff]
      %v248 = vld [vmem:[%s165 + $0x238] sm:$0xf]
      %v249 = vld [vmem:[%s165 + $0x23c] sm:$0xff]
      %v250 = vld [vmem:[%s165 + $0x244] sm:$0xff]
      %v251 = vld [vmem:[%s165 + $0x24c] sm:$0xff]
      %v252 = vld [vmem:[%s165 + $0x254] sm:$0xff]
      %v253 = vld [vmem:[%s165 + $0x25c] sm:$0xff]
      %v254 = vld [vmem:[%s165 + $0x264] sm:$0xff]
      %v255 = vld [vmem:[%s165 + $0x26c] sm:$0xf]
      %v256 = vld [vmem:[%s165 + $0x270] sm:$0xff]
      %v257 = vld [vmem:[%s165 + $0x278] sm:$0xff]
      %v258 = vld [vmem:[%s165 + $0x280] sm:$0xff]
      %v259 = vld [vmem:[%s165 + $0x288] sm:$0xff]
      %v260 = vld [vmem:[%s165 + $0x290] sm:$0xff]
      %v261 = vld [vmem:[%s165 + $0x298] sm:$0xff]
      %v262 = vld [vmem:[%s165 + $0x2a0] sm:$0xf]
      %v263 = vld [vmem:[%s165 + $0x2a4] sm:$0xff]
      %v264 = vld [vmem:[%s165 + $0x2ac] sm:$0xff]
      %v265 = vld [vmem:[%s165 + $0x2b4] sm:$0xff]
      %v266 = vld [vmem:[%s165 + $0x2bc] sm:$0xff]
      %v267 = vld [vmem:[%s165 + $0x2c4] sm:$0xff]
      %v268 = vld [vmem:[%s165 + $0x2cc] sm:$0xff]
      %v269 = vld [vmem:[%s165 + $0x2d4] sm:$0xf]
      %v270 = vld [vmem:[%s165 + $0x2d8] sm:$0xff]
      %v271 = vld [vmem:[%s165 + $0x2e0] sm:$0xff]
      %v272 = vld [vmem:[%s165 + $0x2e8] sm:$0xff]
      %v273 = vld [vmem:[%s165 + $0x2f0] sm:$0xff]
      %v274 = vld [vmem:[%s165 + $0x2f8] sm:$0xff]
      %v275 = vld [vmem:[%s165 + $0x300] sm:$0xff]
      %v276 = vld [vmem:[%s165 + $0x308] sm:$0xf]
      %v277 = vld [vmem:[%s165 + $0x30c] sm:$0xff]
      %v278 = vld [vmem:[%s165 + $0x314] sm:$0xff]
      %v279 = vld [vmem:[%s165 + $0x31c] sm:$0xff]
      %v280 = vld [vmem:[%s165 + $0x324] sm:$0xff]
      %v281 = vld [vmem:[%s165 + $0x32c] sm:$0xff]
      %v282 = vld [vmem:[%s165 + $0x334] sm:$0xff]
      %v283 = vld [vmem:[%s165 + $0x33c] sm:$0xf]
      %v284 = vld [vmem:[%s1] sm:$0xf]
      %v285 = vld [vmem:[%s1 + $0x4] sm:$0xf]
      %v286 = vld [vmem:[%s1 + $0x8] sm:$0xf]
      %v287 = vld [vmem:[%s1 + $0xc] sm:$0xf]
      %v288 = vld [vmem:[%s1 + $0x10] sm:$0xf]
      %v289 = vld [vmem:[%s1 + $0x14] sm:$0xf]
      %v290 = vld [vmem:[%s1 + $0x18] sm:$0xf]
      %v291 = vld [vmem:[%s1 + $0x1c] sm:$0xf]
      %v292 = vld [vmem:[%s1 + $0x20] sm:$0xf]
      %v293 = vld [vmem:[%s1 + $0x24] sm:$0xf]
      %v294 = vld [vmem:[%s1 + $0x28] sm:$0xf]
      %v295 = vld [vmem:[%s1 + $0x2c] sm:$0xf]
      %v296 = vld [vmem:[%s1 + $0x30] sm:$0xf]
      %v297 = vld [vmem:[%s1 + $0x34] sm:$0xf]
      %v298 = vld [vmem:[%s1 + $0x38] sm:$0xf]
      %v299 = vld [vmem:[%s1 + $0x3c] sm:$0xf]
      %v300 = vld [vmem:[%s1 + $0x40] sm:$0xf]
      %v301 = vld [vmem:[%s1 + $0x44] sm:$0xf]
      %v302 = vld [vmem:[%s1 + $0x48] sm:$0xf]
      %v303 = vld [vmem:[%s1 + $0x4c] sm:$0xf]
      %v304 = vld [vmem:[%s1 + $0x50] sm:$0xf]
      %v305 = vld [vmem:[%s1 + $0x54] sm:$0xf]
      %v306 = vld [vmem:[%s1 + $0x58] sm:$0xf]
      %v307 = vld [vmem:[%s1 + $0x5c] sm:$0xf]
      %v308 = vld [vmem:[%s1 + $0x60] sm:$0xf]
      %v309 = vld [vmem:[%s1 + $0x64] sm:$0xf]
      %v310 = vld [vmem:[%s1 + $0x68] sm:$0xf]
      %v311 = vld [vmem:[%s1 + $0x6c] sm:$0xf]
      %v312 = vld [vmem:[%s1 + $0x70] sm:$0xf]
      %v313 = vld [vmem:[%s1 + $0x74] sm:$0xf]
      %v314 = vld [vmem:[%s1 + $0x78] sm:$0xf]
      %v315 = vld [vmem:[%s1 + $0x7c] sm:$0xf]
      %v316 = vld [vmem:[%s1 + $0x80] sm:$0xf]
      %v317 = vld [vmem:[%s1 + $0x84] sm:$0xf]
      %v318 = vld [vmem:[%s1 + $0x88] sm:$0xf]
      %v319 = vld [vmem:[%s1 + $0x8c] sm:$0xf]
      %v320 = vld [vmem:[%s1 + $0x90] sm:$0xf]
      %v321 = vld [vmem:[%s1 + $0x94] sm:$0xf]
      %v322 = vld [vmem:[%s1 + $0x98] sm:$0xf]
      %v323 = vld [vmem:[%s1 + $0x9c] sm:$0xf]
      %v324 = vld [vmem:[%s1 + $0xa0] sm:$0xf]
      %v325 = vld [vmem:[%s1 + $0xa4] sm:$0xf]
      %v326 = vld [vmem:[%s1 + $0xa8] sm:$0xf]
      %v327 = vld [vmem:[%s1 + $0xac] sm:$0xf]
      %v328 = vld [vmem:[%s1 + $0xb0] sm:$0xf]
      %v329 = vld [vmem:[%s1 + $0xb4] sm:$0xf]
      %v330 = vld [vmem:[%s1 + $0xb8] sm:$0xf]
      %v331 = vld [vmem:[%s1 + $0xbc] sm:$0xf]
      %v332 = vld [vmem:[%s1 + $0xc0] sm:$0xf]
      %v333 = vld [vmem:[%s1 + $0xc4] sm:$0xf]
      %v334 = vld [vmem:[%s1 + $0xc8] sm:$0xf]
      %v335 = vld [vmem:[%s1 + $0xcc] sm:$0xf]
      %v336 = vld [vmem:[%s1 + $0xd0] sm:$0xf]
      %v337 = vld [vmem:[%s1 + $0xd4] sm:$0xf]
      %v338 = vld [vmem:[%s1 + $0xd8] sm:$0xf]
      %v339 = vld [vmem:[%s1 + $0xdc] sm:$0xf]
      %v340 = vld [vmem:[%s1 + $0xe0] sm:$0xf]
      %v341 = vld [vmem:[%s1 + $0xe4] sm:$0xf]
      %v342 = vld [vmem:[%s1 + $0xe8] sm:$0xf]
      %v343 = vld [vmem:[%s1 + $0xec] sm:$0xf]
      %v344 = vld [vmem:[%s1 + $0xf0] sm:$0xf]
      %v345 = vld [vmem:[%s1 + $0xf4] sm:$0xf]
      %v346 = vld [vmem:[%s1 + $0xf8] sm:$0xf]
      %v347 = vld [vmem:[%s1 + $0xfc] sm:$0xf]
      %v348 = vld [vmem:[%s1 + $0x100] sm:$0xf]
      %v349 = vld [vmem:[%s1 + $0x104] sm:$0xf]
      %v350 = vld [vmem:[%s1 + $0x108] sm:$0xf]
      %v351 = vld [vmem:[%s1 + $0x10c] sm:$0xf]
      %v352 = vld [vmem:[%s1 + $0x110] sm:$0xf]
      %v353 = vld [vmem:[%s1 + $0x114] sm:$0xf]
      %v354 = vld [vmem:[%s1 + $0x118] sm:$0xf]
      %v355 = vld [vmem:[%s1 + $0x11c] sm:$0xf]
      %v356 = vld [vmem:[%s1 + $0x120] sm:$0xf]
      %v357 = vld [vmem:[%s1 + $0x124] sm:$0xf]
      %v358 = vld [vmem:[%s1 + $0x128] sm:$0xf]
      %v359 = vld [vmem:[%s1 + $0x12c] sm:$0xf]
      %v360 = vld [vmem:[%s1 + $0x130] sm:$0xf]
      %v361 = vld [vmem:[%s1 + $0x134] sm:$0xf]
      %v362 = vld [vmem:[%s1 + $0x138] sm:$0xf]
      %v363 = vld [vmem:[%s1 + $0x13c] sm:$0xf]
      %v364 = vld [vmem:[%s1 + $0x140] sm:$0xf]
      %v365 = vld [vmem:[%s1 + $0x144] sm:$0xf]
      %v366 = vld [vmem:[%s1 + $0x148] sm:$0xf]
      %v367 = vld [vmem:[%s1 + $0x14c] sm:$0xf]
      %v368 = vld [vmem:[%s1 + $0x150] sm:$0xf]
      %v369 = vld [vmem:[%s1 + $0x154] sm:$0xf]
      %v370 = vld [vmem:[%s1 + $0x158] sm:$0xf]
      %v371 = vld [vmem:[%s1 + $0x15c] sm:$0xf]
      %v372 = vld [vmem:[%s1 + $0x160] sm:$0xf]
      %v373 = vld [vmem:[%s1 + $0x164] sm:$0xf]
      %v374 = vld [vmem:[%s1 + $0x168] sm:$0xf]
      %v375 = vld [vmem:[%s1 + $0x16c] sm:$0xf]
      %v376 = vld [vmem:[%s1 + $0x170] sm:$0xf]
      %v377 = vld [vmem:[%s1 + $0x174] sm:$0xf]
      %v378 = vld [vmem:[%s1 + $0x178] sm:$0xf]
      %v379 = vld [vmem:[%s1 + $0x17c] sm:$0xf]
      %v380 = vld [vmem:[%s1 + $0x180] sm:$0xf]
      %v381 = vld [vmem:[%s1 + $0x184] sm:$0xf]
      %v382 = vld [vmem:[%s1 + $0x188] sm:$0xf]
      %v383 = vld [vmem:[%s1 + $0x18c] sm:$0xf]
      %v384 = vld [vmem:[%s1 + $0x190] sm:$0xf]
      %v385 = vld [vmem:[%s1 + $0x194] sm:$0xf]
      %v386 = vld [vmem:[%s1 + $0x198] sm:$0xf]
      %v387 = vld [vmem:[%s1 + $0x19c] sm:$0xf]
      %v388 = vld [vmem:[%s1 + $0x1a0] sm:$0xf]
      %v389 = vld [vmem:[%s1 + $0x1a4] sm:$0xf]
      %v390 = vld [vmem:[%s1 + $0x1a8] sm:$0xf]
      %v391 = vld [vmem:[%s1 + $0x1ac] sm:$0xf]
      %v392 = vld [vmem:[%s1 + $0x1b0] sm:$0xf]
      %v393 = vld [vmem:[%s1 + $0x1b4] sm:$0xf]
      %v394 = vld [vmem:[%s1 + $0x1b8] sm:$0xf]
      %v395 = vld [vmem:[%s1 + $0x1bc] sm:$0xf]
      %v396 = vld [vmem:[%s1 + $0x1c0] sm:$0xf]
      %v397 = vld [vmem:[%s1 + $0x1c4] sm:$0xf]
      %v398 = vld [vmem:[%s1 + $0x1c8] sm:$0xf]
      %v399 = vld [vmem:[%s1 + $0x1cc] sm:$0xf]
      %v400 = vld [vmem:[%s1 + $0x1d0] sm:$0xf]
      %v401 = vld [vmem:[%s1 + $0x1d4] sm:$0xf]
      %v402 = vld [vmem:[%s1 + $0x1d8] sm:$0xf]
      %v403 = vld [vmem:[%s1 + $0x1dc] sm:$0xf]
      %v404 = vld [vmem:[%s1 + $0x1e0] sm:$0xf]
      %v405 = vld [vmem:[%s1 + $0x1e4] sm:$0xf]
      %v406 = vld [vmem:[%s1 + $0x1e8] sm:$0xf]
      %v407 = vld [vmem:[%s1 + $0x1ec] sm:$0xf]
      %v408 = vld [vmem:[%s1 + $0x1f0] sm:$0xf]
      %v409 = vld [vmem:[%s1 + $0x1f4] sm:$0xf]
      %v410 = vld [vmem:[%s1 + $0x1f8] sm:$0xf]
      %v411 = vld [vmem:[%s1 + $0x1fc] sm:$0xf]
      %v412 = vld [vmem:[%s1 + $0x200] sm:$0xf]
      %v413 = vld [vmem:[%s1 + $0x204] sm:$0xf]
      %v414 = vld [vmem:[%s1 + $0x208] sm:$0xf]
      %v415 = vld [vmem:[%s1 + $0x20c] sm:$0xf]
      %v416 = vld [vmem:[%s1 + $0x210] sm:$0xf]
      %v417 = vld [vmem:[%s1 + $0x214] sm:$0xf]
      %v418 = vld [vmem:[%s1 + $0x218] sm:$0xf]
      %v419 = vld [vmem:[%s1 + $0x21c] sm:$0xf]
      %v420 = vld [vmem:[%s1 + $0x220] sm:$0xf]
      %v421 = vld [vmem:[%s1 + $0x224] sm:$0xf]
      %v422 = vld [vmem:[%s1 + $0x228] sm:$0xf]
      %v423 = vld [vmem:[%s1 + $0x22c] sm:$0xf]
      %v424 = vld [vmem:[%s1 + $0x230] sm:$0xf]
      %v425 = vld [vmem:[%s1 + $0x234] sm:$0xf]
      %v426 = vld [vmem:[%s1 + $0x238] sm:$0xf]
      %v427 = vld [vmem:[%s1 + $0x23c] sm:$0xf]
      %v428 = vld [vmem:[%s1 + $0x240] sm:$0xf]
      %v429 = vld [vmem:[%s1 + $0x244] sm:$0xf]
      %v430 = vld [vmem:[%s1 + $0x248] sm:$0xf]
      %v431 = vld [vmem:[%s1 + $0x24c] sm:$0xf]
      %v432 = vld [vmem:[%s1 + $0x250] sm:$0xf]
      %v433 = vld [vmem:[%s1 + $0x254] sm:$0xf]
      %v434 = vld [vmem:[%s1 + $0x258] sm:$0xf]
      %v435 = vld [vmem:[%s1 + $0x25c] sm:$0xf]
      %v436 = vld [vmem:[%s1 + $0x260] sm:$0xf]
      %v437 = vld [vmem:[%s1 + $0x264] sm:$0xf]
      %v438 = vld [vmem:[%s1 + $0x268] sm:$0xf]
      %v439 = vld [vmem:[%s1 + $0x26c] sm:$0xf]
      %v440 = vld [vmem:[%s1 + $0x270] sm:$0xf]
      %v441 = vld [vmem:[%s1 + $0x274] sm:$0xf]
      %v442 = vld [vmem:[%s1 + $0x278] sm:$0xf]
      %v443 = vld [vmem:[%s1 + $0x27c] sm:$0xf]
      %v444 = vld [vmem:[%s1 + $0x280] sm:$0xf]
      %v445 = vld [vmem:[%s1 + $0x284] sm:$0xf]
      %v446 = vld [vmem:[%s1 + $0x288] sm:$0xf]
      %v447 = vld [vmem:[%s1 + $0x28c] sm:$0xf]
      %v448 = vld [vmem:[%s1 + $0x290] sm:$0xf]
      %v449 = vld [vmem:[%s1 + $0x294] sm:$0xf]
      %v450 = vld [vmem:[%s1 + $0x298] sm:$0xf]
      %v451 = vld [vmem:[%s1 + $0x29c] sm:$0xf]
      %v452 = vld [vmem:[%s1 + $0x2a0] sm:$0xf]
      %v453 = vld [vmem:[%s1 + $0x2a4] sm:$0xf]
      %v454 = vld [vmem:[%s1 + $0x2a8] sm:$0xf]
      %v455 = vld [vmem:[%s1 + $0x2ac] sm:$0xf]
      %v456 = vld [vmem:[%s1 + $0x2b0] sm:$0xf]
      %v457 = vld [vmem:[%s1 + $0x2b4] sm:$0xf]
      %v458 = vld [vmem:[%s1 + $0x2b8] sm:$0xf]
      %v459 = vld [vmem:[%s1 + $0x2bc] sm:$0xf]
      %v460 = vld [vmem:[%s1 + $0x2c0] sm:$0xf]
      %v461 = vld [vmem:[%s1 + $0x2c4] sm:$0xf]
      %v462 = vld [vmem:[%s1 + $0x2c8] sm:$0xf]
      %v463 = vld [vmem:[%s1 + $0x2cc] sm:$0xf]
      %v464 = vld [vmem:[%s1 + $0x2d0] sm:$0xf]
      %v465 = vld [vmem:[%s1 + $0x2d4] sm:$0xf]
      %v466 = vld [vmem:[%s1 + $0x2d8] sm:$0xf]
      %v467 = vld [vmem:[%s1 + $0x2dc] sm:$0xf]
      %v468 = vld [vmem:[%s1 + $0x2e0] sm:$0xf]
      %v469 = vld [vmem:[%s1 + $0x2e4] sm:$0xf]
      %v470 = vld [vmem:[%s1 + $0x2e8] sm:$0xf]
      %v471 = vld [vmem:[%s1 + $0x2ec] sm:$0xf]
      %v472 = vld [vmem:[%s1 + $0x2f0] sm:$0xf]
      %v473 = vld [vmem:[%s1 + $0x2f4] sm:$0xf]
      %v474 = vld [vmem:[%s1 + $0x2f8] sm:$0xf]
      %v475 = vld [vmem:[%s1 + $0x2fc] sm:$0xf]
      %v476 = vld [vmem:[%s1 + $0x300] sm:$0xf]
      %v477 = vld [vmem:[%s1 + $0x304] sm:$0xf]
      %v478 = vld [vmem:[%s1 + $0x308] sm:$0xf]
      %v479 = vld [vmem:[%s1 + $0x30c] sm:$0xf]
      %v480 = vld [vmem:[%s1 + $0x310] sm:$0xf]
      %v481 = vld [vmem:[%s1 + $0x314] sm:$0xf]
      %v482 = vld [vmem:[%s1 + $0x318] sm:$0xf]
      %v483 = vld [vmem:[%s1 + $0x31c] sm:$0xf]
      %v596 = vunpack.c.l.b16 %v172
      %v597 = vunpack.c.h.b16 %v172
      %v598 = vunpack.c.l.b16 %v173
      %v599 = vunpack.c.h.b16 %v173
      %v600 = vunpack.c.l.b16 %v174
      %v601 = vunpack.c.h.b16 %v174
      %v602 = vunpack.c.l.b16 %v175
      %v603 = vunpack.c.h.b16 %v175
      %v604 = vunpack.c.l.b16 %v176
      %v605 = vunpack.c.h.b16 %v176
      %v606 = vunpack.c.l.b16 %v177
      %v607 = vunpack.c.h.b16 %v177
      %v608 = vunpack.c.l.b16 %v178
      %v609 = vunpack.c.l.b16 %v179
      %v610 = vunpack.c.h.b16 %v179
      %v611 = vunpack.c.l.b16 %v180
      %v612 = vunpack.c.h.b16 %v180
      %v613 = vunpack.c.l.b16 %v181
      %v614 = vunpack.c.h.b16 %v181
      %v615 = vunpack.c.l.b16 %v182
      %v616 = vunpack.c.h.b16 %v182
      %v617 = vunpack.c.l.b16 %v183
      %v618 = vunpack.c.h.b16 %v183
      %v619 = vunpack.c.l.b16 %v184
      %v620 = vunpack.c.h.b16 %v184
      %v621 = vunpack.c.l.b16 %v185
      %v622 = vunpack.c.l.b16 %v186
      %v623 = vunpack.c.h.b16 %v186
      %v624 = vunpack.c.l.b16 %v187
      %v625 = vunpack.c.h.b16 %v187
      %v626 = vunpack.c.l.b16 %v188
      %v627 = vunpack.c.h.b16 %v188
      %v628 = vunpack.c.l.b16 %v189
      %v629 = vunpack.c.h.b16 %v189
      %v630 = vunpack.c.l.b16 %v190
      %v631 = vunpack.c.h.b16 %v190
      %v632 = vunpack.c.l.b16 %v191
      %v633 = vunpack.c.h.b16 %v191
      %v634 = vunpack.c.l.b16 %v192
      %v635 = vunpack.c.l.b16 %v193
      %v636 = vunpack.c.h.b16 %v193
      %v637 = vunpack.c.l.b16 %v194
      %v638 = vunpack.c.h.b16 %v194
      %v639 = vunpack.c.l.b16 %v195
      %v640 = vunpack.c.h.b16 %v195
      %v641 = vunpack.c.l.b16 %v196
      %v642 = vunpack.c.h.b16 %v196
      %v643 = vunpack.c.l.b16 %v197
      %v644 = vunpack.c.h.b16 %v197
      %v645 = vunpack.c.l.b16 %v198
      %v646 = vunpack.c.h.b16 %v198
      %v647 = vunpack.c.l.b16 %v199
      %v648 = vunpack.c.l.b16 %v200
      %v649 = vunpack.c.h.b16 %v200
      %v650 = vunpack.c.l.b16 %v201
      %v651 = vunpack.c.h.b16 %v201
      %v652 = vunpack.c.l.b16 %v202
      %v653 = vunpack.c.h.b16 %v202
      %v654 = vunpack.c.l.b16 %v203
      %v655 = vunpack.c.h.b16 %v203
      %v656 = vunpack.c.l.b16 %v204
      %v657 = vunpack.c.h.b16 %v204
      %v658 = vunpack.c.l.b16 %v205
      %v659 = vunpack.c.h.b16 %v205
      %v660 = vunpack.c.l.b16 %v206
      %v661 = vunpack.c.l.b16 %v207
      %v662 = vunpack.c.h.b16 %v207
      %v663 = vunpack.c.l.b16 %v208
      %v664 = vunpack.c.h.b16 %v208
      %v665 = vunpack.c.l.b16 %v209
      %v666 = vunpack.c.h.b16 %v209
      %v667 = vunpack.c.l.b16 %v210
      %v668 = vunpack.c.h.b16 %v210
      %v669 = vunpack.c.l.b16 %v211
      %v670 = vunpack.c.h.b16 %v211
      %v671 = vunpack.c.l.b16 %v212
      %v672 = vunpack.c.h.b16 %v212
      %v673 = vunpack.c.l.b16 %v213
      %v674 = vunpack.c.l.b16 %v214
      %v675 = vunpack.c.h.b16 %v214
      %v676 = vunpack.c.l.b16 %v215
      %v677 = vunpack.c.h.b16 %v215
      %v678 = vunpack.c.l.b16 %v216
      %v679 = vunpack.c.h.b16 %v216
      %v680 = vunpack.c.l.b16 %v217
      %v681 = vunpack.c.h.b16 %v217
      %v682 = vunpack.c.l.b16 %v218
      %v683 = vunpack.c.h.b16 %v218
      %v684 = vunpack.c.l.b16 %v219
      %v685 = vunpack.c.h.b16 %v219
      %v686 = vunpack.c.l.b16 %v220
      %v687 = vunpack.c.l.b16 %v221
      %v688 = vunpack.c.h.b16 %v221
      %v689 = vunpack.c.l.b16 %v222
      %v690 = vunpack.c.h.b16 %v222
      %v691 = vunpack.c.l.b16 %v223
      %v692 = vunpack.c.h.b16 %v223
      %v693 = vunpack.c.l.b16 %v224
      %v694 = vunpack.c.h.b16 %v224
      %v695 = vunpack.c.l.b16 %v225
      %v696 = vunpack.c.h.b16 %v225
      %v697 = vunpack.c.l.b16 %v226
      %v698 = vunpack.c.h.b16 %v226
      %v699 = vunpack.c.l.b16 %v227
      %v700 = vunpack.c.l.b16 %v228
      %v701 = vunpack.c.h.b16 %v228
      %v702 = vunpack.c.l.b16 %v229
      %v703 = vunpack.c.h.b16 %v229
      %v704 = vunpack.c.l.b16 %v230
      %v705 = vunpack.c.h.b16 %v230
      %v706 = vunpack.c.l.b16 %v231
      %v707 = vunpack.c.h.b16 %v231
      %v708 = vunpack.c.l.b16 %v232
      %v709 = vunpack.c.h.b16 %v232
      %v710 = vunpack.c.l.b16 %v233
      %v711 = vunpack.c.h.b16 %v233
      %v712 = vunpack.c.l.b16 %v234
      %v713 = vunpack.c.l.b16 %v235
      %v714 = vunpack.c.h.b16 %v235
      %v715 = vunpack.c.l.b16 %v236
      %v716 = vunpack.c.h.b16 %v236
      %v717 = vunpack.c.l.b16 %v237
      %v718 = vunpack.c.h.b16 %v237
      %v719 = vunpack.c.l.b16 %v238
      %v720 = vunpack.c.h.b16 %v238
      %v721 = vunpack.c.l.b16 %v239
      %v722 = vunpack.c.h.b16 %v239
      %v723 = vunpack.c.l.b16 %v240
      %v724 = vunpack.c.h.b16 %v240
      %v725 = vunpack.c.l.b16 %v241
      %v726 = vunpack.c.l.b16 %v242
      %v727 = vunpack.c.h.b16 %v242
      %v728 = vunpack.c.l.b16 %v243
      %v729 = vunpack.c.h.b16 %v243
      %v730 = vunpack.c.l.b16 %v244
      %v731 = vunpack.c.h.b16 %v244
      %v732 = vunpack.c.l.b16 %v245
      %v733 = vunpack.c.h.b16 %v245
      %v734 = vunpack.c.l.b16 %v246
      %v735 = vunpack.c.h.b16 %v246
      %v736 = vunpack.c.l.b16 %v247
      %v737 = vunpack.c.h.b16 %v247
      %v738 = vunpack.c.l.b16 %v248
      %v739 = vunpack.c.l.b16 %v249
      %v740 = vunpack.c.h.b16 %v249
      %v741 = vunpack.c.l.b16 %v250
      %v742 = vunpack.c.h.b16 %v250
      %v743 = vunpack.c.l.b16 %v251
      %v744 = vunpack.c.h.b16 %v251
      %v745 = vunpack.c.l.b16 %v252
      %v746 = vunpack.c.h.b16 %v252
      %v747 = vunpack.c.l.b16 %v253
      %v748 = vunpack.c.h.b16 %v253
      %v749 = vunpack.c.l.b16 %v254
      %v750 = vunpack.c.h.b16 %v254
      %v751 = vunpack.c.l.b16 %v255
      %v752 = vunpack.c.l.b16 %v256
      %v753 = vunpack.c.h.b16 %v256
      %v754 = vunpack.c.l.b16 %v257
      %v755 = vunpack.c.h.b16 %v257
      %v756 = vunpack.c.l.b16 %v258
      %v757 = vunpack.c.h.b16 %v258
      %v758 = vunpack.c.l.b16 %v259
      %v759 = vunpack.c.h.b16 %v259
      %v760 = vunpack.c.l.b16 %v260
      %v761 = vunpack.c.h.b16 %v260
      %v762 = vunpack.c.l.b16 %v261
      %v763 = vunpack.c.h.b16 %v261
      %v764 = vunpack.c.l.b16 %v262
      %v765 = vunpack.c.l.b16 %v263
      %v766 = vunpack.c.h.b16 %v263
      %v767 = vunpack.c.l.b16 %v264
      %v768 = vunpack.c.h.b16 %v264
      %v769 = vunpack.c.l.b16 %v265
      %v770 = vunpack.c.h.b16 %v265
      %v771 = vunpack.c.l.b16 %v266
      %v772 = vunpack.c.h.b16 %v266
      %v773 = vunpack.c.l.b16 %v267
      %v774 = vunpack.c.h.b16 %v267
      %v775 = vunpack.c.l.b16 %v268
      %v776 = vunpack.c.h.b16 %v268
      %v777 = vunpack.c.l.b16 %v269
      %v778 = vunpack.c.l.b16 %v270
      %v779 = vunpack.c.h.b16 %v270
      %v780 = vunpack.c.l.b16 %v271
      %v781 = vunpack.c.h.b16 %v271
      %v782 = vunpack.c.l.b16 %v272
      %v783 = vunpack.c.h.b16 %v272
      %v784 = vunpack.c.l.b16 %v273
      %v785 = vunpack.c.h.b16 %v273
      %v786 = vunpack.c.l.b16 %v274
      %v787 = vunpack.c.h.b16 %v274
      %v788 = vunpack.c.l.b16 %v275
      %v789 = vunpack.c.h.b16 %v275
      %v790 = vunpack.c.l.b16 %v276
      %v791 = vunpack.c.l.b16 %v277
      %v792 = vunpack.c.h.b16 %v277
      %v793 = vunpack.c.l.b16 %v278
      %v794 = vunpack.c.h.b16 %v278
      %v795 = vunpack.c.l.b16 %v279
      %v796 = vunpack.c.h.b16 %v279
      %v797 = vunpack.c.l.b16 %v280
      %v798 = vunpack.c.h.b16 %v280
      %v799 = vunpack.c.l.b16 %v281
      %v800 = vunpack.c.h.b16 %v281
      %v801 = vunpack.c.l.b16 %v282
      %v802 = vunpack.c.h.b16 %v282
      %v803 = vunpack.c.l.b16 %v283
      %v804 = vpack.c.b16 %v609, %v596
      %v805 = vpack.c.b16 %v610, %v597
      %v806 = vpack.c.b16 %v611, %v598
      %v807 = vpack.c.b16 %v612, %v599
      %v808 = vpack.c.b16 %v613, %v600
      %v809 = vpack.c.b16 %v614, %v601
      %v810 = vpack.c.b16 %v615, %v602
      %v811 = vpack.c.b16 %v616, %v603
      %v812 = vpack.c.b16 %v617, %v604
      %v813 = vpack.c.b16 %v618, %v605
      %v814 = vpack.c.b16 %v619, %v606
      %v815 = vpack.c.b16 %v620, %v607
      %v816 = vpack.c.b16 %v621, %v608
      %v817 = vpack.c.b16 %v635, %v622
      %v818 = vpack.c.b16 %v636, %v623
      %v819 = vpack.c.b16 %v637, %v624
      %v820 = vpack.c.b16 %v638, %v625
      %v821 = vpack.c.b16 %v639, %v626
      %v822 = vpack.c.b16 %v640, %v627
      %v823 = vpack.c.b16 %v641, %v628
      %v824 = vpack.c.b16 %v642, %v629
      %v825 = vpack.c.b16 %v643, %v630
      %v826 = vpack.c.b16 %v644, %v631
      %v827 = vpack.c.b16 %v645, %v632
      %v828 = vpack.c.b16 %v646, %v633
      %v829 = vpack.c.b16 %v647, %v634
      %v830 = vpack.c.b16 %v661, %v648
      %v831 = vpack.c.b16 %v662, %v649
      %v832 = vpack.c.b16 %v663, %v650
      %v833 = vpack.c.b16 %v664, %v651
      %v834 = vpack.c.b16 %v665, %v652
      %v835 = vpack.c.b16 %v666, %v653
      %v836 = vpack.c.b16 %v667, %v654
      %v837 = vpack.c.b16 %v668, %v655
      %v838 = vpack.c.b16 %v669, %v656
      %v839 = vpack.c.b16 %v670, %v657
      %v840 = vpack.c.b16 %v671, %v658
      %v841 = vpack.c.b16 %v672, %v659
      %v842 = vpack.c.b16 %v673, %v660
      %v843 = vpack.c.b16 %v687, %v674
      %v844 = vpack.c.b16 %v688, %v675
      %v845 = vpack.c.b16 %v689, %v676
      %v846 = vpack.c.b16 %v690, %v677
      %v847 = vpack.c.b16 %v691, %v678
      %v848 = vpack.c.b16 %v692, %v679
      %v849 = vpack.c.b16 %v693, %v680
      %v850 = vpack.c.b16 %v694, %v681
      %v851 = vpack.c.b16 %v695, %v682
      %v852 = vpack.c.b16 %v696, %v683
      %v853 = vpack.c.b16 %v697, %v684
      %v854 = vpack.c.b16 %v698, %v685
      %v855 = vpack.c.b16 %v699, %v686
      %v856 = vpack.c.b16 %v713, %v700
      %v857 = vpack.c.b16 %v714, %v701
      %v858 = vpack.c.b16 %v715, %v702
      %v859 = vpack.c.b16 %v716, %v703
      %v860 = vpack.c.b16 %v717, %v704
      %v861 = vpack.c.b16 %v718, %v705
      %v862 = vpack.c.b16 %v719, %v706
      %v863 = vpack.c.b16 %v720, %v707
      %v864 = vpack.c.b16 %v721, %v708
      %v865 = vpack.c.b16 %v722, %v709
      %v866 = vpack.c.b16 %v723, %v710
      %v867 = vpack.c.b16 %v724, %v711
      %v868 = vpack.c.b16 %v725, %v712
      %v869 = vpack.c.b16 %v739, %v726
      %v870 = vpack.c.b16 %v740, %v727
      %v871 = vpack.c.b16 %v741, %v728
      %v872 = vpack.c.b16 %v742, %v729
      %v873 = vpack.c.b16 %v743, %v730
      %v874 = vpack.c.b16 %v744, %v731
      %v875 = vpack.c.b16 %v745, %v732
      %v876 = vpack.c.b16 %v746, %v733
      %v877 = vpack.c.b16 %v747, %v734
      %v878 = vpack.c.b16 %v748, %v735
      %v879 = vpack.c.b16 %v749, %v736
      %v880 = vpack.c.b16 %v750, %v737
      %v881 = vpack.c.b16 %v751, %v738
      %v882 = vpack.c.b16 %v765, %v752
      %v883 = vpack.c.b16 %v766, %v753
      %v884 = vpack.c.b16 %v767, %v754
      %v885 = vpack.c.b16 %v768, %v755
      %v886 = vpack.c.b16 %v769, %v756
      %v887 = vpack.c.b16 %v770, %v757
      %v888 = vpack.c.b16 %v771, %v758
      %v889 = vpack.c.b16 %v772, %v759
      %v890 = vpack.c.b16 %v773, %v760
      %v891 = vpack.c.b16 %v774, %v761
      %v892 = vpack.c.b16 %v775, %v762
      %v893 = vpack.c.b16 %v776, %v763
      %v894 = vpack.c.b16 %v777, %v764
      %v895 = vpack.c.b16 %v791, %v778
      %v896 = vpack.c.b16 %v792, %v779
      %v897 = vpack.c.b16 %v793, %v780
      %v898 = vpack.c.b16 %v794, %v781
      %v899 = vpack.c.b16 %v795, %v782
      %v900 = vpack.c.b16 %v796, %v783
      %v901 = vpack.c.b16 %v797, %v784
      %v902 = vpack.c.b16 %v798, %v785
      %v903 = vpack.c.b16 %v799, %v786
      %v904 = vpack.c.b16 %v800, %v787
      %v905 = vpack.c.b16 %v801, %v788
      %v906 = vpack.c.b16 %v802, %v789
      %v907 = vpack.c.b16 %v803, %v790
      %v1204 = vunpack.c.l.b16 %v284
      %v1205 = vunpack.c.l.b16 %v285
      %v1206 = vunpack.c.l.b16 %v286
      %v1207 = vunpack.c.l.b16 %v287
      %v1208 = vunpack.c.l.b16 %v288
      %v1209 = vunpack.c.l.b16 %v289
      %v1210 = vunpack.c.l.b16 %v290
      %v1211 = vunpack.c.l.b16 %v291
      %v1212 = vunpack.c.l.b16 %v292
      %v1213 = vunpack.c.l.b16 %v293
      %v1214 = vunpack.c.l.b16 %v294
      %v1215 = vunpack.c.l.b16 %v295
      %v1216 = vunpack.c.l.b16 %v296
      %v1217 = vunpack.c.l.b16 %v297
      %v1218 = vunpack.c.l.b16 %v298
      %v1219 = vunpack.c.l.b16 %v299
      %v1220 = vunpack.c.l.b16 %v300
      %v1221 = vunpack.c.l.b16 %v301
      %v1222 = vunpack.c.l.b16 %v302
      %v1223 = vunpack.c.l.b16 %v303
      %v1224 = vunpack.c.l.b16 %v304
      %v1225 = vunpack.c.l.b16 %v305
      %v1226 = vunpack.c.l.b16 %v306
      %v1227 = vunpack.c.l.b16 %v307
      %v1228 = vunpack.c.l.b16 %v308
      %v1229 = vunpack.c.l.b16 %v309
      %v1230 = vunpack.c.l.b16 %v310
      %v1231 = vunpack.c.l.b16 %v311
      %v1232 = vunpack.c.l.b16 %v312
      %v1233 = vunpack.c.l.b16 %v313
      %v1234 = vunpack.c.l.b16 %v314
      %v1235 = vunpack.c.l.b16 %v315
      %v1236 = vunpack.c.l.b16 %v316
      %v1237 = vunpack.c.l.b16 %v317
      %v1238 = vunpack.c.l.b16 %v318
      %v1239 = vunpack.c.l.b16 %v319
      %v1240 = vunpack.c.l.b16 %v320
      %v1241 = vunpack.c.l.b16 %v321
      %v1242 = vunpack.c.l.b16 %v322
      %v1243 = vunpack.c.l.b16 %v323
      %v1244 = vunpack.c.l.b16 %v324
      %v1245 = vunpack.c.l.b16 %v325
      %v1246 = vunpack.c.l.b16 %v326
      %v1247 = vunpack.c.l.b16 %v327
      %v1248 = vunpack.c.l.b16 %v328
      %v1249 = vunpack.c.l.b16 %v329
      %v1250 = vunpack.c.l.b16 %v330
      %v1251 = vunpack.c.l.b16 %v331
      %v1252 = vunpack.c.l.b16 %v332
      %v1253 = vunpack.c.l.b16 %v333
      %v1254 = vunpack.c.l.b16 %v334
      %v1255 = vunpack.c.l.b16 %v335
      %v1256 = vunpack.c.l.b16 %v336
      %v1257 = vunpack.c.l.b16 %v337
      %v1258 = vunpack.c.l.b16 %v338
      %v1259 = vunpack.c.l.b16 %v339
      %v1260 = vunpack.c.l.b16 %v340
      %v1261 = vunpack.c.l.b16 %v341
      %v1262 = vunpack.c.l.b16 %v342
      %v1263 = vunpack.c.l.b16 %v343
      %v1264 = vunpack.c.l.b16 %v344
      %v1265 = vunpack.c.l.b16 %v345
      %v1266 = vunpack.c.l.b16 %v346
      %v1267 = vunpack.c.l.b16 %v347
      %v1268 = vunpack.c.l.b16 %v348
      %v1269 = vunpack.c.l.b16 %v349
      %v1270 = vunpack.c.l.b16 %v350
      %v1271 = vunpack.c.l.b16 %v351
      %v1272 = vunpack.c.l.b16 %v352
      %v1273 = vunpack.c.l.b16 %v353
      %v1274 = vunpack.c.l.b16 %v354
      %v1275 = vunpack.c.l.b16 %v355
      %v1276 = vunpack.c.l.b16 %v356
      %v1277 = vunpack.c.l.b16 %v357
      %v1278 = vunpack.c.l.b16 %v358
      %v1279 = vunpack.c.l.b16 %v359
      %v1280 = vunpack.c.l.b16 %v360
      %v1281 = vunpack.c.l.b16 %v361
      %v1282 = vunpack.c.l.b16 %v362
      %v1283 = vunpack.c.l.b16 %v363
      %v1284 = vunpack.c.l.b16 %v364
      %v1285 = vunpack.c.l.b16 %v365
      %v1286 = vunpack.c.l.b16 %v366
      %v1287 = vunpack.c.l.b16 %v367
      %v1288 = vunpack.c.l.b16 %v368
      %v1289 = vunpack.c.l.b16 %v369
      %v1290 = vunpack.c.l.b16 %v370
      %v1291 = vunpack.c.l.b16 %v371
      %v1292 = vunpack.c.l.b16 %v372
      %v1293 = vunpack.c.l.b16 %v373
      %v1294 = vunpack.c.l.b16 %v374
      %v1295 = vunpack.c.l.b16 %v375
      %v1296 = vunpack.c.l.b16 %v376
      %v1297 = vunpack.c.l.b16 %v377
      %v1298 = vunpack.c.l.b16 %v378
      %v1299 = vunpack.c.l.b16 %v379
      %v1300 = vunpack.c.l.b16 %v380
      %v1301 = vunpack.c.l.b16 %v381
      %v1302 = vunpack.c.l.b16 %v382
      %v1303 = vunpack.c.l.b16 %v383
      %v1304 = vunpack.c.l.b16 %v384
      %v1305 = vunpack.c.l.b16 %v385
      %v1306 = vunpack.c.l.b16 %v386
      %v1307 = vunpack.c.l.b16 %v387
      %v1308 = vunpack.c.l.b16 %v388
      %v1309 = vunpack.c.l.b16 %v389
      %v1310 = vunpack.c.l.b16 %v390
      %v1311 = vunpack.c.l.b16 %v391
      %v1312 = vunpack.c.l.b16 %v392
      %v1313 = vunpack.c.l.b16 %v393
      %v1314 = vunpack.c.l.b16 %v394
      %v1315 = vunpack.c.l.b16 %v395
      %v1316 = vunpack.c.l.b16 %v396
      %v1317 = vunpack.c.l.b16 %v397
      %v1318 = vunpack.c.l.b16 %v398
      %v1319 = vunpack.c.l.b16 %v399
      %v1320 = vunpack.c.l.b16 %v400
      %v1321 = vunpack.c.l.b16 %v401
      %v1322 = vunpack.c.l.b16 %v402
      %v1323 = vunpack.c.l.b16 %v403
      %v1324 = vunpack.c.l.b16 %v404
      %v1325 = vunpack.c.l.b16 %v405
      %v1326 = vunpack.c.l.b16 %v406
      %v1327 = vunpack.c.l.b16 %v407
      %v1328 = vunpack.c.l.b16 %v408
      %v1329 = vunpack.c.l.b16 %v409
      %v1330 = vunpack.c.l.b16 %v410
      %v1331 = vunpack.c.l.b16 %v411
      %v1332 = vunpack.c.l.b16 %v412
      %v1333 = vunpack.c.l.b16 %v413
      %v1334 = vunpack.c.l.b16 %v414
      %v1335 = vunpack.c.l.b16 %v415
      %v1336 = vunpack.c.l.b16 %v416
      %v1337 = vunpack.c.l.b16 %v417
      %v1338 = vunpack.c.l.b16 %v418
      %v1339 = vunpack.c.l.b16 %v419
      %v1340 = vunpack.c.l.b16 %v420
      %v1341 = vunpack.c.l.b16 %v421
      %v1342 = vunpack.c.l.b16 %v422
      %v1343 = vunpack.c.l.b16 %v423
      %v1344 = vunpack.c.l.b16 %v424
      %v1345 = vunpack.c.l.b16 %v425
      %v1346 = vunpack.c.l.b16 %v426
      %v1347 = vunpack.c.l.b16 %v427
      %v1348 = vunpack.c.l.b16 %v428
      %v1349 = vunpack.c.l.b16 %v429
      %v1350 = vunpack.c.l.b16 %v430
      %v1351 = vunpack.c.l.b16 %v431
      %v1352 = vunpack.c.l.b16 %v432
      %v1353 = vunpack.c.l.b16 %v433
      %v1354 = vunpack.c.l.b16 %v434
      %v1355 = vunpack.c.l.b16 %v435
      %v1356 = vunpack.c.l.b16 %v436
      %v1357 = vunpack.c.l.b16 %v437
      %v1358 = vunpack.c.l.b16 %v438
      %v1359 = vunpack.c.l.b16 %v439
      %v1360 = vunpack.c.l.b16 %v440
      %v1361 = vunpack.c.l.b16 %v441
      %v1362 = vunpack.c.l.b16 %v442
      %v1363 = vunpack.c.l.b16 %v443
      %v1364 = vunpack.c.l.b16 %v444
      %v1365 = vunpack.c.l.b16 %v445
      %v1366 = vunpack.c.l.b16 %v446
      %v1367 = vunpack.c.l.b16 %v447
      %v1368 = vunpack.c.l.b16 %v448
      %v1369 = vunpack.c.l.b16 %v449
      %v1370 = vunpack.c.l.b16 %v450
      %v1371 = vunpack.c.l.b16 %v451
      %v1372 = vunpack.c.l.b16 %v452
      %v1373 = vunpack.c.l.b16 %v453
      %v1374 = vunpack.c.l.b16 %v454
      %v1375 = vunpack.c.l.b16 %v455
      %v1376 = vunpack.c.l.b16 %v456
      %v1377 = vunpack.c.l.b16 %v457
      %v1378 = vunpack.c.l.b16 %v458
      %v1379 = vunpack.c.l.b16 %v459
      %v1380 = vunpack.c.l.b16 %v460
      %v1381 = vunpack.c.l.b16 %v461
      %v1382 = vunpack.c.l.b16 %v462
      %v1383 = vunpack.c.l.b16 %v463
      %v1384 = vunpack.c.l.b16 %v464
      %v1385 = vunpack.c.l.b16 %v465
      %v1386 = vunpack.c.l.b16 %v466
      %v1387 = vunpack.c.l.b16 %v467
      %v1388 = vunpack.c.l.b16 %v468
      %v1389 = vunpack.c.l.b16 %v469
      %v1390 = vunpack.c.l.b16 %v470
      %v1391 = vunpack.c.l.b16 %v471
      %v1392 = vunpack.c.l.b16 %v472
      %v1393 = vunpack.c.l.b16 %v473
      %v1394 = vunpack.c.l.b16 %v474
      %v1395 = vunpack.c.l.b16 %v475
      %v1396 = vunpack.c.l.b16 %v476
      %v1397 = vunpack.c.l.b16 %v477
      %v1398 = vunpack.c.l.b16 %v478
      %v1399 = vunpack.c.l.b16 %v479
      %v1400 = vunpack.c.l.b16 %v480
      %v1401 = vunpack.c.l.b16 %v481
      %v1402 = vunpack.c.l.b16 %v482
      %v1403 = vunpack.c.l.b16 %v483
      %v1404 = vpack.c.b16 %v1205, %v1204
      %v1405 = vpack.c.b16 %v1207, %v1206
      %v1406 = vpack.c.b16 %v1209, %v1208
      %v1407 = vpack.c.b16 %v1211, %v1210
      %v1408 = vpack.c.b16 %v1213, %v1212
      %v1409 = vpack.c.b16 %v1215, %v1214
      %v1410 = vpack.c.b16 %v1217, %v1216
      %v1411 = vpack.c.b16 %v1219, %v1218
      %v1412 = vpack.c.b16 %v1221, %v1220
      %v1413 = vpack.c.b16 %v1223, %v1222
      %v1414 = vpack.c.b16 %v1225, %v1224
      %v1415 = vpack.c.b16 %v1227, %v1226
      %v1416 = vpack.c.b16 %v1229, %v1228
      %v1417 = vpack.c.b16 %v1231, %v1230
      %v1418 = vpack.c.b16 %v1233, %v1232
      %v1419 = vpack.c.b16 %v1235, %v1234
      %v1420 = vpack.c.b16 %v1237, %v1236
      %v1421 = vpack.c.b16 %v1239, %v1238
      %v1422 = vpack.c.b16 %v1241, %v1240
      %v1423 = vpack.c.b16 %v1243, %v1242
      %v1424 = vpack.c.b16 %v1245, %v1244
      %v1425 = vpack.c.b16 %v1247, %v1246
      %v1426 = vpack.c.b16 %v1249, %v1248
      %v1427 = vpack.c.b16 %v1251, %v1250
      %v1428 = vpack.c.b16 %v1253, %v1252
      %v1429 = vpack.c.b16 %v1255, %v1254
      %v1430 = vpack.c.b16 %v1257, %v1256
      %v1431 = vpack.c.b16 %v1259, %v1258
      %v1432 = vpack.c.b16 %v1261, %v1260
      %v1433 = vpack.c.b16 %v1263, %v1262
      %v1434 = vpack.c.b16 %v1265, %v1264
      %v1435 = vpack.c.b16 %v1267, %v1266
      %v1436 = vpack.c.b16 %v1269, %v1268
      %v1437 = vpack.c.b16 %v1271, %v1270
      %v1438 = vpack.c.b16 %v1273, %v1272
      %v1439 = vpack.c.b16 %v1275, %v1274
      %v1440 = vpack.c.b16 %v1277, %v1276
      %v1441 = vpack.c.b16 %v1279, %v1278
      %v1442 = vpack.c.b16 %v1281, %v1280
      %v1443 = vpack.c.b16 %v1283, %v1282
      %v1444 = vpack.c.b16 %v1285, %v1284
      %v1445 = vpack.c.b16 %v1287, %v1286
      %v1446 = vpack.c.b16 %v1289, %v1288
      %v1447 = vpack.c.b16 %v1291, %v1290
      %v1448 = vpack.c.b16 %v1293, %v1292
      %v1449 = vpack.c.b16 %v1295, %v1294
      %v1450 = vpack.c.b16 %v1297, %v1296
      %v1451 = vpack.c.b16 %v1299, %v1298
      %v1452 = vpack.c.b16 %v1301, %v1300
      %v1453 = vpack.c.b16 %v1303, %v1302
      %v1454 = vpack.c.b16 %v1305, %v1304
      %v1455 = vpack.c.b16 %v1307, %v1306
      %v1456 = vpack.c.b16 %v1309, %v1308
      %v1457 = vpack.c.b16 %v1311, %v1310
      %v1458 = vpack.c.b16 %v1313, %v1312
      %v1459 = vpack.c.b16 %v1315, %v1314
      %v1460 = vpack.c.b16 %v1317, %v1316
      %v1461 = vpack.c.b16 %v1319, %v1318
      %v1462 = vpack.c.b16 %v1321, %v1320
      %v1463 = vpack.c.b16 %v1323, %v1322
      %v1464 = vpack.c.b16 %v1325, %v1324
      %v1465 = vpack.c.b16 %v1327, %v1326
      %v1466 = vpack.c.b16 %v1329, %v1328
      %v1467 = vpack.c.b16 %v1331, %v1330
      %v1468 = vpack.c.b16 %v1333, %v1332
      %v1469 = vpack.c.b16 %v1335, %v1334
      %v1470 = vpack.c.b16 %v1337, %v1336
      %v1471 = vpack.c.b16 %v1339, %v1338
      %v1472 = vpack.c.b16 %v1341, %v1340
      %v1473 = vpack.c.b16 %v1343, %v1342
      %v1474 = vpack.c.b16 %v1345, %v1344
      %v1475 = vpack.c.b16 %v1347, %v1346
      %v1476 = vpack.c.b16 %v1349, %v1348
      %v1477 = vpack.c.b16 %v1351, %v1350
      %v1478 = vpack.c.b16 %v1353, %v1352
      %v1479 = vpack.c.b16 %v1355, %v1354
      %v1480 = vpack.c.b16 %v1357, %v1356
      %v1481 = vpack.c.b16 %v1359, %v1358
      %v1482 = vpack.c.b16 %v1361, %v1360
      %v1483 = vpack.c.b16 %v1363, %v1362
      %v1484 = vpack.c.b16 %v1365, %v1364
      %v1485 = vpack.c.b16 %v1367, %v1366
      %v1486 = vpack.c.b16 %v1369, %v1368
      %v1487 = vpack.c.b16 %v1371, %v1370
      %v1488 = vpack.c.b16 %v1373, %v1372
      %v1489 = vpack.c.b16 %v1375, %v1374
      %v1490 = vpack.c.b16 %v1377, %v1376
      %v1491 = vpack.c.b16 %v1379, %v1378
      %v1492 = vpack.c.b16 %v1381, %v1380
      %v1493 = vpack.c.b16 %v1383, %v1382
      %v1494 = vpack.c.b16 %v1385, %v1384
      %v1495 = vpack.c.b16 %v1387, %v1386
      %v1496 = vpack.c.b16 %v1389, %v1388
      %v1497 = vpack.c.b16 %v1391, %v1390
      %v1498 = vpack.c.b16 %v1393, %v1392
      %v1499 = vpack.c.b16 %v1395, %v1394
      %v1500 = vpack.c.b16 %v1397, %v1396
      %v1501 = vpack.c.b16 %v1399, %v1398
      %v1502 = vpack.c.b16 %v1401, %v1400
      %v1503 = vpack.c.b16 %v1403, %v1402
      %vm1604 = vcmask 523264
      %v1606 = vsel %vm1604, %v816, 0
      %v1609 = vsel %vm1604, %v829, 0
      %v1612 = vsel %vm1604, %v842, 0
      %v1615 = vsel %vm1604, %v855, 0
      %v1618 = vsel %vm1604, %v868, 0
      %v1621 = vsel %vm1604, %v881, 0
      %v1624 = vsel %vm1604, %v894, 0
      %v1627 = vsel %vm1604, %v907, 0
      %1629 = vmatprep.subr.bf16.mxu0 0
      %1630 = vmatpush1.bf16.msra.mxu0 %v1404
      %1631 = vmatprep.subr.bf16.mxu0 0
      %1632 = vmatpush1.bf16.msra.mxu0 %v1405
      %1633 = vmatprep.subr.bf16.mxu0 0
      %1634 = vmatpush1.bf16.msra.mxu0 %v1406
      %1635 = vmatprep.subr.bf16.mxu0 0
      %1636 = vmatpush1.bf16.msra.mxu0 %v1407
      %1637 = vmatprep.subr.bf16.mxu0 0
      %1638 = vmatpush1.bf16.msra.mxu0 %v1408
      %1639 = vmatprep.subr.bf16.mxu0 0
      %1640 = vmatpush1.bf16.msra.mxu0 %v1409
      %1641 = vmatprep.subr.bf16.mxu0 0
      %1642 = vmatpush1.bf16.msra.mxu0 %v1410
      %1643 = vmatprep.subr.bf16.mxu0 0
      %1644 = vmatpush1.bf16.msra.mxu0 %v1411
      %1645 = vmatprep.subr.bf16.mxu0 0
      %1646 = vmatpush1.bf16.msra.mxu0 %v1412
      %1647 = vmatprep.subr.bf16.mxu0 0
      %1648 = vmatpush1.bf16.msra.mxu0 %v1413
      %1649 = vmatprep.subr.bf16.mxu0 0
      %1650 = vmatpush1.bf16.msra.mxu0 %v1414
      %1651 = vmatprep.subr.bf16.mxu0 0
      %1652 = vmatpush1.bf16.msra.mxu0 %v1415
      %1653 = vmatprep.subr.bf16.mxu0 0
      %1654 = vmatpush1.bf16.msra.mxu0 %v1416
      %1655 = vmatprep.subr.bf16.mxu0 0
      %1656 = vmatpush1.bf16.msra.mxu0 %v1417
      %1657 = vmatprep.subr.bf16.mxu0 0
      %1658 = vmatpush1.bf16.msra.mxu0 %v1418
      %1659 = vmatprep.subr.bf16.mxu0 0
      %1660 = vmatpush1.bf16.msra.mxu0 %v1419
      %1661 = vmatprep.mubr.bf16.mxu0 %v805
      %1662 = vmatmul.mubr.bf16.gmra.mrb[0].mxu0 %v804
      %v1663 = vpop.f32.mrb[0].mxu0
      %v1664 = vadd.f32 0.0, %v1663
      %v1665 = vpop.f32.mrb[0].mxu0
      %v1666 = vpop.f32.mrb[0].mxu0
      %v1667 = vadd.f32 0.0, %v1666
      %v1668 = vpop.f32.mrb[0].mxu0
      %1669 = vmatprep.mubr.bf16.mxu0 %v818
      %1670 = vmatmul.mubr.bf16.gmra.mrb[0].mxu0 %v817
      %v1671 = vpop.f32.mrb[0].mxu0
      %v1672 = vadd.f32 0.0, %v1671
      %v1673 = vpop.f32.mrb[0].mxu0
      %v1674 = vpop.f32.mrb[0].mxu0
      %v1675 = vadd.f32 0.0, %v1674
      %v1676 = vpop.f32.mrb[0].mxu0
      %1677 = vmatprep.mubr.bf16.mxu0 %v831
      %1678 = vmatmul.mubr.bf16.gmra.mrb[0].mxu0 %v830
      %v1679 = vpop.f32.mrb[0].mxu0
      %v1680 = vadd.f32 0.0, %v1679
      %v1681 = vpop.f32.mrb[0].mxu0
      %v1682 = vpop.f32.mrb[0].mxu0
      %v1683 = vadd.f32 0.0, %v1682
      %v1684 = vpop.f32.mrb[0].mxu0
      %1685 = vmatprep.mubr.bf16.mxu0 %v844
      %1686 = vmatmul.mubr.bf16.gmra.mrb[0].mxu0 %v843
      %v1687 = vpop.f32.mrb[0].mxu0
      %v1688 = vadd.f32 0.0, %v1687
      %v1689 = vpop.f32.mrb[0].mxu0
      %v1690 = vpop.f32.mrb[0].mxu0
      %v1691 = vadd.f32 0.0, %v1690
      %v1692 = vpop.f32.mrb[0].mxu0
      %1693 = vmatprep.mubr.bf16.mxu0 %v857
      %1694 = vmatmul.mubr.bf16.gmra.mrb[0].mxu0 %v856
      %v1695 = vpop.f32.mrb[0].mxu0
      %v1696 = vadd.f32 0.0, %v1695
      %v1697 = vpop.f32.mrb[0].mxu0
      %v1698 = vpop.f32.mrb[0].mxu0
      %v1699 = vadd.f32 0.0, %v1698
      %v1700 = vpop.f32.mrb[0].mxu0
      %1701 = vmatprep.mubr.bf16.mxu0 %v870
      %1702 = vmatmul.mubr.bf16.gmra.mrb[0].mxu0 %v869
      %v1703 = vpop.f32.mrb[0].mxu0
      %v1704 = vadd.f32 0.0, %v1703
      %v1705 = vpop.f32.mrb[0].mxu0
      %v1706 = vpop.f32.mrb[0].mxu0
      %v1707 = vadd.f32 0.0, %v1706
      %v1708 = vpop.f32.mrb[0].mxu0
      %1709 = vmatprep.mubr.bf16.mxu0 %v883
      %1710 = vmatmul.mubr.bf16.gmra.mrb[0].mxu0 %v882
      %v1711 = vpop.f32.mrb[0].mxu0
      %v1712 = vadd.f32 0.0, %v1711
      %v1713 = vpop.f32.mrb[0].mxu0
      %v1714 = vpop.f32.mrb[0].mxu0
      %v1715 = vadd.f32 0.0, %v1714
      %v1716 = vpop.f32.mrb[0].mxu0
      %1717 = vmatprep.mubr.bf16.mxu0 %v896
      %1718 = vmatmul.mubr.bf16.gmra.mrb[0].mxu0 %v895
      %v1719 = vpop.f32.mrb[0].mxu0
      %v1720 = vadd.f32 0.0, %v1719
      %v1721 = vpop.f32.mrb[0].mxu0
      %v1722 = vpop.f32.mrb[0].mxu0
      %v1723 = vadd.f32 0.0, %v1722
      %v1724 = vpop.f32.mrb[0].mxu0
      %1725 = vdwg.mxu0
      %1726 = vmatprep.subr.bf16.mxu0 0
      %1727 = vmatpush1.bf16.msra.mxu0 %v1420
      %1728 = vmatprep.subr.bf16.mxu0 0
      %1729 = vmatpush1.bf16.msra.mxu0 %v1421
      %1730 = vmatprep.subr.bf16.mxu0 0
      %1731 = vmatpush1.bf16.msra.mxu0 %v1422
      %1732 = vmatprep.subr.bf16.mxu0 0
      %1733 = vmatpush1.bf16.msra.mxu0 %v1423
      %1734 = vmatprep.subr.bf16.mxu0 0
      %1735 = vmatpush1.bf16.msra.mxu0 %v1424
      %1736 = vmatprep.subr.bf16.mxu0 0
      %1737 = vmatpush1.bf16.msra.mxu0 %v1425
      %1738 = vmatprep.subr.bf16.mxu0 0
      %1739 = vmatpush1.bf16.msra.mxu0 %v1426
      %1740 = vmatprep.subr.bf16.mxu0 0
      %1741 = vmatpush1.bf16.msra.mxu0 %v1427
      %1742 = vmatprep.subr.bf16.mxu0 0
      %1743 = vmatpush1.bf16.msra.mxu0 %v1428
      %1744 = vmatprep.subr.bf16.mxu0 0
      %1745 = vmatpush1.bf16.msra.mxu0 %v1429
      %1746 = vmatprep.subr.bf16.mxu0 0
      %1747 = vmatpush1.bf16.msra.mxu0 %v1430
      %1748 = vmatprep.subr.bf16.mxu0 0
      %1749 = vmatpush1.bf16.msra.mxu0 %v1431
      %1750 = vmatprep.subr.bf16.mxu0 0
      %1751 = vmatpush1.bf16.msra.mxu0 %v1432
      %1752 = vmatprep.subr.bf16.mxu0 0
      %1753 = vmatpush1.bf16.msra.mxu0 %v1433
      %1754 = vmatprep.subr.bf16.mxu0 0
      %1755 = vmatpush1.bf16.msra.mxu0 %v1434
      %1756 = vmatprep.subr.bf16.mxu0 0
      %1757 = vmatpush1.bf16.msra.mxu0 %v1435
      %1758 = vmatprep.mubr.bf16.mxu0 %v807
      %1759 = vmatmul.mubr.bf16.gmra.mrb[0].mxu0 %v806
      %v1760 = vpop.f32.mrb[0].mxu0
      %v1761 = vadd.f32 %v1664, %v1760
      %v1762 = vpop.f32.mrb[0].mxu0
      %v1763 = vpop.f32.mrb[0].mxu0
      %v1764 = vadd.f32 %v1667, %v1763
      %v1765 = vpop.f32.mrb[0].mxu0
      %1766 = vmatprep.mubr.bf16.mxu0 %v820
      %1767 = vmatmul.mubr.bf16.gmra.mrb[0].mxu0 %v819
      %v1768 = vpop.f32.mrb[0].mxu0
      %v1769 = vadd.f32 %v1672, %v1768
      %v1770 = vpop.f32.mrb[0].mxu0
      %v1771 = vpop.f32.mrb[0].mxu0
      %v1772 = vadd.f32 %v1675, %v1771
      %v1773 = vpop.f32.mrb[0].mxu0
      %1774 = vmatprep.mubr.bf16.mxu0 %v833
      %1775 = vmatmul.mubr.bf16.gmra.mrb[0].mxu0 %v832
      %v1776 = vpop.f32.mrb[0].mxu0
      %v1777 = vadd.f32 %v1680, %v1776
      %v1778 = vpop.f32.mrb[0].mxu0
      %v1779 = vpop.f32.mrb[0].mxu0
      %v1780 = vadd.f32 %v1683, %v1779
      %v1781 = vpop.f32.mrb[0].mxu0
      %1782 = vmatprep.mubr.bf16.mxu0 %v846
      %1783 = vmatmul.mubr.bf16.gmra.mrb[0].mxu0 %v845
      %v1784 = vpop.f32.mrb[0].mxu0
      %v1785 = vadd.f32 %v1688, %v1784
      %v1786 = vpop.f32.mrb[0].mxu0
      %v1787 = vpop.f32.mrb[0].mxu0
      %v1788 = vadd.f32 %v1691, %v1787
      %v1789 = vpop.f32.mrb[0].mxu0
      %1790 = vmatprep.mubr.bf16.mxu0 %v859
      %1791 = vmatmul.mubr.bf16.gmra.mrb[0].mxu0 %v858
      %v1792 = vpop.f32.mrb[0].mxu0
      %v1793 = vadd.f32 %v1696, %v1792
      %v1794 = vpop.f32.mrb[0].mxu0
      %v1795 = vpop.f32.mrb[0].mxu0
      %v1796 = vadd.f32 %v1699, %v1795
      %v1797 = vpop.f32.mrb[0].mxu0
      %1798 = vmatprep.mubr.bf16.mxu0 %v872
      %1799 = vmatmul.mubr.bf16.gmra.mrb[0].mxu0 %v871
      %v1800 = vpop.f32.mrb[0].mxu0
      %v1801 = vadd.f32 %v1704, %v1800
      %v1802 = vpop.f32.mrb[0].mxu0
      %v1803 = vpop.f32.mrb[0].mxu0
      %v1804 = vadd.f32 %v1707, %v1803
      %v1805 = vpop.f32.mrb[0].mxu0
      %1806 = vmatprep.mubr.bf16.mxu0 %v885
      %1807 = vmatmul.mubr.bf16.gmra.mrb[0].mxu0 %v884
      %v1808 = vpop.f32.mrb[0].mxu0
      %v1809 = vadd.f32 %v1712, %v1808
      %v1810 = vpop.f32.mrb[0].mxu0
      %v1811 = vpop.f32.mrb[0].mxu0
      %v1812 = vadd.f32 %v1715, %v1811
      %v1813 = vpop.f32.mrb[0].mxu0
      %1814 = vmatprep.mubr.bf16.mxu0 %v898
      %1815 = vmatmul.mubr.bf16.gmra.mrb[0].mxu0 %v897
      %v1816 = vpop.f32.mrb[0].mxu0
      %v1817 = vadd.f32 %v1720, %v1816
      %v1818 = vpop.f32.mrb[0].mxu0
      %v1819 = vpop.f32.mrb[0].mxu0
      %v1820 = vadd.f32 %v1723, %v1819
      %v1821 = vpop.f32.mrb[0].mxu0
      %1822 = vdwg.mxu0
      %1823 = vmatprep.subr.bf16.mxu0 0
      %1824 = vmatpush1.bf16.msra.mxu0 %v1436
      %1825 = vmatprep.subr.bf16.mxu0 0
      %1826 = vmatpush1.bf16.msra.mxu0 %v1437
      %1827 = vmatprep.subr.bf16.mxu0 0
      %1828 = vmatpush1.bf16.msra.mxu0 %v1438
      %1829 = vmatprep.subr.bf16.mxu0 0
      %1830 = vmatpush1.bf16.msra.mxu0 %v1439
      %1831 = vmatprep.subr.bf16.mxu0 0
      %1832 = vmatpush1.bf16.msra.mxu0 %v1440
      %1833 = vmatprep.subr.bf16.mxu0 0
      %1834 = vmatpush1.bf16.msra.mxu0 %v1441
      %1835 = vmatprep.subr.bf16.mxu0 0
      %1836 = vmatpush1.bf16.msra.mxu0 %v1442
      %1837 = vmatprep.subr.bf16.mxu0 0
      %1838 = vmatpush1.bf16.msra.mxu0 %v1443
      %1839 = vmatprep.subr.bf16.mxu0 0
      %1840 = vmatpush1.bf16.msra.mxu0 %v1444
      %1841 = vmatprep.subr.bf16.mxu0 0
      %1842 = vmatpush1.bf16.msra.mxu0 %v1445
      %1843 = vmatprep.subr.bf16.mxu0 0
      %1844 = vmatpush1.bf16.msra.mxu0 %v1446
      %1845 = vmatprep.subr.bf16.mxu0 0
      %1846 = vmatpush1.bf16.msra.mxu0 %v1447
      %1847 = vmatprep.subr.bf16.mxu0 0
      %1848 = vmatpush1.bf16.msra.mxu0 %v1448
      %1849 = vmatprep.subr.bf16.mxu0 0
      %1850 = vmatpush1.bf16.msra.mxu0 %v1449
      %1851 = vmatprep.subr.bf16.mxu0 0
      %1852 = vmatpush1.bf16.msra.mxu0 %v1450
      %1853 = vmatprep.subr.bf16.mxu0 0
      %1854 = vmatpush1.bf16.msra.mxu0 %v1451
      %1855 = vmatprep.mubr.bf16.mxu0 %v809
      %1856 = vmatmul.mubr.bf16.gmra.mrb[0].mxu0 %v808
      %v1857 = vpop.f32.mrb[0].mxu0
      %v1858 = vadd.f32 %v1761, %v1857
      %v1859 = vpop.f32.mrb[0].mxu0
      %v1860 = vpop.f32.mrb[0].mxu0
      %v1861 = vadd.f32 %v1764, %v1860
      %v1862 = vpop.f32.mrb[0].mxu0
      %1863 = vmatprep.mubr.bf16.mxu0 %v822
      %1864 = vmatmul.mubr.bf16.gmra.mrb[0].mxu0 %v821
      %v1865 = vpop.f32.mrb[0].mxu0
      %v1866 = vadd.f32 %v1769, %v1865
      %v1867 = vpop.f32.mrb[0].mxu0
      %v1868 = vpop.f32.mrb[0].mxu0
      %v1869 = vadd.f32 %v1772, %v1868
      %v1870 = vpop.f32.mrb[0].mxu0
      %1871 = vmatprep.mubr.bf16.mxu0 %v835
      %1872 = vmatmul.mubr.bf16.gmra.mrb[0].mxu0 %v834
      %v1873 = vpop.f32.mrb[0].mxu0
      %v1874 = vadd.f32 %v1777, %v1873
      %v1875 = vpop.f32.mrb[0].mxu0
      %v1876 = vpop.f32.mrb[0].mxu0
      %v1877 = vadd.f32 %v1780, %v1876
      %v1878 = vpop.f32.mrb[0].mxu0
      %1879 = vmatprep.mubr.bf16.mxu0 %v848
      %1880 = vmatmul.mubr.bf16.gmra.mrb[0].mxu0 %v847
      %v1881 = vpop.f32.mrb[0].mxu0
      %v1882 = vadd.f32 %v1785, %v1881
      %v1883 = vpop.f32.mrb[0].mxu0
      %v1884 = vpop.f32.mrb[0].mxu0
      %v1885 = vadd.f32 %v1788, %v1884
      %v1886 = vpop.f32.mrb[0].mxu0
      %1887 = vmatprep.mubr.bf16.mxu0 %v861
      %1888 = vmatmul.mubr.bf16.gmra.mrb[0].mxu0 %v860
      %v1889 = vpop.f32.mrb[0].mxu0
      %v1890 = vadd.f32 %v1793, %v1889
      %v1891 = vpop.f32.mrb[0].mxu0
      %v1892 = vpop.f32.mrb[0].mxu0
      %v1893 = vadd.f32 %v1796, %v1892
      %v1894 = vpop.f32.mrb[0].mxu0
      %1895 = vmatprep.mubr.bf16.mxu0 %v874
      %1896 = vmatmul.mubr.bf16.gmra.mrb[0].mxu0 %v873
      %v1897 = vpop.f32.mrb[0].mxu0
      %v1898 = vadd.f32 %v1801, %v1897
      %v1899 = vpop.f32.mrb[0].mxu0
      %v1900 = vpop.f32.mrb[0].mxu0
      %v1901 = vadd.f32 %v1804, %v1900
      %v1902 = vpop.f32.mrb[0].mxu0
      %1903 = vmatprep.mubr.bf16.mxu0 %v887
      %1904 = vmatmul.mubr.bf16.gmra.mrb[0].mxu0 %v886
      %v1905 = vpop.f32.mrb[0].mxu0
      %v1906 = vadd.f32 %v1809, %v1905
      %v1907 = vpop.f32.mrb[0].mxu0
      %v1908 = vpop.f32.mrb[0].mxu0
      %v1909 = vadd.f32 %v1812, %v1908
      %v1910 = vpop.f32.mrb[0].mxu0
      %1911 = vmatprep.mubr.bf16.mxu0 %v900
      %1912 = vmatmul.mubr.bf16.gmra.mrb[0].mxu0 %v899
      %v1913 = vpop.f32.mrb[0].mxu0
      %v1914 = vadd.f32 %v1817, %v1913
      %v1915 = vpop.f32.mrb[0].mxu0
      %v1916 = vpop.f32.mrb[0].mxu0
      %v1917 = vadd.f32 %v1820, %v1916
      %v1918 = vpop.f32.mrb[0].mxu0
      %1919 = vdwg.mxu0
      %1920 = vmatprep.subr.bf16.mxu0 0
      %1921 = vmatpush1.bf16.msra.mxu0 %v1452
      %1922 = vmatprep.subr.bf16.mxu0 0
      %1923 = vmatpush1.bf16.msra.mxu0 %v1453
      %1924 = vmatprep.subr.bf16.mxu0 0
      %1925 = vmatpush1.bf16.msra.mxu0 %v1454
      %1926 = vmatprep.subr.bf16.mxu0 0
      %1927 = vmatpush1.bf16.msra.mxu0 %v1455
      %1928 = vmatprep.subr.bf16.mxu0 0
      %1929 = vmatpush1.bf16.msra.mxu0 %v1456
      %1930 = vmatprep.subr.bf16.mxu0 0
      %1931 = vmatpush1.bf16.msra.mxu0 %v1457
      %1932 = vmatprep.subr.bf16.mxu0 0
      %1933 = vmatpush1.bf16.msra.mxu0 %v1458
      %1934 = vmatprep.subr.bf16.mxu0 0
      %1935 = vmatpush1.bf16.msra.mxu0 %v1459
      %1936 = vmatprep.subr.bf16.mxu0 0
      %1937 = vmatpush1.bf16.msra.mxu0 %v1460
      %1938 = vmatprep.subr.bf16.mxu0 0
      %1939 = vmatpush1.bf16.msra.mxu0 %v1461
      %1940 = vmatprep.subr.bf16.mxu0 0
      %1941 = vmatpush1.bf16.msra.mxu0 %v1462
      %1942 = vmatprep.subr.bf16.mxu0 0
      %1943 = vmatpush1.bf16.msra.mxu0 %v1463
      %1944 = vmatprep.subr.bf16.mxu0 0
      %1945 = vmatpush1.bf16.msra.mxu0 %v1464
      %1946 = vmatprep.subr.bf16.mxu0 0
      %1947 = vmatpush1.bf16.msra.mxu0 %v1465
      %1948 = vmatprep.subr.bf16.mxu0 0
      %1949 = vmatpush1.bf16.msra.mxu0 %v1466
      %1950 = vmatprep.subr.bf16.mxu0 0
      %1951 = vmatpush1.bf16.msra.mxu0 %v1467
      %1952 = vmatprep.mubr.bf16.mxu0 %v811
      %1953 = vmatmul.mubr.bf16.gmra.mrb[0].mxu0 %v810
      %v1954 = vpop.f32.mrb[0].mxu0
      %v1955 = vadd.f32 %v1858, %v1954
      %v1956 = vpop.f32.mrb[0].mxu0
      %v1957 = vpop.f32.mrb[0].mxu0
      %v1958 = vadd.f32 %v1861, %v1957
      %v1959 = vpop.f32.mrb[0].mxu0
      %1960 = vmatprep.mubr.bf16.mxu0 %v824
      %1961 = vmatmul.mubr.bf16.gmra.mrb[0].mxu0 %v823
      %v1962 = vpop.f32.mrb[0].mxu0
      %v1963 = vadd.f32 %v1866, %v1962
      %v1964 = vpop.f32.mrb[0].mxu0
      %v1965 = vpop.f32.mrb[0].mxu0
      %v1966 = vadd.f32 %v1869, %v1965
      %v1967 = vpop.f32.mrb[0].mxu0
      %1968 = vmatprep.mubr.bf16.mxu0 %v837
      %1969 = vmatmul.mubr.bf16.gmra.mrb[0].mxu0 %v836
      %v1970 = vpop.f32.mrb[0].mxu0
      %v1971 = vadd.f32 %v1874, %v1970
      %v1972 = vpop.f32.mrb[0].mxu0
      %v1973 = vpop.f32.mrb[0].mxu0
      %v1974 = vadd.f32 %v1877, %v1973
      %v1975 = vpop.f32.mrb[0].mxu0
      %1976 = vmatprep.mubr.bf16.mxu0 %v850
      %1977 = vmatmul.mubr.bf16.gmra.mrb[0].mxu0 %v849
      %v1978 = vpop.f32.mrb[0].mxu0
      %v1979 = vadd.f32 %v1882, %v1978
      %v1980 = vpop.f32.mrb[0].mxu0
      %v1981 = vpop.f32.mrb[0].mxu0
      %v1982 = vadd.f32 %v1885, %v1981
      %v1983 = vpop.f32.mrb[0].mxu0
      %1984 = vmatprep.mubr.bf16.mxu0 %v863
      %1985 = vmatmul.mubr.bf16.gmra.mrb[0].mxu0 %v862
      %v1986 = vpop.f32.mrb[0].mxu0
      %v1987 = vadd.f32 %v1890, %v1986
      %v1988 = vpop.f32.mrb[0].mxu0
      %v1989 = vpop.f32.mrb[0].mxu0
      %v1990 = vadd.f32 %v1893, %v1989
      %v1991 = vpop.f32.mrb[0].mxu0
      %1992 = vmatprep.mubr.bf16.mxu0 %v876
      %1993 = vmatmul.mubr.bf16.gmra.mrb[0].mxu0 %v875
      %v1994 = vpop.f32.mrb[0].mxu0
      %v1995 = vadd.f32 %v1898, %v1994
      %v1996 = vpop.f32.mrb[0].mxu0
      %v1997 = vpop.f32.mrb[0].mxu0
      %v1998 = vadd.f32 %v1901, %v1997
      %v1999 = vpop.f32.mrb[0].mxu0
      %2000 = vmatprep.mubr.bf16.mxu0 %v889
      %2001 = vmatmul.mubr.bf16.gmra.mrb[0].mxu0 %v888
      %v2002 = vpop.f32.mrb[0].mxu0
      %v2003 = vadd.f32 %v1906, %v2002
      %v2004 = vpop.f32.mrb[0].mxu0
      %v2005 = vpop.f32.mrb[0].mxu0
      %v2006 = vadd.f32 %v1909, %v2005
      %v2007 = vpop.f32.mrb[0].mxu0
      %2008 = vmatprep.mubr.bf16.mxu0 %v902
      %2009 = vmatmul.mubr.bf16.gmra.mrb[0].mxu0 %v901
      %v2010 = vpop.f32.mrb[0].mxu0
      %v2011 = vadd.f32 %v1914, %v2010
      %v2012 = vpop.f32.mrb[0].mxu0
      %v2013 = vpop.f32.mrb[0].mxu0
      %v2014 = vadd.f32 %v1917, %v2013
      %v2015 = vpop.f32.mrb[0].mxu0
      %2016 = vdwg.mxu0
      %2017 = vmatprep.subr.bf16.mxu0 0
      %2018 = vmatpush1.bf16.msra.mxu0 %v1468
      %2019 = vmatprep.subr.bf16.mxu0 0
      %2020 = vmatpush1.bf16.msra.mxu0 %v1469
      %2021 = vmatprep.subr.bf16.mxu0 0
      %2022 = vmatpush1.bf16.msra.mxu0 %v1470
      %2023 = vmatprep.subr.bf16.mxu0 0
      %2024 = vmatpush1.bf16.msra.mxu0 %v1471
      %2025 = vmatprep.subr.bf16.mxu0 0
      %2026 = vmatpush1.bf16.msra.mxu0 %v1472
      %2027 = vmatprep.subr.bf16.mxu0 0
      %2028 = vmatpush1.bf16.msra.mxu0 %v1473
      %2029 = vmatprep.subr.bf16.mxu0 0
      %2030 = vmatpush1.bf16.msra.mxu0 %v1474
      %2031 = vmatprep.subr.bf16.mxu0 0
      %2032 = vmatpush1.bf16.msra.mxu0 %v1475
      %2033 = vmatprep.subr.bf16.mxu0 0
      %2034 = vmatpush1.bf16.msra.mxu0 %v1476
      %2035 = vmatprep.subr.bf16.mxu0 0
      %2036 = vmatpush1.bf16.msra.mxu0 %v1477
      %2037 = vmatprep.subr.bf16.mxu0 0
      %2038 = vmatpush1.bf16.msra.mxu0 %v1478
      %2039 = vmatprep.subr.bf16.mxu0 0
      %2040 = vmatpush1.bf16.msra.mxu0 %v1479
      %2041 = vmatprep.subr.bf16.mxu0 0
      %2042 = vmatpush1.bf16.msra.mxu0 %v1480
      %2043 = vmatprep.subr.bf16.mxu0 0
      %2044 = vmatpush1.bf16.msra.mxu0 %v1481
      %2045 = vmatprep.subr.bf16.mxu0 0
      %2046 = vmatpush1.bf16.msra.mxu0 %v1482
      %2047 = vmatprep.subr.bf16.mxu0 0
      %2048 = vmatpush1.bf16.msra.mxu0 %v1483
      %2049 = vmatprep.mubr.bf16.mxu0 %v813
      %2050 = vmatmul.mubr.bf16.gmra.mrb[0].mxu0 %v812
      %v2051 = vpop.f32.mrb[0].mxu0
      %v2052 = vadd.f32 %v1955, %v2051
      %v2053 = vpop.f32.mrb[0].mxu0
      %v2054 = vpop.f32.mrb[0].mxu0
      %v2055 = vadd.f32 %v1958, %v2054
      %v2056 = vpop.f32.mrb[0].mxu0
      %2057 = vmatprep.mubr.bf16.mxu0 %v826
      %2058 = vmatmul.mubr.bf16.gmra.mrb[0].mxu0 %v825
      %v2059 = vpop.f32.mrb[0].mxu0
      %v2060 = vadd.f32 %v1963, %v2059
      %v2061 = vpop.f32.mrb[0].mxu0
      %v2062 = vpop.f32.mrb[0].mxu0
      %v2063 = vadd.f32 %v1966, %v2062
      %v2064 = vpop.f32.mrb[0].mxu0
      %2065 = vmatprep.mubr.bf16.mxu0 %v839
      %2066 = vmatmul.mubr.bf16.gmra.mrb[0].mxu0 %v838
      %v2067 = vpop.f32.mrb[0].mxu0
      %v2068 = vadd.f32 %v1971, %v2067
      %v2069 = vpop.f32.mrb[0].mxu0
      %v2070 = vpop.f32.mrb[0].mxu0
      %v2071 = vadd.f32 %v1974, %v2070
      %v2072 = vpop.f32.mrb[0].mxu0
      %2073 = vmatprep.mubr.bf16.mxu0 %v852
      %2074 = vmatmul.mubr.bf16.gmra.mrb[0].mxu0 %v851
      %v2075 = vpop.f32.mrb[0].mxu0
      %v2076 = vadd.f32 %v1979, %v2075
      %v2077 = vpop.f32.mrb[0].mxu0
      %v2078 = vpop.f32.mrb[0].mxu0
      %v2079 = vadd.f32 %v1982, %v2078
      %v2080 = vpop.f32.mrb[0].mxu0
      %2081 = vmatprep.mubr.bf16.mxu0 %v865
      %2082 = vmatmul.mubr.bf16.gmra.mrb[0].mxu0 %v864
      %v2083 = vpop.f32.mrb[0].mxu0
      %v2084 = vadd.f32 %v1987, %v2083
      %v2085 = vpop.f32.mrb[0].mxu0
      %v2086 = vpop.f32.mrb[0].mxu0
      %v2087 = vadd.f32 %v1990, %v2086
      %v2088 = vpop.f32.mrb[0].mxu0
      %2089 = vmatprep.mubr.bf16.mxu0 %v878
      %2090 = vmatmul.mubr.bf16.gmra.mrb[0].mxu0 %v877
      %v2091 = vpop.f32.mrb[0].mxu0
      %v2092 = vadd.f32 %v1995, %v2091
      %v2093 = vpop.f32.mrb[0].mxu0
      %v2094 = vpop.f32.mrb[0].mxu0
      %v2095 = vadd.f32 %v1998, %v2094
      %v2096 = vpop.f32.mrb[0].mxu0
      %2097 = vmatprep.mubr.bf16.mxu0 %v891
      %2098 = vmatmul.mubr.bf16.gmra.mrb[0].mxu0 %v890
      %v2099 = vpop.f32.mrb[0].mxu0
      %v2100 = vadd.f32 %v2003, %v2099
      %v2101 = vpop.f32.mrb[0].mxu0
      %v2102 = vpop.f32.mrb[0].mxu0
      %v2103 = vadd.f32 %v2006, %v2102
      %v2104 = vpop.f32.mrb[0].mxu0
      %2105 = vmatprep.mubr.bf16.mxu0 %v904
      %2106 = vmatmul.mubr.bf16.gmra.mrb[0].mxu0 %v903
      %v2107 = vpop.f32.mrb[0].mxu0
      %v2108 = vadd.f32 %v2011, %v2107
      %v2109 = vpop.f32.mrb[0].mxu0
      %v2110 = vpop.f32.mrb[0].mxu0
      %v2111 = vadd.f32 %v2014, %v2110
      %v2112 = vpop.f32.mrb[0].mxu0
      %2113 = vdwg.mxu0
      %2114 = vmatprep.subr.bf16.mxu0 0
      %2115 = vmatpush1.bf16.msra.mxu0 %v1484
      %2116 = vmatprep.subr.bf16.mxu0 0
      %2117 = vmatpush1.bf16.msra.mxu0 %v1485
      %2118 = vmatprep.subr.bf16.mxu0 0
      %2119 = vmatpush1.bf16.msra.mxu0 %v1486
      %2120 = vmatprep.subr.bf16.mxu0 0
      %2121 = vmatpush1.bf16.msra.mxu0 %v1487
      %2122 = vmatprep.subr.bf16.mxu0 0
      %2123 = vmatpush1.bf16.msra.mxu0 %v1488
      %2124 = vmatprep.subr.bf16.mxu0 0
      %2125 = vmatpush1.bf16.msra.mxu0 %v1489
      %2126 = vmatprep.subr.bf16.mxu0 0
      %2127 = vmatpush1.bf16.msra.mxu0 %v1490
      %2128 = vmatprep.subr.bf16.mxu0 0
      %2129 = vmatpush1.bf16.msra.mxu0 %v1491
      %2130 = vmatprep.subr.bf16.mxu0 0
      %2131 = vmatpush1.bf16.msra.mxu0 %v1492
      %2132 = vmatprep.subr.bf16.mxu0 0
      %2133 = vmatpush1.bf16.msra.mxu0 %v1493
      %2134 = vmatprep.subr.bf16.mxu0 0
      %2135 = vmatpush1.bf16.msra.mxu0 %v1494
      %2136 = vmatprep.subr.bf16.mxu0 0
      %2137 = vmatpush1.bf16.msra.mxu0 %v1495
      %2138 = vmatprep.subr.bf16.mxu0 0
      %2139 = vmatpush1.bf16.msra.mxu0 %v1496
      %2140 = vmatprep.subr.bf16.mxu0 0
      %2141 = vmatpush1.bf16.msra.mxu0 %v1497
      %2142 = vmatprep.subr.bf16.mxu0 0
      %2143 = vmatpush1.bf16.msra.mxu0 %v1498
      %2144 = vmatprep.subr.bf16.mxu0 0
      %2145 = vmatpush1.bf16.msra.mxu0 %v1499
      %2146 = vmatprep.mubr.bf16.mxu0 %v815
      %2147 = vmatmul.mubr.bf16.gmra.mrb[0].mxu0 %v814
      %v2148 = vpop.f32.mrb[0].mxu0
      %v2149 = vadd.f32 %v2052, %v2148
      %v2150 = vpop.f32.mrb[0].mxu0
      %v2151 = vpop.f32.mrb[0].mxu0
      %v2152 = vadd.f32 %v2055, %v2151
      %v2153 = vpop.f32.mrb[0].mxu0
      %2154 = vmatprep.mubr.bf16.mxu0 %v828
      %2155 = vmatmul.mubr.bf16.gmra.mrb[0].mxu0 %v827
      %v2156 = vpop.f32.mrb[0].mxu0
      %v2157 = vadd.f32 %v2060, %v2156
      %v2158 = vpop.f32.mrb[0].mxu0
      %v2159 = vpop.f32.mrb[0].mxu0
      %v2160 = vadd.f32 %v2063, %v2159
      %v2161 = vpop.f32.mrb[0].mxu0
      %2162 = vmatprep.mubr.bf16.mxu0 %v841
      %2163 = vmatmul.mubr.bf16.gmra.mrb[0].mxu0 %v840
      %v2164 = vpop.f32.mrb[0].mxu0
      %v2165 = vadd.f32 %v2068, %v2164
      %v2166 = vpop.f32.mrb[0].mxu0
      %v2167 = vpop.f32.mrb[0].mxu0
      %v2168 = vadd.f32 %v2071, %v2167
      %v2169 = vpop.f32.mrb[0].mxu0
      %2170 = vmatprep.mubr.bf16.mxu0 %v854
      %2171 = vmatmul.mubr.bf16.gmra.mrb[0].mxu0 %v853
      %v2172 = vpop.f32.mrb[0].mxu0
      %v2173 = vadd.f32 %v2076, %v2172
      %v2174 = vpop.f32.mrb[0].mxu0
      %v2175 = vpop.f32.mrb[0].mxu0
      %v2176 = vadd.f32 %v2079, %v2175
      %v2177 = vpop.f32.mrb[0].mxu0
      %2178 = vmatprep.mubr.bf16.mxu0 %v867
      %2179 = vmatmul.mubr.bf16.gmra.mrb[0].mxu0 %v866
      %v2180 = vpop.f32.mrb[0].mxu0
      %v2181 = vadd.f32 %v2084, %v2180
      %v2182 = vpop.f32.mrb[0].mxu0
      %v2183 = vpop.f32.mrb[0].mxu0
      %v2184 = vadd.f32 %v2087, %v2183
      %v2185 = vpop.f32.mrb[0].mxu0
      %2186 = vmatprep.mubr.bf16.mxu0 %v880
      %2187 = vmatmul.mubr.bf16.gmra.mrb[0].mxu0 %v879
      %v2188 = vpop.f32.mrb[0].mxu0
      %v2189 = vadd.f32 %v2092, %v2188
      %v2190 = vpop.f32.mrb[0].mxu0
      %v2191 = vpop.f32.mrb[0].mxu0
      %v2192 = vadd.f32 %v2095, %v2191
      %v2193 = vpop.f32.mrb[0].mxu0
      %2194 = vmatprep.mubr.bf16.mxu0 %v893
      %2195 = vmatmul.mubr.bf16.gmra.mrb[0].mxu0 %v892
      %v2196 = vpop.f32.mrb[0].mxu0
      %v2197 = vadd.f32 %v2100, %v2196
      %v2198 = vpop.f32.mrb[0].mxu0
      %v2199 = vpop.f32.mrb[0].mxu0
      %v2200 = vadd.f32 %v2103, %v2199
      %v2201 = vpop.f32.mrb[0].mxu0
      %2202 = vmatprep.mubr.bf16.mxu0 %v906
      %2203 = vmatmul.mubr.bf16.gmra.mrb[0].mxu0 %v905
      %v2204 = vpop.f32.mrb[0].mxu0
      %v2205 = vadd.f32 %v2108, %v2204
      %v2206 = vpop.f32.mrb[0].mxu0
      %v2207 = vpop.f32.mrb[0].mxu0
      %v2208 = vadd.f32 %v2111, %v2207
      %v2209 = vpop.f32.mrb[0].mxu0
      %2210 = vdwg.mxu0
      %2211 = vmatprep.subr.bf16.mxu0 0
      %2212 = vmatpush1.bf16.msra.mxu0 %v1500
      %2213 = vmatprep.subr.bf16.mxu0 0
      %2214 = vmatpush1.bf16.msra.mxu0 %v1501
      %2215 = vmatprep.subr.bf16.mxu0 0
      %2216 = vmatpush1.bf16.msra.mxu0 %v1502
      %2217 = vmatprep.subr.bf16.mxu0 0
      %2218 = vmatpush1.bf16.msra.mxu0 %v1503
      %2219 = vmatprep.subr.bf16.mxu0 0
      %2220 = vmatpush1.bf16.msra.mxu0 0
      %2221 = vmatprep.subr.bf16.mxu0 0
      %2222 = vmatpush1.bf16.msra.mxu0 0
      %2223 = vmatprep.subr.bf16.mxu0 0
      %2224 = vmatpush1.bf16.msra.mxu0 0
      %2225 = vmatprep.subr.bf16.mxu0 0
      %2226 = vmatpush1.bf16.msra.mxu0 0
      %2227 = vmatprep.subr.bf16.mxu0 0
      %2228 = vmatpush1.bf16.msra.mxu0 0
      %2229 = vmatprep.subr.bf16.mxu0 0
      %2230 = vmatpush1.bf16.msra.mxu0 0
      %2231 = vmatprep.subr.bf16.mxu0 0
      %2232 = vmatpush1.bf16.msra.mxu0 0
      %2233 = vmatprep.subr.bf16.mxu0 0
      %2234 = vmatpush1.bf16.msra.mxu0 0
      %2235 = vmatprep.subr.bf16.mxu0 0
      %2236 = vmatpush1.bf16.msra.mxu0 0
      %2237 = vmatprep.subr.bf16.mxu0 0
      %2238 = vmatpush1.bf16.msra.mxu0 0
      %2239 = vmatprep.subr.bf16.mxu0 0
      %2240 = vmatpush1.bf16.msra.mxu0 0
      %2241 = vmatprep.subr.bf16.mxu0 0
      %2242 = vmatpush1.bf16.msra.mxu0 0
      %2243 = vmatprep.mubr.bf16.mxu0 0
      %2244 = vmatmul.mubr.bf16.gmra.mrb[0].mxu0 %v1606
      %v2245 = vpop.f32.mrb[0].mxu0
      %v2246 = vadd.f32 %v2149, %v2245
      %v2247 = vpop.f32.mrb[0].mxu0
      %v2248 = vpop.f32.mrb[0].mxu0
      %v2249 = vadd.f32 %v2152, %v2248
      %v2250 = vpop.f32.mrb[0].mxu0
      %2251 = vmatprep.mubr.bf16.mxu0 0
      %2252 = vmatmul.mubr.bf16.gmra.mrb[0].mxu0 %v1609
      %v2253 = vpop.f32.mrb[0].mxu0
      %v2254 = vadd.f32 %v2157, %v2253
      %v2255 = vpop.f32.mrb[0].mxu0
      %v2256 = vpop.f32.mrb[0].mxu0
      %v2257 = vadd.f32 %v2160, %v2256
      %v2258 = vpop.f32.mrb[0].mxu0
      %2259 = vmatprep.mubr.bf16.mxu0 0
      %2260 = vmatmul.mubr.bf16.gmra.mrb[0].mxu0 %v1612
      %v2261 = vpop.f32.mrb[0].mxu0
      %v2262 = vadd.f32 %v2165, %v2261
      %v2263 = vpop.f32.mrb[0].mxu0
      %v2264 = vpop.f32.mrb[0].mxu0
      %v2265 = vadd.f32 %v2168, %v2264
      %v2266 = vpop.f32.mrb[0].mxu0
      %2267 = vmatprep.mubr.bf16.mxu0 0
      %2268 = vmatmul.mubr.bf16.gmra.mrb[0].mxu0 %v1615
      %v2269 = vpop.f32.mrb[0].mxu0
      %v2270 = vadd.f32 %v2173, %v2269
      %v2271 = vpop.f32.mrb[0].mxu0
      %v2272 = vpop.f32.mrb[0].mxu0
      %v2273 = vadd.f32 %v2176, %v2272
      %v2274 = vpop.f32.mrb[0].mxu0
      %2275 = vmatprep.mubr.bf16.mxu0 0
      %2276 = vmatmul.mubr.bf16.gmra.mrb[0].mxu0 %v1618
      %v2277 = vpop.f32.mrb[0].mxu0
      %v2278 = vadd.f32 %v2181, %v2277
      %v2279 = vpop.f32.mrb[0].mxu0
      %v2280 = vpop.f32.mrb[0].mxu0
      %v2281 = vadd.f32 %v2184, %v2280
      %v2282 = vpop.f32.mrb[0].mxu0
      %2283 = vmatprep.mubr.bf16.mxu0 0
      %2284 = vmatmul.mubr.bf16.gmra.mrb[0].mxu0 %v1621
      %v2285 = vpop.f32.mrb[0].mxu0
      %v2286 = vadd.f32 %v2189, %v2285
      %v2287 = vpop.f32.mrb[0].mxu0
      %v2288 = vpop.f32.mrb[0].mxu0
      %v2289 = vadd.f32 %v2192, %v2288
      %v2290 = vpop.f32.mrb[0].mxu0
      %2291 = vmatprep.mubr.bf16.mxu0 0
      %2292 = vmatmul.mubr.bf16.gmra.mrb[0].mxu0 %v1624
      %v2293 = vpop.f32.mrb[0].mxu0
      %v2294 = vadd.f32 %v2197, %v2293
      %v2295 = vpop.f32.mrb[0].mxu0
      %v2296 = vpop.f32.mrb[0].mxu0
      %v2297 = vadd.f32 %v2200, %v2296
      %v2298 = vpop.f32.mrb[0].mxu0
      %2299 = vmatprep.mubr.bf16.mxu0 0
      %2300 = vmatmul.mubr.bf16.gmra.mrb[0].mxu0 %v1627
      %v2301 = vpop.f32.mrb[0].mxu0
      %v2302 = vadd.f32 %v2205, %v2301
      %v2303 = vpop.f32.mrb[0].mxu0
      %v2304 = vpop.f32.mrb[0].mxu0
      %v2305 = vadd.f32 %v2208, %v2304
      %v2306 = vpop.f32.mrb[0].mxu0
      %2307 = vdwg.mxu0
      %v2308 = vmax.f32 %v2246, %v2262
      %v2309 = vmax.f32 %v2249, %v2265
      %v2310 = vmax.f32 %v2254, %v2270
      %v2311 = vmax.f32 %v2257, %v2273
      %v2312 = vmax.f32 %v2278, %v2294
      %v2313 = vmax.f32 %v2281, %v2297
      %v2314 = vmax.f32 %v2286, %v2302
      %v2315 = vmax.f32 %v2289, %v2305
      %v2316 = vmax.f32 %v2308, %v2312
      %v2317 = vmax.f32 %v2309, %v2313
      %v2318 = vmax.f32 %v2310, %v2314
      %v2319 = vmax.f32 %v2311, %v2315
      %v2320 = vld [vmem:[%s2] sm:$0x1]
      %v2322 = vlaneseq
      %v2323 = vshrl.u32 %v2322, 7
      %v2324 = vsub.s32 0, %v2323
      %v2325 = vrot.slane %v2320, %v2324
      %v2327 = vadd.f32 %v2316, %v2325
      %v2328 = vadd.f32 %v2317, %v2325
      %v2329 = vadd.f32 %v2318, %v2325
      %v2330 = vadd.f32 %v2319, %v2325
      %v2331 = vmax.f32 %v2327, 0.0
      %v2332 = vmax.f32 %v2328, 0.0
      %v2333 = vmax.f32 %v2329, 0.0
      %v2334 = vmax.f32 %v2330, 0.0
      %v2335 = vpack.c.bf16 %v2332, %v2331
      %v2336 = vpack.c.bf16 %v2334, %v2333
      %v2339 = vunpack.c.l.b16 %v2335
      %v2340 = vunpack.c.h.b16 %v2335
      %v2341 = vunpack.c.l.b16 %v2336
      %v2342 = vunpack.c.h.b16 %v2336
      %v2343 = vpack.c.b16 %v2339, %v2339
      %v2344 = vpack.c.b16 %v2340, %v2340
      %v2345 = vpack.c.b16 %v2341, %v2341
      %v2346 = vpack.c.b16 %v2342, %v2342
      %2351 = vst [vmem:[%s170] sm:$0xf] %v2343
      %2352 = vst [vmem:[%s170 + $0x4] sm:$0xf] %v2344
      %2353 = vst [vmem:[%s170 + $0x8] sm:$0xf] %v2345
      %2354 = vst [vmem:[%s170 + $0xc] sm:$0xf] %v2346
      %p2355 = scmp.lt.s32.totalorder %s14, 1
      %s2356 = scalar_select %p2355, %s14, 1
      %s2357 = smul.addr %s2356, 4
      %s2358 = smul.addr %s2357, 4
      %s2359 = scalar_lea.vmem %s3, %s2358
      // Predicated region
      $region33: #{convnet_forward.4} parent=31 // pred_check
        %p2360 = pneg %p100
      $region34: #{convnet_forward.4} parent=31 // pred_check_branch
        %2362 = sbr.rel (%p2360) target = $region36
      $region35: #{convnet_forward.4} parent=31 // pred_region
        _
      $region36: #{convnet_forward.4} parent=31 // pred_fallthru
        _
    $region32: #{convnet_forward.4} parent=5 // pred_fallthru
      _
    %p2363 = scmp.le.s32.totalorder 2, %s9
    // Predicated region
    $region37: #{convnet_forward.4} parent=5 // pred_check
      %p2364 = pneg %p2363
    $region38: #{convnet_forward.4} parent=5 // pred_check_branch
      %2366 = sbr.rel (%p2364) target = $region40
    $region39: #{convnet_forward.4} parent=5 // pred_region
      %s2367 = ssub.s32 %s9, 2
      // Predicated region
      $region41: #{convnet_forward.4} parent=39 // pred_check
        %p2368 = pneg %p106
      $region42: #{convnet_forward.4} parent=39 // pred_check_branch
        %2370 = sbr.rel (%p2368) target = $region44
      $region43: #{convnet_forward.4} parent=39 // pred_region
        %p2371 = scmp.lt.s32.totalorder %s15, 1
        %s2372 = scalar_select %p2371, %s15, 1
        %s2373 = smul.addr %s2372, 4
        %s2374 = smul.addr %s2373, 4
        %s2375 = scalar_lea.vmem %s3, %s2374
      $region44: #{convnet_forward.4} parent=39 // pred_fallthru
        _
    $region40: #{convnet_forward.4} parent=5 // pred_fallthru
      _
  $region6: #{convnet_forward.4} parent=0 // loop_footer
    %s13 = sadd.s32 1, %s9
  $region7: #{convnet_forward.4} parent=0 // loop_footer_branch
    %8 = sbr.rel target = $region3
  $region8: #{convnet_forward.4} parent=0 // loop_exit
    _

// kernel: convnet_forward.5
$region0: #{convnet_forward.5}
  #allocation0 [shape = 'u32[]', space=smem, size = 0x4, offset = 0x4, fixed_abs, tag = 'smem constant byte address 0x4 - core index']
  #allocation1 [shape = 'u32[144,128]{1,0:T(1,128)}', space=vmem, size = 0x12000, scoped, tag = 'internal scratch']
  #allocation2 [shape = 'f32[2,1024]{1,0:T(2,128)}', space=vmem, size = 0x2000, scoped, tag = 'scratch operand']
  %s0 = inlined_call_operand.vmem [shape: bf16[2,3200], index: 0, kind: input, shape index: {}]
  %s1 = inlined_call_operand.vmem [shape: bf16[3200,1024], index: 1, kind: input, shape index: {}]
  %s2 = inlined_call_operand.vmem [shape: f32[1,1024], index: 2, kind: input, shape index: {}]
  %s3 = inlined_call_operand.vmem [shape: bf16[1024,1024], index: 3, kind: input, shape index: {}]
  %s4 = inlined_call_operand.vmem [shape: f32[1,1024], index: 4, kind: input, shape index: {}]
  %s5 = inlined_call_operand.vmem [shape: bf16[1024,128], index: 5, kind: input, shape index: {}]
  %s6 = inlined_call_operand.vmem [shape: f32[1,128], index: 6, kind: input, shape index: {}]
  %s7 = inlined_call_operand.hbm [shape: f32[2,128], index: 7, kind: output, shape index: {}]
  %s8 = sld [smem:[#allocation0]]
  $region107: #{convnet_forward.5} parent=0
    _
  %s10 = ssub.s32 1, %s8
  %s11 = scalar_select 0, %s10, %s8
  $region1: #{convnet_forward.5} parent=0
    #allocation3 [shape = 'u8[3276800]{0}', space=vmem, size = 0x320000, scoped, tag = 'input window, operand 1']
    #allocation4 [shape = 'u8[1024]{0}', space=vmem, size = 0x400, scoped, tag = 'output window, operand 0, single buffered']
    #allocation5 [shape = 's32[2]{0}', space=sflag, size = 0x8, scoped, tag = 'scoped memory for convnet_forward.5']
    %12 = vsyncpa [#allocation5], 0
    loop: start=0, step=1, limit=6
    $region2: #{convnet_forward.5} parent=1 // loop_pre_header
      _
    $region3: #{convnet_forward.5} parent=1 // loop_header
      %s14 = sphi 0, %s18
      %p15 = scmp.ge.s32.totalorder %s14, 6
      %s22 = sphi 0, %s22
      %s24 = sphi 0, %s22
      %s25 = sphi 0, %s24
      %s39 = sphi 0, %s25
      %s45 = sphi 0, %s47
      %s48 = sphi 0, %s45
      %s49 = sphi 0, %s48
      %s65 = sphi 0, %s49
      %s71 = sphi 0, %s73
      %s74 = sphi 0, %s71
      %s75 = sphi 0, %s74
      %s91 = sphi 0, %s75
      %s97 = sphi 0, %s99
      %s100 = sphi 0, %s97
      %s101 = sphi 0, %s100
      %s117 = sphi 0, %s101
      %s121 = sphi 0, %s121
      %s123 = sphi 0, %s121
      %s124 = sphi 0, %s123
      %s138 = sphi 0, %s124
      %s142 = sphi 0, %s142
      %s144 = sphi 0, %s142
      %s145 = sphi 0, %s144
      %s159 = sphi 0, %s145
      %s163 = sphi 0, %s163
      %s165 = sphi 0, %s163
      %s166 = sphi 0, %s165
      %s180 = sphi 0, %s166
      %s184 = sphi 0, %s184
      %s186 = sphi 0, %s184
      %s187 = sphi 0, %s186
      %s201 = sphi 0, %s187
    $region4: #{convnet_forward.5} parent=1 // loop_header_branch
      %17 = sbr.rel (%p15) target = $region8
    $region5: #{convnet_forward.5} parent=1 // loop_body
      %s19 = ssub.s32 %s14, 1
      %s20 = ssub.s32 %s14, 2
      %s21 = sadd.s32 %s14, 1
      %s23 = sadd.s32 %s22, 1
      %p26 = scmp.eq.s32.totalorder %s14, 3
      %p27 = scmp.ne.s32.totalorder %s22, %s24
      %p28 = scmp.eq.s32.totalorder %s14, 0
      %p29 = por %p27, %p28
      %p30 = scmp.ne.s32.totalorder %s22, %s24
      %p31 = scmp.eq.s32.totalorder %s19, 3
      %p32 = por %p30, %p31
      %p33 = scmp.ne.s32.totalorder %s24, %s25
      %p34 = scmp.eq.s32.totalorder %s19, 0
      %p35 = por %p33, %p34
      %p36 = scmp.ne.s32.totalorder %s24, %s25
      %p37 = scmp.eq.s32.totalorder %s20, 3
      %p38 = por %p36, %p37
      %p40 = scmp.ne.s32.totalorder %s25, %s39
      %p41 = scmp.eq.s32.totalorder %s20, 0
      %p42 = por %p40, %p41
      %s43 = ssub.s32 %s14, %s21
      %p44 = scmp.eq.s32.totalorder %s43, 0
      %s46 = sadd.s32 %s45, 1
      %s47 = scalar_select %p44, %s45, %s46
      %p50 = pneg %p44
      %p51 = scmp.eq.s32.totalorder %s14, 3
      %p52 = por %p50, %p51
      %p53 = scmp.ne.s32.totalorder %s45, %s48
      %p54 = scmp.eq.s32.totalorder %s14, 0
      %p55 = por %p53, %p54
      %p56 = scmp.ne.s32.totalorder %s45, %s48
      %p57 = scmp.eq.s32.totalorder %s19, 3
      %p58 = por %p56, %p57
      %p59 = scmp.ne.s32.totalorder %s48, %s49
      %p60 = scmp.eq.s32.totalorder %s19, 0
      %p61 = por %p59, %p60
      %p62 = scmp.ne.s32.totalorder %s48, %s49
      %p63 = scmp.eq.s32.totalorder %s20, 3
      %p64 = por %p62, %p63
      %p66 = scmp.ne.s32.totalorder %s49, %s65
      %p67 = scmp.eq.s32.totalorder %s20, 0
      %p68 = por %p66, %p67
      %s69 = ssub.s32 %s14, %s21
      %p70 = scmp.eq.s32.totalorder %s69, 0
      %s72 = sadd.s32 %s71, 1
      %s73 = scalar_select %p70, %s71, %s72
      %p76 = pneg %p70
      %p77 = scmp.eq.s32.totalorder %s14, 3
      %p78 = por %p76, %p77
      %p79 = scmp.ne.s32.totalorder %s71, %s74
      %p80 = scmp.eq.s32.totalorder %s14, 0
      %p81 = por %p79, %p80
      %p82 = scmp.ne.s32.totalorder %s71, %s74
      %p83 = scmp.eq.s32.totalorder %s19, 3
      %p84 = por %p82, %p83
      %p85 = scmp.ne.s32.totalorder %s74, %s75
      %p86 = scmp.eq.s32.totalorder %s19, 0
      %p87 = por %p85, %p86
      %p88 = scmp.ne.s32.totalorder %s74, %s75
      %p89 = scmp.eq.s32.totalorder %s20, 3
      %p90 = por %p88, %p89
      %p92 = scmp.ne.s32.totalorder %s75, %s91
      %p93 = scmp.eq.s32.totalorder %s20, 0
      %p94 = por %p92, %p93
      %s95 = ssub.s32 %s14, %s21
      %p96 = scmp.eq.s32.totalorder %s95, 0
      %s98 = sadd.s32 %s97, 1
      %s99 = scalar_select %p96, %s97, %s98
      %p102 = pneg %p96
      %p103 = scmp.eq.s32.totalorder %s14, 3
      %p104 = por %p102, %p103
      %p105 = scmp.ne.s32.totalorder %s97, %s100
      %p106 = scmp.eq.s32.totalorder %s14, 0
      %p107 = por %p105, %p106
      %p108 = scmp.ne.s32.totalorder %s97, %s100
      %p109 = scmp.eq.s32.totalorder %s19, 3
      %p110 = por %p108, %p109
      %p111 = scmp.ne.s32.totalorder %s100, %s101
      %p112 = scmp.eq.s32.totalorder %s19, 0
      %p113 = por %p111, %p112
      %p114 = scmp.ne.s32.totalorder %s100, %s101
      %p115 = scmp.eq.s32.totalorder %s20, 3
      %p116 = por %p114, %p115
      %p118 = scmp.ne.s32.totalorder %s101, %s117
      %p119 = scmp.eq.s32.totalorder %s20, 0
      %p120 = por %p118, %p119
      %s122 = sadd.s32 %s121, 1
      %p125 = scmp.eq.s32.totalorder %s14, 3
      %p126 = scmp.ne.s32.totalorder %s121, %s123
      %p127 = scmp.eq.s32.totalorder %s14, 0
      %p128 = por %p126, %p127
      %p129 = scmp.ne.s32.totalorder %s121, %s123
      %p130 = scmp.eq.s32.totalorder %s19, 3
      %p131 = por %p129, %p130
      %p132 = scmp.ne.s32.totalorder %s123, %s124
      %p133 = scmp.eq.s32.totalorder %s19, 0
      %p134 = por %p132, %p133
      %p135 = scmp.ne.s32.totalorder %s123, %s124
      %p136 = scmp.eq.s32.totalorder %s20, 3
      %p137 = por %p135, %p136
      %p139 = scmp.ne.s32.totalorder %s124, %s138
      %p140 = scmp.eq.s32.totalorder %s20, 0
      %p141 = por %p139, %p140
      %s143 = sadd.s32 %s142, 1
      %p146 = scmp.eq.s32.totalorder %s14, 3
      %p147 = scmp.ne.s32.totalorder %s142, %s144
      %p148 = scmp.eq.s32.totalorder %s14, 0
      %p149 = por %p147, %p148
      %p150 = scmp.ne.s32.totalorder %s142, %s144
      %p151 = scmp.eq.s32.totalorder %s19, 3
      %p152 = por %p150, %p151
      %p153 = scmp.ne.s32.totalorder %s144, %s145
      %p154 = scmp.eq.s32.totalorder %s19, 0
      %p155 = por %p153, %p154
      %p156 = scmp.ne.s32.totalorder %s144, %s145
      %p157 = scmp.eq.s32.totalorder %s20, 3
      %p158 = por %p156, %p157
      %p160 = scmp.ne.s32.totalorder %s145, %s159
      %p161 = scmp.eq.s32.totalorder %s20, 0
      %p162 = por %p160, %p161
      %s164 = sadd.s32 %s163, 1
      %p167 = scmp.eq.s32.totalorder %s14, 3
      %p168 = scmp.ne.s32.totalorder %s163, %s165
      %p169 = scmp.eq.s32.totalorder %s14, 0
      %p170 = por %p168, %p169
      %p171 = scmp.ne.s32.totalorder %s163, %s165
      %p172 = scmp.eq.s32.totalorder %s19, 3
      %p173 = por %p171, %p172
      %p174 = scmp.ne.s32.totalorder %s165, %s166
      %p175 = scmp.eq.s32.totalorder %s19, 0
      %p176 = por %p174, %p175
      %p177 = scmp.ne.s32.totalorder %s165, %s166
      %p178 = scmp.eq.s32.totalorder %s20, 3
      %p179 = por %p177, %p178
      %p181 = scmp.ne.s32.totalorder %s166, %s180
      %p182 = scmp.eq.s32.totalorder %s20, 0
      %p183 = por %p181, %p182
      %s185 = sadd.s32 %s184, 1
      %p188 = scmp.eq.s32.totalorder %s14, 3
      %p189 = scmp.ne.s32.totalorder %s184, %s186
      %p190 = scmp.eq.s32.totalorder %s14, 0
      %p191 = por %p189, %p190
      %p192 = scmp.ne.s32.totalorder %s184, %s186
      %p193 = scmp.eq.s32.totalorder %s19, 3
      %p194 = por %p192, %p193
      %p195 = scmp.ne.s32.totalorder %s186, %s187
      %p196 = scmp.eq.s32.totalorder %s19, 0
      %p197 = por %p195, %p196
      %p198 = scmp.ne.s32.totalorder %s186, %s187
      %p199 = scmp.eq.s32.totalorder %s20, 3
      %p200 = por %p198, %p199
      %p202 = scmp.ne.s32.totalorder %s187, %s201
      %p203 = scmp.eq.s32.totalorder %s20, 0
      %p204 = por %p202, %p203
      %p205 = scmp.le.s32.totalorder 1, %s14
      %p206 = scmp.lt.s32.totalorder %s14, 5
      %p207 = pnand %p205, %p206
      %p208 = pneg %p207
      // Predicated region
      $region9: #{convnet_forward.5} parent=5 // pred_check
        _
      $region10: #{convnet_forward.5} parent=5 // pred_check_branch
        %210 = sbr.rel (%p207) target = $region12
      $region11: #{convnet_forward.5} parent=5 // pred_region
        %s211 = ssub.s32 %s14, 1
        // Predicated region
        $region13: #{convnet_forward.5} parent=11 // pred_check
          %p212 = pneg %p35
        $region14: #{convnet_forward.5} parent=11 // pred_check_branch
          %214 = sbr.rel (%p212) target = $region16
        $region15: #{convnet_forward.5} parent=11 // pred_region
          _
        $region16: #{convnet_forward.5} parent=11 // pred_fallthru
          _
        // Predicated region
        $region17: #{convnet_forward.5} parent=11 // pred_check
          %p215 = pneg %p134
        $region18: #{convnet_forward.5} parent=11 // pred_check_branch
          %217 = sbr.rel (%p215) target = $region20
        $region19: #{convnet_forward.5} parent=11 // pred_region
          _
        $region20: #{convnet_forward.5} parent=11 // pred_fallthru
          _
        // Predicated region
        $region21: #{convnet_forward.5} parent=11 // pred_check
          %p218 = pneg %p155
        $region22: #{convnet_forward.5} parent=11 // pred_check_branch
          %220 = sbr.rel (%p218) target = $region24
        $region23: #{convnet_forward.5} parent=11 // pred_region
          _
        $region24: #{convnet_forward.5} parent=11 // pred_fallthru
          _
        // Predicated region
        $region25: #{convnet_forward.5} parent=11 // pred_check
          %p221 = pneg %p176
        $region26: #{convnet_forward.5} parent=11 // pred_check_branch
          %223 = sbr.rel (%p221) target = $region28
        $region27: #{convnet_forward.5} parent=11 // pred_region
          _
        $region28: #{convnet_forward.5} parent=11 // pred_fallthru
          _
      $region12: #{convnet_forward.5} parent=5 // pred_fallthru
        _
      %p224 = scmp.lt.s32.totalorder %s14, 4
      // Predicated region
      $region29: #{convnet_forward.5} parent=5 // pred_check
        %p225 = pneg %p224
      $region30: #{convnet_forward.5} parent=5 // pred_check_branch
        %227 = sbr.rel (%p225) target = $region32
      $region31: #{convnet_forward.5} parent=5 // pred_region
        // Predicated region
        $region33: #{convnet_forward.5} parent=31 // pred_check
          %p228 = pneg %p55
        $region34: #{convnet_forward.5} parent=31 // pred_check_branch
          %230 = sbr.rel (%p228) target = $region36
        $region35: #{convnet_forward.5} parent=31 // pred_region
          %s231 = sand.u32 %s45, 1
          %s232 = sand.u32 %s45, 1
          %s233 = smul.addr %s232, 3200
          %s234 = scalar_lea.vmem [#allocation3], %s233
          %s235 = smul.u32 2, %s14
          %s236 = smul.addr %s235, 4
          %s237 = scalar_lea.vmem %s1, %s236
          // Predicated region
          $region37: #{convnet_forward.5} parent=35 // pred_check
            _
          $region38: #{convnet_forward.5} parent=35 // pred_check_branch
            %239 = sbr.rel (0) target = $region40
          $region39: #{convnet_forward.5} parent=35 // pred_region
            // Predicated region
            $region41: #{convnet_forward.5} parent=39 // pred_check
              _
            $region42: #{convnet_forward.5} parent=39 // pred_check_branch
              %241 = sbr.rel (0) target = $region44
            $region43: #{convnet_forward.5} parent=39 // pred_region
              // Predicated region
              $region56: #{convnet_forward.5} parent=43 // pred_check
                _
              $region57: #{convnet_forward.5} parent=43 // pred_check_branch
                %1054 = sbr.rel (0) target = $region59
              $region58: #{convnet_forward.5} parent=43 // pred_region
                loop: start=0, step=1, limit=1
                $region60: #{convnet_forward.5} parent=58 // loop_pre_header
                  _
                $region61: #{convnet_forward.5} parent=58 // loop_header
                  %s1056 = sphi 0, %s1060
                  %p1057 = scmp.ge.s32.totalorder %s1056, 1
                  %s1061 = sphi %s237, %s237
                  %s1062 = sphi %s234, %s234
                $region62: #{convnet_forward.5} parent=58 // loop_header_branch
                  %1059 = sbr.rel (%p1057) target = $region66
                $region63: #{convnet_forward.5} parent=58 // loop_body
                  %v1063 = vld [vmem:[%s1061] sm:$0xff]
                  %1064 = vst [vmem:[%s1062] sm:$0xff] %v1063
                  %v1065 = vld [vmem:[%s1061 + $0x20] sm:$0xff]
                  %1066 = vst [vmem:[%s1062 + $0x8] sm:$0xff] %v1065
                  %v1067 = vld [vmem:[%s1061 + $0x40] sm:$0xff]
                  %1068 = vst [vmem:[%s1062 + $0x10] sm:$0xff] %v1067
                  %v1069 = vld [vmem:[%s1061 + $0x60] sm:$0xff]
                  %1070 = vst [vmem:[%s1062 + $0x18] sm:$0xff] %v1069
                  %v1071 = vld [vmem:[%s1061 + $0x80] sm:$0xff]
                  %1072 = vst [vmem:[%s1062 + $0x20] sm:$0xff] %v1071
                  %v1073 = vld [vmem:[%s1061 + $0xa0] sm:$0xff]
                  %1074 = vst [vmem:[%s1062 + $0x28] sm:$0xff] %v1073
                  %v1075 = vld [vmem:[%s1061 + $0xc0] sm:$0xff]
                  %1076 = vst [vmem:[%s1062 + $0x30] sm:$0xff] %v1075
                  %v1077 = vld [vmem:[%s1061 + $0xe0] sm:$0xff]
                  %1078 = vst [vmem:[%s1062 + $0x38] sm:$0xff] %v1077
                  %v1079 = vld [vmem:[%s1061 + $0x100] sm:$0xff]
                  %1080 = vst [vmem:[%s1062 + $0x40] sm:$0xff] %v1079
                  %v1081 = vld [vmem:[%s1061 + $0x120] sm:$0xff]
                  %1082 = vst [vmem:[%s1062 + $0x48] sm:$0xff] %v1081
                  %v1083 = vld [vmem:[%s1061 + $0x140] sm:$0xff]
                  %1084 = vst [vmem:[%s1062 + $0x50] sm:$0xff] %v1083
                  %v1085 = vld [vmem:[%s1061 + $0x160] sm:$0xff]
                  %1086 = vst [vmem:[%s1062 + $0x58] sm:$0xff] %v1085
                  %v1087 = vld [vmem:[%s1061 + $0x180] sm:$0xff]
                  %1088 = vst [vmem:[%s1062 + $0x60] sm:$0xff] %v1087
                  %v1089 = vld [vmem:[%s1061 + $0x1a0] sm:$0xff]
                  %1090 = vst [vmem:[%s1062 + $0x68] sm:$0xff] %v1089
                  %v1091 = vld [vmem:[%s1061 + $0x1c0] sm:$0xff]
                  %1092 = vst [vmem:[%s1062 + $0x70] sm:$0xff] %v1091
                  %v1093 = vld [vmem:[%s1061 + $0x1e0] sm:$0xff]
                  %1094 = vst [vmem:[%s1062 + $0x78] sm:$0xff] %v1093
                  %v1095 = vld [vmem:[%s1061 + $0x200] sm:$0xff]
                  %1096 = vst [vmem:[%s1062 + $0x80] sm:$0xff] %v1095
                  %v1097 = vld [vmem:[%s1061 + $0x220] sm:$0xff]
                  %1098 = vst [vmem:[%s1062 + $0x88] sm:$0xff] %v1097
                  %v1099 = vld [vmem:[%s1061 + $0x240] sm:$0xff]
                  %1100 = vst [vmem:[%s1062 + $0x90] sm:$0xff] %v1099
                  %v1101 = vld [vmem:[%s1061 + $0x260] sm:$0xff]
                  %1102 = vst [vmem:[%s1062 + $0x98] sm:$0xff] %v1101
                  %v1103 = vld [vmem:[%s1061 + $0x280] sm:$0xff]
                  %1104 = vst [vmem:[%s1062 + $0xa0] sm:$0xff] %v1103
                  %v1105 = vld [vmem:[%s1061 + $0x2a0] sm:$0xff]
                  %1106 = vst [vmem:[%s1062 + $0xa8] sm:$0xff] %v1105
                  %v1107 = vld [vmem:[%s1061 + $0x2c0] sm:$0xff]
                  %1108 = vst [vmem:[%s1062 + $0xb0] sm:$0xff] %v1107
                  %v1109 = vld [vmem:[%s1061 + $0x2e0] sm:$0xff]
                  %1110 = vst [vmem:[%s1062 + $0xb8] sm:$0xff] %v1109
                  %v1111 = vld [vmem:[%s1061 + $0x300] sm:$0xff]
                  %1112 = vst [vmem:[%s1062 + $0xc0] sm:$0xff] %v1111
                  %v1113 = vld [vmem:[%s1061 + $0x320] sm:$0xff]
                  %1114 = vst [vmem:[%s1062 + $0xc8] sm:$0xff] %v1113
                  %v1115 = vld [vmem:[%s1061 + $0x340] sm:$0xff]
                  %1116 = vst [vmem:[%s1062 + $0xd0] sm:$0xff] %v1115
                  %v1117 = vld [vmem:[%s1061 + $0x360] sm:$0xff]
                  %1118 = vst [vmem:[%s1062 + $0xd8] sm:$0xff] %v1117
                  %v1119 = vld [vmem:[%s1061 + $0x380] sm:$0xff]
                  %1120 = vst [vmem:[%s1062 + $0xe0] sm:$0xff] %v1119
                  %v1121 = vld [vmem:[%s1061 + $0x3a0] sm:$0xff]
                  %1122 = vst [vmem:[%s1062 + $0xe8] sm:$0xff] %v1121
                  %v1123 = vld [vmem:[%s1061 + $0x3c0] sm:$0xff]
                  %1124 = vst [vmem:[%s1062 + $0xf0] sm:$0xff] %v1123
                  %v1125 = vld [vmem:[%s1061 + $0x3e0] sm:$0xff]
                  %1126 = vst [vmem:[%s1062 + $0xf8] sm:$0xff] %v1125
                  %v1127 = vld [vmem:[%s1061 + $0x400] sm:$0xff]
                  %1128 = vst [vmem:[%s1062 + $0x100] sm:$0xff] %v1127
                  %v1129 = vld [vmem:[%s1061 + $0x420] sm:$0xff]
                  %1130 = vst [vmem:[%s1062 + $0x108] sm:$0xff] %v1129
                  %v1131 = vld [vmem:[%s1061 + $0x440] sm:$0xff]
                  %1132 = vst [vmem:[%s1062 + $0x110] sm:$0xff] %v1131
                  %v1133 = vld [vmem:[%s1061 + $0x460] sm:$0xff]
                  %1134 = vst [vmem:[%s1062 + $0x118] sm:$0xff] %v1133
                  %v1135 = vld [vmem:[%s1061 + $0x480] sm:$0xff]
                  %1136 = vst [vmem:[%s1062 + $0x120] sm:$0xff] %v1135
                  %v1137 = vld [vmem:[%s1061 + $0x4a0] sm:$0xff]
                  %1138 = vst [vmem:[%s1062 + $0x128] sm:$0xff] %v1137
                  %v1139 = vld [vmem:[%s1061 + $0x4c0] sm:$0xff]
                  %1140 = vst [vmem:[%s1062 + $0x130] sm:$0xff] %v1139
                  %v1141 = vld [vmem:[%s1061 + $0x4e0] sm:$0xff]
                  %1142 = vst [vmem:[%s1062 + $0x138] sm:$0xff] %v1141
                  %v1143 = vld [vmem:[%s1061 + $0x500] sm:$0xff]
                  %1144 = vst [vmem:[%s1062 + $0x140] sm:$0xff] %v1143
                  %v1145 = vld [vmem:[%s1061 + $0x520] sm:$0xff]
                  %1146 = vst [vmem:[%s1062 + $0x148] sm:$0xff] %v1145
                  %v1147 = vld [vmem:[%s1061 + $0x540] sm:$0xff]
                  %1148 = vst [vmem:[%s1062 + $0x150] sm:$0xff] %v1147
                  %v1149 = vld [vmem:[%s1061 + $0x560] sm:$0xff]
                  %1150 = vst [vmem:[%s1062 + $0x158] sm:$0xff] %v1149
                  %v1151 = vld [vmem:[%s1061 + $0x580] sm:$0xff]
                  %1152 = vst [vmem:[%s1062 + $0x160] sm:$0xff] %v1151
                  %v1153 = vld [vmem:[%s1061 + $0x5a0] sm:$0xff]
                  %1154 = vst [vmem:[%s1062 + $0x168] sm:$0xff] %v1153
                  %v1155 = vld [vmem:[%s1061 + $0x5c0] sm:$0xff]
                  %1156 = vst [vmem:[%s1062 + $0x170] sm:$0xff] %v1155
                  %v1157 = vld [vmem:[%s1061 + $0x5e0] sm:$0xff]
                  %1158 = vst [vmem:[%s1062 + $0x178] sm:$0xff] %v1157
                  %v1159 = vld [vmem:[%s1061 + $0x600] sm:$0xff]
                  %1160 = vst [vmem:[%s1062 + $0x180] sm:$0xff] %v1159
                  %v1161 = vld [vmem:[%s1061 + $0x620] sm:$0xff]
                  %1162 = vst [vmem:[%s1062 + $0x188] sm:$0xff] %v1161
                  %v1163 = vld [vmem:[%s1061 + $0x640] sm:$0xff]
                  %1164 = vst [vmem:[%s1062 + $0x190] sm:$0xff] %v1163
                  %v1165 = vld [vmem:[%s1061 + $0x660] sm:$0xff]
                  %1166 = vst [vmem:[%s1062 + $0x198] sm:$0xff] %v1165
                  %v1167 = vld [vmem:[%s1061 + $0x680] sm:$0xff]
                  %1168 = vst [vmem:[%s1062 + $0x1a0] sm:$0xff] %v1167
                  %v1169 = vld [vmem:[%s1061 + $0x6a0] sm:$0xff]
                  %1170 = vst [vmem:[%s1062 + $0x1a8] sm:$0xff] %v1169
                  %v1171 = vld [vmem:[%s1061 + $0x6c0] sm:$0xff]
                  %1172 = vst [vmem:[%s1062 + $0x1b0] sm:$0xff] %v1171
                  %v1173 = vld [vmem:[%s1061 + $0x6e0] sm:$0xff]
                  %1174 = vst [vmem:[%s1062 + $0x1b8] sm:$0xff] %v1173
                  %v1175 = vld [vmem:[%s1061 + $0x700] sm:$0xff]
                  %1176 = vst [vmem:[%s1062 + $0x1c0] sm:$0xff] %v1175
                  %v1177 = vld [vmem:[%s1061 + $0x720] sm:$0xff]
                  %1178 = vst [vmem:[%s1062 + $0x1c8] sm:$0xff] %v1177
                  %v1179 = vld [vmem:[%s1061 + $0x740] sm:$0xff]
                  %1180 = vst [vmem:[%s1062 + $0x1d0] sm:$0xff] %v1179
                  %v1181 = vld [vmem:[%s1061 + $0x760] sm:$0xff]
                  %1182 = vst [vmem:[%s1062 + $0x1d8] sm:$0xff] %v1181
                  %v1183 = vld [vmem:[%s1061 + $0x780] sm:$0xff]
                  %1184 = vst [vmem:[%s1062 + $0x1e0] sm:$0xff] %v1183
                  %v1185 = vld [vmem:[%s1061 + $0x7a0] sm:$0xff]
                  %1186 = vst [vmem:[%s1062 + $0x1e8] sm:$0xff] %v1185
                  %v1187 = vld [vmem:[%s1061 + $0x7c0] sm:$0xff]
                  %1188 = vst [vmem:[%s1062 + $0x1f0] sm:$0xff] %v1187
                  %v1189 = vld [vmem:[%s1061 + $0x7e0] sm:$0xff]
                  %1190 = vst [vmem:[%s1062 + $0x1f8] sm:$0xff] %v1189
                  %v1191 = vld [vmem:[%s1061 + $0x800] sm:$0xff]
                  %1192 = vst [vmem:[%s1062 + $0x200] sm:$0xff] %v1191
                  %v1193 = vld [vmem:[%s1061 + $0x820] sm:$0xff]
                  %1194 = vst [vmem:[%s1062 + $0x208] sm:$0xff] %v1193
                  %v1195 = vld [vmem:[%s1061 + $0x840] sm:$0xff]
                  %1196 = vst [vmem:[%s1062 + $0x210] sm:$0xff] %v1195
                  %v1197 = vld [vmem:[%s1061 + $0x860] sm:$0xff]
                  %1198 = vst [vmem:[%s1062 + $0x218] sm:$0xff] %v1197
                  %v1199 = vld [vmem:[%s1061 + $0x880] sm:$0xff]
                  %1200 = vst [vmem:[%s1062 + $0x220] sm:$0xff] %v1199
                  %v1201 = vld [vmem:[%s1061 + $0x8a0] sm:$0xff]
                  %1202 = vst [vmem:[%s1062 + $0x228] sm:$0xff] %v1201
                  %v1203 = vld [vmem:[%s1061 + $0x8c0] sm:$0xff]
                  %1204 = vst [vmem:[%s1062 + $0x230] sm:$0xff] %v1203
                  %v1205 = vld [vmem:[%s1061 + $0x8e0] sm:$0xff]
                  %1206 = vst [vmem:[%s1062 + $0x238] sm:$0xff] %v1205
                  %v1207 = vld [vmem:[%s1061 + $0x900] sm:$0xff]
                  %1208 = vst [vmem:[%s1062 + $0x240] sm:$0xff] %v1207
                  %v1209 = vld [vmem:[%s1061 + $0x920] sm:$0xff]
                  %1210 = vst [vmem:[%s1062 + $0x248] sm:$0xff] %v1209
                  %v1211 = vld [vmem:[%s1061 + $0x940] sm:$0xff]
                  %1212 = vst [vmem:[%s1062 + $0x250] sm:$0xff] %v1211
                  %v1213 = vld [vmem:[%s1061 + $0x960] sm:$0xff]
                  %1214 = vst [vmem:[%s1062 + $0x258] sm:$0xff] %v1213
                  %v1215 = vld [vmem:[%s1061 + $0x980] sm:$0xff]
                  %1216 = vst [vmem:[%s1062 + $0x260] sm:$0xff] %v1215
                  %v1217 = vld [vmem:[%s1061 + $0x9a0] sm:$0xff]
                  %1218 = vst [vmem:[%s1062 + $0x268] sm:$0xff] %v1217
                  %v1219 = vld [vmem:[%s1061 + $0x9c0] sm:$0xff]
                  %1220 = vst [vmem:[%s1062 + $0x270] sm:$0xff] %v1219
                  %v1221 = vld [vmem:[%s1061 + $0x9e0] sm:$0xff]
                  %1222 = vst [vmem:[%s1062 + $0x278] sm:$0xff] %v1221
                  %v1223 = vld [vmem:[%s1061 + $0xa00] sm:$0xff]
                  %1224 = vst [vmem:[%s1062 + $0x280] sm:$0xff] %v1223
                  %v1225 = vld [vmem:[%s1061 + $0xa20] sm:$0xff]
                  %1226 = vst [vmem:[%s1062 + $0x288] sm:$0xff] %v1225
                  %v1227 = vld [vmem:[%s1061 + $0xa40] sm:$0xff]
                  %1228 = vst [vmem:[%s1062 + $0x290] sm:$0xff] %v1227
                  %v1229 = vld [vmem:[%s1061 + $0xa60] sm:$0xff]
                  %1230 = vst [vmem:[%s1062 + $0x298] sm:$0xff] %v1229
                  %v1231 = vld [vmem:[%s1061 + $0xa80] sm:$0xff]
                  %1232 = vst [vmem:[%s1062 + $0x2a0] sm:$0xff] %v1231
                  %v1233 = vld [vmem:[%s1061 + $0xaa0] sm:$0xff]
                  %1234 = vst [vmem:[%s1062 + $0x2a8] sm:$0xff] %v1233
                  %v1235 = vld [vmem:[%s1061 + $0xac0] sm:$0xff]
                  %1236 = vst [vmem:[%s1062 + $0x2b0] sm:$0xff] %v1235
                  %v1237 = vld [vmem:[%s1061 + $0xae0] sm:$0xff]
                  %1238 = vst [vmem:[%s1062 + $0x2b8] sm:$0xff] %v1237
                  %v1239 = vld [vmem:[%s1061 + $0xb00] sm:$0xff]
                  %1240 = vst [vmem:[%s1062 + $0x2c0] sm:$0xff] %v1239
                  %v1241 = vld [vmem:[%s1061 + $0xb20] sm:$0xff]
                  %1242 = vst [vmem:[%s1062 + $0x2c8] sm:$0xff] %v1241
                  %v1243 = vld [vmem:[%s1061 + $0xb40] sm:$0xff]
                  %1244 = vst [vmem:[%s1062 + $0x2d0] sm:$0xff] %v1243
                  %v1245 = vld [vmem:[%s1061 + $0xb60] sm:$0xff]
                  %1246 = vst [vmem:[%s1062 + $0x2d8] sm:$0xff] %v1245
                  %v1247 = vld [vmem:[%s1061 + $0xb80] sm:$0xff]
                  %1248 = vst [vmem:[%s1062 + $0x2e0] sm:$0xff] %v1247
                  %v1249 = vld [vmem:[%s1061 + $0xba0] sm:$0xff]
                  %1250 = vst [vmem:[%s1062 + $0x2e8] sm:$0xff] %v1249
                  %v1251 = vld [vmem:[%s1061 + $0xbc0] sm:$0xff]
                  %1252 = vst [vmem:[%s1062 + $0x2f0] sm:$0xff] %v1251
                  %v1253 = vld [vmem:[%s1061 + $0xbe0] sm:$0xff]
                  %1254 = vst [vmem:[%s1062 + $0x2f8] sm:$0xff] %v1253
                  %v1255 = vld [vmem:[%s1061 + $0xc00] sm:$0xff]
                  %1256 = vst [vmem:[%s1062 + $0x300] sm:$0xff] %v1255
                  %v1257 = vld [vmem:[%s1061 + $0xc20] sm:$0xff]
                  %1258 = vst [vmem:[%s1062 + $0x308] sm:$0xff] %v1257
                  %v1259 = vld [vmem:[%s1061 + $0xc40] sm:$0xff]
                  %1260 = vst [vmem:[%s1062 + $0x310] sm:$0xff] %v1259
                  %v1261 = vld [vmem:[%s1061 + $0xc60] sm:$0xff]
                  %1262 = vst [vmem:[%s1062 + $0x318] sm:$0xff] %v1261
                  %v1263 = vld [vmem:[%s1061 + $0xc80] sm:$0xff]
                  %1264 = vst [vmem:[%s1062 + $0x320] sm:$0xff] %v1263
                  %v1265 = vld [vmem:[%s1061 + $0xca0] sm:$0xff]
                  %1266 = vst [vmem:[%s1062 + $0x328] sm:$0xff] %v1265
                  %v1267 = vld [vmem:[%s1061 + $0xcc0] sm:$0xff]
                  %1268 = vst [vmem:[%s1062 + $0x330] sm:$0xff] %v1267
                  %v1269 = vld [vmem:[%s1061 + $0xce0] sm:$0xff]
                  %1270 = vst [vmem:[%s1062 + $0x338] sm:$0xff] %v1269
                  %v1271 = vld [vmem:[%s1061 + $0xd00] sm:$0xff]
                  %1272 = vst [vmem:[%s1062 + $0x340] sm:$0xff] %v1271
                  %v1273 = vld [vmem:[%s1061 + $0xd20] sm:$0xff]
                  %1274 = vst [vmem:[%s1062 + $0x348] sm:$0xff] %v1273
                  %v1275 = vld [vmem:[%s1061 + $0xd40] sm:$0xff]
                  %1276 = vst [vmem:[%s1062 + $0x350] sm:$0xff] %v1275
                  %v1277 = vld [vmem:[%s1061 + $0xd60] sm:$0xff]
                  %1278 = vst [vmem:[%s1062 + $0x358] sm:$0xff] %v1277
                  %v1279 = vld [vmem:[%s1061 + $0xd80] sm:$0xff]
                  %1280 = vst [vmem:[%s1062 + $0x360] sm:$0xff] %v1279
                  %v1281 = vld [vmem:[%s1061 + $0xda0] sm:$0xff]
                  %1282 = vst [vmem:[%s1062 + $0x368] sm:$0xff] %v1281
                  %v1283 = vld [vmem:[%s1061 + $0xdc0] sm:$0xff]
                  %1284 = vst [vmem:[%s1062 + $0x370] sm:$0xff] %v1283
                  %v1285 = vld [vmem:[%s1061 + $0xde0] sm:$0xff]
                  %1286 = vst [vmem:[%s1062 + $0x378] sm:$0xff] %v1285
                  %v1287 = vld [vmem:[%s1061 + $0xe00] sm:$0xff]
                  %1288 = vst [vmem:[%s1062 + $0x380] sm:$0xff] %v1287
                  %v1289 = vld [vmem:[%s1061 + $0xe20] sm:$0xff]
                  %1290 = vst [vmem:[%s1062 + $0x388] sm:$0xff] %v1289
                  %v1291 = vld [vmem:[%s1061 + $0xe40] sm:$0xff]
                  %1292 = vst [vmem:[%s1062 + $0x390] sm:$0xff] %v1291
                  %v1293 = vld [vmem:[%s1061 + $0xe60] sm:$0xff]
                  %1294 = vst [vmem:[%s1062 + $0x398] sm:$0xff] %v1293
                  %v1295 = vld [vmem:[%s1061 + $0xe80] sm:$0xff]
                  %1296 = vst [vmem:[%s1062 + $0x3a0] sm:$0xff] %v1295
                  %v1297 = vld [vmem:[%s1061 + $0xea0] sm:$0xff]
                  %1298 = vst [vmem:[%s1062 + $0x3a8] sm:$0xff] %v1297
                  %v1299 = vld [vmem:[%s1061 + $0xec0] sm:$0xff]
                  %1300 = vst [vmem:[%s1062 + $0x3b0] sm:$0xff] %v1299
                  %v1301 = vld [vmem:[%s1061 + $0xee0] sm:$0xff]
                  %1302 = vst [vmem:[%s1062 + $0x3b8] sm:$0xff] %v1301
                  %v1303 = vld [vmem:[%s1061 + $0xf00] sm:$0xff]
                  %1304 = vst [vmem:[%s1062 + $0x3c0] sm:$0xff] %v1303
                  %v1305 = vld [vmem:[%s1061 + $0xf20] sm:$0xff]
                  %1306 = vst [vmem:[%s1062 + $0x3c8] sm:$0xff] %v1305
                  %v1307 = vld [vmem:[%s1061 + $0xf40] sm:$0xff]
                  %1308 = vst [vmem:[%s1062 + $0x3d0] sm:$0xff] %v1307
                  %v1309 = vld [vmem:[%s1061 + $0xf60] sm:$0xff]
                  %1310 = vst [vmem:[%s1062 + $0x3d8] sm:$0xff] %v1309
                  %v1311 = vld [vmem:[%s1061 + $0xf80] sm:$0xff]
                  %1312 = vst [vmem:[%s1062 + $0x3e0] sm:$0xff] %v1311
                  %v1313 = vld [vmem:[%s1061 + $0xfa0] sm:$0xff]
                  %1314 = vst [vmem:[%s1062 + $0x3e8] sm:$0xff] %v1313
                  %v1315 = vld [vmem:[%s1061 + $0xfc0] sm:$0xff]
                  %1316 = vst [vmem:[%s1062 + $0x3f0] sm:$0xff] %v1315
                  %v1317 = vld [vmem:[%s1061 + $0xfe0] sm:$0xff]
                  %1318 = vst [vmem:[%s1062 + $0x3f8] sm:$0xff] %v1317
                  %v1319 = vld [vmem:[%s1061 + $0x1000] sm:$0xff]
                  %1320 = vst [vmem:[%s1062 + $0x400] sm:$0xff] %v1319
                  %v1321 = vld [vmem:[%s1061 + $0x1020] sm:$0xff]
                  %1322 = vst [vmem:[%s1062 + $0x408] sm:$0xff] %v1321
                  %v1323 = vld [vmem:[%s1061 + $0x1040] sm:$0xff]
                  %1324 = vst [vmem:[%s1062 + $0x410] sm:$0xff] %v1323
                  %v1325 = vld [vmem:[%s1061 + $0x1060] sm:$0xff]
                  %1326 = vst [vmem:[%s1062 + $0x418] sm:$0xff] %v1325
                  %v1327 = vld [vmem:[%s1061 + $0x1080] sm:$0xff]
                  %1328 = vst [vmem:[%s1062 + $0x420] sm:$0xff] %v1327
                  %v1329 = vld [vmem:[%s1061 + $0x10a0] sm:$0xff]
                  %1330 = vst [vmem:[%s1062 + $0x428] sm:$0xff] %v1329
                  %v1331 = vld [vmem:[%s1061 + $0x10c0] sm:$0xff]
                  %1332 = vst [vmem:[%s1062 + $0x430] sm:$0xff] %v1331
                  %v1333 = vld [vmem:[%s1061 + $0x10e0] sm:$0xff]
                  %1334 = vst [vmem:[%s1062 + $0x438] sm:$0xff] %v1333
                  %v1335 = vld [vmem:[%s1061 + $0x1100] sm:$0xff]
                  %1336 = vst [vmem:[%s1062 + $0x440] sm:$0xff] %v1335
                  %v1337 = vld [vmem:[%s1061 + $0x1120] sm:$0xff]
                  %1338 = vst [vmem:[%s1062 + $0x448] sm:$0xff] %v1337
                  %v1339 = vld [vmem:[%s1061 + $0x1140] sm:$0xff]
                  %1340 = vst [vmem:[%s1062 + $0x450] sm:$0xff] %v1339
                  %v1341 = vld [vmem:[%s1061 + $0x1160] sm:$0xff]
                  %1342 = vst [vmem:[%s1062 + $0x458] sm:$0xff] %v1341
                  %v1343 = vld [vmem:[%s1061 + $0x1180] sm:$0xff]
                  %1344 = vst [vmem:[%s1062 + $0x460] sm:$0xff] %v1343
                  %v1345 = vld [vmem:[%s1061 + $0x11a0] sm:$0xff]
                  %1346 = vst [vmem:[%s1062 + $0x468] sm:$0xff] %v1345
                  %v1347 = vld [vmem:[%s1061 + $0x11c0] sm:$0xff]
                  %1348 = vst [vmem:[%s1062 + $0x470] sm:$0xff] %v1347
                  %v1349 = vld [vmem:[%s1061 + $0x11e0] sm:$0xff]
                  %1350 = vst [vmem:[%s1062 + $0x478] sm:$0xff] %v1349
                  %v1351 = vld [vmem:[%s1061 + $0x1200] sm:$0xff]
                  %1352 = vst [vmem:[%s1062 + $0x480] sm:$0xff] %v1351
                  %v1353 = vld [vmem:[%s1061 + $0x1220] sm:$0xff]
                  %1354 = vst [vmem:[%s1062 + $0x488] sm:$0xff] %v1353
                  %v1355 = vld [vmem:[%s1061 + $0x1240] sm:$0xff]
                  %1356 = vst [vmem:[%s1062 + $0x490] sm:$0xff] %v1355
                  %v1357 = vld [vmem:[%s1061 + $0x1260] sm:$0xff]
                  %1358 = vst [vmem:[%s1062 + $0x498] sm:$0xff] %v1357
                  %v1359 = vld [vmem:[%s1061 + $0x1280] sm:$0xff]
                  %1360 = vst [vmem:[%s1062 + $0x4a0] sm:$0xff] %v1359
                  %v1361 = vld [vmem:[%s1061 + $0x12a0] sm:$0xff]
                  %1362 = vst [vmem:[%s1062 + $0x4a8] sm:$0xff] %v1361
                  %v1363 = vld [vmem:[%s1061 + $0x12c0] sm:$0xff]
                  %1364 = vst [vmem:[%s1062 + $0x4b0] sm:$0xff] %v1363
                  %v1365 = vld [vmem:[%s1061 + $0x12e0] sm:$0xff]
                  %1366 = vst [vmem:[%s1062 + $0x4b8] sm:$0xff] %v1365
                  %v1367 = vld [vmem:[%s1061 + $0x1300] sm:$0xff]
                  %1368 = vst [vmem:[%s1062 + $0x4c0] sm:$0xff] %v1367
                  %v1369 = vld [vmem:[%s1061 + $0x1320] sm:$0xff]
                  %1370 = vst [vmem:[%s1062 + $0x4c8] sm:$0xff] %v1369
                  %v1371 = vld [vmem:[%s1061 + $0x1340] sm:$0xff]
                  %1372 = vst [vmem:[%s1062 + $0x4d0] sm:$0xff] %v1371
                  %v1373 = vld [vmem:[%s1061 + $0x1360] sm:$0xff]
                  %1374 = vst [vmem:[%s1062 + $0x4d8] sm:$0xff] %v1373
                  %v1375 = vld [vmem:[%s1061 + $0x1380] sm:$0xff]
                  %1376 = vst [vmem:[%s1062 + $0x4e0] sm:$0xff] %v1375
                  %v1377 = vld [vmem:[%s1061 + $0x13a0] sm:$0xff]
                  %1378 = vst [vmem:[%s1062 + $0x4e8] sm:$0xff] %v1377
                  %v1379 = vld [vmem:[%s1061 + $0x13c0] sm:$0xff]
                  %1380 = vst [vmem:[%s1062 + $0x4f0] sm:$0xff] %v1379
                  %v1381 = vld [vmem:[%s1061 + $0x13e0] sm:$0xff]
                  %1382 = vst [vmem:[%s1062 + $0x4f8] sm:$0xff] %v1381
                  %v1383 = vld [vmem:[%s1061 + $0x1400] sm:$0xff]
                  %1384 = vst [vmem:[%s1062 + $0x500] sm:$0xff] %v1383
                  %v1385 = vld [vmem:[%s1061 + $0x1420] sm:$0xff]
                  %1386 = vst [vmem:[%s1062 + $0x508] sm:$0xff] %v1385
                  %v1387 = vld [vmem:[%s1061 + $0x1440] sm:$0xff]
                  %1388 = vst [vmem:[%s1062 + $0x510] sm:$0xff] %v1387
                  %v1389 = vld [vmem:[%s1061 + $0x1460] sm:$0xff]
                  %1390 = vst [vmem:[%s1062 + $0x518] sm:$0xff] %v1389
                  %v1391 = vld [vmem:[%s1061 + $0x1480] sm:$0xff]
                  %1392 = vst [vmem:[%s1062 + $0x520] sm:$0xff] %v1391
                  %v1393 = vld [vmem:[%s1061 + $0x14a0] sm:$0xff]
                  %1394 = vst [vmem:[%s1062 + $0x528] sm:$0xff] %v1393
                  %v1395 = vld [vmem:[%s1061 + $0x14c0] sm:$0xff]
                  %1396 = vst [vmem:[%s1062 + $0x530] sm:$0xff] %v1395
                  %v1397 = vld [vmem:[%s1061 + $0x14e0] sm:$0xff]
                  %1398 = vst [vmem:[%s1062 + $0x538] sm:$0xff] %v1397
                  %v1399 = vld [vmem:[%s1061 + $0x1500] sm:$0xff]
                  %1400 = vst [vmem:[%s1062 + $0x540] sm:$0xff] %v1399
                  %v1401 = vld [vmem:[%s1061 + $0x1520] sm:$0xff]
                  %1402 = vst [vmem:[%s1062 + $0x548] sm:$0xff] %v1401
                  %v1403 = vld [vmem:[%s1061 + $0x1540] sm:$0xff]
                  %1404 = vst [vmem:[%s1062 + $0x550] sm:$0xff] %v1403
                  %v1405 = vld [vmem:[%s1061 + $0x1560] sm:$0xff]
                  %1406 = vst [vmem:[%s1062 + $0x558] sm:$0xff] %v1405
                  %v1407 = vld [vmem:[%s1061 + $0x1580] sm:$0xff]
                  %1408 = vst [vmem:[%s1062 + $0x560] sm:$0xff] %v1407
                  %v1409 = vld [vmem:[%s1061 + $0x15a0] sm:$0xff]
                  %1410 = vst [vmem:[%s1062 + $0x568] sm:$0xff] %v1409
                  %v1411 = vld [vmem:[%s1061 + $0x15c0] sm:$0xff]
                  %1412 = vst [vmem:[%s1062 + $0x570] sm:$0xff] %v1411
                  %v1413 = vld [vmem:[%s1061 + $0x15e0] sm:$0xff]
                  %1414 = vst [vmem:[%s1062 + $0x578] sm:$0xff] %v1413
                  %v1415 = vld [vmem:[%s1061 + $0x1600] sm:$0xff]
                  %1416 = vst [vmem:[%s1062 + $0x580] sm:$0xff] %v1415
                  %v1417 = vld [vmem:[%s1061 + $0x1620] sm:$0xff]
                  %1418 = vst [vmem:[%s1062 + $0x588] sm:$0xff] %v1417
                  %v1419 = vld [vmem:[%s1061 + $0x1640] sm:$0xff]
                  %1420 = vst [vmem:[%s1062 + $0x590] sm:$0xff] %v1419
                  %v1421 = vld [vmem:[%s1061 + $0x1660] sm:$0xff]
                  %1422 = vst [vmem:[%s1062 + $0x598] sm:$0xff] %v1421
                  %v1423 = vld [vmem:[%s1061 + $0x1680] sm:$0xff]
                  %1424 = vst [vmem:[%s1062 + $0x5a0] sm:$0xff] %v1423
                  %v1425 = vld [vmem:[%s1061 + $0x16a0] sm:$0xff]
                  %1426 = vst [vmem:[%s1062 + $0x5a8] sm:$0xff] %v1425
                  %v1427 = vld [vmem:[%s1061 + $0x16c0] sm:$0xff]
                  %1428 = vst [vmem:[%s1062 + $0x5b0] sm:$0xff] %v1427
                  %v1429 = vld [vmem:[%s1061 + $0x16e0] sm:$0xff]
                  %1430 = vst [vmem:[%s1062 + $0x5b8] sm:$0xff] %v1429
                  %v1431 = vld [vmem:[%s1061 + $0x1700] sm:$0xff]
                  %1432 = vst [vmem:[%s1062 + $0x5c0] sm:$0xff] %v1431
                  %v1433 = vld [vmem:[%s1061 + $0x1720] sm:$0xff]
                  %1434 = vst [vmem:[%s1062 + $0x5c8] sm:$0xff] %v1433
                  %v1435 = vld [vmem:[%s1061 + $0x1740] sm:$0xff]
                  %1436 = vst [vmem:[%s1062 + $0x5d0] sm:$0xff] %v1435
                  %v1437 = vld [vmem:[%s1061 + $0x1760] sm:$0xff]
                  %1438 = vst [vmem:[%s1062 + $0x5d8] sm:$0xff] %v1437
                  %v1439 = vld [vmem:[%s1061 + $0x1780] sm:$0xff]
                  %1440 = vst [vmem:[%s1062 + $0x5e0] sm:$0xff] %v1439
                  %v1441 = vld [vmem:[%s1061 + $0x17a0] sm:$0xff]
                  %1442 = vst [vmem:[%s1062 + $0x5e8] sm:$0xff] %v1441
                  %v1443 = vld [vmem:[%s1061 + $0x17c0] sm:$0xff]
                  %1444 = vst [vmem:[%s1062 + $0x5f0] sm:$0xff] %v1443
                  %v1445 = vld [vmem:[%s1061 + $0x17e0] sm:$0xff]
                  %1446 = vst [vmem:[%s1062 + $0x5f8] sm:$0xff] %v1445
                  %v1447 = vld [vmem:[%s1061 + $0x1800] sm:$0xff]
                  %1448 = vst [vmem:[%s1062 + $0x600] sm:$0xff] %v1447
                  %v1449 = vld [vmem:[%s1061 + $0x1820] sm:$0xff]
                  %1450 = vst [vmem:[%s1062 + $0x608] sm:$0xff] %v1449
                  %v1451 = vld [vmem:[%s1061 + $0x1840] sm:$0xff]
                  %1452 = vst [vmem:[%s1062 + $0x610] sm:$0xff] %v1451
                  %v1453 = vld [vmem:[%s1061 + $0x1860] sm:$0xff]
                  %1454 = vst [vmem:[%s1062 + $0x618] sm:$0xff] %v1453
                  %v1455 = vld [vmem:[%s1061 + $0x1880] sm:$0xff]
                  %1456 = vst [vmem:[%s1062 + $0x620] sm:$0xff] %v1455
                  %v1457 = vld [vmem:[%s1061 + $0x18a0] sm:$0xff]
                  %1458 = vst [vmem:[%s1062 + $0x628] sm:$0xff] %v1457
                  %v1459 = vld [vmem:[%s1061 + $0x18c0] sm:$0xff]
                  %1460 = vst [vmem:[%s1062 + $0x630] sm:$0xff] %v1459
                  %v1461 = vld [vmem:[%s1061 + $0x18e0] sm:$0xff]
                  %1462 = vst [vmem:[%s1062 + $0x638] sm:$0xff] %v1461
                  %v1463 = vld [vmem:[%s1061 + $0x1900] sm:$0xff]
                  %1464 = vst [vmem:[%s1062 + $0x640] sm:$0xff] %v1463
                  %v1465 = vld [vmem:[%s1061 + $0x1920] sm:$0xff]
                  %1466 = vst [vmem:[%s1062 + $0x648] sm:$0xff] %v1465
                  %v1467 = vld [vmem:[%s1061 + $0x1940] sm:$0xff]
                  %1468 = vst [vmem:[%s1062 + $0x650] sm:$0xff] %v1467
                  %v1469 = vld [vmem:[%s1061 + $0x1960] sm:$0xff]
                  %1470 = vst [vmem:[%s1062 + $0x658] sm:$0xff] %v1469
                  %v1471 = vld [vmem:[%s1061 + $0x1980] sm:$0xff]
                  %1472 = vst [vmem:[%s1062 + $0x660] sm:$0xff] %v1471
                  %v1473 = vld [vmem:[%s1061 + $0x19a0] sm:$0xff]
                  %1474 = vst [vmem:[%s1062 + $0x668] sm:$0xff] %v1473
                  %v1475 = vld [vmem:[%s1061 + $0x19c0] sm:$0xff]
                  %1476 = vst [vmem:[%s1062 + $0x670] sm:$0xff] %v1475
                  %v1477 = vld [vmem:[%s1061 + $0x19e0] sm:$0xff]
                  %1478 = vst [vmem:[%s1062 + $0x678] sm:$0xff] %v1477
                  %v1479 = vld [vmem:[%s1061 + $0x1a00] sm:$0xff]
                  %1480 = vst [vmem:[%s1062 + $0x680] sm:$0xff] %v1479
                  %v1481 = vld [vmem:[%s1061 + $0x1a20] sm:$0xff]
                  %1482 = vst [vmem:[%s1062 + $0x688] sm:$0xff] %v1481
                  %v1483 = vld [vmem:[%s1061 + $0x1a40] sm:$0xff]
                  %1484 = vst [vmem:[%s1062 + $0x690] sm:$0xff] %v1483
                  %v1485 = vld [vmem:[%s1061 + $0x1a60] sm:$0xff]
                  %1486 = vst [vmem:[%s1062 + $0x698] sm:$0xff] %v1485
                  %v1487 = vld [vmem:[%s1061 + $0x1a80] sm:$0xff]
                  %1488 = vst [vmem:[%s1062 + $0x6a0] sm:$0xff] %v1487
                  %v1489 = vld [vmem:[%s1061 + $0x1aa0] sm:$0xff]
                  %1490 = vst [vmem:[%s1062 + $0x6a8] sm:$0xff] %v1489
                  %v1491 = vld [vmem:[%s1061 + $0x1ac0] sm:$0xff]
                  %1492 = vst [vmem:[%s1062 + $0x6b0] sm:$0xff] %v1491
                  %v1493 = vld [vmem:[%s1061 + $0x1ae0] sm:$0xff]
                  %1494 = vst [vmem:[%s1062 + $0x6b8] sm:$0xff] %v1493
                  %v1495 = vld [vmem:[%s1061 + $0x1b00] sm:$0xff]
                  %1496 = vst [vmem:[%s1062 + $0x6c0] sm:$0xff] %v1495
                  %v1497 = vld [vmem:[%s1061 + $0x1b20] sm:$0xff]
                  %1498 = vst [vmem:[%s1062 + $0x6c8] sm:$0xff] %v1497
                  %v1499 = vld [vmem:[%s1061 + $0x1b40] sm:$0xff]
                  %1500 = vst [vmem:[%s1062 + $0x6d0] sm:$0xff] %v1499
                  %v1501 = vld [vmem:[%s1061 + $0x1b60] sm:$0xff]
                  %1502 = vst [vmem:[%s1062 + $0x6d8] sm:$0xff] %v1501
                  %v1503 = vld [vmem:[%s1061 + $0x1b80] sm:$0xff]
                  %1504 = vst [vmem:[%s1062 + $0x6e0] sm:$0xff] %v1503
                  %v1505 = vld [vmem:[%s1061 + $0x1ba0] sm:$0xff]
                  %1506 = vst [vmem:[%s1062 + $0x6e8] sm:$0xff] %v1505
                  %v1507 = vld [vmem:[%s1061 + $0x1bc0] sm:$0xff]
                  %1508 = vst [vmem:[%s1062 + $0x6f0] sm:$0xff] %v1507
                  %v1509 = vld [vmem:[%s1061 + $0x1be0] sm:$0xff]
                  %1510 = vst [vmem:[%s1062 + $0x6f8] sm:$0xff] %v1509
                  %v1511 = vld [vmem:[%s1061 + $0x1c00] sm:$0xff]
                  %1512 = vst [vmem:[%s1062 + $0x700] sm:$0xff] %v1511
                  %v1513 = vld [vmem:[%s1061 + $0x1c20] sm:$0xff]
                  %1514 = vst [vmem:[%s1062 + $0x708] sm:$0xff] %v1513
                  %v1515 = vld [vmem:[%s1061 + $0x1c40] sm:$0xff]
                  %1516 = vst [vmem:[%s1062 + $0x710] sm:$0xff] %v1515
                  %v1517 = vld [vmem:[%s1061 + $0x1c60] sm:$0xff]
                  %1518 = vst [vmem:[%s1062 + $0x718] sm:$0xff] %v1517
                  %v1519 = vld [vmem:[%s1061 + $0x1c80] sm:$0xff]
                  %1520 = vst [vmem:[%s1062 + $0x720] sm:$0xff] %v1519
                  %v1521 = vld [vmem:[%s1061 + $0x1ca0] sm:$0xff]
                  %1522 = vst [vmem:[%s1062 + $0x728] sm:$0xff] %v1521
                  %v1523 = vld [vmem:[%s1061 + $0x1cc0] sm:$0xff]
                  %1524 = vst [vmem:[%s1062 + $0x730] sm:$0xff] %v1523
                  %v1525 = vld [vmem:[%s1061 + $0x1ce0] sm:$0xff]
                  %1526 = vst [vmem:[%s1062 + $0x738] sm:$0xff] %v1525
                  %v1527 = vld [vmem:[%s1061 + $0x1d00] sm:$0xff]
                  %1528 = vst [vmem:[%s1062 + $0x740] sm:$0xff] %v1527
                  %v1529 = vld [vmem:[%s1061 + $0x1d20] sm:$0xff]
                  %1530 = vst [vmem:[%s1062 + $0x748] sm:$0xff] %v1529
                  %v1531 = vld [vmem:[%s1061 + $0x1d40] sm:$0xff]
                  %1532 = vst [vmem:[%s1062 + $0x750] sm:$0xff] %v1531
                  %v1533 = vld [vmem:[%s1061 + $0x1d60] sm:$0xff]
                  %1534 = vst [vmem:[%s1062 + $0x758] sm:$0xff] %v1533
                  %v1535 = vld [vmem:[%s1061 + $0x1d80] sm:$0xff]
                  %1536 = vst [vmem:[%s1062 + $0x760] sm:$0xff] %v1535
                  %v1537 = vld [vmem:[%s1061 + $0x1da0] sm:$0xff]
                  %1538 = vst [vmem:[%s1062 + $0x768] sm:$0xff] %v1537
                  %v1539 = vld [vmem:[%s1061 + $0x1dc0] sm:$0xff]
                  %1540 = vst [vmem:[%s1062 + $0x770] sm:$0xff] %v1539
                  %v1541 = vld [vmem:[%s1061 + $0x1de0] sm:$0xff]
                  %1542 = vst [vmem:[%s1062 + $0x778] sm:$0xff] %v1541
                  %v1543 = vld [vmem:[%s1061 + $0x1e00] sm:$0xff]
                  %1544 = vst [vmem:[%s1062 + $0x780] sm:$0xff] %v1543
                  %v1545 = vld [vmem:[%s1061 + $0x1e20] sm:$0xff]
                  %1546 = vst [vmem:[%s1062 + $0x788] sm:$0xff] %v1545
                  %v1547 = vld [vmem:[%s1061 + $0x1e40] sm:$0xff]
                  %1548 = vst [vmem:[%s1062 + $0x790] sm:$0xff] %v1547
                  %v1549 = vld [vmem:[%s1061 + $0x1e60] sm:$0xff]
                  %1550 = vst [vmem:[%s1062 + $0x798] sm:$0xff] %v1549
                  %v1551 = vld [vmem:[%s1061 + $0x1e80] sm:$0xff]
                  %1552 = vst [vmem:[%s1062 + $0x7a0] sm:$0xff] %v1551
                  %v1553 = vld [vmem:[%s1061 + $0x1ea0] sm:$0xff]
                  %1554 = vst [vmem:[%s1062 + $0x7a8] sm:$0xff] %v1553
                  %v1555 = vld [vmem:[%s1061 + $0x1ec0] sm:$0xff]
                  %1556 = vst [vmem:[%s1062 + $0x7b0] sm:$0xff] %v1555
                  %v1557 = vld [vmem:[%s1061 + $0x1ee0] sm:$0xff]
                  %1558 = vst [vmem:[%s1062 + $0x7b8] sm:$0xff] %v1557
                  %v1559 = vld [vmem:[%s1061 + $0x1f00] sm:$0xff]
                  %1560 = vst [vmem:[%s1062 + $0x7c0] sm:$0xff] %v1559
                  %v1561 = vld [vmem:[%s1061 + $0x1f20] sm:$0xff]
                  %1562 = vst [vmem:[%s1062 + $0x7c8] sm:$0xff] %v1561
                  %v1563 = vld [vmem:[%s1061 + $0x1f40] sm:$0xff]
                  %1564 = vst [vmem:[%s1062 + $0x7d0] sm:$0xff] %v1563
                  %v1565 = vld [vmem:[%s1061 + $0x1f60] sm:$0xff]
                  %1566 = vst [vmem:[%s1062 + $0x7d8] sm:$0xff] %v1565
                  %v1567 = vld [vmem:[%s1061 + $0x1f80] sm:$0xff]
                  %1568 = vst [vmem:[%s1062 + $0x7e0] sm:$0xff] %v1567
                  %v1569 = vld [vmem:[%s1061 + $0x1fa0] sm:$0xff]
                  %1570 = vst [vmem:[%s1062 + $0x7e8] sm:$0xff] %v1569
                  %v1571 = vld [vmem:[%s1061 + $0x1fc0] sm:$0xff]
                  %1572 = vst [vmem:[%s1062 + $0x7f0] sm:$0xff] %v1571
                  %v1573 = vld [vmem:[%s1061 + $0x1fe0] sm:$0xff]
                  %1574 = vst [vmem:[%s1062 + $0x7f8] sm:$0xff] %v1573
                  %v1575 = vld [vmem:[%s1061 + $0x2000] sm:$0xff]
                  %1576 = vst [vmem:[%s1062 + $0x800] sm:$0xff] %v1575
                  %v1577 = vld [vmem:[%s1061 + $0x2020] sm:$0xff]
                  %1578 = vst [vmem:[%s1062 + $0x808] sm:$0xff] %v1577
                  %v1579 = vld [vmem:[%s1061 + $0x2040] sm:$0xff]
                  %1580 = vst [vmem:[%s1062 + $0x810] sm:$0xff] %v1579
                  %v1581 = vld [vmem:[%s1061 + $0x2060] sm:$0xff]
                  %1582 = vst [vmem:[%s1062 + $0x818] sm:$0xff] %v1581
                  %v1583 = vld [vmem:[%s1061 + $0x2080] sm:$0xff]
                  %1584 = vst [vmem:[%s1062 + $0x820] sm:$0xff] %v1583
                  %v1585 = vld [vmem:[%s1061 + $0x20a0] sm:$0xff]
                  %1586 = vst [vmem:[%s1062 + $0x828] sm:$0xff] %v1585
                  %v1587 = vld [vmem:[%s1061 + $0x20c0] sm:$0xff]
                  %1588 = vst [vmem:[%s1062 + $0x830] sm:$0xff] %v1587
                  %v1589 = vld [vmem:[%s1061 + $0x20e0] sm:$0xff]
                  %1590 = vst [vmem:[%s1062 + $0x838] sm:$0xff] %v1589
                  %v1591 = vld [vmem:[%s1061 + $0x2100] sm:$0xff]
                  %1592 = vst [vmem:[%s1062 + $0x840] sm:$0xff] %v1591
                  %v1593 = vld [vmem:[%s1061 + $0x2120] sm:$0xff]
                  %1594 = vst [vmem:[%s1062 + $0x848] sm:$0xff] %v1593
                  %v1595 = vld [vmem:[%s1061 + $0x2140] sm:$0xff]
                  %1596 = vst [vmem:[%s1062 + $0x850] sm:$0xff] %v1595
                  %v1597 = vld [vmem:[%s1061 + $0x2160] sm:$0xff]
                  %1598 = vst [vmem:[%s1062 + $0x858] sm:$0xff] %v1597
                  %v1599 = vld [vmem:[%s1061 + $0x2180] sm:$0xff]
                  %1600 = vst [vmem:[%s1062 + $0x860] sm:$0xff] %v1599
                  %v1601 = vld [vmem:[%s1061 + $0x21a0] sm:$0xff]
                  %1602 = vst [vmem:[%s1062 + $0x868] sm:$0xff] %v1601
                  %v1603 = vld [vmem:[%s1061 + $0x21c0] sm:$0xff]
                  %1604 = vst [vmem:[%s1062 + $0x870] sm:$0xff] %v1603
                  %v1605 = vld [vmem:[%s1061 + $0x21e0] sm:$0xff]
                  %1606 = vst [vmem:[%s1062 + $0x878] sm:$0xff] %v1605
                  %v1607 = vld [vmem:[%s1061 + $0x2200] sm:$0xff]
                  %1608 = vst [vmem:[%s1062 + $0x880] sm:$0xff] %v1607
                  %v1609 = vld [vmem:[%s1061 + $0x2220] sm:$0xff]
                  %1610 = vst [vmem:[%s1062 + $0x888] sm:$0xff] %v1609
                  %v1611 = vld [vmem:[%s1061 + $0x2240] sm:$0xff]
                  %1612 = vst [vmem:[%s1062 + $0x890] sm:$0xff] %v1611
                  %v1613 = vld [vmem:[%s1061 + $0x2260] sm:$0xff]
                  %1614 = vst [vmem:[%s1062 + $0x898] sm:$0xff] %v1613
                  %v1615 = vld [vmem:[%s1061 + $0x2280] sm:$0xff]
                  %1616 = vst [vmem:[%s1062 + $0x8a0] sm:$0xff] %v1615
                  %v1617 = vld [vmem:[%s1061 + $0x22a0] sm:$0xff]
                  %1618 = vst [vmem:[%s1062 + $0x8a8] sm:$0xff] %v1617
                  %v1619 = vld [vmem:[%s1061 + $0x22c0] sm:$0xff]
                  %1620 = vst [vmem:[%s1062 + $0x8b0] sm:$0xff] %v1619
                  %v1621 = vld [vmem:[%s1061 + $0x22e0] sm:$0xff]
                  %1622 = vst [vmem:[%s1062 + $0x8b8] sm:$0xff] %v1621
                  %v1623 = vld [vmem:[%s1061 + $0x2300] sm:$0xff]
                  %1624 = vst [vmem:[%s1062 + $0x8c0] sm:$0xff] %v1623
                  %v1625 = vld [vmem:[%s1061 + $0x2320] sm:$0xff]
                  %1626 = vst [vmem:[%s1062 + $0x8c8] sm:$0xff] %v1625
                  %v1627 = vld [vmem:[%s1061 + $0x2340] sm:$0xff]
                  %1628 = vst [vmem:[%s1062 + $0x8d0] sm:$0xff] %v1627
                  %v1629 = vld [vmem:[%s1061 + $0x2360] sm:$0xff]
                  %1630 = vst [vmem:[%s1062 + $0x8d8] sm:$0xff] %v1629
                  %v1631 = vld [vmem:[%s1061 + $0x2380] sm:$0xff]
                  %1632 = vst [vmem:[%s1062 + $0x8e0] sm:$0xff] %v1631
                  %v1633 = vld [vmem:[%s1061 + $0x23a0] sm:$0xff]
                  %1634 = vst [vmem:[%s1062 + $0x8e8] sm:$0xff] %v1633
                  %v1635 = vld [vmem:[%s1061 + $0x23c0] sm:$0xff]
                  %1636 = vst [vmem:[%s1062 + $0x8f0] sm:$0xff] %v1635
                  %v1637 = vld [vmem:[%s1061 + $0x23e0] sm:$0xff]
                  %1638 = vst [vmem:[%s1062 + $0x8f8] sm:$0xff] %v1637
                  %v1639 = vld [vmem:[%s1061 + $0x2400] sm:$0xff]
                  %1640 = vst [vmem:[%s1062 + $0x900] sm:$0xff] %v1639
                  %v1641 = vld [vmem:[%s1061 + $0x2420] sm:$0xff]
                  %1642 = vst [vmem:[%s1062 + $0x908] sm:$0xff] %v1641
                  %v1643 = vld [vmem:[%s1061 + $0x2440] sm:$0xff]
                  %1644 = vst [vmem:[%s1062 + $0x910] sm:$0xff] %v1643
                  %v1645 = vld [vmem:[%s1061 + $0x2460] sm:$0xff]
                  %1646 = vst [vmem:[%s1062 + $0x918] sm:$0xff] %v1645
                  %v1647 = vld [vmem:[%s1061 + $0x2480] sm:$0xff]
                  %1648 = vst [vmem:[%s1062 + $0x920] sm:$0xff] %v1647
                  %v1649 = vld [vmem:[%s1061 + $0x24a0] sm:$0xff]
                  %1650 = vst [vmem:[%s1062 + $0x928] sm:$0xff] %v1649
                  %v1651 = vld [vmem:[%s1061 + $0x24c0] sm:$0xff]
                  %1652 = vst [vmem:[%s1062 + $0x930] sm:$0xff] %v1651
                  %v1653 = vld [vmem:[%s1061 + $0x24e0] sm:$0xff]
                  %1654 = vst [vmem:[%s1062 + $0x938] sm:$0xff] %v1653
                  %v1655 = vld [vmem:[%s1061 + $0x2500] sm:$0xff]
                  %1656 = vst [vmem:[%s1062 + $0x940] sm:$0xff] %v1655
                  %v1657 = vld [vmem:[%s1061 + $0x2520] sm:$0xff]
                  %1658 = vst [vmem:[%s1062 + $0x948] sm:$0xff] %v1657
                  %v1659 = vld [vmem:[%s1061 + $0x2540] sm:$0xff]
                  %1660 = vst [vmem:[%s1062 + $0x950] sm:$0xff] %v1659
                  %v1661 = vld [vmem:[%s1061 + $0x2560] sm:$0xff]
                  %1662 = vst [vmem:[%s1062 + $0x958] sm:$0xff] %v1661
                  %v1663 = vld [vmem:[%s1061 + $0x2580] sm:$0xff]
                  %1664 = vst [vmem:[%s1062 + $0x960] sm:$0xff] %v1663
                  %v1665 = vld [vmem:[%s1061 + $0x25a0] sm:$0xff]
                  %1666 = vst [vmem:[%s1062 + $0x968] sm:$0xff] %v1665
                  %v1667 = vld [vmem:[%s1061 + $0x25c0] sm:$0xff]
                  %1668 = vst [vmem:[%s1062 + $0x970] sm:$0xff] %v1667
                  %v1669 = vld [vmem:[%s1061 + $0x25e0] sm:$0xff]
                  %1670 = vst [vmem:[%s1062 + $0x978] sm:$0xff] %v1669
                  %v1671 = vld [vmem:[%s1061 + $0x2600] sm:$0xff]
                  %1672 = vst [vmem:[%s1062 + $0x980] sm:$0xff] %v1671
                  %v1673 = vld [vmem:[%s1061 + $0x2620] sm:$0xff]
                  %1674 = vst [vmem:[%s1062 + $0x988] sm:$0xff] %v1673
                  %v1675 = vld [vmem:[%s1061 + $0x2640] sm:$0xff]
                  %1676 = vst [vmem:[%s1062 + $0x990] sm:$0xff] %v1675
                  %v1677 = vld [vmem:[%s1061 + $0x2660] sm:$0xff]
                  %1678 = vst [vmem:[%s1062 + $0x998] sm:$0xff] %v1677
                  %v1679 = vld [vmem:[%s1061 + $0x2680] sm:$0xff]
                  %1680 = vst [vmem:[%s1062 + $0x9a0] sm:$0xff] %v1679
                  %v1681 = vld [vmem:[%s1061 + $0x26a0] sm:$0xff]
                  %1682 = vst [vmem:[%s1062 + $0x9a8] sm:$0xff] %v1681
                  %v1683 = vld [vmem:[%s1061 + $0x26c0] sm:$0xff]
                  %1684 = vst [vmem:[%s1062 + $0x9b0] sm:$0xff] %v1683
                  %v1685 = vld [vmem:[%s1061 + $0x26e0] sm:$0xff]
                  %1686 = vst [vmem:[%s1062 + $0x9b8] sm:$0xff] %v1685
                  %v1687 = vld [vmem:[%s1061 + $0x2700] sm:$0xff]
                  %1688 = vst [vmem:[%s1062 + $0x9c0] sm:$0xff] %v1687
                  %v1689 = vld [vmem:[%s1061 + $0x2720] sm:$0xff]
                  %1690 = vst [vmem:[%s1062 + $0x9c8] sm:$0xff] %v1689
                  %v1691 = vld [vmem:[%s1061 + $0x2740] sm:$0xff]
                  %1692 = vst [vmem:[%s1062 + $0x9d0] sm:$0xff] %v1691
                  %v1693 = vld [vmem:[%s1061 + $0x2760] sm:$0xff]
                  %1694 = vst [vmem:[%s1062 + $0x9d8] sm:$0xff] %v1693
                  %v1695 = vld [vmem:[%s1061 + $0x2780] sm:$0xff]
                  %1696 = vst [vmem:[%s1062 + $0x9e0] sm:$0xff] %v1695
                  %v1697 = vld [vmem:[%s1061 + $0x27a0] sm:$0xff]
                  %1698 = vst [vmem:[%s1062 + $0x9e8] sm:$0xff] %v1697
                  %v1699 = vld [vmem:[%s1061 + $0x27c0] sm:$0xff]
                  %1700 = vst [vmem:[%s1062 + $0x9f0] sm:$0xff] %v1699
                  %v1701 = vld [vmem:[%s1061 + $0x27e0] sm:$0xff]
                  %1702 = vst [vmem:[%s1062 + $0x9f8] sm:$0xff] %v1701
                  %v1703 = vld [vmem:[%s1061 + $0x2800] sm:$0xff]
                  %1704 = vst [vmem:[%s1062 + $0xa00] sm:$0xff] %v1703
                  %v1705 = vld [vmem:[%s1061 + $0x2820] sm:$0xff]
                  %1706 = vst [vmem:[%s1062 + $0xa08] sm:$0xff] %v1705
                  %v1707 = vld [vmem:[%s1061 + $0x2840] sm:$0xff]
                  %1708 = vst [vmem:[%s1062 + $0xa10] sm:$0xff] %v1707
                  %v1709 = vld [vmem:[%s1061 + $0x2860] sm:$0xff]
                  %1710 = vst [vmem:[%s1062 + $0xa18] sm:$0xff] %v1709
                  %v1711 = vld [vmem:[%s1061 + $0x2880] sm:$0xff]
                  %1712 = vst [vmem:[%s1062 + $0xa20] sm:$0xff] %v1711
                  %v1713 = vld [vmem:[%s1061 + $0x28a0] sm:$0xff]
                  %1714 = vst [vmem:[%s1062 + $0xa28] sm:$0xff] %v1713
                  %v1715 = vld [vmem:[%s1061 + $0x28c0] sm:$0xff]
                  %1716 = vst [vmem:[%s1062 + $0xa30] sm:$0xff] %v1715
                  %v1717 = vld [vmem:[%s1061 + $0x28e0] sm:$0xff]
                  %1718 = vst [vmem:[%s1062 + $0xa38] sm:$0xff] %v1717
                  %v1719 = vld [vmem:[%s1061 + $0x2900] sm:$0xff]
                  %1720 = vst [vmem:[%s1062 + $0xa40] sm:$0xff] %v1719
                  %v1721 = vld [vmem:[%s1061 + $0x2920] sm:$0xff]
                  %1722 = vst [vmem:[%s1062 + $0xa48] sm:$0xff] %v1721
                  %v1723 = vld [vmem:[%s1061 + $0x2940] sm:$0xff]
                  %1724 = vst [vmem:[%s1062 + $0xa50] sm:$0xff] %v1723
                  %v1725 = vld [vmem:[%s1061 + $0x2960] sm:$0xff]
                  %1726 = vst [vmem:[%s1062 + $0xa58] sm:$0xff] %v1725
                  %v1727 = vld [vmem:[%s1061 + $0x2980] sm:$0xff]
                  %1728 = vst [vmem:[%s1062 + $0xa60] sm:$0xff] %v1727
                  %v1729 = vld [vmem:[%s1061 + $0x29a0] sm:$0xff]
                  %1730 = vst [vmem:[%s1062 + $0xa68] sm:$0xff] %v1729
                  %v1731 = vld [vmem:[%s1061 + $0x29c0] sm:$0xff]
                  %1732 = vst [vmem:[%s1062 + $0xa70] sm:$0xff] %v1731
                  %v1733 = vld [vmem:[%s1061 + $0x29e0] sm:$0xff]
                  %1734 = vst [vmem:[%s1062 + $0xa78] sm:$0xff] %v1733
                  %v1735 = vld [vmem:[%s1061 + $0x2a00] sm:$0xff]
                  %1736 = vst [vmem:[%s1062 + $0xa80] sm:$0xff] %v1735
                  %v1737 = vld [vmem:[%s1061 + $0x2a20] sm:$0xff]
                  %1738 = vst [vmem:[%s1062 + $0xa88] sm:$0xff] %v1737
                  %v1739 = vld [vmem:[%s1061 + $0x2a40] sm:$0xff]
                  %1740 = vst [vmem:[%s1062 + $0xa90] sm:$0xff] %v1739
                  %v1741 = vld [vmem:[%s1061 + $0x2a60] sm:$0xff]
                  %1742 = vst [vmem:[%s1062 + $0xa98] sm:$0xff] %v1741
                  %v1743 = vld [vmem:[%s1061 + $0x2a80] sm:$0xff]
                  %1744 = vst [vmem:[%s1062 + $0xaa0] sm:$0xff] %v1743
                  %v1745 = vld [vmem:[%s1061 + $0x2aa0] sm:$0xff]
                  %1746 = vst [vmem:[%s1062 + $0xaa8] sm:$0xff] %v1745
                  %v1747 = vld [vmem:[%s1061 + $0x2ac0] sm:$0xff]
                  %1748 = vst [vmem:[%s1062 + $0xab0] sm:$0xff] %v1747
                  %v1749 = vld [vmem:[%s1061 + $0x2ae0] sm:$0xff]
                  %1750 = vst [vmem:[%s1062 + $0xab8] sm:$0xff] %v1749
                  %v1751 = vld [vmem:[%s1061 + $0x2b00] sm:$0xff]
                  %1752 = vst [vmem:[%s1062 + $0xac0] sm:$0xff] %v1751
                  %v1753 = vld [vmem:[%s1061 + $0x2b20] sm:$0xff]
                  %1754 = vst [vmem:[%s1062 + $0xac8] sm:$0xff] %v1753
                  %v1755 = vld [vmem:[%s1061 + $0x2b40] sm:$0xff]
                  %1756 = vst [vmem:[%s1062 + $0xad0] sm:$0xff] %v1755
                  %v1757 = vld [vmem:[%s1061 + $0x2b60] sm:$0xff]
                  %1758 = vst [vmem:[%s1062 + $0xad8] sm:$0xff] %v1757
                  %v1759 = vld [vmem:[%s1061 + $0x2b80] sm:$0xff]
                  %1760 = vst [vmem:[%s1062 + $0xae0] sm:$0xff] %v1759
                  %v1761 = vld [vmem:[%s1061 + $0x2ba0] sm:$0xff]
                  %1762 = vst [vmem:[%s1062 + $0xae8] sm:$0xff] %v1761
                  %v1763 = vld [vmem:[%s1061 + $0x2bc0] sm:$0xff]
                  %1764 = vst [vmem:[%s1062 + $0xaf0] sm:$0xff] %v1763
                  %v1765 = vld [vmem:[%s1061 + $0x2be0] sm:$0xff]
                  %1766 = vst [vmem:[%s1062 + $0xaf8] sm:$0xff] %v1765
                  %v1767 = vld [vmem:[%s1061 + $0x2c00] sm:$0xff]
                  %1768 = vst [vmem:[%s1062 + $0xb00] sm:$0xff] %v1767
                  %v1769 = vld [vmem:[%s1061 + $0x2c20] sm:$0xff]
                  %1770 = vst [vmem:[%s1062 + $0xb08] sm:$0xff] %v1769
                  %v1771 = vld [vmem:[%s1061 + $0x2c40] sm:$0xff]
                  %1772 = vst [vmem:[%s1062 + $0xb10] sm:$0xff] %v1771
                  %v1773 = vld [vmem:[%s1061 + $0x2c60] sm:$0xff]
                  %1774 = vst [vmem:[%s1062 + $0xb18] sm:$0xff] %v1773
                  %v1775 = vld [vmem:[%s1061 + $0x2c80] sm:$0xff]
                  %1776 = vst [vmem:[%s1062 + $0xb20] sm:$0xff] %v1775
                  %v1777 = vld [vmem:[%s1061 + $0x2ca0] sm:$0xff]
                  %1778 = vst [vmem:[%s1062 + $0xb28] sm:$0xff] %v1777
                  %v1779 = vld [vmem:[%s1061 + $0x2cc0] sm:$0xff]
                  %1780 = vst [vmem:[%s1062 + $0xb30] sm:$0xff] %v1779
                  %v1781 = vld [vmem:[%s1061 + $0x2ce0] sm:$0xff]
                  %1782 = vst [vmem:[%s1062 + $0xb38] sm:$0xff] %v1781
                  %v1783 = vld [vmem:[%s1061 + $0x2d00] sm:$0xff]
                  %1784 = vst [vmem:[%s1062 + $0xb40] sm:$0xff] %v1783
                  %v1785 = vld [vmem:[%s1061 + $0x2d20] sm:$0xff]
                  %1786 = vst [vmem:[%s1062 + $0xb48] sm:$0xff] %v1785
                  %v1787 = vld [vmem:[%s1061 + $0x2d40] sm:$0xff]
                  %1788 = vst [vmem:[%s1062 + $0xb50] sm:$0xff] %v1787
                  %v1789 = vld [vmem:[%s1061 + $0x2d60] sm:$0xff]
                  %1790 = vst [vmem:[%s1062 + $0xb58] sm:$0xff] %v1789
                  %v1791 = vld [vmem:[%s1061 + $0x2d80] sm:$0xff]
                  %1792 = vst [vmem:[%s1062 + $0xb60] sm:$0xff] %v1791
                  %v1793 = vld [vmem:[%s1061 + $0x2da0] sm:$0xff]
                  %1794 = vst [vmem:[%s1062 + $0xb68] sm:$0xff] %v1793
                  %v1795 = vld [vmem:[%s1061 + $0x2dc0] sm:$0xff]
                  %1796 = vst [vmem:[%s1062 + $0xb70] sm:$0xff] %v1795
                  %v1797 = vld [vmem:[%s1061 + $0x2de0] sm:$0xff]
                  %1798 = vst [vmem:[%s1062 + $0xb78] sm:$0xff] %v1797
                  %v1799 = vld [vmem:[%s1061 + $0x2e00] sm:$0xff]
                  %1800 = vst [vmem:[%s1062 + $0xb80] sm:$0xff] %v1799
                  %v1801 = vld [vmem:[%s1061 + $0x2e20] sm:$0xff]
                  %1802 = vst [vmem:[%s1062 + $0xb88] sm:$0xff] %v1801
                  %v1803 = vld [vmem:[%s1061 + $0x2e40] sm:$0xff]
                  %1804 = vst [vmem:[%s1062 + $0xb90] sm:$0xff] %v1803
                  %v1805 = vld [vmem:[%s1061 + $0x2e60] sm:$0xff]
                  %1806 = vst [vmem:[%s1062 + $0xb98] sm:$0xff] %v1805
                  %v1807 = vld [vmem:[%s1061 + $0x2e80] sm:$0xff]
                  %1808 = vst [vmem:[%s1062 + $0xba0] sm:$0xff] %v1807
                  %v1809 = vld [vmem:[%s1061 + $0x2ea0] sm:$0xff]
                  %1810 = vst [vmem:[%s1062 + $0xba8] sm:$0xff] %v1809
                  %v1811 = vld [vmem:[%s1061 + $0x2ec0] sm:$0xff]
                  %1812 = vst [vmem:[%s1062 + $0xbb0] sm:$0xff] %v1811
                  %v1813 = vld [vmem:[%s1061 + $0x2ee0] sm:$0xff]
                  %1814 = vst [vmem:[%s1062 + $0xbb8] sm:$0xff] %v1813
                  %v1815 = vld [vmem:[%s1061 + $0x2f00] sm:$0xff]
                  %1816 = vst [vmem:[%s1062 + $0xbc0] sm:$0xff] %v1815
                  %v1817 = vld [vmem:[%s1061 + $0x2f20] sm:$0xff]
                  %1818 = vst [vmem:[%s1062 + $0xbc8] sm:$0xff] %v1817
                  %v1819 = vld [vmem:[%s1061 + $0x2f40] sm:$0xff]
                  %1820 = vst [vmem:[%s1062 + $0xbd0] sm:$0xff] %v1819
                  %v1821 = vld [vmem:[%s1061 + $0x2f60] sm:$0xff]
                  %1822 = vst [vmem:[%s1062 + $0xbd8] sm:$0xff] %v1821
                  %v1823 = vld [vmem:[%s1061 + $0x2f80] sm:$0xff]
                  %1824 = vst [vmem:[%s1062 + $0xbe0] sm:$0xff] %v1823
                  %v1825 = vld [vmem:[%s1061 + $0x2fa0] sm:$0xff]
                  %1826 = vst [vmem:[%s1062 + $0xbe8] sm:$0xff] %v1825
                  %v1827 = vld [vmem:[%s1061 + $0x2fc0] sm:$0xff]
                  %1828 = vst [vmem:[%s1062 + $0xbf0] sm:$0xff] %v1827
                  %v1829 = vld [vmem:[%s1061 + $0x2fe0] sm:$0xff]
                  %1830 = vst [vmem:[%s1062 + $0xbf8] sm:$0xff] %v1829
                  %v1831 = vld [vmem:[%s1061 + $0x3000] sm:$0xff]
                  %1832 = vst [vmem:[%s1062 + $0xc00] sm:$0xff] %v1831
                  %v1833 = vld [vmem:[%s1061 + $0x3020] sm:$0xff]
                  %1834 = vst [vmem:[%s1062 + $0xc08] sm:$0xff] %v1833
                  %v1835 = vld [vmem:[%s1061 + $0x3040] sm:$0xff]
                  %1836 = vst [vmem:[%s1062 + $0xc10] sm:$0xff] %v1835
                  %v1837 = vld [vmem:[%s1061 + $0x3060] sm:$0xff]
                  %1838 = vst [vmem:[%s1062 + $0xc18] sm:$0xff] %v1837
                  %v1839 = vld [vmem:[%s1061 + $0x3080] sm:$0xff]
                  %1840 = vst [vmem:[%s1062 + $0xc20] sm:$0xff] %v1839
                  %v1841 = vld [vmem:[%s1061 + $0x30a0] sm:$0xff]
                  %1842 = vst [vmem:[%s1062 + $0xc28] sm:$0xff] %v1841
                  %v1843 = vld [vmem:[%s1061 + $0x30c0] sm:$0xff]
                  %1844 = vst [vmem:[%s1062 + $0xc30] sm:$0xff] %v1843
                  %v1845 = vld [vmem:[%s1061 + $0x30e0] sm:$0xff]
                  %1846 = vst [vmem:[%s1062 + $0xc38] sm:$0xff] %v1845
                  %v1847 = vld [vmem:[%s1061 + $0x3100] sm:$0xff]
                  %1848 = vst [vmem:[%s1062 + $0xc40] sm:$0xff] %v1847
                  %v1849 = vld [vmem:[%s1061 + $0x3120] sm:$0xff]
                  %1850 = vst [vmem:[%s1062 + $0xc48] sm:$0xff] %v1849
                  %v1851 = vld [vmem:[%s1061 + $0x3140] sm:$0xff]
                  %1852 = vst [vmem:[%s1062 + $0xc50] sm:$0xff] %v1851
                  %v1853 = vld [vmem:[%s1061 + $0x3160] sm:$0xff]
                  %1854 = vst [vmem:[%s1062 + $0xc58] sm:$0xff] %v1853
                  %v1855 = vld [vmem:[%s1061 + $0x3180] sm:$0xff]
                  %1856 = vst [vmem:[%s1062 + $0xc60] sm:$0xff] %v1855
                  %v1857 = vld [vmem:[%s1061 + $0x31a0] sm:$0xff]
                  %1858 = vst [vmem:[%s1062 + $0xc68] sm:$0xff] %v1857
                  %v1859 = vld [vmem:[%s1061 + $0x31c0] sm:$0xff]
                  %1860 = vst [vmem:[%s1062 + $0xc70] sm:$0xff] %v1859
                  %v1861 = vld [vmem:[%s1061 + $0x31e0] sm:$0xff]
                  %1862 = vst [vmem:[%s1062 + $0xc78] sm:$0xff] %v1861
                $region64: #{convnet_forward.5} parent=58 // loop_footer
                  %s1060 = sadd.s32 1, %s1056
                $region65: #{convnet_forward.5} parent=58 // loop_footer_branch
                  %1055 = sbr.rel target = $region61
                $region66: #{convnet_forward.5} parent=58 // loop_exit
                  _
              $region59: #{convnet_forward.5} parent=43 // pred_fallthru
                _
              // Predicated region
              $region67: #{convnet_forward.5} parent=43 // pred_check
                _
              $region68: #{convnet_forward.5} parent=43 // pred_check_branch
                %1864 = sbr.rel target = $region70
              $region69: #{convnet_forward.5} parent=43 // pred_region
                _
              $region70: #{convnet_forward.5} parent=43 // pred_fallthru
                _
            $region44: #{convnet_forward.5} parent=39 // pred_fallthru
              _
            // Predicated region
            $region45: #{convnet_forward.5} parent=39 // pred_check
              _
            $region46: #{convnet_forward.5} parent=39 // pred_check_branch
              %243 = sbr.rel target = $region48
            $region47: #{convnet_forward.5} parent=39 // pred_region
              loop: start=0, step=1, limit=1
              $region49: #{convnet_forward.5} parent=47 // loop_pre_header
                _
              $region50: #{convnet_forward.5} parent=47 // loop_header
                %s246 = sphi 0, %s250
                %p247 = scmp.ge.s32.totalorder %s246, 1
                %s251 = sphi %s237, %s237
                %s252 = sphi %s234, %s234
              $region51: #{convnet_forward.5} parent=47 // loop_header_branch
                %249 = sbr.rel (%p247) target = $region55
              $region52: #{convnet_forward.5} parent=47 // loop_body
                %v253 = vld [vmem:[%s251] sm:$0xff]
                %254 = vst [vmem:[%s252] sm:$0xff] %v253
                %v255 = vld [vmem:[%s251 + $0x20] sm:$0xff]
                %256 = vst [vmem:[%s252 + $0x8] sm:$0xff] %v255
                %v257 = vld [vmem:[%s251 + $0x40] sm:$0xff]
                %258 = vst [vmem:[%s252 + $0x10] sm:$0xff] %v257
                %v259 = vld [vmem:[%s251 + $0x60] sm:$0xff]
                %260 = vst [vmem:[%s252 + $0x18] sm:$0xff] %v259
                %v261 = vld [vmem:[%s251 + $0x80] sm:$0xff]
                %262 = vst [vmem:[%s252 + $0x20] sm:$0xff] %v261
                %v263 = vld [vmem:[%s251 + $0xa0] sm:$0xff]
                %264 = vst [vmem:[%s252 + $0x28] sm:$0xff] %v263
                %v265 = vld [vmem:[%s251 + $0xc0] sm:$0xff]
                %266 = vst [vmem:[%s252 + $0x30] sm:$0xff] %v265
                %v267 = vld [vmem:[%s251 + $0xe0] sm:$0xff]
                %268 = vst [vmem:[%s252 + $0x38] sm:$0xff] %v267
                %v269 = vld [vmem:[%s251 + $0x100] sm:$0xff]
                %270 = vst [vmem:[%s252 + $0x40] sm:$0xff] %v269
                %v271 = vld [vmem:[%s251 + $0x120] sm:$0xff]
                %272 = vst [vmem:[%s252 + $0x48] sm:$0xff] %v271
                %v273 = vld [vmem:[%s251 + $0x140] sm:$0xff]
                %274 = vst [vmem:[%s252 + $0x50] sm:$0xff] %v273
                %v275 = vld [vmem:[%s251 + $0x160] sm:$0xff]
                %276 = vst [vmem:[%s252 + $0x58] sm:$0xff] %v275
                %v277 = vld [vmem:[%s251 + $0x180] sm:$0xff]
                %278 = vst [vmem:[%s252 + $0x60] sm:$0xff] %v277
                %v279 = vld [vmem:[%s251 + $0x1a0] sm:$0xff]
                %280 = vst [vmem:[%s252 + $0x68] sm:$0xff] %v279
                %v281 = vld [vmem:[%s251 + $0x1c0] sm:$0xff]
                %282 = vst [vmem:[%s252 + $0x70] sm:$0xff] %v281
                %v283 = vld [vmem:[%s251 + $0x1e0] sm:$0xff]
                %284 = vst [vmem:[%s252 + $0x78] sm:$0xff] %v283
                %v285 = vld [vmem:[%s251 + $0x200] sm:$0xff]
                %286 = vst [vmem:[%s252 + $0x80] sm:$0xff] %v285
                %v287 = vld [vmem:[%s251 + $0x220] sm:$0xff]
                %288 = vst [vmem:[%s252 + $0x88] sm:$0xff] %v287
                %v289 = vld [vmem:[%s251 + $0x240] sm:$0xff]
                %290 = vst [vmem:[%s252 + $0x90] sm:$0xff] %v289
                %v291 = vld [vmem:[%s251 + $0x260] sm:$0xff]
                %292 = vst [vmem:[%s252 + $0x98] sm:$0xff] %v291
                %v293 = vld [vmem:[%s251 + $0x280] sm:$0xff]
                %294 = vst [vmem:[%s252 + $0xa0] sm:$0xff] %v293
                %v295 = vld [vmem:[%s251 + $0x2a0] sm:$0xff]
                %296 = vst [vmem:[%s252 + $0xa8] sm:$0xff] %v295
                %v297 = vld [vmem:[%s251 + $0x2c0] sm:$0xff]
                %298 = vst [vmem:[%s252 + $0xb0] sm:$0xff] %v297
                %v299 = vld [vmem:[%s251 + $0x2e0] sm:$0xff]
                %300 = vst [vmem:[%s252 + $0xb8] sm:$0xff] %v299
                %v301 = vld [vmem:[%s251 + $0x300] sm:$0xff]
                %302 = vst [vmem:[%s252 + $0xc0] sm:$0xff] %v301
                %v303 = vld [vmem:[%s251 + $0x320] sm:$0xff]
                %304 = vst [vmem:[%s252 + $0xc8] sm:$0xff] %v303
                %v305 = vld [vmem:[%s251 + $0x340] sm:$0xff]
                %306 = vst [vmem:[%s252 + $0xd0] sm:$0xff] %v305
                %v307 = vld [vmem:[%s251 + $0x360] sm:$0xff]
                %308 = vst [vmem:[%s252 + $0xd8] sm:$0xff] %v307
                %v309 = vld [vmem:[%s251 + $0x380] sm:$0xff]
                %310 = vst [vmem:[%s252 + $0xe0] sm:$0xff] %v309
                %v311 = vld [vmem:[%s251 + $0x3a0] sm:$0xff]
                %312 = vst [vmem:[%s252 + $0xe8] sm:$0xff] %v311
                %v313 = vld [vmem:[%s251 + $0x3c0] sm:$0xff]
                %314 = vst [vmem:[%s252 + $0xf0] sm:$0xff] %v313
                %v315 = vld [vmem:[%s251 + $0x3e0] sm:$0xff]
                %316 = vst [vmem:[%s252 + $0xf8] sm:$0xff] %v315
                %v317 = vld [vmem:[%s251 + $0x400] sm:$0xff]
                %318 = vst [vmem:[%s252 + $0x100] sm:$0xff] %v317
                %v319 = vld [vmem:[%s251 + $0x420] sm:$0xff]
                %320 = vst [vmem:[%s252 + $0x108] sm:$0xff] %v319
                %v321 = vld [vmem:[%s251 + $0x440] sm:$0xff]
                %322 = vst [vmem:[%s252 + $0x110] sm:$0xff] %v321
                %v323 = vld [vmem:[%s251 + $0x460] sm:$0xff]
                %324 = vst [vmem:[%s252 + $0x118] sm:$0xff] %v323
                %v325 = vld [vmem:[%s251 + $0x480] sm:$0xff]
                %326 = vst [vmem:[%s252 + $0x120] sm:$0xff] %v325
                %v327 = vld [vmem:[%s251 + $0x4a0] sm:$0xff]
                %328 = vst [vmem:[%s252 + $0x128] sm:$0xff] %v327
                %v329 = vld [vmem:[%s251 + $0x4c0] sm:$0xff]
                %330 = vst [vmem:[%s252 + $0x130] sm:$0xff] %v329
                %v331 = vld [vmem:[%s251 + $0x4e0] sm:$0xff]
                %332 = vst [vmem:[%s252 + $0x138] sm:$0xff] %v331
                %v333 = vld [vmem:[%s251 + $0x500] sm:$0xff]
                %334 = vst [vmem:[%s252 + $0x140] sm:$0xff] %v333
                %v335 = vld [vmem:[%s251 + $0x520] sm:$0xff]
                %336 = vst [vmem:[%s252 + $0x148] sm:$0xff] %v335
                %v337 = vld [vmem:[%s251 + $0x540] sm:$0xff]
                %338 = vst [vmem:[%s252 + $0x150] sm:$0xff] %v337
                %v339 = vld [vmem:[%s251 + $0x560] sm:$0xff]
                %340 = vst [vmem:[%s252 + $0x158] sm:$0xff] %v339
                %v341 = vld [vmem:[%s251 + $0x580] sm:$0xff]
                %342 = vst [vmem:[%s252 + $0x160] sm:$0xff] %v341
                %v343 = vld [vmem:[%s251 + $0x5a0] sm:$0xff]
                %344 = vst [vmem:[%s252 + $0x168] sm:$0xff] %v343
                %v345 = vld [vmem:[%s251 + $0x5c0] sm:$0xff]
                %346 = vst [vmem:[%s252 + $0x170] sm:$0xff] %v345
                %v347 = vld [vmem:[%s251 + $0x5e0] sm:$0xff]
                %348 = vst [vmem:[%s252 + $0x178] sm:$0xff] %v347
                %v349 = vld [vmem:[%s251 + $0x600] sm:$0xff]
                %350 = vst [vmem:[%s252 + $0x180] sm:$0xff] %v349
                %v351 = vld [vmem:[%s251 + $0x620] sm:$0xff]
                %352 = vst [vmem:[%s252 + $0x188] sm:$0xff] %v351
                %v353 = vld [vmem:[%s251 + $0x640] sm:$0xff]
                %354 = vst [vmem:[%s252 + $0x190] sm:$0xff] %v353
                %v355 = vld [vmem:[%s251 + $0x660] sm:$0xff]
                %356 = vst [vmem:[%s252 + $0x198] sm:$0xff] %v355
                %v357 = vld [vmem:[%s251 + $0x680] sm:$0xff]
                %358 = vst [vmem:[%s252 + $0x1a0] sm:$0xff] %v357
                %v359 = vld [vmem:[%s251 + $0x6a0] sm:$0xff]
                %360 = vst [vmem:[%s252 + $0x1a8] sm:$0xff] %v359
                %v361 = vld [vmem:[%s251 + $0x6c0] sm:$0xff]
                %362 = vst [vmem:[%s252 + $0x1b0] sm:$0xff] %v361
                %v363 = vld [vmem:[%s251 + $0x6e0] sm:$0xff]
                %364 = vst [vmem:[%s252 + $0x1b8] sm:$0xff] %v363
                %v365 = vld [vmem:[%s251 + $0x700] sm:$0xff]
                %366 = vst [vmem:[%s252 + $0x1c0] sm:$0xff] %v365
                %v367 = vld [vmem:[%s251 + $0x720] sm:$0xff]
                %368 = vst [vmem:[%s252 + $0x1c8] sm:$0xff] %v367
                %v369 = vld [vmem:[%s251 + $0x740] sm:$0xff]
                %370 = vst [vmem:[%s252 + $0x1d0] sm:$0xff] %v369
                %v371 = vld [vmem:[%s251 + $0x760] sm:$0xff]
                %372 = vst [vmem:[%s252 + $0x1d8] sm:$0xff] %v371
                %v373 = vld [vmem:[%s251 + $0x780] sm:$0xff]
                %374 = vst [vmem:[%s252 + $0x1e0] sm:$0xff] %v373
                %v375 = vld [vmem:[%s251 + $0x7a0] sm:$0xff]
                %376 = vst [vmem:[%s252 + $0x1e8] sm:$0xff] %v375
                %v377 = vld [vmem:[%s251 + $0x7c0] sm:$0xff]
                %378 = vst [vmem:[%s252 + $0x1f0] sm:$0xff] %v377
                %v379 = vld [vmem:[%s251 + $0x7e0] sm:$0xff]
                %380 = vst [vmem:[%s252 + $0x1f8] sm:$0xff] %v379
                %v381 = vld [vmem:[%s251 + $0x800] sm:$0xff]
                %382 = vst [vmem:[%s252 + $0x200] sm:$0xff] %v381
                %v383 = vld [vmem:[%s251 + $0x820] sm:$0xff]
                %384 = vst [vmem:[%s252 + $0x208] sm:$0xff] %v383
                %v385 = vld [vmem:[%s251 + $0x840] sm:$0xff]
                %386 = vst [vmem:[%s252 + $0x210] sm:$0xff] %v385
                %v387 = vld [vmem:[%s251 + $0x860] sm:$0xff]
                %388 = vst [vmem:[%s252 + $0x218] sm:$0xff] %v387
                %v389 = vld [vmem:[%s251 + $0x880] sm:$0xff]
                %390 = vst [vmem:[%s252 + $0x220] sm:$0xff] %v389
                %v391 = vld [vmem:[%s251 + $0x8a0] sm:$0xff]
                %392 = vst [vmem:[%s252 + $0x228] sm:$0xff] %v391
                %v393 = vld [vmem:[%s251 + $0x8c0] sm:$0xff]
                %394 = vst [vmem:[%s252 + $0x230] sm:$0xff] %v393
                %v395 = vld [vmem:[%s251 + $0x8e0] sm:$0xff]
                %396 = vst [vmem:[%s252 + $0x238] sm:$0xff] %v395
                %v397 = vld [vmem:[%s251 + $0x900] sm:$0xff]
                %398 = vst [vmem:[%s252 + $0x240] sm:$0xff] %v397
                %v399 = vld [vmem:[%s251 + $0x920] sm:$0xff]
                %400 = vst [vmem:[%s252 + $0x248] sm:$0xff] %v399
                %v401 = vld [vmem:[%s251 + $0x940] sm:$0xff]
                %402 = vst [vmem:[%s252 + $0x250] sm:$0xff] %v401
                %v403 = vld [vmem:[%s251 + $0x960] sm:$0xff]
                %404 = vst [vmem:[%s252 + $0x258] sm:$0xff] %v403
                %v405 = vld [vmem:[%s251 + $0x980] sm:$0xff]
                %406 = vst [vmem:[%s252 + $0x260] sm:$0xff] %v405
                %v407 = vld [vmem:[%s251 + $0x9a0] sm:$0xff]
                %408 = vst [vmem:[%s252 + $0x268] sm:$0xff] %v407
                %v409 = vld [vmem:[%s251 + $0x9c0] sm:$0xff]
                %410 = vst [vmem:[%s252 + $0x270] sm:$0xff] %v409
                %v411 = vld [vmem:[%s251 + $0x9e0] sm:$0xff]
                %412 = vst [vmem:[%s252 + $0x278] sm:$0xff] %v411
                %v413 = vld [vmem:[%s251 + $0xa00] sm:$0xff]
                %414 = vst [vmem:[%s252 + $0x280] sm:$0xff] %v413
                %v415 = vld [vmem:[%s251 + $0xa20] sm:$0xff]
                %416 = vst [vmem:[%s252 + $0x288] sm:$0xff] %v415
                %v417 = vld [vmem:[%s251 + $0xa40] sm:$0xff]
                %418 = vst [vmem:[%s252 + $0x290] sm:$0xff] %v417
                %v419 = vld [vmem:[%s251 + $0xa60] sm:$0xff]
                %420 = vst [vmem:[%s252 + $0x298] sm:$0xff] %v419
                %v421 = vld [vmem:[%s251 + $0xa80] sm:$0xff]
                %422 = vst [vmem:[%s252 + $0x2a0] sm:$0xff] %v421
                %v423 = vld [vmem:[%s251 + $0xaa0] sm:$0xff]
                %424 = vst [vmem:[%s252 + $0x2a8] sm:$0xff] %v423
                %v425 = vld [vmem:[%s251 + $0xac0] sm:$0xff]
                %426 = vst [vmem:[%s252 + $0x2b0] sm:$0xff] %v425
                %v427 = vld [vmem:[%s251 + $0xae0] sm:$0xff]
                %428 = vst [vmem:[%s252 + $0x2b8] sm:$0xff] %v427
                %v429 = vld [vmem:[%s251 + $0xb00] sm:$0xff]
                %430 = vst [vmem:[%s252 + $0x2c0] sm:$0xff] %v429
                %v431 = vld [vmem:[%s251 + $0xb20] sm:$0xff]
                %432 = vst [vmem:[%s252 + $0x2c8] sm:$0xff] %v431
                %v433 = vld [vmem:[%s251 + $0xb40] sm:$0xff]
                %434 = vst [vmem:[%s252 + $0x2d0] sm:$0xff] %v433
                %v435 = vld [vmem:[%s251 + $0xb60] sm:$0xff]
                %436 = vst [vmem:[%s252 + $0x2d8] sm:$0xff] %v435
                %v437 = vld [vmem:[%s251 + $0xb80] sm:$0xff]
                %438 = vst [vmem:[%s252 + $0x2e0] sm:$0xff] %v437
                %v439 = vld [vmem:[%s251 + $0xba0] sm:$0xff]
                %440 = vst [vmem:[%s252 + $0x2e8] sm:$0xff] %v439
                %v441 = vld [vmem:[%s251 + $0xbc0] sm:$0xff]
                %442 = vst [vmem:[%s252 + $0x2f0] sm:$0xff] %v441
                %v443 = vld [vmem:[%s251 + $0xbe0] sm:$0xff]
                %444 = vst [vmem:[%s252 + $0x2f8] sm:$0xff] %v443
                %v445 = vld [vmem:[%s251 + $0xc00] sm:$0xff]
                %446 = vst [vmem:[%s252 + $0x300] sm:$0xff] %v445
                %v447 = vld [vmem:[%s251 + $0xc20] sm:$0xff]
                %448 = vst [vmem:[%s252 + $0x308] sm:$0xff] %v447
                %v449 = vld [vmem:[%s251 + $0xc40] sm:$0xff]
                %450 = vst [vmem:[%s252 + $0x310] sm:$0xff] %v449
                %v451 = vld [vmem:[%s251 + $0xc60] sm:$0xff]
                %452 = vst [vmem:[%s252 + $0x318] sm:$0xff] %v451
                %v453 = vld [vmem:[%s251 + $0xc80] sm:$0xff]
                %454 = vst [vmem:[%s252 + $0x320] sm:$0xff] %v453
                %v455 = vld [vmem:[%s251 + $0xca0] sm:$0xff]
                %456 = vst [vmem:[%s252 + $0x328] sm:$0xff] %v455
                %v457 = vld [vmem:[%s251 + $0xcc0] sm:$0xff]
                %458 = vst [vmem:[%s252 + $0x330] sm:$0xff] %v457
                %v459 = vld [vmem:[%s251 + $0xce0] sm:$0xff]
                %460 = vst [vmem:[%s252 + $0x338] sm:$0xff] %v459
                %v461 = vld [vmem:[%s251 + $0xd00] sm:$0xff]
                %462 = vst [vmem:[%s252 + $0x340] sm:$0xff] %v461
                %v463 = vld [vmem:[%s251 + $0xd20] sm:$0xff]
                %464 = vst [vmem:[%s252 + $0x348] sm:$0xff] %v463
                %v465 = vld [vmem:[%s251 + $0xd40] sm:$0xff]
                %466 = vst [vmem:[%s252 + $0x350] sm:$0xff] %v465
                %v467 = vld [vmem:[%s251 + $0xd60] sm:$0xff]
                %468 = vst [vmem:[%s252 + $0x358] sm:$0xff] %v467
                %v469 = vld [vmem:[%s251 + $0xd80] sm:$0xff]
                %470 = vst [vmem:[%s252 + $0x360] sm:$0xff] %v469
                %v471 = vld [vmem:[%s251 + $0xda0] sm:$0xff]
                %472 = vst [vmem:[%s252 + $0x368] sm:$0xff] %v471
                %v473 = vld [vmem:[%s251 + $0xdc0] sm:$0xff]
                %474 = vst [vmem:[%s252 + $0x370] sm:$0xff] %v473
                %v475 = vld [vmem:[%s251 + $0xde0] sm:$0xff]
                %476 = vst [vmem:[%s252 + $0x378] sm:$0xff] %v475
                %v477 = vld [vmem:[%s251 + $0xe00] sm:$0xff]
                %478 = vst [vmem:[%s252 + $0x380] sm:$0xff] %v477
                %v479 = vld [vmem:[%s251 + $0xe20] sm:$0xff]
                %480 = vst [vmem:[%s252 + $0x388] sm:$0xff] %v479
                %v481 = vld [vmem:[%s251 + $0xe40] sm:$0xff]
                %482 = vst [vmem:[%s252 + $0x390] sm:$0xff] %v481
                %v483 = vld [vmem:[%s251 + $0xe60] sm:$0xff]
                %484 = vst [vmem:[%s252 + $0x398] sm:$0xff] %v483
                %v485 = vld [vmem:[%s251 + $0xe80] sm:$0xff]
                %486 = vst [vmem:[%s252 + $0x3a0] sm:$0xff] %v485
                %v487 = vld [vmem:[%s251 + $0xea0] sm:$0xff]
                %488 = vst [vmem:[%s252 + $0x3a8] sm:$0xff] %v487
                %v489 = vld [vmem:[%s251 + $0xec0] sm:$0xff]
                %490 = vst [vmem:[%s252 + $0x3b0] sm:$0xff] %v489
                %v491 = vld [vmem:[%s251 + $0xee0] sm:$0xff]
                %492 = vst [vmem:[%s252 + $0x3b8] sm:$0xff] %v491
                %v493 = vld [vmem:[%s251 + $0xf00] sm:$0xff]
                %494 = vst [vmem:[%s252 + $0x3c0] sm:$0xff] %v493
                %v495 = vld [vmem:[%s251 + $0xf20] sm:$0xff]
                %496 = vst [vmem:[%s252 + $0x3c8] sm:$0xff] %v495
                %v497 = vld [vmem:[%s251 + $0xf40] sm:$0xff]
                %498 = vst [vmem:[%s252 + $0x3d0] sm:$0xff] %v497
                %v499 = vld [vmem:[%s251 + $0xf60] sm:$0xff]
                %500 = vst [vmem:[%s252 + $0x3d8] sm:$0xff] %v499
                %v501 = vld [vmem:[%s251 + $0xf80] sm:$0xff]
                %502 = vst [vmem:[%s252 + $0x3e0] sm:$0xff] %v501
                %v503 = vld [vmem:[%s251 + $0xfa0] sm:$0xff]
                %504 = vst [vmem:[%s252 + $0x3e8] sm:$0xff] %v503
                %v505 = vld [vmem:[%s251 + $0xfc0] sm:$0xff]
                %506 = vst [vmem:[%s252 + $0x3f0] sm:$0xff] %v505
                %v507 = vld [vmem:[%s251 + $0xfe0] sm:$0xff]
                %508 = vst [vmem:[%s252 + $0x3f8] sm:$0xff] %v507
                %v509 = vld [vmem:[%s251 + $0x1000] sm:$0xff]
                %510 = vst [vmem:[%s252 + $0x400] sm:$0xff] %v509
                %v511 = vld [vmem:[%s251 + $0x1020] sm:$0xff]
                %512 = vst [vmem:[%s252 + $0x408] sm:$0xff] %v511
                %v513 = vld [vmem:[%s251 + $0x1040] sm:$0xff]
                %514 = vst [vmem:[%s252 + $0x410] sm:$0xff] %v513
                %v515 = vld [vmem:[%s251 + $0x1060] sm:$0xff]
                %516 = vst [vmem:[%s252 + $0x418] sm:$0xff] %v515
                %v517 = vld [vmem:[%s251 + $0x1080] sm:$0xff]
                %518 = vst [vmem:[%s252 + $0x420] sm:$0xff] %v517
                %v519 = vld [vmem:[%s251 + $0x10a0] sm:$0xff]
                %520 = vst [vmem:[%s252 + $0x428] sm:$0xff] %v519
                %v521 = vld [vmem:[%s251 + $0x10c0] sm:$0xff]
                %522 = vst [vmem:[%s252 + $0x430] sm:$0xff] %v521
                %v523 = vld [vmem:[%s251 + $0x10e0] sm:$0xff]
                %524 = vst [vmem:[%s252 + $0x438] sm:$0xff] %v523
                %v525 = vld [vmem:[%s251 + $0x1100] sm:$0xff]
                %526 = vst [vmem:[%s252 + $0x440] sm:$0xff] %v525
                %v527 = vld [vmem:[%s251 + $0x1120] sm:$0xff]
                %528 = vst [vmem:[%s252 + $0x448] sm:$0xff] %v527
                %v529 = vld [vmem:[%s251 + $0x1140] sm:$0xff]
                %530 = vst [vmem:[%s252 + $0x450] sm:$0xff] %v529
                %v531 = vld [vmem:[%s251 + $0x1160] sm:$0xff]
                %532 = vst [vmem:[%s252 + $0x458] sm:$0xff] %v531
                %v533 = vld [vmem:[%s251 + $0x1180] sm:$0xff]
                %534 = vst [vmem:[%s252 + $0x460] sm:$0xff] %v533
                %v535 = vld [vmem:[%s251 + $0x11a0] sm:$0xff]
                %536 = vst [vmem:[%s252 + $0x468] sm:$0xff] %v535
                %v537 = vld [vmem:[%s251 + $0x11c0] sm:$0xff]
                %538 = vst [vmem:[%s252 + $0x470] sm:$0xff] %v537
                %v539 = vld [vmem:[%s251 + $0x11e0] sm:$0xff]
                %540 = vst [vmem:[%s252 + $0x478] sm:$0xff] %v539
                %v541 = vld [vmem:[%s251 + $0x1200] sm:$0xff]
                %542 = vst [vmem:[%s252 + $0x480] sm:$0xff] %v541
                %v543 = vld [vmem:[%s251 + $0x1220] sm:$0xff]
                %544 = vst [vmem:[%s252 + $0x488] sm:$0xff] %v543
                %v545 = vld [vmem:[%s251 + $0x1240] sm:$0xff]
                %546 = vst [vmem:[%s252 + $0x490] sm:$0xff] %v545
                %v547 = vld [vmem:[%s251 + $0x1260] sm:$0xff]
                %548 = vst [vmem:[%s252 + $0x498] sm:$0xff] %v547
                %v549 = vld [vmem:[%s251 + $0x1280] sm:$0xff]
                %550 = vst [vmem:[%s252 + $0x4a0] sm:$0xff] %v549
                %v551 = vld [vmem:[%s251 + $0x12a0] sm:$0xff]
                %552 = vst [vmem:[%s252 + $0x4a8] sm:$0xff] %v551
                %v553 = vld [vmem:[%s251 + $0x12c0] sm:$0xff]
                %554 = vst [vmem:[%s252 + $0x4b0] sm:$0xff] %v553
                %v555 = vld [vmem:[%s251 + $0x12e0] sm:$0xff]
                %556 = vst [vmem:[%s252 + $0x4b8] sm:$0xff] %v555
                %v557 = vld [vmem:[%s251 + $0x1300] sm:$0xff]
                %558 = vst [vmem:[%s252 + $0x4c0] sm:$0xff] %v557
                %v559 = vld [vmem:[%s251 + $0x1320] sm:$0xff]
                %560 = vst [vmem:[%s252 + $0x4c8] sm:$0xff] %v559
                %v561 = vld [vmem:[%s251 + $0x1340] sm:$0xff]
                %562 = vst [vmem:[%s252 + $0x4d0] sm:$0xff] %v561
                %v563 = vld [vmem:[%s251 + $0x1360] sm:$0xff]
                %564 = vst [vmem:[%s252 + $0x4d8] sm:$0xff] %v563
                %v565 = vld [vmem:[%s251 + $0x1380] sm:$0xff]
                %566 = vst [vmem:[%s252 + $0x4e0] sm:$0xff] %v565
                %v567 = vld [vmem:[%s251 + $0x13a0] sm:$0xff]
                %568 = vst [vmem:[%s252 + $0x4e8] sm:$0xff] %v567
                %v569 = vld [vmem:[%s251 + $0x13c0] sm:$0xff]
                %570 = vst [vmem:[%s252 + $0x4f0] sm:$0xff] %v569
                %v571 = vld [vmem:[%s251 + $0x13e0] sm:$0xff]
                %572 = vst [vmem:[%s252 + $0x4f8] sm:$0xff] %v571
                %v573 = vld [vmem:[%s251 + $0x1400] sm:$0xff]
                %574 = vst [vmem:[%s252 + $0x500] sm:$0xff] %v573
                %v575 = vld [vmem:[%s251 + $0x1420] sm:$0xff]
                %576 = vst [vmem:[%s252 + $0x508] sm:$0xff] %v575
                %v577 = vld [vmem:[%s251 + $0x1440] sm:$0xff]
                %578 = vst [vmem:[%s252 + $0x510] sm:$0xff] %v577
                %v579 = vld [vmem:[%s251 + $0x1460] sm:$0xff]
                %580 = vst [vmem:[%s252 + $0x518] sm:$0xff] %v579
                %v581 = vld [vmem:[%s251 + $0x1480] sm:$0xff]
                %582 = vst [vmem:[%s252 + $0x520] sm:$0xff] %v581
                %v583 = vld [vmem:[%s251 + $0x14a0] sm:$0xff]
                %584 = vst [vmem:[%s252 + $0x528] sm:$0xff] %v583
                %v585 = vld [vmem:[%s251 + $0x14c0] sm:$0xff]
                %586 = vst [vmem:[%s252 + $0x530] sm:$0xff] %v585
                %v587 = vld [vmem:[%s251 + $0x14e0] sm:$0xff]
                %588 = vst [vmem:[%s252 + $0x538] sm:$0xff] %v587
                %v589 = vld [vmem:[%s251 + $0x1500] sm:$0xff]
                %590 = vst [vmem:[%s252 + $0x540] sm:$0xff] %v589
                %v591 = vld [vmem:[%s251 + $0x1520] sm:$0xff]
                %592 = vst [vmem:[%s252 + $0x548] sm:$0xff] %v591
                %v593 = vld [vmem:[%s251 + $0x1540] sm:$0xff]
                %594 = vst [vmem:[%s252 + $0x550] sm:$0xff] %v593
                %v595 = vld [vmem:[%s251 + $0x1560] sm:$0xff]
                %596 = vst [vmem:[%s252 + $0x558] sm:$0xff] %v595
                %v597 = vld [vmem:[%s251 + $0x1580] sm:$0xff]
                %598 = vst [vmem:[%s252 + $0x560] sm:$0xff] %v597
                %v599 = vld [vmem:[%s251 + $0x15a0] sm:$0xff]
                %600 = vst [vmem:[%s252 + $0x568] sm:$0xff] %v599
                %v601 = vld [vmem:[%s251 + $0x15c0] sm:$0xff]
                %602 = vst [vmem:[%s252 + $0x570] sm:$0xff] %v601
                %v603 = vld [vmem:[%s251 + $0x15e0] sm:$0xff]
                %604 = vst [vmem:[%s252 + $0x578] sm:$0xff] %v603
                %v605 = vld [vmem:[%s251 + $0x1600] sm:$0xff]
                %606 = vst [vmem:[%s252 + $0x580] sm:$0xff] %v605
                %v607 = vld [vmem:[%s251 + $0x1620] sm:$0xff]
                %608 = vst [vmem:[%s252 + $0x588] sm:$0xff] %v607
                %v609 = vld [vmem:[%s251 + $0x1640] sm:$0xff]
                %610 = vst [vmem:[%s252 + $0x590] sm:$0xff] %v609
                %v611 = vld [vmem:[%s251 + $0x1660] sm:$0xff]
                %612 = vst [vmem:[%s252 + $0x598] sm:$0xff] %v611
                %v613 = vld [vmem:[%s251 + $0x1680] sm:$0xff]
                %614 = vst [vmem:[%s252 + $0x5a0] sm:$0xff] %v613
                %v615 = vld [vmem:[%s251 + $0x16a0] sm:$0xff]
                %616 = vst [vmem:[%s252 + $0x5a8] sm:$0xff] %v615
                %v617 = vld [vmem:[%s251 + $0x16c0] sm:$0xff]
                %618 = vst [vmem:[%s252 + $0x5b0] sm:$0xff] %v617
                %v619 = vld [vmem:[%s251 + $0x16e0] sm:$0xff]
                %620 = vst [vmem:[%s252 + $0x5b8] sm:$0xff] %v619
                %v621 = vld [vmem:[%s251 + $0x1700] sm:$0xff]
                %622 = vst [vmem:[%s252 + $0x5c0] sm:$0xff] %v621
                %v623 = vld [vmem:[%s251 + $0x1720] sm:$0xff]
                %624 = vst [vmem:[%s252 + $0x5c8] sm:$0xff] %v623
                %v625 = vld [vmem:[%s251 + $0x1740] sm:$0xff]
                %626 = vst [vmem:[%s252 + $0x5d0] sm:$0xff] %v625
                %v627 = vld [vmem:[%s251 + $0x1760] sm:$0xff]
                %628 = vst [vmem:[%s252 + $0x5d8] sm:$0xff] %v627
                %v629 = vld [vmem:[%s251 + $0x1780] sm:$0xff]
                %630 = vst [vmem:[%s252 + $0x5e0] sm:$0xff] %v629
                %v631 = vld [vmem:[%s251 + $0x17a0] sm:$0xff]
                %632 = vst [vmem:[%s252 + $0x5e8] sm:$0xff] %v631
                %v633 = vld [vmem:[%s251 + $0x17c0] sm:$0xff]
                %634 = vst [vmem:[%s252 + $0x5f0] sm:$0xff] %v633
                %v635 = vld [vmem:[%s251 + $0x17e0] sm:$0xff]
                %636 = vst [vmem:[%s252 + $0x5f8] sm:$0xff] %v635
                %v637 = vld [vmem:[%s251 + $0x1800] sm:$0xff]
                %638 = vst [vmem:[%s252 + $0x600] sm:$0xff] %v637
                %v639 = vld [vmem:[%s251 + $0x1820] sm:$0xff]
                %640 = vst [vmem:[%s252 + $0x608] sm:$0xff] %v639
                %v641 = vld [vmem:[%s251 + $0x1840] sm:$0xff]
                %642 = vst [vmem:[%s252 + $0x610] sm:$0xff] %v641
                %v643 = vld [vmem:[%s251 + $0x1860] sm:$0xff]
                %644 = vst [vmem:[%s252 + $0x618] sm:$0xff] %v643
                %v645 = vld [vmem:[%s251 + $0x1880] sm:$0xff]
                %646 = vst [vmem:[%s252 + $0x620] sm:$0xff] %v645
                %v647 = vld [vmem:[%s251 + $0x18a0] sm:$0xff]
                %648 = vst [vmem:[%s252 + $0x628] sm:$0xff] %v647
                %v649 = vld [vmem:[%s251 + $0x18c0] sm:$0xff]
                %650 = vst [vmem:[%s252 + $0x630] sm:$0xff] %v649
                %v651 = vld [vmem:[%s251 + $0x18e0] sm:$0xff]
                %652 = vst [vmem:[%s252 + $0x638] sm:$0xff] %v651
                %v653 = vld [vmem:[%s251 + $0x1900] sm:$0xff]
                %654 = vst [vmem:[%s252 + $0x640] sm:$0xff] %v653
                %v655 = vld [vmem:[%s251 + $0x1920] sm:$0xff]
                %656 = vst [vmem:[%s252 + $0x648] sm:$0xff] %v655
                %v657 = vld [vmem:[%s251 + $0x1940] sm:$0xff]
                %658 = vst [vmem:[%s252 + $0x650] sm:$0xff] %v657
                %v659 = vld [vmem:[%s251 + $0x1960] sm:$0xff]
                %660 = vst [vmem:[%s252 + $0x658] sm:$0xff] %v659
                %v661 = vld [vmem:[%s251 + $0x1980] sm:$0xff]
                %662 = vst [vmem:[%s252 + $0x660] sm:$0xff] %v661
                %v663 = vld [vmem:[%s251 + $0x19a0] sm:$0xff]
                %664 = vst [vmem:[%s252 + $0x668] sm:$0xff] %v663
                %v665 = vld [vmem:[%s251 + $0x19c0] sm:$0xff]
                %666 = vst [vmem:[%s252 + $0x670] sm:$0xff] %v665
                %v667 = vld [vmem:[%s251 + $0x19e0] sm:$0xff]
                %668 = vst [vmem:[%s252 + $0x678] sm:$0xff] %v667
                %v669 = vld [vmem:[%s251 + $0x1a00] sm:$0xff]
                %670 = vst [vmem:[%s252 + $0x680] sm:$0xff] %v669
                %v671 = vld [vmem:[%s251 + $0x1a20] sm:$0xff]
                %672 = vst [vmem:[%s252 + $0x688] sm:$0xff] %v671
                %v673 = vld [vmem:[%s251 + $0x1a40] sm:$0xff]
                %674 = vst [vmem:[%s252 + $0x690] sm:$0xff] %v673
                %v675 = vld [vmem:[%s251 + $0x1a60] sm:$0xff]
                %676 = vst [vmem:[%s252 + $0x698] sm:$0xff] %v675
                %v677 = vld [vmem:[%s251 + $0x1a80] sm:$0xff]
                %678 = vst [vmem:[%s252 + $0x6a0] sm:$0xff] %v677
                %v679 = vld [vmem:[%s251 + $0x1aa0] sm:$0xff]
                %680 = vst [vmem:[%s252 + $0x6a8] sm:$0xff] %v679
                %v681 = vld [vmem:[%s251 + $0x1ac0] sm:$0xff]
                %682 = vst [vmem:[%s252 + $0x6b0] sm:$0xff] %v681
                %v683 = vld [vmem:[%s251 + $0x1ae0] sm:$0xff]
                %684 = vst [vmem:[%s252 + $0x6b8] sm:$0xff] %v683
                %v685 = vld [vmem:[%s251 + $0x1b00] sm:$0xff]
                %686 = vst [vmem:[%s252 + $0x6c0] sm:$0xff] %v685
                %v687 = vld [vmem:[%s251 + $0x1b20] sm:$0xff]
                %688 = vst [vmem:[%s252 + $0x6c8] sm:$0xff] %v687
                %v689 = vld [vmem:[%s251 + $0x1b40] sm:$0xff]
                %690 = vst [vmem:[%s252 + $0x6d0] sm:$0xff] %v689
                %v691 = vld [vmem:[%s251 + $0x1b60] sm:$0xff]
                %692 = vst [vmem:[%s252 + $0x6d8] sm:$0xff] %v691
                %v693 = vld [vmem:[%s251 + $0x1b80] sm:$0xff]
                %694 = vst [vmem:[%s252 + $0x6e0] sm:$0xff] %v693
                %v695 = vld [vmem:[%s251 + $0x1ba0] sm:$0xff]
                %696 = vst [vmem:[%s252 + $0x6e8] sm:$0xff] %v695
                %v697 = vld [vmem:[%s251 + $0x1bc0] sm:$0xff]
                %698 = vst [vmem:[%s252 + $0x6f0] sm:$0xff] %v697
                %v699 = vld [vmem:[%s251 + $0x1be0] sm:$0xff]
                %700 = vst [vmem:[%s252 + $0x6f8] sm:$0xff] %v699
                %v701 = vld [vmem:[%s251 + $0x1c00] sm:$0xff]
                %702 = vst [vmem:[%s252 + $0x700] sm:$0xff] %v701
                %v703 = vld [vmem:[%s251 + $0x1c20] sm:$0xff]
                %704 = vst [vmem:[%s252 + $0x708] sm:$0xff] %v703
                %v705 = vld [vmem:[%s251 + $0x1c40] sm:$0xff]
                %706 = vst [vmem:[%s252 + $0x710] sm:$0xff] %v705
                %v707 = vld [vmem:[%s251 + $0x1c60] sm:$0xff]
                %708 = vst [vmem:[%s252 + $0x718] sm:$0xff] %v707
                %v709 = vld [vmem:[%s251 + $0x1c80] sm:$0xff]
                %710 = vst [vmem:[%s252 + $0x720] sm:$0xff] %v709
                %v711 = vld [vmem:[%s251 + $0x1ca0] sm:$0xff]
                %712 = vst [vmem:[%s252 + $0x728] sm:$0xff] %v711
                %v713 = vld [vmem:[%s251 + $0x1cc0] sm:$0xff]
                %714 = vst [vmem:[%s252 + $0x730] sm:$0xff] %v713
                %v715 = vld [vmem:[%s251 + $0x1ce0] sm:$0xff]
                %716 = vst [vmem:[%s252 + $0x738] sm:$0xff] %v715
                %v717 = vld [vmem:[%s251 + $0x1d00] sm:$0xff]
                %718 = vst [vmem:[%s252 + $0x740] sm:$0xff] %v717
                %v719 = vld [vmem:[%s251 + $0x1d20] sm:$0xff]
                %720 = vst [vmem:[%s252 + $0x748] sm:$0xff] %v719
                %v721 = vld [vmem:[%s251 + $0x1d40] sm:$0xff]
                %722 = vst [vmem:[%s252 + $0x750] sm:$0xff] %v721
                %v723 = vld [vmem:[%s251 + $0x1d60] sm:$0xff]
                %724 = vst [vmem:[%s252 + $0x758] sm:$0xff] %v723
                %v725 = vld [vmem:[%s251 + $0x1d80] sm:$0xff]
                %726 = vst [vmem:[%s252 + $0x760] sm:$0xff] %v725
                %v727 = vld [vmem:[%s251 + $0x1da0] sm:$0xff]
                %728 = vst [vmem:[%s252 + $0x768] sm:$0xff] %v727
                %v729 = vld [vmem:[%s251 + $0x1dc0] sm:$0xff]
                %730 = vst [vmem:[%s252 + $0x770] sm:$0xff] %v729
                %v731 = vld [vmem:[%s251 + $0x1de0] sm:$0xff]
                %732 = vst [vmem:[%s252 + $0x778] sm:$0xff] %v731
                %v733 = vld [vmem:[%s251 + $0x1e00] sm:$0xff]
                %734 = vst [vmem:[%s252 + $0x780] sm:$0xff] %v733
                %v735 = vld [vmem:[%s251 + $0x1e20] sm:$0xff]
                %736 = vst [vmem:[%s252 + $0x788] sm:$0xff] %v735
                %v737 = vld [vmem:[%s251 + $0x1e40] sm:$0xff]
                %738 = vst [vmem:[%s252 + $0x790] sm:$0xff] %v737
                %v739 = vld [vmem:[%s251 + $0x1e60] sm:$0xff]
                %740 = vst [vmem:[%s252 + $0x798] sm:$0xff] %v739
                %v741 = vld [vmem:[%s251 + $0x1e80] sm:$0xff]
                %742 = vst [vmem:[%s252 + $0x7a0] sm:$0xff] %v741
                %v743 = vld [vmem:[%s251 + $0x1ea0] sm:$0xff]
                %744 = vst [vmem:[%s252 + $0x7a8] sm:$0xff] %v743
                %v745 = vld [vmem:[%s251 + $0x1ec0] sm:$0xff]
                %746 = vst [vmem:[%s252 + $0x7b0] sm:$0xff] %v745
                %v747 = vld [vmem:[%s251 + $0x1ee0] sm:$0xff]
                %748 = vst [vmem:[%s252 + $0x7b8] sm:$0xff] %v747
                %v749 = vld [vmem:[%s251 + $0x1f00] sm:$0xff]
                %750 = vst [vmem:[%s252 + $0x7c0] sm:$0xff] %v749
                %v751 = vld [vmem:[%s251 + $0x1f20] sm:$0xff]
                %752 = vst [vmem:[%s252 + $0x7c8] sm:$0xff] %v751
                %v753 = vld [vmem:[%s251 + $0x1f40] sm:$0xff]
                %754 = vst [vmem:[%s252 + $0x7d0] sm:$0xff] %v753
                %v755 = vld [vmem:[%s251 + $0x1f60] sm:$0xff]
                %756 = vst [vmem:[%s252 + $0x7d8] sm:$0xff] %v755
                %v757 = vld [vmem:[%s251 + $0x1f80] sm:$0xff]
                %758 = vst [vmem:[%s252 + $0x7e0] sm:$0xff] %v757
                %v759 = vld [vmem:[%s251 + $0x1fa0] sm:$0xff]
                %760 = vst [vmem:[%s252 + $0x7e8] sm:$0xff] %v759
                %v761 = vld [vmem:[%s251 + $0x1fc0] sm:$0xff]
                %762 = vst [vmem:[%s252 + $0x7f0] sm:$0xff] %v761
                %v763 = vld [vmem:[%s251 + $0x1fe0] sm:$0xff]
                %764 = vst [vmem:[%s252 + $0x7f8] sm:$0xff] %v763
                %v765 = vld [vmem:[%s251 + $0x2000] sm:$0xff]
                %766 = vst [vmem:[%s252 + $0x800] sm:$0xff] %v765
                %v767 = vld [vmem:[%s251 + $0x2020] sm:$0xff]
                %768 = vst [vmem:[%s252 + $0x808] sm:$0xff] %v767
                %v769 = vld [vmem:[%s251 + $0x2040] sm:$0xff]
                %770 = vst [vmem:[%s252 + $0x810] sm:$0xff] %v769
                %v771 = vld [vmem:[%s251 + $0x2060] sm:$0xff]
                %772 = vst [vmem:[%s252 + $0x818] sm:$0xff] %v771
                %v773 = vld [vmem:[%s251 + $0x2080] sm:$0xff]
                %774 = vst [vmem:[%s252 + $0x820] sm:$0xff] %v773
                %v775 = vld [vmem:[%s251 + $0x20a0] sm:$0xff]
                %776 = vst [vmem:[%s252 + $0x828] sm:$0xff] %v775
                %v777 = vld [vmem:[%s251 + $0x20c0] sm:$0xff]
                %778 = vst [vmem:[%s252 + $0x830] sm:$0xff] %v777
                %v779 = vld [vmem:[%s251 + $0x20e0] sm:$0xff]
                %780 = vst [vmem:[%s252 + $0x838] sm:$0xff] %v779
                %v781 = vld [vmem:[%s251 + $0x2100] sm:$0xff]
                %782 = vst [vmem:[%s252 + $0x840] sm:$0xff] %v781
                %v783 = vld [vmem:[%s251 + $0x2120] sm:$0xff]
                %784 = vst [vmem:[%s252 + $0x848] sm:$0xff] %v783
                %v785 = vld [vmem:[%s251 + $0x2140] sm:$0xff]
                %786 = vst [vmem:[%s252 + $0x850] sm:$0xff] %v785
                %v787 = vld [vmem:[%s251 + $0x2160] sm:$0xff]
                %788 = vst [vmem:[%s252 + $0x858] sm:$0xff] %v787
                %v789 = vld [vmem:[%s251 + $0x2180] sm:$0xff]
                %790 = vst [vmem:[%s252 + $0x860] sm:$0xff] %v789
                %v791 = vld [vmem:[%s251 + $0x21a0] sm:$0xff]
                %792 = vst [vmem:[%s252 + $0x868] sm:$0xff] %v791
                %v793 = vld [vmem:[%s251 + $0x21c0] sm:$0xff]
                %794 = vst [vmem:[%s252 + $0x870] sm:$0xff] %v793
                %v795 = vld [vmem:[%s251 + $0x21e0] sm:$0xff]
                %796 = vst [vmem:[%s252 + $0x878] sm:$0xff] %v795
                %v797 = vld [vmem:[%s251 + $0x2200] sm:$0xff]
                %798 = vst [vmem:[%s252 + $0x880] sm:$0xff] %v797
                %v799 = vld [vmem:[%s251 + $0x2220] sm:$0xff]
                %800 = vst [vmem:[%s252 + $0x888] sm:$0xff] %v799
                %v801 = vld [vmem:[%s251 + $0x2240] sm:$0xff]
                %802 = vst [vmem:[%s252 + $0x890] sm:$0xff] %v801
                %v803 = vld [vmem:[%s251 + $0x2260] sm:$0xff]
                %804 = vst [vmem:[%s252 + $0x898] sm:$0xff] %v803
                %v805 = vld [vmem:[%s251 + $0x2280] sm:$0xff]
                %806 = vst [vmem:[%s252 + $0x8a0] sm:$0xff] %v805
                %v807 = vld [vmem:[%s251 + $0x22a0] sm:$0xff]
                %808 = vst [vmem:[%s252 + $0x8a8] sm:$0xff] %v807
                %v809 = vld [vmem:[%s251 + $0x22c0] sm:$0xff]
                %810 = vst [vmem:[%s252 + $0x8b0] sm:$0xff] %v809
                %v811 = vld [vmem:[%s251 + $0x22e0] sm:$0xff]
                %812 = vst [vmem:[%s252 + $0x8b8] sm:$0xff] %v811
                %v813 = vld [vmem:[%s251 + $0x2300] sm:$0xff]
                %814 = vst [vmem:[%s252 + $0x8c0] sm:$0xff] %v813
                %v815 = vld [vmem:[%s251 + $0x2320] sm:$0xff]
                %816 = vst [vmem:[%s252 + $0x8c8] sm:$0xff] %v815
                %v817 = vld [vmem:[%s251 + $0x2340] sm:$0xff]
                %818 = vst [vmem:[%s252 + $0x8d0] sm:$0xff] %v817
                %v819 = vld [vmem:[%s251 + $0x2360] sm:$0xff]
                %820 = vst [vmem:[%s252 + $0x8d8] sm:$0xff] %v819
                %v821 = vld [vmem:[%s251 + $0x2380] sm:$0xff]
                %822 = vst [vmem:[%s252 + $0x8e0] sm:$0xff] %v821
                %v823 = vld [vmem:[%s251 + $0x23a0] sm:$0xff]
                %824 = vst [vmem:[%s252 + $0x8e8] sm:$0xff] %v823
                %v825 = vld [vmem:[%s251 + $0x23c0] sm:$0xff]
                %826 = vst [vmem:[%s252 + $0x8f0] sm:$0xff] %v825
                %v827 = vld [vmem:[%s251 + $0x23e0] sm:$0xff]
                %828 = vst [vmem:[%s252 + $0x8f8] sm:$0xff] %v827
                %v829 = vld [vmem:[%s251 + $0x2400] sm:$0xff]
                %830 = vst [vmem:[%s252 + $0x900] sm:$0xff] %v829
                %v831 = vld [vmem:[%s251 + $0x2420] sm:$0xff]
                %832 = vst [vmem:[%s252 + $0x908] sm:$0xff] %v831
                %v833 = vld [vmem:[%s251 + $0x2440] sm:$0xff]
                %834 = vst [vmem:[%s252 + $0x910] sm:$0xff] %v833
                %v835 = vld [vmem:[%s251 + $0x2460] sm:$0xff]
                %836 = vst [vmem:[%s252 + $0x918] sm:$0xff] %v835
                %v837 = vld [vmem:[%s251 + $0x2480] sm:$0xff]
                %838 = vst [vmem:[%s252 + $0x920] sm:$0xff] %v837
                %v839 = vld [vmem:[%s251 + $0x24a0] sm:$0xff]
                %840 = vst [vmem:[%s252 + $0x928] sm:$0xff] %v839
                %v841 = vld [vmem:[%s251 + $0x24c0] sm:$0xff]
                %842 = vst [vmem:[%s252 + $0x930] sm:$0xff] %v841
                %v843 = vld [vmem:[%s251 + $0x24e0] sm:$0xff]
                %844 = vst [vmem:[%s252 + $0x938] sm:$0xff] %v843
                %v845 = vld [vmem:[%s251 + $0x2500] sm:$0xff]
                %846 = vst [vmem:[%s252 + $0x940] sm:$0xff] %v845
                %v847 = vld [vmem:[%s251 + $0x2520] sm:$0xff]
                %848 = vst [vmem:[%s252 + $0x948] sm:$0xff] %v847
                %v849 = vld [vmem:[%s251 + $0x2540] sm:$0xff]
                %850 = vst [vmem:[%s252 + $0x950] sm:$0xff] %v849
                %v851 = vld [vmem:[%s251 + $0x2560] sm:$0xff]
                %852 = vst [vmem:[%s252 + $0x958] sm:$0xff] %v851
                %v853 = vld [vmem:[%s251 + $0x2580] sm:$0xff]
                %854 = vst [vmem:[%s252 + $0x960] sm:$0xff] %v853
                %v855 = vld [vmem:[%s251 + $0x25a0] sm:$0xff]
                %856 = vst [vmem:[%s252 + $0x968] sm:$0xff] %v855
                %v857 = vld [vmem:[%s251 + $0x25c0] sm:$0xff]
                %858 = vst [vmem:[%s252 + $0x970] sm:$0xff] %v857
                %v859 = vld [vmem:[%s251 + $0x25e0] sm:$0xff]
                %860 = vst [vmem:[%s252 + $0x978] sm:$0xff] %v859
                %v861 = vld [vmem:[%s251 + $0x2600] sm:$0xff]
                %862 = vst [vmem:[%s252 + $0x980] sm:$0xff] %v861
                %v863 = vld [vmem:[%s251 + $0x2620] sm:$0xff]
                %864 = vst [vmem:[%s252 + $0x988] sm:$0xff] %v863
                %v865 = vld [vmem:[%s251 + $0x2640] sm:$0xff]
                %866 = vst [vmem:[%s252 + $0x990] sm:$0xff] %v865
                %v867 = vld [vmem:[%s251 + $0x2660] sm:$0xff]
                %868 = vst [vmem:[%s252 + $0x998] sm:$0xff] %v867
                %v869 = vld [vmem:[%s251 + $0x2680] sm:$0xff]
                %870 = vst [vmem:[%s252 + $0x9a0] sm:$0xff] %v869
                %v871 = vld [vmem:[%s251 + $0x26a0] sm:$0xff]
                %872 = vst [vmem:[%s252 + $0x9a8] sm:$0xff] %v871
                %v873 = vld [vmem:[%s251 + $0x26c0] sm:$0xff]
                %874 = vst [vmem:[%s252 + $0x9b0] sm:$0xff] %v873
                %v875 = vld [vmem:[%s251 + $0x26e0] sm:$0xff]
                %876 = vst [vmem:[%s252 + $0x9b8] sm:$0xff] %v875
                %v877 = vld [vmem:[%s251 + $0x2700] sm:$0xff]
                %878 = vst [vmem:[%s252 + $0x9c0] sm:$0xff] %v877
                %v879 = vld [vmem:[%s251 + $0x2720] sm:$0xff]
                %880 = vst [vmem:[%s252 + $0x9c8] sm:$0xff] %v879
                %v881 = vld [vmem:[%s251 + $0x2740] sm:$0xff]
                %882 = vst [vmem:[%s252 + $0x9d0] sm:$0xff] %v881
                %v883 = vld [vmem:[%s251 + $0x2760] sm:$0xff]
                %884 = vst [vmem:[%s252 + $0x9d8] sm:$0xff] %v883
                %v885 = vld [vmem:[%s251 + $0x2780] sm:$0xff]
                %886 = vst [vmem:[%s252 + $0x9e0] sm:$0xff] %v885
                %v887 = vld [vmem:[%s251 + $0x27a0] sm:$0xff]
                %888 = vst [vmem:[%s252 + $0x9e8] sm:$0xff] %v887
                %v889 = vld [vmem:[%s251 + $0x27c0] sm:$0xff]
                %890 = vst [vmem:[%s252 + $0x9f0] sm:$0xff] %v889
                %v891 = vld [vmem:[%s251 + $0x27e0] sm:$0xff]
                %892 = vst [vmem:[%s252 + $0x9f8] sm:$0xff] %v891
                %v893 = vld [vmem:[%s251 + $0x2800] sm:$0xff]
                %894 = vst [vmem:[%s252 + $0xa00] sm:$0xff] %v893
                %v895 = vld [vmem:[%s251 + $0x2820] sm:$0xff]
                %896 = vst [vmem:[%s252 + $0xa08] sm:$0xff] %v895
                %v897 = vld [vmem:[%s251 + $0x2840] sm:$0xff]
                %898 = vst [vmem:[%s252 + $0xa10] sm:$0xff] %v897
                %v899 = vld [vmem:[%s251 + $0x2860] sm:$0xff]
                %900 = vst [vmem:[%s252 + $0xa18] sm:$0xff] %v899
                %v901 = vld [vmem:[%s251 + $0x2880] sm:$0xff]
                %902 = vst [vmem:[%s252 + $0xa20] sm:$0xff] %v901
                %v903 = vld [vmem:[%s251 + $0x28a0] sm:$0xff]
                %904 = vst [vmem:[%s252 + $0xa28] sm:$0xff] %v903
                %v905 = vld [vmem:[%s251 + $0x28c0] sm:$0xff]
                %906 = vst [vmem:[%s252 + $0xa30] sm:$0xff] %v905
                %v907 = vld [vmem:[%s251 + $0x28e0] sm:$0xff]
                %908 = vst [vmem:[%s252 + $0xa38] sm:$0xff] %v907
                %v909 = vld [vmem:[%s251 + $0x2900] sm:$0xff]
                %910 = vst [vmem:[%s252 + $0xa40] sm:$0xff] %v909
                %v911 = vld [vmem:[%s251 + $0x2920] sm:$0xff]
                %912 = vst [vmem:[%s252 + $0xa48] sm:$0xff] %v911
                %v913 = vld [vmem:[%s251 + $0x2940] sm:$0xff]
                %914 = vst [vmem:[%s252 + $0xa50] sm:$0xff] %v913
                %v915 = vld [vmem:[%s251 + $0x2960] sm:$0xff]
                %916 = vst [vmem:[%s252 + $0xa58] sm:$0xff] %v915
                %v917 = vld [vmem:[%s251 + $0x2980] sm:$0xff]
                %918 = vst [vmem:[%s252 + $0xa60] sm:$0xff] %v917
                %v919 = vld [vmem:[%s251 + $0x29a0] sm:$0xff]
                %920 = vst [vmem:[%s252 + $0xa68] sm:$0xff] %v919
                %v921 = vld [vmem:[%s251 + $0x29c0] sm:$0xff]
                %922 = vst [vmem:[%s252 + $0xa70] sm:$0xff] %v921
                %v923 = vld [vmem:[%s251 + $0x29e0] sm:$0xff]
                %924 = vst [vmem:[%s252 + $0xa78] sm:$0xff] %v923
                %v925 = vld [vmem:[%s251 + $0x2a00] sm:$0xff]
                %926 = vst [vmem:[%s252 + $0xa80] sm:$0xff] %v925
                %v927 = vld [vmem:[%s251 + $0x2a20] sm:$0xff]
                %928 = vst [vmem:[%s252 + $0xa88] sm:$0xff] %v927
                %v929 = vld [vmem:[%s251 + $0x2a40] sm:$0xff]
                %930 = vst [vmem:[%s252 + $0xa90] sm:$0xff] %v929
                %v931 = vld [vmem:[%s251 + $0x2a60] sm:$0xff]
                %932 = vst [vmem:[%s252 + $0xa98] sm:$0xff] %v931
                %v933 = vld [vmem:[%s251 + $0x2a80] sm:$0xff]
                %934 = vst [vmem:[%s252 + $0xaa0] sm:$0xff] %v933
                %v935 = vld [vmem:[%s251 + $0x2aa0] sm:$0xff]
                %936 = vst [vmem:[%s252 + $0xaa8] sm:$0xff] %v935
                %v937 = vld [vmem:[%s251 + $0x2ac0] sm:$0xff]
                %938 = vst [vmem:[%s252 + $0xab0] sm:$0xff] %v937
                %v939 = vld [vmem:[%s251 + $0x2ae0] sm:$0xff]
                %940 = vst [vmem:[%s252 + $0xab8] sm:$0xff] %v939
                %v941 = vld [vmem:[%s251 + $0x2b00] sm:$0xff]
                %942 = vst [vmem:[%s252 + $0xac0] sm:$0xff] %v941
                %v943 = vld [vmem:[%s251 + $0x2b20] sm:$0xff]
                %944 = vst [vmem:[%s252 + $0xac8] sm:$0xff] %v943
                %v945 = vld [vmem:[%s251 + $0x2b40] sm:$0xff]
                %946 = vst [vmem:[%s252 + $0xad0] sm:$0xff] %v945
                %v947 = vld [vmem:[%s251 + $0x2b60] sm:$0xff]
                %948 = vst [vmem:[%s252 + $0xad8] sm:$0xff] %v947
                %v949 = vld [vmem:[%s251 + $0x2b80] sm:$0xff]
                %950 = vst [vmem:[%s252 + $0xae0] sm:$0xff] %v949
                %v951 = vld [vmem:[%s251 + $0x2ba0] sm:$0xff]
                %952 = vst [vmem:[%s252 + $0xae8] sm:$0xff] %v951
                %v953 = vld [vmem:[%s251 + $0x2bc0] sm:$0xff]
                %954 = vst [vmem:[%s252 + $0xaf0] sm:$0xff] %v953
                %v955 = vld [vmem:[%s251 + $0x2be0] sm:$0xff]
                %956 = vst [vmem:[%s252 + $0xaf8] sm:$0xff] %v955
                %v957 = vld [vmem:[%s251 + $0x2c00] sm:$0xff]
                %958 = vst [vmem:[%s252 + $0xb00] sm:$0xff] %v957
                %v959 = vld [vmem:[%s251 + $0x2c20] sm:$0xff]
                %960 = vst [vmem:[%s252 + $0xb08] sm:$0xff] %v959
                %v961 = vld [vmem:[%s251 + $0x2c40] sm:$0xff]
                %962 = vst [vmem:[%s252 + $0xb10] sm:$0xff] %v961
                %v963 = vld [vmem:[%s251 + $0x2c60] sm:$0xff]
                %964 = vst [vmem:[%s252 + $0xb18] sm:$0xff] %v963
                %v965 = vld [vmem:[%s251 + $0x2c80] sm:$0xff]
                %966 = vst [vmem:[%s252 + $0xb20] sm:$0xff] %v965
                %v967 = vld [vmem:[%s251 + $0x2ca0] sm:$0xff]
                %968 = vst [vmem:[%s252 + $0xb28] sm:$0xff] %v967
                %v969 = vld [vmem:[%s251 + $0x2cc0] sm:$0xff]
                %970 = vst [vmem:[%s252 + $0xb30] sm:$0xff] %v969
                %v971 = vld [vmem:[%s251 + $0x2ce0] sm:$0xff]
                %972 = vst [vmem:[%s252 + $0xb38] sm:$0xff] %v971
                %v973 = vld [vmem:[%s251 + $0x2d00] sm:$0xff]
                %974 = vst [vmem:[%s252 + $0xb40] sm:$0xff] %v973
                %v975 = vld [vmem:[%s251 + $0x2d20] sm:$0xff]
                %976 = vst [vmem:[%s252 + $0xb48] sm:$0xff] %v975
                %v977 = vld [vmem:[%s251 + $0x2d40] sm:$0xff]
                %978 = vst [vmem:[%s252 + $0xb50] sm:$0xff] %v977
                %v979 = vld [vmem:[%s251 + $0x2d60] sm:$0xff]
                %980 = vst [vmem:[%s252 + $0xb58] sm:$0xff] %v979
                %v981 = vld [vmem:[%s251 + $0x2d80] sm:$0xff]
                %982 = vst [vmem:[%s252 + $0xb60] sm:$0xff] %v981
                %v983 = vld [vmem:[%s251 + $0x2da0] sm:$0xff]
                %984 = vst [vmem:[%s252 + $0xb68] sm:$0xff] %v983
                %v985 = vld [vmem:[%s251 + $0x2dc0] sm:$0xff]
                %986 = vst [vmem:[%s252 + $0xb70] sm:$0xff] %v985
                %v987 = vld [vmem:[%s251 + $0x2de0] sm:$0xff]
                %988 = vst [vmem:[%s252 + $0xb78] sm:$0xff] %v987
                %v989 = vld [vmem:[%s251 + $0x2e00] sm:$0xff]
                %990 = vst [vmem:[%s252 + $0xb80] sm:$0xff] %v989
                %v991 = vld [vmem:[%s251 + $0x2e20] sm:$0xff]
                %992 = vst [vmem:[%s252 + $0xb88] sm:$0xff] %v991
                %v993 = vld [vmem:[%s251 + $0x2e40] sm:$0xff]
                %994 = vst [vmem:[%s252 + $0xb90] sm:$0xff] %v993
                %v995 = vld [vmem:[%s251 + $0x2e60] sm:$0xff]
                %996 = vst [vmem:[%s252 + $0xb98] sm:$0xff] %v995
                %v997 = vld [vmem:[%s251 + $0x2e80] sm:$0xff]
                %998 = vst [vmem:[%s252 + $0xba0] sm:$0xff] %v997
                %v999 = vld [vmem:[%s251 + $0x2ea0] sm:$0xff]
                %1000 = vst [vmem:[%s252 + $0xba8] sm:$0xff] %v999
                %v1001 = vld [vmem:[%s251 + $0x2ec0] sm:$0xff]
                %1002 = vst [vmem:[%s252 + $0xbb0] sm:$0xff] %v1001
                %v1003 = vld [vmem:[%s251 + $0x2ee0] sm:$0xff]
                %1004 = vst [vmem:[%s252 + $0xbb8] sm:$0xff] %v1003
                %v1005 = vld [vmem:[%s251 + $0x2f00] sm:$0xff]
                %1006 = vst [vmem:[%s252 + $0xbc0] sm:$0xff] %v1005
                %v1007 = vld [vmem:[%s251 + $0x2f20] sm:$0xff]
                %1008 = vst [vmem:[%s252 + $0xbc8] sm:$0xff] %v1007
                %v1009 = vld [vmem:[%s251 + $0x2f40] sm:$0xff]
                %1010 = vst [vmem:[%s252 + $0xbd0] sm:$0xff] %v1009
                %v1011 = vld [vmem:[%s251 + $0x2f60] sm:$0xff]
                %1012 = vst [vmem:[%s252 + $0xbd8] sm:$0xff] %v1011
                %v1013 = vld [vmem:[%s251 + $0x2f80] sm:$0xff]
                %1014 = vst [vmem:[%s252 + $0xbe0] sm:$0xff] %v1013
                %v1015 = vld [vmem:[%s251 + $0x2fa0] sm:$0xff]
                %1016 = vst [vmem:[%s252 + $0xbe8] sm:$0xff] %v1015
                %v1017 = vld [vmem:[%s251 + $0x2fc0] sm:$0xff]
                %1018 = vst [vmem:[%s252 + $0xbf0] sm:$0xff] %v1017
                %v1019 = vld [vmem:[%s251 + $0x2fe0] sm:$0xff]
                %1020 = vst [vmem:[%s252 + $0xbf8] sm:$0xff] %v1019
                %v1021 = vld [vmem:[%s251 + $0x3000] sm:$0xff]
                %1022 = vst [vmem:[%s252 + $0xc00] sm:$0xff] %v1021
                %v1023 = vld [vmem:[%s251 + $0x3020] sm:$0xff]
                %1024 = vst [vmem:[%s252 + $0xc08] sm:$0xff] %v1023
                %v1025 = vld [vmem:[%s251 + $0x3040] sm:$0xff]
                %1026 = vst [vmem:[%s252 + $0xc10] sm:$0xff] %v1025
                %v1027 = vld [vmem:[%s251 + $0x3060] sm:$0xff]
                %1028 = vst [vmem:[%s252 + $0xc18] sm:$0xff] %v1027
                %v1029 = vld [vmem:[%s251 + $0x3080] sm:$0xff]
                %1030 = vst [vmem:[%s252 + $0xc20] sm:$0xff] %v1029
                %v1031 = vld [vmem:[%s251 + $0x30a0] sm:$0xff]
                %1032 = vst [vmem:[%s252 + $0xc28] sm:$0xff] %v1031
                %v1033 = vld [vmem:[%s251 + $0x30c0] sm:$0xff]
                %1034 = vst [vmem:[%s252 + $0xc30] sm:$0xff] %v1033
                %v1035 = vld [vmem:[%s251 + $0x30e0] sm:$0xff]
                %1036 = vst [vmem:[%s252 + $0xc38] sm:$0xff] %v1035
                %v1037 = vld [vmem:[%s251 + $0x3100] sm:$0xff]
                %1038 = vst [vmem:[%s252 + $0xc40] sm:$0xff] %v1037
                %v1039 = vld [vmem:[%s251 + $0x3120] sm:$0xff]
                %1040 = vst [vmem:[%s252 + $0xc48] sm:$0xff] %v1039
                %v1041 = vld [vmem:[%s251 + $0x3140] sm:$0xff]
                %1042 = vst [vmem:[%s252 + $0xc50] sm:$0xff] %v1041
                %v1043 = vld [vmem:[%s251 + $0x3160] sm:$0xff]
                %1044 = vst [vmem:[%s252 + $0xc58] sm:$0xff] %v1043
                %v1045 = vld [vmem:[%s251 + $0x3180] sm:$0xff]
                %1046 = vst [vmem:[%s252 + $0xc60] sm:$0xff] %v1045
                %v1047 = vld [vmem:[%s251 + $0x31a0] sm:$0xff]
                %1048 = vst [vmem:[%s252 + $0xc68] sm:$0xff] %v1047
                %v1049 = vld [vmem:[%s251 + $0x31c0] sm:$0xff]
                %1050 = vst [vmem:[%s252 + $0xc70] sm:$0xff] %v1049
                %v1051 = vld [vmem:[%s251 + $0x31e0] sm:$0xff]
                %1052 = vst [vmem:[%s252 + $0xc78] sm:$0xff] %v1051
              $region53: #{convnet_forward.5} parent=47 // loop_footer
                %s250 = sadd.s32 1, %s246
              $region54: #{convnet_forward.5} parent=47 // loop_footer_branch
                %245 = sbr.rel target = $region50
              $region55: #{convnet_forward.5} parent=47 // loop_exit
                _
            $region48: #{convnet_forward.5} parent=39 // pred_fallthru
              _
          $region40: #{convnet_forward.5} parent=35 // pred_fallthru
            _
          %1865 = vnop
        $region36: #{convnet_forward.5} parent=31 // pred_fallthru
          _
        // Predicated region
        $region71: #{convnet_forward.5} parent=31 // pred_check
          %p1866 = pneg %p81
        $region72: #{convnet_forward.5} parent=31 // pred_check_branch
          %1868 = sbr.rel (%p1866) target = $region74
        $region73: #{convnet_forward.5} parent=31 // pred_region
          %s1869 = smul.u32 2, %s14
          %p1870 = scmp.lt.s32.totalorder %s1869, 7
          %s1871 = scalar_select %p1870, %s1869, 7
          %s1872 = scalar_lea.vmem %s2, %s1871
          %s1873 = smul.u32 2, %s14
        $region74: #{convnet_forward.5} parent=31 // pred_fallthru
          _
        // Predicated region
        $region75: #{convnet_forward.5} parent=31 // pred_check
          %p1874 = pneg %p107
        $region76: #{convnet_forward.5} parent=31 // pred_check_branch
          %1876 = sbr.rel (%p1874) target = $region78
        $region77: #{convnet_forward.5} parent=31 // pred_region
          %s1877 = smul.u32 32, %s14
          %p1878 = scmp.lt.s32.totalorder %s1877, 127
          %s1879 = scalar_select %p1878, %s1877, 127
          %s1880 = smul.addr %s1879, 8
          %s1881 = smul.addr %s1880, 4
          %s1882 = scalar_lea.vmem %s3, %s1881
          %s1883 = smul.u32 32, %s14
        $region78: #{convnet_forward.5} parent=31 // pred_fallthru
          _
      $region32: #{convnet_forward.5} parent=5 // pred_fallthru
        _
      %p1884 = scmp.le.s32.totalorder 1, %s14
      %p1885 = scmp.lt.s32.totalorder %s14, 5
      %p1886 = pnand %p1884, %p1885
      %p1887 = pneg %p1886
      // Predicated region
      $region79: #{convnet_forward.5} parent=5 // pred_check
        _
      $region80: #{convnet_forward.5} parent=5 // pred_check_branch
        %1889 = sbr.rel (%p1886) target = $region82
      $region81: #{convnet_forward.5} parent=5 // pred_region
        %s1890 = ssub.s32 %s14, 1
        %s1891 = sand.u32 %s48, 1
        %s1892 = sand.u32 %s48, 1
        %s1893 = smul.addr %s1892, 3200
        %s1894 = scalar_lea.vmem [#allocation3], %s1893
        // Predicated region
        $region83: #{convnet_forward.5} parent=81 // pred_check
          %p1895 = pneg %p61
        $region84: #{convnet_forward.5} parent=81 // pred_check_branch
          %1897 = sbr.rel (%p1895) target = $region86
        $region85: #{convnet_forward.5} parent=81 // pred_region
          _
        $region86: #{convnet_forward.5} parent=81 // pred_fallthru
          _
        %p1898 = pneg %p35
        %p1899 = pneg %p32
        %s1900 = sand.u32 %s48, 1
        %s1901 = sand.u32 %s48, 1
        %s1902 = smul.addr %s1901, 3200
        %s1903 = scalar_lea.vmem [#allocation3], %s1902
        %p1904 = pneg %p61
        %p1905 = pneg %p58
        %s1906 = smul.u32 2, %s19
        %p1907 = scmp.lt.s32.totalorder %s1906, 7
        %s1908 = scalar_select %p1907, %s1906, 7
        %s1909 = scalar_lea.vmem %s2, %s1908
        %p1910 = pneg %p87
        %p1911 = pneg %p84
        %s1912 = smul.u32 32, %s19
        %p1913 = scmp.lt.s32.totalorder %s1912, 127
        %s1914 = scalar_select %p1913, %s1912, 127
        %s1915 = smul.addr %s1914, 8
        %s1916 = smul.addr %s1915, 4
        %s1917 = scalar_lea.vmem %s3, %s1916
        %p1918 = pneg %p113
        %p1919 = pneg %p110
        %p1920 = pneg %p134
        %p1921 = pneg %p131
        %p1922 = pneg %p155
        %p1923 = pneg %p152
        %p1924 = pneg %p176
        %p1925 = pneg %p173
        %p1926 = pneg %p197
        %p1927 = pneg %p194
        %s1928 = smul.u32 2, %s19
        %s1929 = smul.u32 2, %s19
        %p1930 = scmp.lt.s32.totalorder %s1929, 7
        %s1931 = scalar_select %p1930, %s1929, 7
        %s1932 = scalar_lea.vmem %s2, %s1931
        %s1933 = smul.u32 2, %s19
        %s1934 = smul.u32 32, %s19
        %p1935 = scmp.lt.s32.totalorder %s1934, 127
        %s1936 = scalar_select %p1935, %s1934, 127
        %s1937 = smul.addr %s1936, 8
        %s1938 = smul.addr %s1937, 4
        %s1939 = scalar_lea.vmem %s3, %s1938
        %s1940 = smul.u32 32, %s19
        %p1942 = scmp.eq.s32.totalorder %s19, 0
        // Predicated region
        $region87: #{convnet_forward.5} parent=81 // pred_check
          %p1943 = pneg %p1942
        $region88: #{convnet_forward.5} parent=81 // pred_check_branch
          %1945 = sbr.rel (%p1943) target = $region90
        $region89: #{convnet_forward.5} parent=81 // pred_region
          %1946 = vst [vmem:[#allocation2] sm:$0xff] 0.0
          %1947 = vst [vmem:[#allocation2 + $0x8] sm:$0xff] 0.0
        $region90: #{convnet_forward.5} parent=81 // pred_fallthru
          _
        %v1948 = vld [vmem:[%s0] sm:$0xff]
        %v1949 = vld [vmem:[%s0 + $0x8] sm:$0xff]
        %v1950 = vld [vmem:[%s0 + $0x10] sm:$0xff]
        %v1951 = vld [vmem:[%s0 + $0x18] sm:$0x1]
        %v1952 = vld [vmem:[%s1894] sm:$0xff]
        %v1953 = vld [vmem:[%s1894 + $0x8] sm:$0xff]
        %v1954 = vld [vmem:[%s1894 + $0x10] sm:$0xff]
        %v1955 = vld [vmem:[%s1894 + $0x18] sm:$0xff]
        %v1956 = vld [vmem:[%s1894 + $0x20] sm:$0xff]
        %v1957 = vld [vmem:[%s1894 + $0x28] sm:$0xff]
        %v1958 = vld [vmem:[%s1894 + $0x30] sm:$0xff]
        %v1959 = vld [vmem:[%s1894 + $0x38] sm:$0xff]
        %v1960 = vld [vmem:[%s1894 + $0x40] sm:$0xff]
        %v1961 = vld [vmem:[%s1894 + $0x48] sm:$0xff]
        %v1962 = vld [vmem:[%s1894 + $0x50] sm:$0xff]
        %v1963 = vld [vmem:[%s1894 + $0x58] sm:$0xff]
        %v1964 = vld [vmem:[%s1894 + $0x60] sm:$0xff]
        %v1965 = vld [vmem:[%s1894 + $0x68] sm:$0xff]
        %v1966 = vld [vmem:[%s1894 + $0x70] sm:$0xff]
        %v1967 = vld [vmem:[%s1894 + $0x78] sm:$0xff]
        %v1968 = vld [vmem:[%s1894 + $0x80] sm:$0xff]
        %v1969 = vld [vmem:[%s1894 + $0x88] sm:$0xff]
        %v1970 = vld [vmem:[%s1894 + $0x90] sm:$0xff]
        %v1971 = vld [vmem:[%s1894 + $0x98] sm:$0xff]
        %v1972 = vld [vmem:[%s1894 + $0xa0] sm:$0xff]
        %v1973 = vld [vmem:[%s1894 + $0xa8] sm:$0xff]
        %v1974 = vld [vmem:[%s1894 + $0xb0] sm:$0xff]
        %v1975 = vld [vmem:[%s1894 + $0xb8] sm:$0xff]
        %v1976 = vld [vmem:[%s1894 + $0xc0] sm:$0xff]
        %v1977 = vld [vmem:[%s1894 + $0xc8] sm:$0xff]
        %v1978 = vld [vmem:[%s1894 + $0xd0] sm:$0xff]
        %v1979 = vld [vmem:[%s1894 + $0xd8] sm:$0xff]
        %v1980 = vld [vmem:[%s1894 + $0xe0] sm:$0xff]
        %v1981 = vld [vmem:[%s1894 + $0xe8] sm:$0xff]
        %v1982 = vld [vmem:[%s1894 + $0xf0] sm:$0xff]
        %v1983 = vld [vmem:[%s1894 + $0xf8] sm:$0xff]
        %v1984 = vld [vmem:[%s1894 + $0x100] sm:$0xff]
        %v1985 = vld [vmem:[%s1894 + $0x108] sm:$0xff]
        %v1986 = vld [vmem:[%s1894 + $0x110] sm:$0xff]
        %v1987 = vld [vmem:[%s1894 + $0x118] sm:$0xff]
        %v1988 = vld [vmem:[%s1894 + $0x120] sm:$0xff]
        %v1989 = vld [vmem:[%s1894 + $0x128] sm:$0xff]
        %v1990 = vld [vmem:[%s1894 + $0x130] sm:$0xff]
        %v1991 = vld [vmem:[%s1894 + $0x138] sm:$0xff]
        %v1992 = vld [vmem:[%s1894 + $0x140] sm:$0xff]
        %v1993 = vld [vmem:[%s1894 + $0x148] sm:$0xff]
        %v1994 = vld [vmem:[%s1894 + $0x150] sm:$0xff]
        %v1995 = vld [vmem:[%s1894 + $0x158] sm:$0xff]
        %v1996 = vld [vmem:[%s1894 + $0x160] sm:$0xff]
        %v1997 = vld [vmem:[%s1894 + $0x168] sm:$0xff]
        %v1998 = vld [vmem:[%s1894 + $0x170] sm:$0xff]
        %v1999 = vld [vmem:[%s1894 + $0x178] sm:$0xff]
        %v2000 = vld [vmem:[%s1894 + $0x180] sm:$0xff]
        %v2001 = vld [vmem:[%s1894 + $0x188] sm:$0xff]
        %v2002 = vld [vmem:[%s1894 + $0x190] sm:$0xff]
        %v2003 = vld [vmem:[%s1894 + $0x198] sm:$0xff]
        %v2004 = vld [vmem:[%s1894 + $0x1a0] sm:$0xff]
        %v2005 = vld [vmem:[%s1894 + $0x1a8] sm:$0xff]
        %v2006 = vld [vmem:[%s1894 + $0x1b0] sm:$0xff]
        %v2007 = vld [vmem:[%s1894 + $0x1b8] sm:$0xff]
        %v2008 = vld [vmem:[%s1894 + $0x1c0] sm:$0xff]
        %v2009 = vld [vmem:[%s1894 + $0x1c8] sm:$0xff]
        %v2010 = vld [vmem:[%s1894 + $0x1d0] sm:$0xff]
        %v2011 = vld [vmem:[%s1894 + $0x1d8] sm:$0xff]
        %v2012 = vld [vmem:[%s1894 + $0x1e0] sm:$0xff]
        %v2013 = vld [vmem:[%s1894 + $0x1e8] sm:$0xff]
        %v2014 = vld [vmem:[%s1894 + $0x1f0] sm:$0xff]
        %v2015 = vld [vmem:[%s1894 + $0x1f8] sm:$0xff]
        %v2016 = vld [vmem:[%s1894 + $0x200] sm:$0xff]
        %v2017 = vld [vmem:[%s1894 + $0x208] sm:$0xff]
        %v2018 = vld [vmem:[%s1894 + $0x210] sm:$0xff]
        %v2019 = vld [vmem:[%s1894 + $0x218] sm:$0xff]
        %v2020 = vld [vmem:[%s1894 + $0x220] sm:$0xff]
        %v2021 = vld [vmem:[%s1894 + $0x228] sm:$0xff]
        %v2022 = vld [vmem:[%s1894 + $0x230] sm:$0xff]
        %v2023 = vld [vmem:[%s1894 + $0x238] sm:$0xff]
        %v2024 = vld [vmem:[%s1894 + $0x240] sm:$0xff]
        %v2025 = vld [vmem:[%s1894 + $0x248] sm:$0xff]
        %v2026 = vld [vmem:[%s1894 + $0x250] sm:$0xff]
        %v2027 = vld [vmem:[%s1894 + $0x258] sm:$0xff]
        %v2028 = vld [vmem:[%s1894 + $0x260] sm:$0xff]
        %v2029 = vld [vmem:[%s1894 + $0x268] sm:$0xff]
        %v2030 = vld [vmem:[%s1894 + $0x270] sm:$0xff]
        %v2031 = vld [vmem:[%s1894 + $0x278] sm:$0xff]
        %v2032 = vld [vmem:[%s1894 + $0x280] sm:$0xff]
        %v2033 = vld [vmem:[%s1894 + $0x288] sm:$0xff]
        %v2034 = vld [vmem:[%s1894 + $0x290] sm:$0xff]
        %v2035 = vld [vmem:[%s1894 + $0x298] sm:$0xff]
        %v2036 = vld [vmem:[%s1894 + $0x2a0] sm:$0xff]
        %v2037 = vld [vmem:[%s1894 + $0x2a8] sm:$0xff]
        %v2038 = vld [vmem:[%s1894 + $0x2b0] sm:$0xff]
        %v2039 = vld [vmem:[%s1894 + $0x2b8] sm:$0xff]
        %v2040 = vld [vmem:[%s1894 + $0x2c0] sm:$0xff]
        %v2041 = vld [vmem:[%s1894 + $0x2c8] sm:$0xff]
        %v2042 = vld [vmem:[%s1894 + $0x2d0] sm:$0xff]
        %v2043 = vld [vmem:[%s1894 + $0x2d8] sm:$0xff]
        %v2044 = vld [vmem:[%s1894 + $0x2e0] sm:$0xff]
        %v2045 = vld [vmem:[%s1894 + $0x2e8] sm:$0xff]
        %v2046 = vld [vmem:[%s1894 + $0x2f0] sm:$0xff]
        %v2047 = vld [vmem:[%s1894 + $0x2f8] sm:$0xff]
        %v2048 = vld [vmem:[%s1894 + $0x300] sm:$0xff]
        %v2049 = vld [vmem:[%s1894 + $0x308] sm:$0xff]
        %v2050 = vld [vmem:[%s1894 + $0x310] sm:$0xff]
        %v2051 = vld [vmem:[%s1894 + $0x318] sm:$0xff]
        %v2052 = vld [vmem:[%s1894 + $0x320] sm:$0xff]
        %v2053 = vld [vmem:[%s1894 + $0x328] sm:$0xff]
        %v2054 = vld [vmem:[%s1894 + $0x330] sm:$0xff]
        %v2055 = vld [vmem:[%s1894 + $0x338] sm:$0xff]
        %v2056 = vld [vmem:[%s1894 + $0x340] sm:$0xff]
        %v2057 = vld [vmem:[%s1894 + $0x348] sm:$0xff]
        %v2058 = vld [vmem:[%s1894 + $0x350] sm:$0xff]
        %v2059 = vld [vmem:[%s1894 + $0x358] sm:$0xff]
        %v2060 = vld [vmem:[%s1894 + $0x360] sm:$0xff]
        %v2061 = vld [vmem:[%s1894 + $0x368] sm:$0xff]
        %v2062 = vld [vmem:[%s1894 + $0x370] sm:$0xff]
        %v2063 = vld [vmem:[%s1894 + $0x378] sm:$0xff]
        %v2064 = vld [vmem:[%s1894 + $0x380] sm:$0xff]
        %v2065 = vld [vmem:[%s1894 + $0x388] sm:$0xff]
        %v2066 = vld [vmem:[%s1894 + $0x390] sm:$0xff]
        %v2067 = vld [vmem:[%s1894 + $0x398] sm:$0xff]
        %v2068 = vld [vmem:[%s1894 + $0x3a0] sm:$0xff]
        %v2069 = vld [vmem:[%s1894 + $0x3a8] sm:$0xff]
        %v2070 = vld [vmem:[%s1894 + $0x3b0] sm:$0xff]
        %v2071 = vld [vmem:[%s1894 + $0x3b8] sm:$0xff]
        %v2072 = vld [vmem:[%s1894 + $0x3c0] sm:$0xff]
        %v2073 = vld [vmem:[%s1894 + $0x3c8] sm:$0xff]
        %v2074 = vld [vmem:[%s1894 + $0x3d0] sm:$0xff]
        %v2075 = vld [vmem:[%s1894 + $0x3d8] sm:$0xff]
        %v2076 = vld [vmem:[%s1894 + $0x3e0] sm:$0xff]
        %v2077 = vld [vmem:[%s1894 + $0x3e8] sm:$0xff]
        %v2078 = vld [vmem:[%s1894 + $0x3f0] sm:$0xff]
        %v2079 = vld [vmem:[%s1894 + $0x3f8] sm:$0xff]
        %v2080 = vld [vmem:[%s1894 + $0x400] sm:$0xff]
        %v2081 = vld [vmem:[%s1894 + $0x408] sm:$0xff]
        %v2082 = vld [vmem:[%s1894 + $0x410] sm:$0xff]
        %v2083 = vld [vmem:[%s1894 + $0x418] sm:$0xff]
        %v2084 = vld [vmem:[%s1894 + $0x420] sm:$0xff]
        %v2085 = vld [vmem:[%s1894 + $0x428] sm:$0xff]
        %v2086 = vld [vmem:[%s1894 + $0x430] sm:$0xff]
        %v2087 = vld [vmem:[%s1894 + $0x438] sm:$0xff]
        %v2088 = vld [vmem:[%s1894 + $0x440] sm:$0xff]
        %v2089 = vld [vmem:[%s1894 + $0x448] sm:$0xff]
        %v2090 = vld [vmem:[%s1894 + $0x450] sm:$0xff]
        %v2091 = vld [vmem:[%s1894 + $0x458] sm:$0xff]
        %v2092 = vld [vmem:[%s1894 + $0x460] sm:$0xff]
        %v2093 = vld [vmem:[%s1894 + $0x468] sm:$0xff]
        %v2094 = vld [vmem:[%s1894 + $0x470] sm:$0xff]
        %v2095 = vld [vmem:[%s1894 + $0x478] sm:$0xff]
        %v2096 = vld [vmem:[%s1894 + $0x480] sm:$0xff]
        %v2097 = vld [vmem:[%s1894 + $0x488] sm:$0xff]
        %v2098 = vld [vmem:[%s1894 + $0x490] sm:$0xff]
        %v2099 = vld [vmem:[%s1894 + $0x498] sm:$0xff]
        %v2100 = vld [vmem:[%s1894 + $0x4a0] sm:$0xff]
        %v2101 = vld [vmem:[%s1894 + $0x4a8] sm:$0xff]
        %v2102 = vld [vmem:[%s1894 + $0x4b0] sm:$0xff]
        %v2103 = vld [vmem:[%s1894 + $0x4b8] sm:$0xff]
        %v2104 = vld [vmem:[%s1894 + $0x4c0] sm:$0xff]
        %v2105 = vld [vmem:[%s1894 + $0x4c8] sm:$0xff]
        %v2106 = vld [vmem:[%s1894 + $0x4d0] sm:$0xff]
        %v2107 = vld [vmem:[%s1894 + $0x4d8] sm:$0xff]
        %v2108 = vld [vmem:[%s1894 + $0x4e0] sm:$0xff]
        %v2109 = vld [vmem:[%s1894 + $0x4e8] sm:$0xff]
        %v2110 = vld [vmem:[%s1894 + $0x4f0] sm:$0xff]
        %v2111 = vld [vmem:[%s1894 + $0x4f8] sm:$0xff]
        %v2112 = vld [vmem:[%s1894 + $0x500] sm:$0xff]
        %v2113 = vld [vmem:[%s1894 + $0x508] sm:$0xff]
        %v2114 = vld [vmem:[%s1894 + $0x510] sm:$0xff]
        %v2115 = vld [vmem:[%s1894 + $0x518] sm:$0xff]
        %v2116 = vld [vmem:[%s1894 + $0x520] sm:$0xff]
        %v2117 = vld [vmem:[%s1894 + $0x528] sm:$0xff]
        %v2118 = vld [vmem:[%s1894 + $0x530] sm:$0xff]
        %v2119 = vld [vmem:[%s1894 + $0x538] sm:$0xff]
        %v2120 = vld [vmem:[%s1894 + $0x540] sm:$0xff]
        %v2121 = vld [vmem:[%s1894 + $0x548] sm:$0xff]
        %v2122 = vld [vmem:[%s1894 + $0x550] sm:$0xff]
        %v2123 = vld [vmem:[%s1894 + $0x558] sm:$0xff]
        %v2124 = vld [vmem:[%s1894 + $0x560] sm:$0xff]
        %v2125 = vld [vmem:[%s1894 + $0x568] sm:$0xff]
        %v2126 = vld [vmem:[%s1894 + $0x570] sm:$0xff]
        %v2127 = vld [vmem:[%s1894 + $0x578] sm:$0xff]
        %v2128 = vld [vmem:[%s1894 + $0x580] sm:$0xff]
        %v2129 = vld [vmem:[%s1894 + $0x588] sm:$0xff]
        %v2130 = vld [vmem:[%s1894 + $0x590] sm:$0xff]
        %v2131 = vld [vmem:[%s1894 + $0x598] sm:$0xff]
        %v2132 = vld [vmem:[%s1894 + $0x5a0] sm:$0xff]
        %v2133 = vld [vmem:[%s1894 + $0x5a8] sm:$0xff]
        %v2134 = vld [vmem:[%s1894 + $0x5b0] sm:$0xff]
        %v2135 = vld [vmem:[%s1894 + $0x5b8] sm:$0xff]
        %v2136 = vld [vmem:[%s1894 + $0x5c0] sm:$0xff]
        %v2137 = vld [vmem:[%s1894 + $0x5c8] sm:$0xff]
        %v2138 = vld [vmem:[%s1894 + $0x5d0] sm:$0xff]
        %v2139 = vld [vmem:[%s1894 + $0x5d8] sm:$0xff]
        %v2140 = vld [vmem:[%s1894 + $0x5e0] sm:$0xff]
        %v2141 = vld [vmem:[%s1894 + $0x5e8] sm:$0xff]
        %v2142 = vld [vmem:[%s1894 + $0x5f0] sm:$0xff]
        %v2143 = vld [vmem:[%s1894 + $0x5f8] sm:$0xff]
        %v2144 = vld [vmem:[%s1894 + $0x600] sm:$0xff]
        %v2145 = vld [vmem:[%s1894 + $0x608] sm:$0xff]
        %v2146 = vld [vmem:[%s1894 + $0x610] sm:$0xff]
        %v2147 = vld [vmem:[%s1894 + $0x618] sm:$0xff]
        %v2148 = vld [vmem:[%s1894 + $0x620] sm:$0xff]
        %v2149 = vld [vmem:[%s1894 + $0x628] sm:$0xff]
        %v2150 = vld [vmem:[%s1894 + $0x630] sm:$0xff]
        %v2151 = vld [vmem:[%s1894 + $0x638] sm:$0xff]
        %v2152 = vld [vmem:[%s1894 + $0x640] sm:$0xff]
        %v2153 = vld [vmem:[%s1894 + $0x648] sm:$0xff]
        %v2154 = vld [vmem:[%s1894 + $0x650] sm:$0xff]
        %v2155 = vld [vmem:[%s1894 + $0x658] sm:$0xff]
        %v2156 = vld [vmem:[%s1894 + $0x660] sm:$0xff]
        %v2157 = vld [vmem:[%s1894 + $0x668] sm:$0xff]
        %v2158 = vld [vmem:[%s1894 + $0x670] sm:$0xff]
        %v2159 = vld [vmem:[%s1894 + $0x678] sm:$0xff]
        %v2160 = vld [vmem:[%s1894 + $0x680] sm:$0xff]
        %v2161 = vld [vmem:[%s1894 + $0x688] sm:$0xff]
        %v2162 = vld [vmem:[%s1894 + $0x690] sm:$0xff]
        %v2163 = vld [vmem:[%s1894 + $0x698] sm:$0xff]
        %v2164 = vld [vmem:[%s1894 + $0x6a0] sm:$0xff]
        %v2165 = vld [vmem:[%s1894 + $0x6a8] sm:$0xff]
        %v2166 = vld [vmem:[%s1894 + $0x6b0] sm:$0xff]
        %v2167 = vld [vmem:[%s1894 + $0x6b8] sm:$0xff]
        %v2168 = vld [vmem:[%s1894 + $0x6c0] sm:$0xff]
        %v2169 = vld [vmem:[%s1894 + $0x6c8] sm:$0xff]
        %v2170 = vld [vmem:[%s1894 + $0x6d0] sm:$0xff]
        %v2171 = vld [vmem:[%s1894 + $0x6d8] sm:$0xff]
        %v2172 = vld [vmem:[%s1894 + $0x6e0] sm:$0xff]
        %v2173 = vld [vmem:[%s1894 + $0x6e8] sm:$0xff]
        %v2174 = vld [vmem:[%s1894 + $0x6f0] sm:$0xff]
        %v2175 = vld [vmem:[%s1894 + $0x6f8] sm:$0xff]
        %v2176 = vld [vmem:[%s1894 + $0x700] sm:$0xff]
        %v2177 = vld [vmem:[%s1894 + $0x708] sm:$0xff]
        %v2178 = vld [vmem:[%s1894 + $0x710] sm:$0xff]
        %v2179 = vld [vmem:[%s1894 + $0x718] sm:$0xff]
        %v2180 = vld [vmem:[%s1894 + $0x720] sm:$0xff]
        %v2181 = vld [vmem:[%s1894 + $0x728] sm:$0xff]
        %v2182 = vld [vmem:[%s1894 + $0x730] sm:$0xff]
        %v2183 = vld [vmem:[%s1894 + $0x738] sm:$0xff]
        %v2184 = vld [vmem:[%s1894 + $0x740] sm:$0xff]
        %v2185 = vld [vmem:[%s1894 + $0x748] sm:$0xff]
        %v2186 = vld [vmem:[%s1894 + $0x750] sm:$0xff]
        %v2187 = vld [vmem:[%s1894 + $0x758] sm:$0xff]
        %v2188 = vld [vmem:[%s1894 + $0x760] sm:$0xff]
        %v2189 = vld [vmem:[%s1894 + $0x768] sm:$0xff]
        %v2190 = vld [vmem:[%s1894 + $0x770] sm:$0xff]
        %v2191 = vld [vmem:[%s1894 + $0x778] sm:$0xff]
        %v2192 = vld [vmem:[%s1894 + $0x780] sm:$0xff]
        %v2193 = vld [vmem:[%s1894 + $0x788] sm:$0xff]
        %v2194 = vld [vmem:[%s1894 + $0x790] sm:$0xff]
        %v2195 = vld [vmem:[%s1894 + $0x798] sm:$0xff]
        %v2196 = vld [vmem:[%s1894 + $0x7a0] sm:$0xff]
        %v2197 = vld [vmem:[%s1894 + $0x7a8] sm:$0xff]
        %v2198 = vld [vmem:[%s1894 + $0x7b0] sm:$0xff]
        %v2199 = vld [vmem:[%s1894 + $0x7b8] sm:$0xff]
        %v2200 = vld [vmem:[%s1894 + $0x7c0] sm:$0xff]
        %v2201 = vld [vmem:[%s1894 + $0x7c8] sm:$0xff]
        %v2202 = vld [vmem:[%s1894 + $0x7d0] sm:$0xff]
        %v2203 = vld [vmem:[%s1894 + $0x7d8] sm:$0xff]
        %v2204 = vld [vmem:[%s1894 + $0x7e0] sm:$0xff]
        %v2205 = vld [vmem:[%s1894 + $0x7e8] sm:$0xff]
        %v2206 = vld [vmem:[%s1894 + $0x7f0] sm:$0xff]
        %v2207 = vld [vmem:[%s1894 + $0x7f8] sm:$0xff]
        %v2208 = vld [vmem:[%s1894 + $0x800] sm:$0xff]
        %v2209 = vld [vmem:[%s1894 + $0x808] sm:$0xff]
        %v2210 = vld [vmem:[%s1894 + $0x810] sm:$0xff]
        %v2211 = vld [vmem:[%s1894 + $0x818] sm:$0xff]
        %v2212 = vld [vmem:[%s1894 + $0x820] sm:$0xff]
        %v2213 = vld [vmem:[%s1894 + $0x828] sm:$0xff]
        %v2214 = vld [vmem:[%s1894 + $0x830] sm:$0xff]
        %v2215 = vld [vmem:[%s1894 + $0x838] sm:$0xff]
        %v2216 = vld [vmem:[%s1894 + $0x840] sm:$0xff]
        %v2217 = vld [vmem:[%s1894 + $0x848] sm:$0xff]
        %v2218 = vld [vmem:[%s1894 + $0x850] sm:$0xff]
        %v2219 = vld [vmem:[%s1894 + $0x858] sm:$0xff]
        %v2220 = vld [vmem:[%s1894 + $0x860] sm:$0xff]
        %v2221 = vld [vmem:[%s1894 + $0x868] sm:$0xff]
        %v2222 = vld [vmem:[%s1894 + $0x870] sm:$0xff]
        %v2223 = vld [vmem:[%s1894 + $0x878] sm:$0xff]
        %v2224 = vld [vmem:[%s1894 + $0x880] sm:$0xff]
        %v2225 = vld [vmem:[%s1894 + $0x888] sm:$0xff]
        %v2226 = vld [vmem:[%s1894 + $0x890] sm:$0xff]
        %v2227 = vld [vmem:[%s1894 + $0x898] sm:$0xff]
        %v2228 = vld [vmem:[%s1894 + $0x8a0] sm:$0xff]
        %v2229 = vld [vmem:[%s1894 + $0x8a8] sm:$0xff]
        %v2230 = vld [vmem:[%s1894 + $0x8b0] sm:$0xff]
        %v2231 = vld [vmem:[%s1894 + $0x8b8] sm:$0xff]
        %v2232 = vld [vmem:[%s1894 + $0x8c0] sm:$0xff]
        %v2233 = vld [vmem:[%s1894 + $0x8c8] sm:$0xff]
        %v2234 = vld [vmem:[%s1894 + $0x8d0] sm:$0xff]
        %v2235 = vld [vmem:[%s1894 + $0x8d8] sm:$0xff]
        %v2236 = vld [vmem:[%s1894 + $0x8e0] sm:$0xff]
        %v2237 = vld [vmem:[%s1894 + $0x8e8] sm:$0xff]
        %v2238 = vld [vmem:[%s1894 + $0x8f0] sm:$0xff]
        %v2239 = vld [vmem:[%s1894 + $0x8f8] sm:$0xff]
        %v2240 = vld [vmem:[%s1894 + $0x900] sm:$0xff]
        %v2241 = vld [vmem:[%s1894 + $0x908] sm:$0xff]
        %v2242 = vld [vmem:[%s1894 + $0x910] sm:$0xff]
        %v2243 = vld [vmem:[%s1894 + $0x918] sm:$0xff]
        %v2244 = vld [vmem:[%s1894 + $0x920] sm:$0xff]
        %v2245 = vld [vmem:[%s1894 + $0x928] sm:$0xff]
        %v2246 = vld [vmem:[%s1894 + $0x930] sm:$0xff]
        %v2247 = vld [vmem:[%s1894 + $0x938] sm:$0xff]
        %v2248 = vld [vmem:[%s1894 + $0x940] sm:$0xff]
        %v2249 = vld [vmem:[%s1894 + $0x948] sm:$0xff]
        %v2250 = vld [vmem:[%s1894 + $0x950] sm:$0xff]
        %v2251 = vld [vmem:[%s1894 + $0x958] sm:$0xff]
        %v2252 = vld [vmem:[%s1894 + $0x960] sm:$0xff]
        %v2253 = vld [vmem:[%s1894 + $0x968] sm:$0xff]
        %v2254 = vld [vmem:[%s1894 + $0x970] sm:$0xff]
        %v2255 = vld [vmem:[%s1894 + $0x978] sm:$0xff]
        %v2256 = vld [vmem:[%s1894 + $0x980] sm:$0xff]
        %v2257 = vld [vmem:[%s1894 + $0x988] sm:$0xff]
        %v2258 = vld [vmem:[%s1894 + $0x990] sm:$0xff]
        %v2259 = vld [vmem:[%s1894 + $0x998] sm:$0xff]
        %v2260 = vld [vmem:[%s1894 + $0x9a0] sm:$0xff]
        %v2261 = vld [vmem:[%s1894 + $0x9a8] sm:$0xff]
        %v2262 = vld [vmem:[%s1894 + $0x9b0] sm:$0xff]
        %v2263 = vld [vmem:[%s1894 + $0x9b8] sm:$0xff]
        %v2264 = vld [vmem:[%s1894 + $0x9c0] sm:$0xff]
        %v2265 = vld [vmem:[%s1894 + $0x9c8] sm:$0xff]
        %v2266 = vld [vmem:[%s1894 + $0x9d0] sm:$0xff]
        %v2267 = vld [vmem:[%s1894 + $0x9d8] sm:$0xff]
        %v2268 = vld [vmem:[%s1894 + $0x9e0] sm:$0xff]
        %v2269 = vld [vmem:[%s1894 + $0x9e8] sm:$0xff]
        %v2270 = vld [vmem:[%s1894 + $0x9f0] sm:$0xff]
        %v2271 = vld [vmem:[%s1894 + $0x9f8] sm:$0xff]
        %v2272 = vld [vmem:[%s1894 + $0xa00] sm:$0xff]
        %v2273 = vld [vmem:[%s1894 + $0xa08] sm:$0xff]
        %v2274 = vld [vmem:[%s1894 + $0xa10] sm:$0xff]
        %v2275 = vld [vmem:[%s1894 + $0xa18] sm:$0xff]
        %v2276 = vld [vmem:[%s1894 + $0xa20] sm:$0xff]
        %v2277 = vld [vmem:[%s1894 + $0xa28] sm:$0xff]
        %v2278 = vld [vmem:[%s1894 + $0xa30] sm:$0xff]
        %v2279 = vld [vmem:[%s1894 + $0xa38] sm:$0xff]
        %v2280 = vld [vmem:[%s1894 + $0xa40] sm:$0xff]
        %v2281 = vld [vmem:[%s1894 + $0xa48] sm:$0xff]
        %v2282 = vld [vmem:[%s1894 + $0xa50] sm:$0xff]
        %v2283 = vld [vmem:[%s1894 + $0xa58] sm:$0xff]
        %v2284 = vld [vmem:[%s1894 + $0xa60] sm:$0xff]
        %v2285 = vld [vmem:[%s1894 + $0xa68] sm:$0xff]
        %v2286 = vld [vmem:[%s1894 + $0xa70] sm:$0xff]
        %v2287 = vld [vmem:[%s1894 + $0xa78] sm:$0xff]
        %v2288 = vld [vmem:[%s1894 + $0xa80] sm:$0xff]
        %v2289 = vld [vmem:[%s1894 + $0xa88] sm:$0xff]
        %v2290 = vld [vmem:[%s1894 + $0xa90] sm:$0xff]
        %v2291 = vld [vmem:[%s1894 + $0xa98] sm:$0xff]
        %v2292 = vld [vmem:[%s1894 + $0xaa0] sm:$0xff]
        %v2293 = vld [vmem:[%s1894 + $0xaa8] sm:$0xff]
        %v2294 = vld [vmem:[%s1894 + $0xab0] sm:$0xff]
        %v2295 = vld [vmem:[%s1894 + $0xab8] sm:$0xff]
        %v2296 = vld [vmem:[%s1894 + $0xac0] sm:$0xff]
        %v2297 = vld [vmem:[%s1894 + $0xac8] sm:$0xff]
        %v2298 = vld [vmem:[%s1894 + $0xad0] sm:$0xff]
        %v2299 = vld [vmem:[%s1894 + $0xad8] sm:$0xff]
        %v2300 = vld [vmem:[%s1894 + $0xae0] sm:$0xff]
        %v2301 = vld [vmem:[%s1894 + $0xae8] sm:$0xff]
        %v2302 = vld [vmem:[%s1894 + $0xaf0] sm:$0xff]
        %v2303 = vld [vmem:[%s1894 + $0xaf8] sm:$0xff]
        %v2304 = vld [vmem:[%s1894 + $0xb00] sm:$0xff]
        %v2305 = vld [vmem:[%s1894 + $0xb08] sm:$0xff]
        %v2306 = vld [vmem:[%s1894 + $0xb10] sm:$0xff]
        %v2307 = vld [vmem:[%s1894 + $0xb18] sm:$0xff]
        %v2308 = vld [vmem:[%s1894 + $0xb20] sm:$0xff]
        %v2309 = vld [vmem:[%s1894 + $0xb28] sm:$0xff]
        %v2310 = vld [vmem:[%s1894 + $0xb30] sm:$0xff]
        %v2311 = vld [vmem:[%s1894 + $0xb38] sm:$0xff]
        %v2312 = vld [vmem:[%s1894 + $0xb40] sm:$0xff]
        %v2313 = vld [vmem:[%s1894 + $0xb48] sm:$0xff]
        %v2314 = vld [vmem:[%s1894 + $0xb50] sm:$0xff]
        %v2315 = vld [vmem:[%s1894 + $0xb58] sm:$0xff]
        %v2316 = vld [vmem:[%s1894 + $0xb60] sm:$0xff]
        %v2317 = vld [vmem:[%s1894 + $0xb68] sm:$0xff]
        %v2318 = vld [vmem:[%s1894 + $0xb70] sm:$0xff]
        %v2319 = vld [vmem:[%s1894 + $0xb78] sm:$0xff]
        %v2320 = vld [vmem:[%s1894 + $0xb80] sm:$0xff]
        %v2321 = vld [vmem:[%s1894 + $0xb88] sm:$0xff]
        %v2322 = vld [vmem:[%s1894 + $0xb90] sm:$0xff]
        %v2323 = vld [vmem:[%s1894 + $0xb98] sm:$0xff]
        %v2324 = vld [vmem:[%s1894 + $0xba0] sm:$0xff]
        %v2325 = vld [vmem:[%s1894 + $0xba8] sm:$0xff]
        %v2326 = vld [vmem:[%s1894 + $0xbb0] sm:$0xff]
        %v2327 = vld [vmem:[%s1894 + $0xbb8] sm:$0xff]
        %v2328 = vld [vmem:[%s1894 + $0xbc0] sm:$0xff]
        %v2329 = vld [vmem:[%s1894 + $0xbc8] sm:$0xff]
        %v2330 = vld [vmem:[%s1894 + $0xbd0] sm:$0xff]
        %v2331 = vld [vmem:[%s1894 + $0xbd8] sm:$0xff]
        %v2332 = vld [vmem:[%s1894 + $0xbe0] sm:$0xff]
        %v2333 = vld [vmem:[%s1894 + $0xbe8] sm:$0xff]
        %v2334 = vld [vmem:[%s1894 + $0xbf0] sm:$0xff]
        %v2335 = vld [vmem:[%s1894 + $0xbf8] sm:$0xff]
        %v2336 = vld [vmem:[%s1894 + $0xc00] sm:$0xff]
        %v2337 = vld [vmem:[%s1894 + $0xc08] sm:$0xff]
        %v2338 = vld [vmem:[%s1894 + $0xc10] sm:$0xff]
        %v2339 = vld [vmem:[%s1894 + $0xc18] sm:$0xff]
        %v2340 = vld [vmem:[%s1894 + $0xc20] sm:$0xff]
        %v2341 = vld [vmem:[%s1894 + $0xc28] sm:$0xff]
        %v2342 = vld [vmem:[%s1894 + $0xc30] sm:$0xff]
        %v2343 = vld [vmem:[%s1894 + $0xc38] sm:$0xff]
        %v2344 = vld [vmem:[%s1894 + $0xc40] sm:$0xff]
        %v2345 = vld [vmem:[%s1894 + $0xc48] sm:$0xff]
        %v2346 = vld [vmem:[%s1894 + $0xc50] sm:$0xff]
        %v2347 = vld [vmem:[%s1894 + $0xc58] sm:$0xff]
        %v2348 = vld [vmem:[%s1894 + $0xc60] sm:$0xff]
        %v2349 = vld [vmem:[%s1894 + $0xc68] sm:$0xff]
        %v2350 = vld [vmem:[%s1894 + $0xc70] sm:$0xff]
        %v2351 = vld [vmem:[%s1894 + $0xc78] sm:$0xff]
        %v2352 = vld [vmem:[%s1932] sm:$0x3]
        %v2354 = vlaneseq
        %v2355 = vshrl.u32 %v2354, 7
        %v2356 = vsub.s32 0, %v2355
        %v2357 = vrot.slane %v2352, %v2356
        %v2358 = vlaneseq
        %v2359 = vshrl.u32 %v2358, 7
        %v2360 = vsub.s32 1, %v2359
        %v2361 = vrot.slane %v2352, %v2360
        %v2368 = vcombine.high %v1948, %v1948
        %v2370 = vunpack.c.l.s4 1966171168
        %v2371 = vunpack.c.0.s8 %v2370
        %v2372 = vlaneseq
        %v2373 = vshrl.u32 %v2372, 7
        %v2374 = vsub.s32 %v2371, %v2373
        %v2375 = vrot.slane %v1948, %v2374
        %v2377 = vunpack.c.l.s4 1966171168
        %v2378 = vunpack.c.0.s8 %v2377
        %v2379 = vlaneseq
        %v2380 = vshrl.u32 %v2379, 7
        %v2381 = vsub.s32 %v2378, %v2380
        %v2382 = vrot.slane %v2368, %v2381
        %v2383 = vcombine.high %v2375, %v2375
        %v2384 = vcombine.high %v2382, %v2382
        %v2386 = vunpack.c.l.s4 1966171168
        %v2387 = vunpack.c.0.s8 %v2386
        %v2388 = vlaneseq
        %v2389 = vshrl.u32 %v2388, 7
        %v2390 = vsub.s32 %v2387, %v2389
        %v2391 = vrot.slane %v2375, %v2390
        %v2393 = vunpack.c.l.s4 1966171168
        %v2394 = vunpack.c.0.s8 %v2393
        %v2395 = vlaneseq
        %v2396 = vshrl.u32 %v2395, 7
        %v2397 = vsub.s32 %v2394, %v2396
        %v2398 = vrot.slane %v2382, %v2397
        %v2400 = vunpack.c.l.s4 1966171168
        %v2401 = vunpack.c.0.s8 %v2400
        %v2402 = vlaneseq
        %v2403 = vshrl.u32 %v2402, 7
        %v2404 = vsub.s32 %v2401, %v2403
        %v2405 = vrot.slane %v2383, %v2404
        %v2407 = vunpack.c.l.s4 1966171168
        %v2408 = vunpack.c.0.s8 %v2407
        %v2409 = vlaneseq
        %v2410 = vshrl.u32 %v2409, 7
        %v2411 = vsub.s32 %v2408, %v2410
        %v2412 = vrot.slane %v2384, %v2411
        %v2413 = vcombine.high %v2391, %v2391
        %v2414 = vcombine.high %v2398, %v2398
        %v2415 = vcombine.high %v2405, %v2405
        %v2416 = vcombine.high %v2412, %v2412
        %v2417 = vcombine.high %v1949, %v1949
        %v2419 = vunpack.c.l.s4 1966171168
        %v2420 = vunpack.c.0.s8 %v2419
        %v2421 = vlaneseq
        %v2422 = vshrl.u32 %v2421, 7
        %v2423 = vsub.s32 %v2420, %v2422
        %v2424 = vrot.slane %v1949, %v2423
        %v2426 = vunpack.c.l.s4 1966171168
        %v2427 = vunpack.c.0.s8 %v2426
        %v2428 = vlaneseq
        %v2429 = vshrl.u32 %v2428, 7
        %v2430 = vsub.s32 %v2427, %v2429
        %v2431 = vrot.slane %v2417, %v2430
        %v2432 = vcombine.high %v2424, %v2424
        %v2433 = vcombine.high %v2431, %v2431
        %v2435 = vunpack.c.l.s4 1966171168
        %v2436 = vunpack.c.0.s8 %v2435
        %v2437 = vlaneseq
        %v2438 = vshrl.u32 %v2437, 7
        %v2439 = vsub.s32 %v2436, %v2438
        %v2440 = vrot.slane %v2424, %v2439
        %v2442 = vunpack.c.l.s4 1966171168
        %v2443 = vunpack.c.0.s8 %v2442
        %v2444 = vlaneseq
        %v2445 = vshrl.u32 %v2444, 7
        %v2446 = vsub.s32 %v2443, %v2445
        %v2447 = vrot.slane %v2431, %v2446
        %v2449 = vunpack.c.l.s4 1966171168
        %v2450 = vunpack.c.0.s8 %v2449
        %v2451 = vlaneseq
        %v2452 = vshrl.u32 %v2451, 7
        %v2453 = vsub.s32 %v2450, %v2452
        %v2454 = vrot.slane %v2432, %v2453
        %v2456 = vunpack.c.l.s4 1966171168
        %v2457 = vunpack.c.0.s8 %v2456
        %v2458 = vlaneseq
        %v2459 = vshrl.u32 %v2458, 7
        %v2460 = vsub.s32 %v2457, %v2459
        %v2461 = vrot.slane %v2433, %v2460
        %v2462 = vcombine.high %v2440, %v2440
        %v2463 = vcombine.high %v2447, %v2447
        %v2464 = vcombine.high %v2454, %v2454
        %v2465 = vcombine.high %v2461, %v2461
        %v2466 = vcombine.high %v1950, %v1950
        %v2468 = vunpack.c.l.s4 1966171168
        %v2469 = vunpack.c.0.s8 %v2468
        %v2470 = vlaneseq
        %v2471 = vshrl.u32 %v2470, 7
        %v2472 = vsub.s32 %v2469, %v2471
        %v2473 = vrot.slane %v1950, %v2472
        %v2475 = vunpack.c.l.s4 1966171168
        %v2476 = vunpack.c.0.s8 %v2475
        %v2477 = vlaneseq
        %v2478 = vshrl.u32 %v2477, 7
        %v2479 = vsub.s32 %v2476, %v2478
        %v2480 = vrot.slane %v2466, %v2479
        %v2481 = vcombine.high %v2473, %v2473
        %v2482 = vcombine.high %v2480, %v2480
        %v2484 = vunpack.c.l.s4 1966171168
        %v2485 = vunpack.c.0.s8 %v2484
        %v2486 = vlaneseq
        %v2487 = vshrl.u32 %v2486, 7
        %v2488 = vsub.s32 %v2485, %v2487
        %v2489 = vrot.slane %v2473, %v2488
        %v2491 = vunpack.c.l.s4 1966171168
        %v2492 = vunpack.c.0.s8 %v2491
        %v2493 = vlaneseq
        %v2494 = vshrl.u32 %v2493, 7
        %v2495 = vsub.s32 %v2492, %v2494
        %v2496 = vrot.slane %v2480, %v2495
        %v2498 = vunpack.c.l.s4 1966171168
        %v2499 = vunpack.c.0.s8 %v2498
        %v2500 = vlaneseq
        %v2501 = vshrl.u32 %v2500, 7
        %v2502 = vsub.s32 %v2499, %v2501
        %v2503 = vrot.slane %v2481, %v2502
        %v2505 = vunpack.c.l.s4 1966171168
        %v2506 = vunpack.c.0.s8 %v2505
        %v2507 = vlaneseq
        %v2508 = vshrl.u32 %v2507, 7
        %v2509 = vsub.s32 %v2506, %v2508
        %v2510 = vrot.slane %v2482, %v2509
        %v2511 = vcombine.high %v2489, %v2489
        %v2512 = vcombine.high %v2496, %v2496
        %v2513 = vcombine.high %v2503, %v2503
        %v2514 = vcombine.high %v2510, %v2510
        %v2516 = vunpack.c.l.s4 1966171168
        %v2517 = vunpack.c.0.s8 %v2516
        %v2518 = vlaneseq
        %v2519 = vshrl.u32 %v2518, 7
        %v2520 = vsub.s32 %v2517, %v2519
        %v2521 = vrot.slane %v1951, %v2520
        %v2523 = vunpack.c.l.s4 1966171168
        %v2524 = vunpack.c.0.s8 %v2523
        %v2525 = vlaneseq
        %v2526 = vshrl.u32 %v2525, 7
        %v2527 = vsub.s32 %v2524, %v2526
        %v2528 = vrot.slane %v2521, %v2527
        %v2954 = vunpack.c.l.b16 %v1952
        %v2955 = vunpack.c.h.b16 %v1952
        %v2956 = vunpack.c.l.b16 %v1953
        %v2957 = vunpack.c.h.b16 %v1953
        %v2958 = vunpack.c.l.b16 %v1954
        %v2959 = vunpack.c.h.b16 %v1954
        %v2960 = vunpack.c.l.b16 %v1955
        %v2961 = vunpack.c.h.b16 %v1955
        %v2962 = vunpack.c.l.b16 %v1956
        %v2963 = vunpack.c.h.b16 %v1956
        %v2964 = vunpack.c.l.b16 %v1957
        %v2965 = vunpack.c.h.b16 %v1957
        %v2966 = vunpack.c.l.b16 %v1958
        %v2967 = vunpack.c.h.b16 %v1958
        %v2968 = vunpack.c.l.b16 %v1959
        %v2969 = vunpack.c.h.b16 %v1959
        %v2970 = vunpack.c.l.b16 %v1960
        %v2971 = vunpack.c.h.b16 %v1960
        %v2972 = vunpack.c.l.b16 %v1961
        %v2973 = vunpack.c.h.b16 %v1961
        %v2974 = vunpack.c.l.b16 %v1962
        %v2975 = vunpack.c.h.b16 %v1962
        %v2976 = vunpack.c.l.b16 %v1963
        %v2977 = vunpack.c.h.b16 %v1963
        %v2978 = vunpack.c.l.b16 %v1964
        %v2979 = vunpack.c.h.b16 %v1964
        %v2980 = vunpack.c.l.b16 %v1965
        %v2981 = vunpack.c.h.b16 %v1965
        %v2982 = vunpack.c.l.b16 %v1966
        %v2983 = vunpack.c.h.b16 %v1966
        %v2984 = vunpack.c.l.b16 %v1967
        %v2985 = vunpack.c.h.b16 %v1967
        %v2986 = vunpack.c.l.b16 %v1968
        %v2987 = vunpack.c.h.b16 %v1968
        %v2988 = vunpack.c.l.b16 %v1969
        %v2989 = vunpack.c.h.b16 %v1969
        %v2990 = vunpack.c.l.b16 %v1970
        %v2991 = vunpack.c.h.b16 %v1970
        %v2992 = vunpack.c.l.b16 %v1971
        %v2993 = vunpack.c.h.b16 %v1971
        %v2994 = vunpack.c.l.b16 %v1972
        %v2995 = vunpack.c.h.b16 %v1972
        %v2996 = vunpack.c.l.b16 %v1973
        %v2997 = vunpack.c.h.b16 %v1973
        %v2998 = vunpack.c.l.b16 %v1974
        %v2999 = vunpack.c.h.b16 %v1974
        %v3000 = vunpack.c.l.b16 %v1975
        %v3001 = vunpack.c.h.b16 %v1975
        %v3002 = vunpack.c.l.b16 %v1976
        %v3003 = vunpack.c.h.b16 %v1976
        %v3004 = vunpack.c.l.b16 %v1977
        %v3005 = vunpack.c.h.b16 %v1977
        %v3006 = vunpack.c.l.b16 %v1978
        %v3007 = vunpack.c.h.b16 %v1978
        %v3008 = vunpack.c.l.b16 %v1979
        %v3009 = vunpack.c.h.b16 %v1979
        %v3010 = vunpack.c.l.b16 %v1980
        %v3011 = vunpack.c.h.b16 %v1980
        %v3012 = vunpack.c.l.b16 %v1981
        %v3013 = vunpack.c.h.b16 %v1981
        %v3014 = vunpack.c.l.b16 %v1982
        %v3015 = vunpack.c.h.b16 %v1982
        %v3016 = vunpack.c.l.b16 %v1983
        %v3017 = vunpack.c.h.b16 %v1983
        %v3018 = vunpack.c.l.b16 %v1984
        %v3019 = vunpack.c.h.b16 %v1984
        %v3020 = vunpack.c.l.b16 %v1985
        %v3021 = vunpack.c.h.b16 %v1985
        %v3022 = vunpack.c.l.b16 %v1986
        %v3023 = vunpack.c.h.b16 %v1986
        %v3024 = vunpack.c.l.b16 %v1987
        %v3025 = vunpack.c.h.b16 %v1987
        %v3026 = vunpack.c.l.b16 %v1988
        %v3027 = vunpack.c.h.b16 %v1988
        %v3028 = vunpack.c.l.b16 %v1989
        %v3029 = vunpack.c.h.b16 %v1989
        %v3030 = vunpack.c.l.b16 %v1990
        %v3031 = vunpack.c.h.b16 %v1990
        %v3032 = vunpack.c.l.b16 %v1991
        %v3033 = vunpack.c.h.b16 %v1991
        %v3034 = vunpack.c.l.b16 %v1992
        %v3035 = vunpack.c.h.b16 %v1992
        %v3036 = vunpack.c.l.b16 %v1993
        %v3037 = vunpack.c.h.b16 %v1993
        %v3038 = vunpack.c.l.b16 %v1994
        %v3039 = vunpack.c.h.b16 %v1994
        %v3040 = vunpack.c.l.b16 %v1995
        %v3041 = vunpack.c.h.b16 %v1995
        %v3042 = vunpack.c.l.b16 %v1996
        %v3043 = vunpack.c.h.b16 %v1996
        %v3044 = vunpack.c.l.b16 %v1997
        %v3045 = vunpack.c.h.b16 %v1997
        %v3046 = vunpack.c.l.b16 %v1998
        %v3047 = vunpack.c.h.b16 %v1998
        %v3048 = vunpack.c.l.b16 %v1999
        %v3049 = vunpack.c.h.b16 %v1999
        %v3050 = vunpack.c.l.b16 %v2000
        %v3051 = vunpack.c.h.b16 %v2000
        %v3052 = vunpack.c.l.b16 %v2001
        %v3053 = vunpack.c.h.b16 %v2001
        %v3054 = vunpack.c.l.b16 %v2002
        %v3055 = vunpack.c.h.b16 %v2002
        %v3056 = vunpack.c.l.b16 %v2003
        %v3057 = vunpack.c.h.b16 %v2003
        %v3058 = vunpack.c.l.b16 %v2004
        %v3059 = vunpack.c.h.b16 %v2004
        %v3060 = vunpack.c.l.b16 %v2005
        %v3061 = vunpack.c.h.b16 %v2005
        %v3062 = vunpack.c.l.b16 %v2006
        %v3063 = vunpack.c.h.b16 %v2006
        %v3064 = vunpack.c.l.b16 %v2007
        %v3065 = vunpack.c.h.b16 %v2007
        %v3066 = vunpack.c.l.b16 %v2008
        %v3067 = vunpack.c.h.b16 %v2008
        %v3068 = vunpack.c.l.b16 %v2009
        %v3069 = vunpack.c.h.b16 %v2009
        %v3070 = vunpack.c.l.b16 %v2010
        %v3071 = vunpack.c.h.b16 %v2010
        %v3072 = vunpack.c.l.b16 %v2011
        %v3073 = vunpack.c.h.b16 %v2011
        %v3074 = vunpack.c.l.b16 %v2012
        %v3075 = vunpack.c.h.b16 %v2012
        %v3076 = vunpack.c.l.b16 %v2013
        %v3077 = vunpack.c.h.b16 %v2013
        %v3078 = vunpack.c.l.b16 %v2014
        %v3079 = vunpack.c.h.b16 %v2014
        %v3080 = vunpack.c.l.b16 %v2015
        %v3081 = vunpack.c.h.b16 %v2015
        %v3082 = vunpack.c.l.b16 %v2016
        %v3083 = vunpack.c.h.b16 %v2016
        %v3084 = vunpack.c.l.b16 %v2017
        %v3085 = vunpack.c.h.b16 %v2017
        %v3086 = vunpack.c.l.b16 %v2018
        %v3087 = vunpack.c.h.b16 %v2018
        %v3088 = vunpack.c.l.b16 %v2019
        %v3089 = vunpack.c.h.b16 %v2019
        %v3090 = vunpack.c.l.b16 %v2020
        %v3091 = vunpack.c.h.b16 %v2020
        %v3092 = vunpack.c.l.b16 %v2021
        %v3093 = vunpack.c.h.b16 %v2021
        %v3094 = vunpack.c.l.b16 %v2022
        %v3095 = vunpack.c.h.b16 %v2022
        %v3096 = vunpack.c.l.b16 %v2023
        %v3097 = vunpack.c.h.b16 %v2023
        %v3098 = vunpack.c.l.b16 %v2024
        %v3099 = vunpack.c.h.b16 %v2024
        %v3100 = vunpack.c.l.b16 %v2025
        %v3101 = vunpack.c.h.b16 %v2025
        %v3102 = vunpack.c.l.b16 %v2026
        %v3103 = vunpack.c.h.b16 %v2026
        %v3104 = vunpack.c.l.b16 %v2027
        %v3105 = vunpack.c.h.b16 %v2027
        %v3106 = vunpack.c.l.b16 %v2028
        %v3107 = vunpack.c.h.b16 %v2028
        %v3108 = vunpack.c.l.b16 %v2029
        %v3109 = vunpack.c.h.b16 %v2029
        %v3110 = vunpack.c.l.b16 %v2030
        %v3111 = vunpack.c.h.b16 %v2030
        %v3112 = vunpack.c.l.b16 %v2031
        %v3113 = vunpack.c.h.b16 %v2031
        %v3114 = vunpack.c.l.b16 %v2032
        %v3115 = vunpack.c.h.b16 %v2032
        %v3116 = vunpack.c.l.b16 %v2033
        %v3117 = vunpack.c.h.b16 %v2033
        %v3118 = vunpack.c.l.b16 %v2034
        %v3119 = vunpack.c.h.b16 %v2034
        %v3120 = vunpack.c.l.b16 %v2035
        %v3121 = vunpack.c.h.b16 %v2035
        %v3122 = vunpack.c.l.b16 %v2036
        %v3123 = vunpack.c.h.b16 %v2036
        %v3124 = vunpack.c.l.b16 %v2037
        %v3125 = vunpack.c.h.b16 %v2037
        %v3126 = vunpack.c.l.b16 %v2038
        %v3127 = vunpack.c.h.b16 %v2038
        %v3128 = vunpack.c.l.b16 %v2039
        %v3129 = vunpack.c.h.b16 %v2039
        %v3130 = vunpack.c.l.b16 %v2040
        %v3131 = vunpack.c.h.b16 %v2040
        %v3132 = vunpack.c.l.b16 %v2041
        %v3133 = vunpack.c.h.b16 %v2041
        %v3134 = vunpack.c.l.b16 %v2042
        %v3135 = vunpack.c.h.b16 %v2042
        %v3136 = vunpack.c.l.b16 %v2043
        %v3137 = vunpack.c.h.b16 %v2043
        %v3138 = vunpack.c.l.b16 %v2044
        %v3139 = vunpack.c.h.b16 %v2044
        %v3140 = vunpack.c.l.b16 %v2045
        %v3141 = vunpack.c.h.b16 %v2045
        %v3142 = vunpack.c.l.b16 %v2046
        %v3143 = vunpack.c.h.b16 %v2046
        %v3144 = vunpack.c.l.b16 %v2047
        %v3145 = vunpack.c.h.b16 %v2047
        %v3146 = vunpack.c.l.b16 %v2048
        %v3147 = vunpack.c.h.b16 %v2048
        %v3148 = vunpack.c.l.b16 %v2049
        %v3149 = vunpack.c.h.b16 %v2049
        %v3150 = vunpack.c.l.b16 %v2050
        %v3151 = vunpack.c.h.b16 %v2050
        %v3152 = vunpack.c.l.b16 %v2051
        %v3153 = vunpack.c.h.b16 %v2051
        %v3154 = vunpack.c.l.b16 %v2052
        %v3155 = vunpack.c.h.b16 %v2052
        %v3156 = vunpack.c.l.b16 %v2053
        %v3157 = vunpack.c.h.b16 %v2053
        %v3158 = vunpack.c.l.b16 %v2054
        %v3159 = vunpack.c.h.b16 %v2054
        %v3160 = vunpack.c.l.b16 %v2055
        %v3161 = vunpack.c.h.b16 %v2055
        %v3162 = vunpack.c.l.b16 %v2056
        %v3163 = vunpack.c.h.b16 %v2056
        %v3164 = vunpack.c.l.b16 %v2057
        %v3165 = vunpack.c.h.b16 %v2057
        %v3166 = vunpack.c.l.b16 %v2058
        %v3167 = vunpack.c.h.b16 %v2058
        %v3168 = vunpack.c.l.b16 %v2059
        %v3169 = vunpack.c.h.b16 %v2059
        %v3170 = vunpack.c.l.b16 %v2060
        %v3171 = vunpack.c.h.b16 %v2060
        %v3172 = vunpack.c.l.b16 %v2061
        %v3173 = vunpack.c.h.b16 %v2061
        %v3174 = vunpack.c.l.b16 %v2062
        %v3175 = vunpack.c.h.b16 %v2062
        %v3176 = vunpack.c.l.b16 %v2063
        %v3177 = vunpack.c.h.b16 %v2063
        %v3178 = vunpack.c.l.b16 %v2064
        %v3179 = vunpack.c.h.b16 %v2064
        %v3180 = vunpack.c.l.b16 %v2065
        %v3181 = vunpack.c.h.b16 %v2065
        %v3182 = vunpack.c.l.b16 %v2066
        %v3183 = vunpack.c.h.b16 %v2066
        %v3184 = vunpack.c.l.b16 %v2067
        %v3185 = vunpack.c.h.b16 %v2067
        %v3186 = vunpack.c.l.b16 %v2068
        %v3187 = vunpack.c.h.b16 %v2068
        %v3188 = vunpack.c.l.b16 %v2069
        %v3189 = vunpack.c.h.b16 %v2069
        %v3190 = vunpack.c.l.b16 %v2070
        %v3191 = vunpack.c.h.b16 %v2070
        %v3192 = vunpack.c.l.b16 %v2071
        %v3193 = vunpack.c.h.b16 %v2071
        %v3194 = vunpack.c.l.b16 %v2072
        %v3195 = vunpack.c.h.b16 %v2072
        %v3196 = vunpack.c.l.b16 %v2073
        %v3197 = vunpack.c.h.b16 %v2073
        %v3198 = vunpack.c.l.b16 %v2074
        %v3199 = vunpack.c.h.b16 %v2074
        %v3200 = vunpack.c.l.b16 %v2075
        %v3201 = vunpack.c.h.b16 %v2075
        %v3202 = vunpack.c.l.b16 %v2076
        %v3203 = vunpack.c.h.b16 %v2076
        %v3204 = vunpack.c.l.b16 %v2077
        %v3205 = vunpack.c.h.b16 %v2077
        %v3206 = vunpack.c.l.b16 %v2078
        %v3207 = vunpack.c.h.b16 %v2078
        %v3208 = vunpack.c.l.b16 %v2079
        %v3209 = vunpack.c.h.b16 %v2079
        %v3210 = vunpack.c.l.b16 %v2080
        %v3211 = vunpack.c.h.b16 %v2080
        %v3212 = vunpack.c.l.b16 %v2081
        %v3213 = vunpack.c.h.b16 %v2081
        %v3214 = vunpack.c.l.b16 %v2082
        %v3215 = vunpack.c.h.b16 %v2082
        %v3216 = vunpack.c.l.b16 %v2083
        %v3217 = vunpack.c.h.b16 %v2083
        %v3218 = vunpack.c.l.b16 %v2084
        %v3219 = vunpack.c.h.b16 %v2084
        %v3220 = vunpack.c.l.b16 %v2085
        %v3221 = vunpack.c.h.b16 %v2085
        %v3222 = vunpack.c.l.b16 %v2086
        %v3223 = vunpack.c.h.b16 %v2086
        %v3224 = vunpack.c.l.b16 %v2087
        %v3225 = vunpack.c.h.b16 %v2087
        %v3226 = vunpack.c.l.b16 %v2088
        %v3227 = vunpack.c.h.b16 %v2088
        %v3228 = vunpack.c.l.b16 %v2089
        %v3229 = vunpack.c.h.b16 %v2089
        %v3230 = vunpack.c.l.b16 %v2090
        %v3231 = vunpack.c.h.b16 %v2090
        %v3232 = vunpack.c.l.b16 %v2091
        %v3233 = vunpack.c.h.b16 %v2091
        %v3234 = vunpack.c.l.b16 %v2092
        %v3235 = vunpack.c.h.b16 %v2092
        %v3236 = vunpack.c.l.b16 %v2093
        %v3237 = vunpack.c.h.b16 %v2093
        %v3238 = vunpack.c.l.b16 %v2094
        %v3239 = vunpack.c.h.b16 %v2094
        %v3240 = vunpack.c.l.b16 %v2095
        %v3241 = vunpack.c.h.b16 %v2095
        %v3242 = vunpack.c.l.b16 %v2096
        %v3243 = vunpack.c.h.b16 %v2096
        %v3244 = vunpack.c.l.b16 %v2097
        %v3245 = vunpack.c.h.b16 %v2097
        %v3246 = vunpack.c.l.b16 %v2098
        %v3247 = vunpack.c.h.b16 %v2098
        %v3248 = vunpack.c.l.b16 %v2099
        %v3249 = vunpack.c.h.b16 %v2099
        %v3250 = vunpack.c.l.b16 %v2100
        %v3251 = vunpack.c.h.b16 %v2100
        %v3252 = vunpack.c.l.b16 %v2101
        %v3253 = vunpack.c.h.b16 %v2101
        %v3254 = vunpack.c.l.b16 %v2102
        %v3255 = vunpack.c.h.b16 %v2102
        %v3256 = vunpack.c.l.b16 %v2103
        %v3257 = vunpack.c.h.b16 %v2103
        %v3258 = vunpack.c.l.b16 %v2104
        %v3259 = vunpack.c.h.b16 %v2104
        %v3260 = vunpack.c.l.b16 %v2105
        %v3261 = vunpack.c.h.b16 %v2105
        %v3262 = vunpack.c.l.b16 %v2106
        %v3263 = vunpack.c.h.b16 %v2106
        %v3264 = vunpack.c.l.b16 %v2107
        %v3265 = vunpack.c.h.b16 %v2107
        %v3266 = vunpack.c.l.b16 %v2108
        %v3267 = vunpack.c.h.b16 %v2108
        %v3268 = vunpack.c.l.b16 %v2109
        %v3269 = vunpack.c.h.b16 %v2109
        %v3270 = vunpack.c.l.b16 %v2110
        %v3271 = vunpack.c.h.b16 %v2110
        %v3272 = vunpack.c.l.b16 %v2111
        %v3273 = vunpack.c.h.b16 %v2111
        %v3274 = vunpack.c.l.b16 %v2112
        %v3275 = vunpack.c.h.b16 %v2112
        %v3276 = vunpack.c.l.b16 %v2113
        %v3277 = vunpack.c.h.b16 %v2113
        %v3278 = vunpack.c.l.b16 %v2114
        %v3279 = vunpack.c.h.b16 %v2114
        %v3280 = vunpack.c.l.b16 %v2115
        %v3281 = vunpack.c.h.b16 %v2115
        %v3282 = vunpack.c.l.b16 %v2116
        %v3283 = vunpack.c.h.b16 %v2116
        %v3284 = vunpack.c.l.b16 %v2117
        %v3285 = vunpack.c.h.b16 %v2117
        %v3286 = vunpack.c.l.b16 %v2118
        %v3287 = vunpack.c.h.b16 %v2118
        %v3288 = vunpack.c.l.b16 %v2119
        %v3289 = vunpack.c.h.b16 %v2119
        %v3290 = vunpack.c.l.b16 %v2120
        %v3291 = vunpack.c.h.b16 %v2120
        %v3292 = vunpack.c.l.b16 %v2121
        %v3293 = vunpack.c.h.b16 %v2121
        %v3294 = vunpack.c.l.b16 %v2122
        %v3295 = vunpack.c.h.b16 %v2122
        %v3296 = vunpack.c.l.b16 %v2123
        %v3297 = vunpack.c.h.b16 %v2123
        %v3298 = vunpack.c.l.b16 %v2124
        %v3299 = vunpack.c.h.b16 %v2124
        %v3300 = vunpack.c.l.b16 %v2125
        %v3301 = vunpack.c.h.b16 %v2125
        %v3302 = vunpack.c.l.b16 %v2126
        %v3303 = vunpack.c.h.b16 %v2126
        %v3304 = vunpack.c.l.b16 %v2127
        %v3305 = vunpack.c.h.b16 %v2127
        %v3306 = vunpack.c.l.b16 %v2128
        %v3307 = vunpack.c.h.b16 %v2128
        %v3308 = vunpack.c.l.b16 %v2129
        %v3309 = vunpack.c.h.b16 %v2129
        %v3310 = vunpack.c.l.b16 %v2130
        %v3311 = vunpack.c.h.b16 %v2130
        %v3312 = vunpack.c.l.b16 %v2131
        %v3313 = vunpack.c.h.b16 %v2131
        %v3314 = vunpack.c.l.b16 %v2132
        %v3315 = vunpack.c.h.b16 %v2132
        %v3316 = vunpack.c.l.b16 %v2133
        %v3317 = vunpack.c.h.b16 %v2133
        %v3318 = vunpack.c.l.b16 %v2134
        %v3319 = vunpack.c.h.b16 %v2134
        %v3320 = vunpack.c.l.b16 %v2135
        %v3321 = vunpack.c.h.b16 %v2135
        %v3322 = vunpack.c.l.b16 %v2136
        %v3323 = vunpack.c.h.b16 %v2136
        %v3324 = vunpack.c.l.b16 %v2137
        %v3325 = vunpack.c.h.b16 %v2137
        %v3326 = vunpack.c.l.b16 %v2138
        %v3327 = vunpack.c.h.b16 %v2138
        %v3328 = vunpack.c.l.b16 %v2139
        %v3329 = vunpack.c.h.b16 %v2139
        %v3330 = vunpack.c.l.b16 %v2140
        %v3331 = vunpack.c.h.b16 %v2140
        %v3332 = vunpack.c.l.b16 %v2141
        %v3333 = vunpack.c.h.b16 %v2141
        %v3334 = vunpack.c.l.b16 %v2142
        %v3335 = vunpack.c.h.b16 %v2142
        %v3336 = vunpack.c.l.b16 %v2143
        %v3337 = vunpack.c.h.b16 %v2143
        %v3338 = vunpack.c.l.b16 %v2144
        %v3339 = vunpack.c.h.b16 %v2144
        %v3340 = vunpack.c.l.b16 %v2145
        %v3341 = vunpack.c.h.b16 %v2145
        %v3342 = vunpack.c.l.b16 %v2146
        %v3343 = vunpack.c.h.b16 %v2146
        %v3344 = vunpack.c.l.b16 %v2147
        %v3345 = vunpack.c.h.b16 %v2147
        %v3346 = vunpack.c.l.b16 %v2148
        %v3347 = vunpack.c.h.b16 %v2148
        %v3348 = vunpack.c.l.b16 %v2149
        %v3349 = vunpack.c.h.b16 %v2149
        %v3350 = vunpack.c.l.b16 %v2150
        %v3351 = vunpack.c.h.b16 %v2150
        %v3352 = vunpack.c.l.b16 %v2151
        %v3353 = vunpack.c.h.b16 %v2151
        %v3354 = vunpack.c.l.b16 %v2152
        %v3355 = vunpack.c.h.b16 %v2152
        %v3356 = vunpack.c.l.b16 %v2153
        %v3357 = vunpack.c.h.b16 %v2153
        %v3358 = vunpack.c.l.b16 %v2154
        %v3359 = vunpack.c.h.b16 %v2154
        %v3360 = vunpack.c.l.b16 %v2155
        %v3361 = vunpack.c.h.b16 %v2155
        %v3362 = vunpack.c.l.b16 %v2156
        %v3363 = vunpack.c.h.b16 %v2156
        %v3364 = vunpack.c.l.b16 %v2157
        %v3365 = vunpack.c.h.b16 %v2157
        %v3366 = vunpack.c.l.b16 %v2158
        %v3367 = vunpack.c.h.b16 %v2158
        %v3368 = vunpack.c.l.b16 %v2159
        %v3369 = vunpack.c.h.b16 %v2159
        %v3370 = vunpack.c.l.b16 %v2160
        %v3371 = vunpack.c.h.b16 %v2160
        %v3372 = vunpack.c.l.b16 %v2161
        %v3373 = vunpack.c.h.b16 %v2161
        %v3374 = vunpack.c.l.b16 %v2162
        %v3375 = vunpack.c.h.b16 %v2162
        %v3376 = vunpack.c.l.b16 %v2163
        %v3377 = vunpack.c.h.b16 %v2163
        %v3378 = vunpack.c.l.b16 %v2164
        %v3379 = vunpack.c.h.b16 %v2164
        %v3380 = vunpack.c.l.b16 %v2165
        %v3381 = vunpack.c.h.b16 %v2165
        %v3382 = vunpack.c.l.b16 %v2166
        %v3383 = vunpack.c.h.b16 %v2166
        %v3384 = vunpack.c.l.b16 %v2167
        %v3385 = vunpack.c.h.b16 %v2167
        %v3386 = vunpack.c.l.b16 %v2168
        %v3387 = vunpack.c.h.b16 %v2168
        %v3388 = vunpack.c.l.b16 %v2169
        %v3389 = vunpack.c.h.b16 %v2169
        %v3390 = vunpack.c.l.b16 %v2170
        %v3391 = vunpack.c.h.b16 %v2170
        %v3392 = vunpack.c.l.b16 %v2171
        %v3393 = vunpack.c.h.b16 %v2171
        %v3394 = vunpack.c.l.b16 %v2172
        %v3395 = vunpack.c.h.b16 %v2172
        %v3396 = vunpack.c.l.b16 %v2173
        %v3397 = vunpack.c.h.b16 %v2173
        %v3398 = vunpack.c.l.b16 %v2174
        %v3399 = vunpack.c.h.b16 %v2174
        %v3400 = vunpack.c.l.b16 %v2175
        %v3401 = vunpack.c.h.b16 %v2175
        %v3402 = vunpack.c.l.b16 %v2176
        %v3403 = vunpack.c.h.b16 %v2176
        %v3404 = vunpack.c.l.b16 %v2177
        %v3405 = vunpack.c.h.b16 %v2177
        %v3406 = vunpack.c.l.b16 %v2178
        %v3407 = vunpack.c.h.b16 %v2178
        %v3408 = vunpack.c.l.b16 %v2179
        %v3409 = vunpack.c.h.b16 %v2179
        %v3410 = vunpack.c.l.b16 %v2180
        %v3411 = vunpack.c.h.b16 %v2180
        %v3412 = vunpack.c.l.b16 %v2181
        %v3413 = vunpack.c.h.b16 %v2181
        %v3414 = vunpack.c.l.b16 %v2182
        %v3415 = vunpack.c.h.b16 %v2182
        %v3416 = vunpack.c.l.b16 %v2183
        %v3417 = vunpack.c.h.b16 %v2183
        %v3418 = vunpack.c.l.b16 %v2184
        %v3419 = vunpack.c.h.b16 %v2184
        %v3420 = vunpack.c.l.b16 %v2185
        %v3421 = vunpack.c.h.b16 %v2185
        %v3422 = vunpack.c.l.b16 %v2186
        %v3423 = vunpack.c.h.b16 %v2186
        %v3424 = vunpack.c.l.b16 %v2187
        %v3425 = vunpack.c.h.b16 %v2187
        %v3426 = vunpack.c.l.b16 %v2188
        %v3427 = vunpack.c.h.b16 %v2188
        %v3428 = vunpack.c.l.b16 %v2189
        %v3429 = vunpack.c.h.b16 %v2189
        %v3430 = vunpack.c.l.b16 %v2190
        %v3431 = vunpack.c.h.b16 %v2190
        %v3432 = vunpack.c.l.b16 %v2191
        %v3433 = vunpack.c.h.b16 %v2191
        %v3434 = vunpack.c.l.b16 %v2192
        %v3435 = vunpack.c.h.b16 %v2192
        %v3436 = vunpack.c.l.b16 %v2193
        %v3437 = vunpack.c.h.b16 %v2193
        %v3438 = vunpack.c.l.b16 %v2194
        %v3439 = vunpack.c.h.b16 %v2194
        %v3440 = vunpack.c.l.b16 %v2195
        %v3441 = vunpack.c.h.b16 %v2195
        %v3442 = vunpack.c.l.b16 %v2196
        %v3443 = vunpack.c.h.b16 %v2196
        %v3444 = vunpack.c.l.b16 %v2197
        %v3445 = vunpack.c.h.b16 %v2197
        %v3446 = vunpack.c.l.b16 %v2198
        %v3447 = vunpack.c.h.b16 %v2198
        %v3448 = vunpack.c.l.b16 %v2199
        %v3449 = vunpack.c.h.b16 %v2199
        %v3450 = vunpack.c.l.b16 %v2200
        %v3451 = vunpack.c.h.b16 %v2200
        %v3452 = vunpack.c.l.b16 %v2201
        %v3453 = vunpack.c.h.b16 %v2201
        %v3454 = vunpack.c.l.b16 %v2202
        %v3455 = vunpack.c.h.b16 %v2202
        %v3456 = vunpack.c.l.b16 %v2203
        %v3457 = vunpack.c.h.b16 %v2203
        %v3458 = vunpack.c.l.b16 %v2204
        %v3459 = vunpack.c.h.b16 %v2204
        %v3460 = vunpack.c.l.b16 %v2205
        %v3461 = vunpack.c.h.b16 %v2205
        %v3462 = vunpack.c.l.b16 %v2206
        %v3463 = vunpack.c.h.b16 %v2206
        %v3464 = vunpack.c.l.b16 %v2207
        %v3465 = vunpack.c.h.b16 %v2207
        %v3466 = vunpack.c.l.b16 %v2208
        %v3467 = vunpack.c.h.b16 %v2208
        %v3468 = vunpack.c.l.b16 %v2209
        %v3469 = vunpack.c.h.b16 %v2209
        %v3470 = vunpack.c.l.b16 %v2210
        %v3471 = vunpack.c.h.b16 %v2210
        %v3472 = vunpack.c.l.b16 %v2211
        %v3473 = vunpack.c.h.b16 %v2211
        %v3474 = vunpack.c.l.b16 %v2212
        %v3475 = vunpack.c.h.b16 %v2212
        %v3476 = vunpack.c.l.b16 %v2213
        %v3477 = vunpack.c.h.b16 %v2213
        %v3478 = vunpack.c.l.b16 %v2214
        %v3479 = vunpack.c.h.b16 %v2214
        %v3480 = vunpack.c.l.b16 %v2215
        %v3481 = vunpack.c.h.b16 %v2215
        %v3482 = vunpack.c.l.b16 %v2216
        %v3483 = vunpack.c.h.b16 %v2216
        %v3484 = vunpack.c.l.b16 %v2217
        %v3485 = vunpack.c.h.b16 %v2217
        %v3486 = vunpack.c.l.b16 %v2218
        %v3487 = vunpack.c.h.b16 %v2218
        %v3488 = vunpack.c.l.b16 %v2219
        %v3489 = vunpack.c.h.b16 %v2219
        %v3490 = vunpack.c.l.b16 %v2220
        %v3491 = vunpack.c.h.b16 %v2220
        %v3492 = vunpack.c.l.b16 %v2221
        %v3493 = vunpack.c.h.b16 %v2221
        %v3494 = vunpack.c.l.b16 %v2222
        %v3495 = vunpack.c.h.b16 %v2222
        %v3496 = vunpack.c.l.b16 %v2223
        %v3497 = vunpack.c.h.b16 %v2223
        %v3498 = vunpack.c.l.b16 %v2224
        %v3499 = vunpack.c.h.b16 %v2224
        %v3500 = vunpack.c.l.b16 %v2225
        %v3501 = vunpack.c.h.b16 %v2225
        %v3502 = vunpack.c.l.b16 %v2226
        %v3503 = vunpack.c.h.b16 %v2226
        %v3504 = vunpack.c.l.b16 %v2227
        %v3505 = vunpack.c.h.b16 %v2227
        %v3506 = vunpack.c.l.b16 %v2228
        %v3507 = vunpack.c.h.b16 %v2228
        %v3508 = vunpack.c.l.b16 %v2229
        %v3509 = vunpack.c.h.b16 %v2229
        %v3510 = vunpack.c.l.b16 %v2230
        %v3511 = vunpack.c.h.b16 %v2230
        %v3512 = vunpack.c.l.b16 %v2231
        %v3513 = vunpack.c.h.b16 %v2231
        %v3514 = vunpack.c.l.b16 %v2232
        %v3515 = vunpack.c.h.b16 %v2232
        %v3516 = vunpack.c.l.b16 %v2233
        %v3517 = vunpack.c.h.b16 %v2233
        %v3518 = vunpack.c.l.b16 %v2234
        %v3519 = vunpack.c.h.b16 %v2234
        %v3520 = vunpack.c.l.b16 %v2235
        %v3521 = vunpack.c.h.b16 %v2235
        %v3522 = vunpack.c.l.b16 %v2236
        %v3523 = vunpack.c.h.b16 %v2236
        %v3524 = vunpack.c.l.b16 %v2237
        %v3525 = vunpack.c.h.b16 %v2237
        %v3526 = vunpack.c.l.b16 %v2238
        %v3527 = vunpack.c.h.b16 %v2238
        %v3528 = vunpack.c.l.b16 %v2239
        %v3529 = vunpack.c.h.b16 %v2239
        %v3530 = vunpack.c.l.b16 %v2240
        %v3531 = vunpack.c.h.b16 %v2240
        %v3532 = vunpack.c.l.b16 %v2241
        %v3533 = vunpack.c.h.b16 %v2241
        %v3534 = vunpack.c.l.b16 %v2242
        %v3535 = vunpack.c.h.b16 %v2242
        %v3536 = vunpack.c.l.b16 %v2243
        %v3537 = vunpack.c.h.b16 %v2243
        %v3538 = vunpack.c.l.b16 %v2244
        %v3539 = vunpack.c.h.b16 %v2244
        %v3540 = vunpack.c.l.b16 %v2245
        %v3541 = vunpack.c.h.b16 %v2245
        %v3542 = vunpack.c.l.b16 %v2246
        %v3543 = vunpack.c.h.b16 %v2246
        %v3544 = vunpack.c.l.b16 %v2247
        %v3545 = vunpack.c.h.b16 %v2247
        %v3546 = vunpack.c.l.b16 %v2248
        %v3547 = vunpack.c.h.b16 %v2248
        %v3548 = vunpack.c.l.b16 %v2249
        %v3549 = vunpack.c.h.b16 %v2249
        %v3550 = vunpack.c.l.b16 %v2250
        %v3551 = vunpack.c.h.b16 %v2250
        %v3552 = vunpack.c.l.b16 %v2251
        %v3553 = vunpack.c.h.b16 %v2251
        %v3554 = vunpack.c.l.b16 %v2252
        %v3555 = vunpack.c.h.b16 %v2252
        %v3556 = vunpack.c.l.b16 %v2253
        %v3557 = vunpack.c.h.b16 %v2253
        %v3558 = vunpack.c.l.b16 %v2254
        %v3559 = vunpack.c.h.b16 %v2254
        %v3560 = vunpack.c.l.b16 %v2255
        %v3561 = vunpack.c.h.b16 %v2255
        %v3562 = vunpack.c.l.b16 %v2256
        %v3563 = vunpack.c.h.b16 %v2256
        %v3564 = vunpack.c.l.b16 %v2257
        %v3565 = vunpack.c.h.b16 %v2257
        %v3566 = vunpack.c.l.b16 %v2258
        %v3567 = vunpack.c.h.b16 %v2258
        %v3568 = vunpack.c.l.b16 %v2259
        %v3569 = vunpack.c.h.b16 %v2259
        %v3570 = vunpack.c.l.b16 %v2260
        %v3571 = vunpack.c.h.b16 %v2260
        %v3572 = vunpack.c.l.b16 %v2261
        %v3573 = vunpack.c.h.b16 %v2261
        %v3574 = vunpack.c.l.b16 %v2262
        %v3575 = vunpack.c.h.b16 %v2262
        %v3576 = vunpack.c.l.b16 %v2263
        %v3577 = vunpack.c.h.b16 %v2263
        %v3578 = vunpack.c.l.b16 %v2264
        %v3579 = vunpack.c.h.b16 %v2264
        %v3580 = vunpack.c.l.b16 %v2265
        %v3581 = vunpack.c.h.b16 %v2265
        %v3582 = vunpack.c.l.b16 %v2266
        %v3583 = vunpack.c.h.b16 %v2266
        %v3584 = vunpack.c.l.b16 %v2267
        %v3585 = vunpack.c.h.b16 %v2267
        %v3586 = vunpack.c.l.b16 %v2268
        %v3587 = vunpack.c.h.b16 %v2268
        %v3588 = vunpack.c.l.b16 %v2269
        %v3589 = vunpack.c.h.b16 %v2269
        %v3590 = vunpack.c.l.b16 %v2270
        %v3591 = vunpack.c.h.b16 %v2270
        %v3592 = vunpack.c.l.b16 %v2271
        %v3593 = vunpack.c.h.b16 %v2271
        %v3594 = vunpack.c.l.b16 %v2272
        %v3595 = vunpack.c.h.b16 %v2272
        %v3596 = vunpack.c.l.b16 %v2273
        %v3597 = vunpack.c.h.b16 %v2273
        %v3598 = vunpack.c.l.b16 %v2274
        %v3599 = vunpack.c.h.b16 %v2274
        %v3600 = vunpack.c.l.b16 %v2275
        %v3601 = vunpack.c.h.b16 %v2275
        %v3602 = vunpack.c.l.b16 %v2276
        %v3603 = vunpack.c.h.b16 %v2276
        %v3604 = vunpack.c.l.b16 %v2277
        %v3605 = vunpack.c.h.b16 %v2277
        %v3606 = vunpack.c.l.b16 %v2278
        %v3607 = vunpack.c.h.b16 %v2278
        %v3608 = vunpack.c.l.b16 %v2279
        %v3609 = vunpack.c.h.b16 %v2279
        %v3610 = vunpack.c.l.b16 %v2280
        %v3611 = vunpack.c.h.b16 %v2280
        %v3612 = vunpack.c.l.b16 %v2281
        %v3613 = vunpack.c.h.b16 %v2281
        %v3614 = vunpack.c.l.b16 %v2282
        %v3615 = vunpack.c.h.b16 %v2282
        %v3616 = vunpack.c.l.b16 %v2283
        %v3617 = vunpack.c.h.b16 %v2283
        %v3618 = vunpack.c.l.b16 %v2284
        %v3619 = vunpack.c.h.b16 %v2284
        %v3620 = vunpack.c.l.b16 %v2285
        %v3621 = vunpack.c.h.b16 %v2285
        %v3622 = vunpack.c.l.b16 %v2286
        %v3623 = vunpack.c.h.b16 %v2286
        %v3624 = vunpack.c.l.b16 %v2287
        %v3625 = vunpack.c.h.b16 %v2287
        %v3626 = vunpack.c.l.b16 %v2288
        %v3627 = vunpack.c.h.b16 %v2288
        %v3628 = vunpack.c.l.b16 %v2289
        %v3629 = vunpack.c.h.b16 %v2289
        %v3630 = vunpack.c.l.b16 %v2290
        %v3631 = vunpack.c.h.b16 %v2290
        %v3632 = vunpack.c.l.b16 %v2291
        %v3633 = vunpack.c.h.b16 %v2291
        %v3634 = vunpack.c.l.b16 %v2292
        %v3635 = vunpack.c.h.b16 %v2292
        %v3636 = vunpack.c.l.b16 %v2293
        %v3637 = vunpack.c.h.b16 %v2293
        %v3638 = vunpack.c.l.b16 %v2294
        %v3639 = vunpack.c.h.b16 %v2294
        %v3640 = vunpack.c.l.b16 %v2295
        %v3641 = vunpack.c.h.b16 %v2295
        %v3642 = vunpack.c.l.b16 %v2296
        %v3643 = vunpack.c.h.b16 %v2296
        %v3644 = vunpack.c.l.b16 %v2297
        %v3645 = vunpack.c.h.b16 %v2297
        %v3646 = vunpack.c.l.b16 %v2298
        %v3647 = vunpack.c.h.b16 %v2298
        %v3648 = vunpack.c.l.b16 %v2299
        %v3649 = vunpack.c.h.b16 %v2299
        %v3650 = vunpack.c.l.b16 %v2300
        %v3651 = vunpack.c.h.b16 %v2300
        %v3652 = vunpack.c.l.b16 %v2301
        %v3653 = vunpack.c.h.b16 %v2301
        %v3654 = vunpack.c.l.b16 %v2302
        %v3655 = vunpack.c.h.b16 %v2302
        %v3656 = vunpack.c.l.b16 %v2303
        %v3657 = vunpack.c.h.b16 %v2303
        %v3658 = vunpack.c.l.b16 %v2304
        %v3659 = vunpack.c.h.b16 %v2304
        %v3660 = vunpack.c.l.b16 %v2305
        %v3661 = vunpack.c.h.b16 %v2305
        %v3662 = vunpack.c.l.b16 %v2306
        %v3663 = vunpack.c.h.b16 %v2306
        %v3664 = vunpack.c.l.b16 %v2307
        %v3665 = vunpack.c.h.b16 %v2307
        %v3666 = vunpack.c.l.b16 %v2308
        %v3667 = vunpack.c.h.b16 %v2308
        %v3668 = vunpack.c.l.b16 %v2309
        %v3669 = vunpack.c.h.b16 %v2309
        %v3670 = vunpack.c.l.b16 %v2310
        %v3671 = vunpack.c.h.b16 %v2310
        %v3672 = vunpack.c.l.b16 %v2311
        %v3673 = vunpack.c.h.b16 %v2311
        %v3674 = vunpack.c.l.b16 %v2312
        %v3675 = vunpack.c.h.b16 %v2312
        %v3676 = vunpack.c.l.b16 %v2313
        %v3677 = vunpack.c.h.b16 %v2313
        %v3678 = vunpack.c.l.b16 %v2314
        %v3679 = vunpack.c.h.b16 %v2314
        %v3680 = vunpack.c.l.b16 %v2315
        %v3681 = vunpack.c.h.b16 %v2315
        %v3682 = vunpack.c.l.b16 %v2316
        %v3683 = vunpack.c.h.b16 %v2316
        %v3684 = vunpack.c.l.b16 %v2317
        %v3685 = vunpack.c.h.b16 %v2317
        %v3686 = vunpack.c.l.b16 %v2318
        %v3687 = vunpack.c.h.b16 %v2318
        %v3688 = vunpack.c.l.b16 %v2319
        %v3689 = vunpack.c.h.b16 %v2319
        %v3690 = vunpack.c.l.b16 %v2320
        %v3691 = vunpack.c.h.b16 %v2320
        %v3692 = vunpack.c.l.b16 %v2321
        %v3693 = vunpack.c.h.b16 %v2321
        %v3694 = vunpack.c.l.b16 %v2322
        %v3695 = vunpack.c.h.b16 %v2322
        %v3696 = vunpack.c.l.b16 %v2323
        %v3697 = vunpack.c.h.b16 %v2323
        %v3698 = vunpack.c.l.b16 %v2324
        %v3699 = vunpack.c.h.b16 %v2324
        %v3700 = vunpack.c.l.b16 %v2325
        %v3701 = vunpack.c.h.b16 %v2325
        %v3702 = vunpack.c.l.b16 %v2326
        %v3703 = vunpack.c.h.b16 %v2326
        %v3704 = vunpack.c.l.b16 %v2327
        %v3705 = vunpack.c.h.b16 %v2327
        %v3706 = vunpack.c.l.b16 %v2328
        %v3707 = vunpack.c.h.b16 %v2328
        %v3708 = vunpack.c.l.b16 %v2329
        %v3709 = vunpack.c.h.b16 %v2329
        %v3710 = vunpack.c.l.b16 %v2330
        %v3711 = vunpack.c.h.b16 %v2330
        %v3712 = vunpack.c.l.b16 %v2331
        %v3713 = vunpack.c.h.b16 %v2331
        %v3714 = vunpack.c.l.b16 %v2332
        %v3715 = vunpack.c.h.b16 %v2332
        %v3716 = vunpack.c.l.b16 %v2333
        %v3717 = vunpack.c.h.b16 %v2333
        %v3718 = vunpack.c.l.b16 %v2334
        %v3719 = vunpack.c.h.b16 %v2334
        %v3720 = vunpack.c.l.b16 %v2335
        %v3721 = vunpack.c.h.b16 %v2335
        %v3722 = vunpack.c.l.b16 %v2336
        %v3723 = vunpack.c.h.b16 %v2336
        %v3724 = vunpack.c.l.b16 %v2337
        %v3725 = vunpack.c.h.b16 %v2337
        %v3726 = vunpack.c.l.b16 %v2338
        %v3727 = vunpack.c.h.b16 %v2338
        %v3728 = vunpack.c.l.b16 %v2339
        %v3729 = vunpack.c.h.b16 %v2339
        %v3730 = vunpack.c.l.b16 %v2340
        %v3731 = vunpack.c.h.b16 %v2340
        %v3732 = vunpack.c.l.b16 %v2341
        %v3733 = vunpack.c.h.b16 %v2341
        %v3734 = vunpack.c.l.b16 %v2342
        %v3735 = vunpack.c.h.b16 %v2342
        %v3736 = vunpack.c.l.b16 %v2343
        %v3737 = vunpack.c.h.b16 %v2343
        %v3738 = vunpack.c.l.b16 %v2344
        %v3739 = vunpack.c.h.b16 %v2344
        %v3740 = vunpack.c.l.b16 %v2345
        %v3741 = vunpack.c.h.b16 %v2345
        %v3742 = vunpack.c.l.b16 %v2346
        %v3743 = vunpack.c.h.b16 %v2346
        %v3744 = vunpack.c.l.b16 %v2347
        %v3745 = vunpack.c.h.b16 %v2347
        %v3746 = vunpack.c.l.b16 %v2348
        %v3747 = vunpack.c.h.b16 %v2348
        %v3748 = vunpack.c.l.b16 %v2349
        %v3749 = vunpack.c.h.b16 %v2349
        %v3750 = vunpack.c.l.b16 %v2350
        %v3751 = vunpack.c.h.b16 %v2350
        %v3752 = vunpack.c.l.b16 %v2351
        %v3753 = vunpack.c.h.b16 %v2351
        %v3754 = vpack.c.b16 %v2956, %v2954
        %v3755 = vpack.c.b16 %v2957, %v2955
        %v3756 = vpack.c.b16 %v2960, %v2958
        %v3757 = vpack.c.b16 %v2961, %v2959
        %v3758 = vpack.c.b16 %v2964, %v2962
        %v3759 = vpack.c.b16 %v2965, %v2963
        %v3760 = vpack.c.b16 %v2968, %v2966
        %v3761 = vpack.c.b16 %v2969, %v2967
        %v3762 = vpack.c.b16 %v2972, %v2970
        %v3763 = vpack.c.b16 %v2973, %v2971
        %v3764 = vpack.c.b16 %v2976, %v2974
        %v3765 = vpack.c.b16 %v2977, %v2975
        %v3766 = vpack.c.b16 %v2980, %v2978
        %v3767 = vpack.c.b16 %v2981, %v2979
        %v3768 = vpack.c.b16 %v2984, %v2982
        %v3769 = vpack.c.b16 %v2985, %v2983
        %v3770 = vpack.c.b16 %v2988, %v2986
        %v3771 = vpack.c.b16 %v2989, %v2987
        %v3772 = vpack.c.b16 %v2992, %v2990
        %v3773 = vpack.c.b16 %v2993, %v2991
        %v3774 = vpack.c.b16 %v2996, %v2994
        %v3775 = vpack.c.b16 %v2997, %v2995
        %v3776 = vpack.c.b16 %v3000, %v2998
        %v3777 = vpack.c.b16 %v3001, %v2999
        %v3778 = vpack.c.b16 %v3004, %v3002
        %v3779 = vpack.c.b16 %v3005, %v3003
        %v3780 = vpack.c.b16 %v3008, %v3006
        %v3781 = vpack.c.b16 %v3009, %v3007
        %v3782 = vpack.c.b16 %v3012, %v3010
        %v3783 = vpack.c.b16 %v3013, %v3011
        %v3784 = vpack.c.b16 %v3016, %v3014
        %v3785 = vpack.c.b16 %v3017, %v3015
        %v3786 = vpack.c.b16 %v3020, %v3018
        %v3787 = vpack.c.b16 %v3021, %v3019
        %v3788 = vpack.c.b16 %v3024, %v3022
        %v3789 = vpack.c.b16 %v3025, %v3023
        %v3790 = vpack.c.b16 %v3028, %v3026
        %v3791 = vpack.c.b16 %v3029, %v3027
        %v3792 = vpack.c.b16 %v3032, %v3030
        %v3793 = vpack.c.b16 %v3033, %v3031
        %v3794 = vpack.c.b16 %v3036, %v3034
        %v3795 = vpack.c.b16 %v3037, %v3035
        %v3796 = vpack.c.b16 %v3040, %v3038
        %v3797 = vpack.c.b16 %v3041, %v3039
        %v3798 = vpack.c.b16 %v3044, %v3042
        %v3799 = vpack.c.b16 %v3045, %v3043
        %v3800 = vpack.c.b16 %v3048, %v3046
        %v3801 = vpack.c.b16 %v3049, %v3047
        %v3802 = vpack.c.b16 %v3052, %v3050
        %v3803 = vpack.c.b16 %v3053, %v3051
        %v3804 = vpack.c.b16 %v3056, %v3054
        %v3805 = vpack.c.b16 %v3057, %v3055
        %v3806 = vpack.c.b16 %v3060, %v3058
        %v3807 = vpack.c.b16 %v3061, %v3059
        %v3808 = vpack.c.b16 %v3064, %v3062
        %v3809 = vpack.c.b16 %v3065, %v3063
        %v3810 = vpack.c.b16 %v3068, %v3066
        %v3811 = vpack.c.b16 %v3069, %v3067
        %v3812 = vpack.c.b16 %v3072, %v3070
        %v3813 = vpack.c.b16 %v3073, %v3071
        %v3814 = vpack.c.b16 %v3076, %v3074
        %v3815 = vpack.c.b16 %v3077, %v3075
        %v3816 = vpack.c.b16 %v3080, %v3078
        %v3817 = vpack.c.b16 %v3081, %v3079
        %v3818 = vpack.c.b16 %v3084, %v3082
        %v3819 = vpack.c.b16 %v3085, %v3083
        %v3820 = vpack.c.b16 %v3088, %v3086
        %v3821 = vpack.c.b16 %v3089, %v3087
        %v3822 = vpack.c.b16 %v3092, %v3090
        %v3823 = vpack.c.b16 %v3093, %v3091
        %v3824 = vpack.c.b16 %v3096, %v3094
        %v3825 = vpack.c.b16 %v3097, %v3095
        %v3826 = vpack.c.b16 %v3100, %v3098
        %v3827 = vpack.c.b16 %v3101, %v3099
        %v3828 = vpack.c.b16 %v3104, %v3102
        %v3829 = vpack.c.b16 %v3105, %v3103
        %v3830 = vpack.c.b16 %v3108, %v3106
        %v3831 = vpack.c.b16 %v3109, %v3107
        %v3832 = vpack.c.b16 %v3112, %v3110
        %v3833 = vpack.c.b16 %v3113, %v3111
        %v3834 = vpack.c.b16 %v3116, %v3114
        %v3835 = vpack.c.b16 %v3117, %v3115
        %v3836 = vpack.c.b16 %v3120, %v3118
        %v3837 = vpack.c.b16 %v3121, %v3119
        %v3838 = vpack.c.b16 %v3124, %v3122
        %v3839 = vpack.c.b16 %v3125, %v3123
        %v3840 = vpack.c.b16 %v3128, %v3126
        %v3841 = vpack.c.b16 %v3129, %v3127
        %v3842 = vpack.c.b16 %v3132, %v3130
        %v3843 = vpack.c.b16 %v3133, %v3131
        %v3844 = vpack.c.b16 %v3136, %v3134
        %v3845 = vpack.c.b16 %v3137, %v3135
        %v3846 = vpack.c.b16 %v3140, %v3138
        %v3847 = vpack.c.b16 %v3141, %v3139
        %v3848 = vpack.c.b16 %v3144, %v3142
        %v3849 = vpack.c.b16 %v3145, %v3143
        %v3850 = vpack.c.b16 %v3148, %v3146
        %v3851 = vpack.c.b16 %v3149, %v3147
        %v3852 = vpack.c.b16 %v3152, %v3150
        %v3853 = vpack.c.b16 %v3153, %v3151
        %v3854 = vpack.c.b16 %v3156, %v3154
        %v3855 = vpack.c.b16 %v3157, %v3155
        %v3856 = vpack.c.b16 %v3160, %v3158
        %v3857 = vpack.c.b16 %v3161, %v3159
        %v3858 = vpack.c.b16 %v3164, %v3162
        %v3859 = vpack.c.b16 %v3165, %v3163
        %v3860 = vpack.c.b16 %v3168, %v3166
        %v3861 = vpack.c.b16 %v3169, %v3167
        %v3862 = vpack.c.b16 %v3172, %v3170
        %v3863 = vpack.c.b16 %v3173, %v3171
        %v3864 = vpack.c.b16 %v3176, %v3174
        %v3865 = vpack.c.b16 %v3177, %v3175
        %v3866 = vpack.c.b16 %v3180, %v3178
        %v3867 = vpack.c.b16 %v3181, %v3179
        %v3868 = vpack.c.b16 %v3184, %v3182
        %v3869 = vpack.c.b16 %v3185, %v3183
        %v3870 = vpack.c.b16 %v3188, %v3186
        %v3871 = vpack.c.b16 %v3189, %v3187
        %v3872 = vpack.c.b16 %v3192, %v3190
        %v3873 = vpack.c.b16 %v3193, %v3191
        %v3874 = vpack.c.b16 %v3196, %v3194
        %v3875 = vpack.c.b16 %v3197, %v3195
        %v3876 = vpack.c.b16 %v3200, %v3198
        %v3877 = vpack.c.b16 %v3201, %v3199
        %v3878 = vpack.c.b16 %v3204, %v3202
        %v3879 = vpack.c.b16 %v3205, %v3203
        %v3880 = vpack.c.b16 %v3208, %v3206
        %v3881 = vpack.c.b16 %v3209, %v3207
        %v3882 = vpack.c.b16 %v3212, %v3210
        %v3883 = vpack.c.b16 %v3213, %v3211
        %v3884 = vpack.c.b16 %v3216, %v3214
        %v3885 = vpack.c.b16 %v3217, %v3215
        %v3886 = vpack.c.b16 %v3220, %v3218
        %v3887 = vpack.c.b16 %v3221, %v3219
        %v3888 = vpack.c.b16 %v3224, %v3222
        %v3889 = vpack.c.b16 %v3225, %v3223
        %v3890 = vpack.c.b16 %v3228, %v3226
        %v3891 = vpack.c.b16 %v3229, %v3227
        %v3892 = vpack.c.b16 %v3232, %v3230
        %v3893 = vpack.c.b16 %v3233, %v3231
        %v3894 = vpack.c.b16 %v3236, %v3234
        %v3895 = vpack.c.b16 %v3237, %v3235
        %v3896 = vpack.c.b16 %v3240, %v3238
        %v3897 = vpack.c.b16 %v3241, %v3239
        %v3898 = vpack.c.b16 %v3244, %v3242
        %v3899 = vpack.c.b16 %v3245, %v3243
        %v3900 = vpack.c.b16 %v3248, %v3246
        %v3901 = vpack.c.b16 %v3249, %v3247
        %v3902 = vpack.c.b16 %v3252, %v3250
        %v3903 = vpack.c.b16 %v3253, %v3251
        %v3904 = vpack.c.b16 %v3256, %v3254
        %v3905 = vpack.c.b16 %v3257, %v3255
        %v3906 = vpack.c.b16 %v3260, %v3258
        %v3907 = vpack.c.b16 %v3261, %v3259
        %v3908 = vpack.c.b16 %v3264, %v3262
        %v3909 = vpack.c.b16 %v3265, %v3263
        %v3910 = vpack.c.b16 %v3268, %v3266
        %v3911 = vpack.c.b16 %v3269, %v3267
        %v3912 = vpack.c.b16 %v3272, %v3270
        %v3913 = vpack.c.b16 %v3273, %v3271
        %v3914 = vpack.c.b16 %v3276, %v3274
        %v3915 = vpack.c.b16 %v3277, %v3275
        %v3916 = vpack.c.b16 %v3280, %v3278
        %v3917 = vpack.c.b16 %v3281, %v3279
        %v3918 = vpack.c.b16 %v3284, %v3282
        %v3919 = vpack.c.b16 %v3285, %v3283
        %v3920 = vpack.c.b16 %v3288, %v3286
        %v3921 = vpack.c.b16 %v3289, %v3287
        %v3922 = vpack.c.b16 %v3292, %v3290
        %v3923 = vpack.c.b16 %v3293, %v3291
        %v3924 = vpack.c.b16 %v3296, %v3294
        %v3925 = vpack.c.b16 %v3297, %v3295
        %v3926 = vpack.c.b16 %v3300, %v3298
        %v3927 = vpack.c.b16 %v3301, %v3299
        %v3928 = vpack.c.b16 %v3304, %v3302
        %v3929 = vpack.c.b16 %v3305, %v3303
        %v3930 = vpack.c.b16 %v3308, %v3306
        %v3931 = vpack.c.b16 %v3309, %v3307
        %v3932 = vpack.c.b16 %v3312, %v3310
        %v3933 = vpack.c.b16 %v3313, %v3311
        %v3934 = vpack.c.b16 %v3316, %v3314
        %v3935 = vpack.c.b16 %v3317, %v3315
        %v3936 = vpack.c.b16 %v3320, %v3318
        %v3937 = vpack.c.b16 %v3321, %v3319
        %v3938 = vpack.c.b16 %v3324, %v3322
        %v3939 = vpack.c.b16 %v3325, %v3323
        %v3940 = vpack.c.b16 %v3328, %v3326
        %v3941 = vpack.c.b16 %v3329, %v3327
        %v3942 = vpack.c.b16 %v3332, %v3330
        %v3943 = vpack.c.b16 %v3333, %v3331
        %v3944 = vpack.c.b16 %v3336, %v3334
        %v3945 = vpack.c.b16 %v3337, %v3335
        %v3946 = vpack.c.b16 %v3340, %v3338
        %v3947 = vpack.c.b16 %v3341, %v3339
        %v3948 = vpack.c.b16 %v3344, %v3342
        %v3949 = vpack.c.b16 %v3345, %v3343
        %v3950 = vpack.c.b16 %v3348, %v3346
        %v3951 = vpack.c.b16 %v3349, %v3347
        %v3952 = vpack.c.b16 %v3352, %v3350
        %v3953 = vpack.c.b16 %v3353, %v3351
        %v3954 = vpack.c.b16 %v3356, %v3354
        %v3955 = vpack.c.b16 %v3357, %v3355
        %v3956 = vpack.c.b16 %v3360, %v3358
        %v3957 = vpack.c.b16 %v3361, %v3359
        %v3958 = vpack.c.b16 %v3364, %v3362
        %v3959 = vpack.c.b16 %v3365, %v3363
        %v3960 = vpack.c.b16 %v3368, %v3366
        %v3961 = vpack.c.b16 %v3369, %v3367
        %v3962 = vpack.c.b16 %v3372, %v3370
        %v3963 = vpack.c.b16 %v3373, %v3371
        %v3964 = vpack.c.b16 %v3376, %v3374
        %v3965 = vpack.c.b16 %v3377, %v3375
        %v3966 = vpack.c.b16 %v3380, %v3378
        %v3967 = vpack.c.b16 %v3381, %v3379
        %v3968 = vpack.c.b16 %v3384, %v3382
        %v3969 = vpack.c.b16 %v3385, %v3383
        %v3970 = vpack.c.b16 %v3388, %v3386
        %v3971 = vpack.c.b16 %v3389, %v3387
        %v3972 = vpack.c.b16 %v3392, %v3390
        %v3973 = vpack.c.b16 %v3393, %v3391
        %v3974 = vpack.c.b16 %v3396, %v3394
        %v3975 = vpack.c.b16 %v3397, %v3395
        %v3976 = vpack.c.b16 %v3400, %v3398
        %v3977 = vpack.c.b16 %v3401, %v3399
        %v3978 = vpack.c.b16 %v3404, %v3402
        %v3979 = vpack.c.b16 %v3405, %v3403
        %v3980 = vpack.c.b16 %v3408, %v3406
        %v3981 = vpack.c.b16 %v3409, %v3407
        %v3982 = vpack.c.b16 %v3412, %v3410
        %v3983 = vpack.c.b16 %v3413, %v3411
        %v3984 = vpack.c.b16 %v3416, %v3414
        %v3985 = vpack.c.b16 %v3417, %v3415
        %v3986 = vpack.c.b16 %v3420, %v3418
        %v3987 = vpack.c.b16 %v3421, %v3419
        %v3988 = vpack.c.b16 %v3424, %v3422
        %v3989 = vpack.c.b16 %v3425, %v3423
        %v3990 = vpack.c.b16 %v3428, %v3426
        %v3991 = vpack.c.b16 %v3429, %v3427
        %v3992 = vpack.c.b16 %v3432, %v3430
        %v3993 = vpack.c.b16 %v3433, %v3431
        %v3994 = vpack.c.b16 %v3436, %v3434
        %v3995 = vpack.c.b16 %v3437, %v3435
        %v3996 = vpack.c.b16 %v3440, %v3438
        %v3997 = vpack.c.b16 %v3441, %v3439
        %v3998 = vpack.c.b16 %v3444, %v3442
        %v3999 = vpack.c.b16 %v3445, %v3443
        %v4000 = vpack.c.b16 %v3448, %v3446
        %v4001 = vpack.c.b16 %v3449, %v3447
        %v4002 = vpack.c.b16 %v3452, %v3450
        %v4003 = vpack.c.b16 %v3453, %v3451
        %v4004 = vpack.c.b16 %v3456, %v3454
        %v4005 = vpack.c.b16 %v3457, %v3455
        %v4006 = vpack.c.b16 %v3460, %v3458
        %v4007 = vpack.c.b16 %v3461, %v3459
        %v4008 = vpack.c.b16 %v3464, %v3462
        %v4009 = vpack.c.b16 %v3465, %v3463
        %v4010 = vpack.c.b16 %v3468, %v3466
        %v4011 = vpack.c.b16 %v3469, %v3467
        %v4012 = vpack.c.b16 %v3472, %v3470
        %v4013 = vpack.c.b16 %v3473, %v3471
        %v4014 = vpack.c.b16 %v3476, %v3474
        %v4015 = vpack.c.b16 %v3477, %v3475
        %v4016 = vpack.c.b16 %v3480, %v3478
        %v4017 = vpack.c.b16 %v3481, %v3479
        %v4018 = vpack.c.b16 %v3484, %v3482
        %v4019 = vpack.c.b16 %v3485, %v3483
        %v4020 = vpack.c.b16 %v3488, %v3486
        %v4021 = vpack.c.b16 %v3489, %v3487
        %v4022 = vpack.c.b16 %v3492, %v3490
        %v4023 = vpack.c.b16 %v3493, %v3491
        %v4024 = vpack.c.b16 %v3496, %v3494
        %v4025 = vpack.c.b16 %v3497, %v3495
        %v4026 = vpack.c.b16 %v3500, %v3498
        %v4027 = vpack.c.b16 %v3501, %v3499
        %v4028 = vpack.c.b16 %v3504, %v3502
        %v4029 = vpack.c.b16 %v3505, %v3503
        %v4030 = vpack.c.b16 %v3508, %v3506
        %v4031 = vpack.c.b16 %v3509, %v3507
        %v4032 = vpack.c.b16 %v3512, %v3510
        %v4033 = vpack.c.b16 %v3513, %v3511
        %v4034 = vpack.c.b16 %v3516, %v3514
        %v4035 = vpack.c.b16 %v3517, %v3515
        %v4036 = vpack.c.b16 %v3520, %v3518
        %v4037 = vpack.c.b16 %v3521, %v3519
        %v4038 = vpack.c.b16 %v3524, %v3522
        %v4039 = vpack.c.b16 %v3525, %v3523
        %v4040 = vpack.c.b16 %v3528, %v3526
        %v4041 = vpack.c.b16 %v3529, %v3527
        %v4042 = vpack.c.b16 %v3532, %v3530
        %v4043 = vpack.c.b16 %v3533, %v3531
        %v4044 = vpack.c.b16 %v3536, %v3534
        %v4045 = vpack.c.b16 %v3537, %v3535
        %v4046 = vpack.c.b16 %v3540, %v3538
        %v4047 = vpack.c.b16 %v3541, %v3539
        %v4048 = vpack.c.b16 %v3544, %v3542
        %v4049 = vpack.c.b16 %v3545, %v3543
        %v4050 = vpack.c.b16 %v3548, %v3546
        %v4051 = vpack.c.b16 %v3549, %v3547
        %v4052 = vpack.c.b16 %v3552, %v3550
        %v4053 = vpack.c.b16 %v3553, %v3551
        %v4054 = vpack.c.b16 %v3556, %v3554
        %v4055 = vpack.c.b16 %v3557, %v3555
        %v4056 = vpack.c.b16 %v3560, %v3558
        %v4057 = vpack.c.b16 %v3561, %v3559
        %v4058 = vpack.c.b16 %v3564, %v3562
        %v4059 = vpack.c.b16 %v3565, %v3563
        %v4060 = vpack.c.b16 %v3568, %v3566
        %v4061 = vpack.c.b16 %v3569, %v3567
        %v4062 = vpack.c.b16 %v3572, %v3570
        %v4063 = vpack.c.b16 %v3573, %v3571
        %v4064 = vpack.c.b16 %v3576, %v3574
        %v4065 = vpack.c.b16 %v3577, %v3575
        %v4066 = vpack.c.b16 %v3580, %v3578
        %v4067 = vpack.c.b16 %v3581, %v3579
        %v4068 = vpack.c.b16 %v3584, %v3582
        %v4069 = vpack.c.b16 %v3585, %v3583
        %v4070 = vpack.c.b16 %v3588, %v3586
        %v4071 = vpack.c.b16 %v3589, %v3587
        %v4072 = vpack.c.b16 %v3592, %v3590
        %v4073 = vpack.c.b16 %v3593, %v3591
        %v4074 = vpack.c.b16 %v3596, %v3594
        %v4075 = vpack.c.b16 %v3597, %v3595
        %v4076 = vpack.c.b16 %v3600, %v3598
        %v4077 = vpack.c.b16 %v3601, %v3599
        %v4078 = vpack.c.b16 %v3604, %v3602
        %v4079 = vpack.c.b16 %v3605, %v3603
        %v4080 = vpack.c.b16 %v3608, %v3606
        %v4081 = vpack.c.b16 %v3609, %v3607
        %v4082 = vpack.c.b16 %v3612, %v3610
        %v4083 = vpack.c.b16 %v3613, %v3611
        %v4084 = vpack.c.b16 %v3616, %v3614
        %v4085 = vpack.c.b16 %v3617, %v3615
        %v4086 = vpack.c.b16 %v3620, %v3618
        %v4087 = vpack.c.b16 %v3621, %v3619
        %v4088 = vpack.c.b16 %v3624, %v3622
        %v4089 = vpack.c.b16 %v3625, %v3623
        %v4090 = vpack.c.b16 %v3628, %v3626
        %v4091 = vpack.c.b16 %v3629, %v3627
        %v4092 = vpack.c.b16 %v3632, %v3630
        %v4093 = vpack.c.b16 %v3633, %v3631
        %v4094 = vpack.c.b16 %v3636, %v3634
        %v4095 = vpack.c.b16 %v3637, %v3635
        %v4096 = vpack.c.b16 %v3640, %v3638
        %v4097 = vpack.c.b16 %v3641, %v3639
        %v4098 = vpack.c.b16 %v3644, %v3642
        %v4099 = vpack.c.b16 %v3645, %v3643
        %v4100 = vpack.c.b16 %v3648, %v3646
        %v4101 = vpack.c.b16 %v3649, %v3647
        %v4102 = vpack.c.b16 %v3652, %v3650
        %v4103 = vpack.c.b16 %v3653, %v3651
        %v4104 = vpack.c.b16 %v3656, %v3654
        %v4105 = vpack.c.b16 %v3657, %v3655
        %v4106 = vpack.c.b16 %v3660, %v3658
        %v4107 = vpack.c.b16 %v3661, %v3659
        %v4108 = vpack.c.b16 %v3664, %v3662
        %v4109 = vpack.c.b16 %v3665, %v3663
        %v4110 = vpack.c.b16 %v3668, %v3666
        %v4111 = vpack.c.b16 %v3669, %v3667
        %v4112 = vpack.c.b16 %v3672, %v3670
        %v4113 = vpack.c.b16 %v3673, %v3671
        %v4114 = vpack.c.b16 %v3676, %v3674
        %v4115 = vpack.c.b16 %v3677, %v3675
        %v4116 = vpack.c.b16 %v3680, %v3678
        %v4117 = vpack.c.b16 %v3681, %v3679
        %v4118 = vpack.c.b16 %v3684, %v3682
        %v4119 = vpack.c.b16 %v3685, %v3683
        %v4120 = vpack.c.b16 %v3688, %v3686
        %v4121 = vpack.c.b16 %v3689, %v3687
        %v4122 = vpack.c.b16 %v3692, %v3690
        %v4123 = vpack.c.b16 %v3693, %v3691
        %v4124 = vpack.c.b16 %v3696, %v3694
        %v4125 = vpack.c.b16 %v3697, %v3695
        %v4126 = vpack.c.b16 %v3700, %v3698
        %v4127 = vpack.c.b16 %v3701, %v3699
        %v4128 = vpack.c.b16 %v3704, %v3702
        %v4129 = vpack.c.b16 %v3705, %v3703
        %v4130 = vpack.c.b16 %v3708, %v3706
        %v4131 = vpack.c.b16 %v3709, %v3707
        %v4132 = vpack.c.b16 %v3712, %v3710
        %v4133 = vpack.c.b16 %v3713, %v3711
        %v4134 = vpack.c.b16 %v3716, %v3714
        %v4135 = vpack.c.b16 %v3717, %v3715
        %v4136 = vpack.c.b16 %v3720, %v3718
        %v4137 = vpack.c.b16 %v3721, %v3719
        %v4138 = vpack.c.b16 %v3724, %v3722
        %v4139 = vpack.c.b16 %v3725, %v3723
        %v4140 = vpack.c.b16 %v3728, %v3726
        %v4141 = vpack.c.b16 %v3729, %v3727
        %v4142 = vpack.c.b16 %v3732, %v3730
        %v4143 = vpack.c.b16 %v3733, %v3731
        %v4144 = vpack.c.b16 %v3736, %v3734
        %v4145 = vpack.c.b16 %v3737, %v3735
        %v4146 = vpack.c.b16 %v3740, %v3738
        %v4147 = vpack.c.b16 %v3741, %v3739
        %v4148 = vpack.c.b16 %v3744, %v3742
        %v4149 = vpack.c.b16 %v3745, %v3743
        %v4150 = vpack.c.b16 %v3748, %v3746
        %v4151 = vpack.c.b16 %v3749, %v3747
        %v4152 = vpack.c.b16 %v3752, %v3750
        %v4153 = vpack.c.b16 %v3753, %v3751
        %4554 = vmatprep.subr.bf16.mxu0 %v3755
        %4555 = vmatpush1.bf16.msra.mxu0 %v3754
        %4556 = vmatprep.subr.bf16.mxu0 %v3757
        %4557 = vmatpush1.bf16.msra.mxu0 %v3756
        %4558 = vmatprep.subr.bf16.mxu0 %v3759
        %4559 = vmatpush1.bf16.msra.mxu0 %v3758
        %4560 = vmatprep.subr.bf16.mxu0 %v3761
        %4561 = vmatpush1.bf16.msra.mxu0 %v3760
        %4562 = vmatprep.subr.bf16.mxu0 %v3763
        %4563 = vmatpush1.bf16.msra.mxu0 %v3762
        %4564 = vmatprep.subr.bf16.mxu0 %v3765
        %4565 = vmatpush1.bf16.msra.mxu0 %v3764
        %4566 = vmatprep.subr.bf16.mxu0 %v3767
        %4567 = vmatpush1.bf16.msra.mxu0 %v3766
        %4568 = vmatprep.subr.bf16.mxu0 %v3769
        %4569 = vmatpush1.bf16.msra.mxu0 %v3768
        %4570 = vmatprep.subr.bf16.mxu0 %v3771
        %4571 = vmatpush1.bf16.msra.mxu0 %v3770
        %4572 = vmatprep.subr.bf16.mxu0 %v3773
        %4573 = vmatpush1.bf16.msra.mxu0 %v3772
        %4574 = vmatprep.subr.bf16.mxu0 %v3775
        %4575 = vmatpush1.bf16.msra.mxu0 %v3774
        %4576 = vmatprep.subr.bf16.mxu0 %v3777
        %4577 = vmatpush1.bf16.msra.mxu0 %v3776
        %4578 = vmatprep.subr.bf16.mxu0 %v3779
        %4579 = vmatpush1.bf16.msra.mxu0 %v3778
        %4580 = vmatprep.subr.bf16.mxu0 %v3781
        %4581 = vmatpush1.bf16.msra.mxu0 %v3780
        %4582 = vmatprep.subr.bf16.mxu0 %v3783
        %4583 = vmatpush1.bf16.msra.mxu0 %v3782
        %4584 = vmatprep.subr.bf16.mxu0 %v3785
        %4585 = vmatpush1.bf16.msra.mxu0 %v3784
        %4586 = vmatprep.mubr.bf16.mxu0 %v2405
        %4587 = vmatmul.mubr.bf16.gmra.mrb[0].mxu0 %v2391
        %v4588 = vpop.f32.mrb[0].mxu0
        %v4589 = vadd.f32 %v2357, %v4588
        %v4590 = vpop.f32.mrb[0].mxu0
        %v4591 = vadd.f32 %v2361, %v4590
        %v4592 = vpop.f32.mrb[0].mxu0
        %v4593 = vpop.f32.mrb[0].mxu0
        %4594 = vdwg.mxu0
        %4595 = vmatprep.subr.bf16.mxu0 %v3787
        %4596 = vmatpush1.bf16.msra.mxu0 %v3786
        %4597 = vmatprep.subr.bf16.mxu0 %v3789
        %4598 = vmatpush1.bf16.msra.mxu0 %v3788
        %4599 = vmatprep.subr.bf16.mxu0 %v3791
        %4600 = vmatpush1.bf16.msra.mxu0 %v3790
        %4601 = vmatprep.subr.bf16.mxu0 %v3793
        %4602 = vmatpush1.bf16.msra.mxu0 %v3792
        %4603 = vmatprep.subr.bf16.mxu0 %v3795
        %4604 = vmatpush1.bf16.msra.mxu0 %v3794
        %4605 = vmatprep.subr.bf16.mxu0 %v3797
        %4606 = vmatpush1.bf16.msra.mxu0 %v3796
        %4607 = vmatprep.subr.bf16.mxu0 %v3799
        %4608 = vmatpush1.bf16.msra.mxu0 %v3798
        %4609 = vmatprep.subr.bf16.mxu0 %v3801
        %4610 = vmatpush1.bf16.msra.mxu0 %v3800
        %4611 = vmatprep.subr.bf16.mxu0 %v3803
        %4612 = vmatpush1.bf16.msra.mxu0 %v3802
        %4613 = vmatprep.subr.bf16.mxu0 %v3805
        %4614 = vmatpush1.bf16.msra.mxu0 %v3804
        %4615 = vmatprep.subr.bf16.mxu0 %v3807
        %4616 = vmatpush1.bf16.msra.mxu0 %v3806
        %4617 = vmatprep.subr.bf16.mxu0 %v3809
        %4618 = vmatpush1.bf16.msra.mxu0 %v3808
        %4619 = vmatprep.subr.bf16.mxu0 %v3811
        %4620 = vmatpush1.bf16.msra.mxu0 %v3810
        %4621 = vmatprep.subr.bf16.mxu0 %v3813
        %4622 = vmatpush1.bf16.msra.mxu0 %v3812
        %4623 = vmatprep.subr.bf16.mxu0 %v3815
        %4624 = vmatpush1.bf16.msra.mxu0 %v3814
        %4625 = vmatprep.subr.bf16.mxu0 %v3817
        %4626 = vmatpush1.bf16.msra.mxu0 %v3816
        %4627 = vmatprep.mubr.bf16.mxu0 %v2415
        %4628 = vmatmul.mubr.bf16.gmra.mrb[0].mxu0 %v2413
        %v4629 = vpop.f32.mrb[0].mxu0
        %v4630 = vadd.f32 %v4589, %v4629
        %v4631 = vpop.f32.mrb[0].mxu0
        %v4632 = vadd.f32 %v4591, %v4631
        %v4633 = vpop.f32.mrb[0].mxu0
        %v4634 = vpop.f32.mrb[0].mxu0
        %4635 = vdwg.mxu0
        %4636 = vmatprep.subr.bf16.mxu0 %v3819
        %4637 = vmatpush1.bf16.msra.mxu0 %v3818
        %4638 = vmatprep.subr.bf16.mxu0 %v3821
        %4639 = vmatpush1.bf16.msra.mxu0 %v3820
        %4640 = vmatprep.subr.bf16.mxu0 %v3823
        %4641 = vmatpush1.bf16.msra.mxu0 %v3822
        %4642 = vmatprep.subr.bf16.mxu0 %v3825
        %4643 = vmatpush1.bf16.msra.mxu0 %v3824
        %4644 = vmatprep.subr.bf16.mxu0 %v3827
        %4645 = vmatpush1.bf16.msra.mxu0 %v3826
        %4646 = vmatprep.subr.bf16.mxu0 %v3829
        %4647 = vmatpush1.bf16.msra.mxu0 %v3828
        %4648 = vmatprep.subr.bf16.mxu0 %v3831
        %4649 = vmatpush1.bf16.msra.mxu0 %v3830
        %4650 = vmatprep.subr.bf16.mxu0 %v3833
        %4651 = vmatpush1.bf16.msra.mxu0 %v3832
        %4652 = vmatprep.subr.bf16.mxu0 %v3835
        %4653 = vmatpush1.bf16.msra.mxu0 %v3834
        %4654 = vmatprep.subr.bf16.mxu0 %v3837
        %4655 = vmatpush1.bf16.msra.mxu0 %v3836
        %4656 = vmatprep.subr.bf16.mxu0 %v3839
        %4657 = vmatpush1.bf16.msra.mxu0 %v3838
        %4658 = vmatprep.subr.bf16.mxu0 %v3841
        %4659 = vmatpush1.bf16.msra.mxu0 %v3840
        %4660 = vmatprep.subr.bf16.mxu0 %v3843
        %4661 = vmatpush1.bf16.msra.mxu0 %v3842
        %4662 = vmatprep.subr.bf16.mxu0 %v3845
        %4663 = vmatpush1.bf16.msra.mxu0 %v3844
        %4664 = vmatprep.subr.bf16.mxu0 %v3847
        %4665 = vmatpush1.bf16.msra.mxu0 %v3846
        %4666 = vmatprep.subr.bf16.mxu0 %v3849
        %4667 = vmatpush1.bf16.msra.mxu0 %v3848
        %4668 = vmatprep.mubr.bf16.mxu0 %v2412
        %4669 = vmatmul.mubr.bf16.gmra.mrb[0].mxu0 %v2398
        %v4670 = vpop.f32.mrb[0].mxu0
        %v4671 = vadd.f32 %v4630, %v4670
        %v4672 = vpop.f32.mrb[0].mxu0
        %v4673 = vadd.f32 %v4632, %v4672
        %v4674 = vpop.f32.mrb[0].mxu0
        %v4675 = vpop.f32.mrb[0].mxu0
        %4676 = vdwg.mxu0
        %4677 = vmatprep.subr.bf16.mxu0 %v3851
        %4678 = vmatpush1.bf16.msra.mxu0 %v3850
        %4679 = vmatprep.subr.bf16.mxu0 %v3853
        %4680 = vmatpush1.bf16.msra.mxu0 %v3852
        %4681 = vmatprep.subr.bf16.mxu0 %v3855
        %4682 = vmatpush1.bf16.msra.mxu0 %v3854
        %4683 = vmatprep.subr.bf16.mxu0 %v3857
        %4684 = vmatpush1.bf16.msra.mxu0 %v3856
        %4685 = vmatprep.subr.bf16.mxu0 %v3859
        %4686 = vmatpush1.bf16.msra.mxu0 %v3858
        %4687 = vmatprep.subr.bf16.mxu0 %v3861
        %4688 = vmatpush1.bf16.msra.mxu0 %v3860
        %4689 = vmatprep.subr.bf16.mxu0 %v3863
        %4690 = vmatpush1.bf16.msra.mxu0 %v3862
        %4691 = vmatprep.subr.bf16.mxu0 %v3865
        %4692 = vmatpush1.bf16.msra.mxu0 %v3864
        %4693 = vmatprep.subr.bf16.mxu0 %v3867
        %4694 = vmatpush1.bf16.msra.mxu0 %v3866
        %4695 = vmatprep.subr.bf16.mxu0 %v3869
        %4696 = vmatpush1.bf16.msra.mxu0 %v3868
        %4697 = vmatprep.subr.bf16.mxu0 %v3871
        %4698 = vmatpush1.bf16.msra.mxu0 %v3870
        %4699 = vmatprep.subr.bf16.mxu0 %v3873
        %4700 = vmatpush1.bf16.msra.mxu0 %v3872
        %4701 = vmatprep.subr.bf16.mxu0 %v3875
        %4702 = vmatpush1.bf16.msra.mxu0 %v3874
        %4703 = vmatprep.subr.bf16.mxu0 %v3877
        %4704 = vmatpush1.bf16.msra.mxu0 %v3876
        %4705 = vmatprep.subr.bf16.mxu0 %v3879
        %4706 = vmatpush1.bf16.msra.mxu0 %v3878
        %4707 = vmatprep.subr.bf16.mxu0 %v3881
        %4708 = vmatpush1.bf16.msra.mxu0 %v3880
        %4709 = vmatprep.mubr.bf16.mxu0 %v2416
        %4710 = vmatmul.mubr.bf16.gmra.mrb[0].mxu0 %v2414
        %v4711 = vpop.f32.mrb[0].mxu0
        %v4712 = vadd.f32 %v4671, %v4711
        %v4713 = vpop.f32.mrb[0].mxu0
        %v4714 = vadd.f32 %v4673, %v4713
        %v4715 = vpop.f32.mrb[0].mxu0
        %v4716 = vpop.f32.mrb[0].mxu0
        %4717 = vdwg.mxu0
        %4718 = vmatprep.subr.bf16.mxu0 %v3883
        %4719 = vmatpush1.bf16.msra.mxu0 %v3882
        %4720 = vmatprep.subr.bf16.mxu0 %v3885
        %4721 = vmatpush1.bf16.msra.mxu0 %v3884
        %4722 = vmatprep.subr.bf16.mxu0 %v3887
        %4723 = vmatpush1.bf16.msra.mxu0 %v3886
        %4724 = vmatprep.subr.bf16.mxu0 %v3889
        %4725 = vmatpush1.bf16.msra.mxu0 %v3888
        %4726 = vmatprep.subr.bf16.mxu0 %v3891
        %4727 = vmatpush1.bf16.msra.mxu0 %v3890
        %4728 = vmatprep.subr.bf16.mxu0 %v3893
        %4729 = vmatpush1.bf16.msra.mxu0 %v3892
        %4730 = vmatprep.subr.bf16.mxu0 %v3895
        %4731 = vmatpush1.bf16.msra.mxu0 %v3894
        %4732 = vmatprep.subr.bf16.mxu0 %v3897
        %4733 = vmatpush1.bf16.msra.mxu0 %v3896
        %4734 = vmatprep.subr.bf16.mxu0 %v3899
        %4735 = vmatpush1.bf16.msra.mxu0 %v3898
        %4736 = vmatprep.subr.bf16.mxu0 %v3901
        %4737 = vmatpush1.bf16.msra.mxu0 %v3900
        %4738 = vmatprep.subr.bf16.mxu0 %v3903
        %4739 = vmatpush1.bf16.msra.mxu0 %v3902
        %4740 = vmatprep.subr.bf16.mxu0 %v3905
        %4741 = vmatpush1.bf16.msra.mxu0 %v3904
        %4742 = vmatprep.subr.bf16.mxu0 %v3907
        %4743 = vmatpush1.bf16.msra.mxu0 %v3906
        %4744 = vmatprep.subr.bf16.mxu0 %v3909
        %4745 = vmatpush1.bf16.msra.mxu0 %v3908
        %4746 = vmatprep.subr.bf16.mxu0 %v3911
        %4747 = vmatpush1.bf16.msra.mxu0 %v3910
        %4748 = vmatprep.subr.bf16.mxu0 %v3913
        %4749 = vmatpush1.bf16.msra.mxu0 %v3912
        %4750 = vmatprep.mubr.bf16.mxu0 %v2454
        %4751 = vmatmul.mubr.bf16.gmra.mrb[0].mxu0 %v2440
        %v4752 = vpop.f32.mrb[0].mxu0
        %v4753 = vadd.f32 %v4712, %v4752
        %v4754 = vpop.f32.mrb[0].mxu0
        %v4755 = vadd.f32 %v4714, %v4754
        %v4756 = vpop.f32.mrb[0].mxu0
        %v4757 = vpop.f32.mrb[0].mxu0
        %4758 = vdwg.mxu0
        %4759 = vmatprep.subr.bf16.mxu0 %v3915
        %4760 = vmatpush1.bf16.msra.mxu0 %v3914
        %4761 = vmatprep.subr.bf16.mxu0 %v3917
        %4762 = vmatpush1.bf16.msra.mxu0 %v3916
        %4763 = vmatprep.subr.bf16.mxu0 %v3919
        %4764 = vmatpush1.bf16.msra.mxu0 %v3918
        %4765 = vmatprep.subr.bf16.mxu0 %v3921
        %4766 = vmatpush1.bf16.msra.mxu0 %v3920
        %4767 = vmatprep.subr.bf16.mxu0 %v3923
        %4768 = vmatpush1.bf16.msra.mxu0 %v3922
        %4769 = vmatprep.subr.bf16.mxu0 %v3925
        %4770 = vmatpush1.bf16.msra.mxu0 %v3924
        %4771 = vmatprep.subr.bf16.mxu0 %v3927
        %4772 = vmatpush1.bf16.msra.mxu0 %v3926
        %4773 = vmatprep.subr.bf16.mxu0 %v3929
        %4774 = vmatpush1.bf16.msra.mxu0 %v3928
        %4775 = vmatprep.subr.bf16.mxu0 %v3931
        %4776 = vmatpush1.bf16.msra.mxu0 %v3930
        %4777 = vmatprep.subr.bf16.mxu0 %v3933
        %4778 = vmatpush1.bf16.msra.mxu0 %v3932
        %4779 = vmatprep.subr.bf16.mxu0 %v3935
        %4780 = vmatpush1.bf16.msra.mxu0 %v3934
        %4781 = vmatprep.subr.bf16.mxu0 %v3937
        %4782 = vmatpush1.bf16.msra.mxu0 %v3936
        %4783 = vmatprep.subr.bf16.mxu0 %v3939
        %4784 = vmatpush1.bf16.msra.mxu0 %v3938
        %4785 = vmatprep.subr.bf16.mxu0 %v3941
        %4786 = vmatpush1.bf16.msra.mxu0 %v3940
        %4787 = vmatprep.subr.bf16.mxu0 %v3943
        %4788 = vmatpush1.bf16.msra.mxu0 %v3942
        %4789 = vmatprep.subr.bf16.mxu0 %v3945
        %4790 = vmatpush1.bf16.msra.mxu0 %v3944
        %4791 = vmatprep.mubr.bf16.mxu0 %v2464
        %4792 = vmatmul.mubr.bf16.gmra.mrb[0].mxu0 %v2462
        %v4793 = vpop.f32.mrb[0].mxu0
        %v4794 = vadd.f32 %v4753, %v4793
        %v4795 = vpop.f32.mrb[0].mxu0
        %v4796 = vadd.f32 %v4755, %v4795
        %v4797 = vpop.f32.mrb[0].mxu0
        %v4798 = vpop.f32.mrb[0].mxu0
        %4799 = vdwg.mxu0
        %4800 = vmatprep.subr.bf16.mxu0 %v3947
        %4801 = vmatpush1.bf16.msra.mxu0 %v3946
        %4802 = vmatprep.subr.bf16.mxu0 %v3949
        %4803 = vmatpush1.bf16.msra.mxu0 %v3948
        %4804 = vmatprep.subr.bf16.mxu0 %v3951
        %4805 = vmatpush1.bf16.msra.mxu0 %v3950
        %4806 = vmatprep.subr.bf16.mxu0 %v3953
        %4807 = vmatpush1.bf16.msra.mxu0 %v3952
        %4808 = vmatprep.subr.bf16.mxu0 %v3955
        %4809 = vmatpush1.bf16.msra.mxu0 %v3954
        %4810 = vmatprep.subr.bf16.mxu0 %v3957
        %4811 = vmatpush1.bf16.msra.mxu0 %v3956
        %4812 = vmatprep.subr.bf16.mxu0 %v3959
        %4813 = vmatpush1.bf16.msra.mxu0 %v3958
        %4814 = vmatprep.subr.bf16.mxu0 %v3961
        %4815 = vmatpush1.bf16.msra.mxu0 %v3960
        %4816 = vmatprep.subr.bf16.mxu0 %v3963
        %4817 = vmatpush1.bf16.msra.mxu0 %v3962
        %4818 = vmatprep.subr.bf16.mxu0 %v3965
        %4819 = vmatpush1.bf16.msra.mxu0 %v3964
        %4820 = vmatprep.subr.bf16.mxu0 %v3967
        %4821 = vmatpush1.bf16.msra.mxu0 %v3966
        %4822 = vmatprep.subr.bf16.mxu0 %v3969
        %4823 = vmatpush1.bf16.msra.mxu0 %v3968
        %4824 = vmatprep.subr.bf16.mxu0 %v3971
        %4825 = vmatpush1.bf16.msra.mxu0 %v3970
        %4826 = vmatprep.subr.bf16.mxu0 %v3973
        %4827 = vmatpush1.bf16.msra.mxu0 %v3972
        %4828 = vmatprep.subr.bf16.mxu0 %v3975
        %4829 = vmatpush1.bf16.msra.mxu0 %v3974
        %4830 = vmatprep.subr.bf16.mxu0 %v3977
        %4831 = vmatpush1.bf16.msra.mxu0 %v3976
        %4832 = vmatprep.mubr.bf16.mxu0 %v2461
        %4833 = vmatmul.mubr.bf16.gmra.mrb[0].mxu0 %v2447
        %v4834 = vpop.f32.mrb[0].mxu0
        %v4835 = vadd.f32 %v4794, %v4834
        %v4836 = vpop.f32.mrb[0].mxu0
        %v4837 = vadd.f32 %v4796, %v4836
        %v4838 = vpop.f32.mrb[0].mxu0
        %v4839 = vpop.f32.mrb[0].mxu0
        %4840 = vdwg.mxu0
        %4841 = vmatprep.subr.bf16.mxu0 %v3979
        %4842 = vmatpush1.bf16.msra.mxu0 %v3978
        %4843 = vmatprep.subr.bf16.mxu0 %v3981
        %4844 = vmatpush1.bf16.msra.mxu0 %v3980
        %4845 = vmatprep.subr.bf16.mxu0 %v3983
        %4846 = vmatpush1.bf16.msra.mxu0 %v3982
        %4847 = vmatprep.subr.bf16.mxu0 %v3985
        %4848 = vmatpush1.bf16.msra.mxu0 %v3984
        %4849 = vmatprep.subr.bf16.mxu0 %v3987
        %4850 = vmatpush1.bf16.msra.mxu0 %v3986
        %4851 = vmatprep.subr.bf16.mxu0 %v3989
        %4852 = vmatpush1.bf16.msra.mxu0 %v3988
        %4853 = vmatprep.subr.bf16.mxu0 %v3991
        %4854 = vmatpush1.bf16.msra.mxu0 %v3990
        %4855 = vmatprep.subr.bf16.mxu0 %v3993
        %4856 = vmatpush1.bf16.msra.mxu0 %v3992
        %4857 = vmatprep.subr.bf16.mxu0 %v3995
        %4858 = vmatpush1.bf16.msra.mxu0 %v3994
        %4859 = vmatprep.subr.bf16.mxu0 %v3997
        %4860 = vmatpush1.bf16.msra.mxu0 %v3996
        %4861 = vmatprep.subr.bf16.mxu0 %v3999
        %4862 = vmatpush1.bf16.msra.mxu0 %v3998
        %4863 = vmatprep.subr.bf16.mxu0 %v4001
        %4864 = vmatpush1.bf16.msra.mxu0 %v4000
        %4865 = vmatprep.subr.bf16.mxu0 %v4003
        %4866 = vmatpush1.bf16.msra.mxu0 %v4002
        %4867 = vmatprep.subr.bf16.mxu0 %v4005
        %4868 = vmatpush1.bf16.msra.mxu0 %v4004
        %4869 = vmatprep.subr.bf16.mxu0 %v4007
        %4870 = vmatpush1.bf16.msra.mxu0 %v4006
        %4871 = vmatprep.subr.bf16.mxu0 %v4009
        %4872 = vmatpush1.bf16.msra.mxu0 %v4008
        %4873 = vmatprep.mubr.bf16.mxu0 %v2465
        %4874 = vmatmul.mubr.bf16.gmra.mrb[0].mxu0 %v2463
        %v4875 = vpop.f32.mrb[0].mxu0
        %v4876 = vadd.f32 %v4835, %v4875
        %v4877 = vpop.f32.mrb[0].mxu0
        %v4878 = vadd.f32 %v4837, %v4877
        %v4879 = vpop.f32.mrb[0].mxu0
        %v4880 = vpop.f32.mrb[0].mxu0
        %4881 = vdwg.mxu0
        %4882 = vmatprep.subr.bf16.mxu0 %v4011
        %4883 = vmatpush1.bf16.msra.mxu0 %v4010
        %4884 = vmatprep.subr.bf16.mxu0 %v4013
        %4885 = vmatpush1.bf16.msra.mxu0 %v4012
        %4886 = vmatprep.subr.bf16.mxu0 %v4015
        %4887 = vmatpush1.bf16.msra.mxu0 %v4014
        %4888 = vmatprep.subr.bf16.mxu0 %v4017
        %4889 = vmatpush1.bf16.msra.mxu0 %v4016
        %4890 = vmatprep.subr.bf16.mxu0 %v4019
        %4891 = vmatpush1.bf16.msra.mxu0 %v4018
        %4892 = vmatprep.subr.bf16.mxu0 %v4021
        %4893 = vmatpush1.bf16.msra.mxu0 %v4020
        %4894 = vmatprep.subr.bf16.mxu0 %v4023
        %4895 = vmatpush1.bf16.msra.mxu0 %v4022
        %4896 = vmatprep.subr.bf16.mxu0 %v4025
        %4897 = vmatpush1.bf16.msra.mxu0 %v4024
        %4898 = vmatprep.subr.bf16.mxu0 %v4027
        %4899 = vmatpush1.bf16.msra.mxu0 %v4026
        %4900 = vmatprep.subr.bf16.mxu0 %v4029
        %4901 = vmatpush1.bf16.msra.mxu0 %v4028
        %4902 = vmatprep.subr.bf16.mxu0 %v4031
        %4903 = vmatpush1.bf16.msra.mxu0 %v4030
        %4904 = vmatprep.subr.bf16.mxu0 %v4033
        %4905 = vmatpush1.bf16.msra.mxu0 %v4032
        %4906 = vmatprep.subr.bf16.mxu0 %v4035
        %4907 = vmatpush1.bf16.msra.mxu0 %v4034
        %4908 = vmatprep.subr.bf16.mxu0 %v4037
        %4909 = vmatpush1.bf16.msra.mxu0 %v4036
        %4910 = vmatprep.subr.bf16.mxu0 %v4039
        %4911 = vmatpush1.bf16.msra.mxu0 %v4038
        %4912 = vmatprep.subr.bf16.mxu0 %v4041
        %4913 = vmatpush1.bf16.msra.mxu0 %v4040
        %4914 = vmatprep.mubr.bf16.mxu0 %v2503
        %4915 = vmatmul.mubr.bf16.gmra.mrb[0].mxu0 %v2489
        %v4916 = vpop.f32.mrb[0].mxu0
        %v4917 = vadd.f32 %v4876, %v4916
        %v4918 = vpop.f32.mrb[0].mxu0
        %v4919 = vadd.f32 %v4878, %v4918
        %v4920 = vpop.f32.mrb[0].mxu0
        %v4921 = vpop.f32.mrb[0].mxu0
        %4922 = vdwg.mxu0
        %4923 = vmatprep.subr.bf16.mxu0 %v4043
        %4924 = vmatpush1.bf16.msra.mxu0 %v4042
        %4925 = vmatprep.subr.bf16.mxu0 %v4045
        %4926 = vmatpush1.bf16.msra.mxu0 %v4044
        %4927 = vmatprep.subr.bf16.mxu0 %v4047
        %4928 = vmatpush1.bf16.msra.mxu0 %v4046
        %4929 = vmatprep.subr.bf16.mxu0 %v4049
        %4930 = vmatpush1.bf16.msra.mxu0 %v4048
        %4931 = vmatprep.subr.bf16.mxu0 %v4051
        %4932 = vmatpush1.bf16.msra.mxu0 %v4050
        %4933 = vmatprep.subr.bf16.mxu0 %v4053
        %4934 = vmatpush1.bf16.msra.mxu0 %v4052
        %4935 = vmatprep.subr.bf16.mxu0 %v4055
        %4936 = vmatpush1.bf16.msra.mxu0 %v4054
        %4937 = vmatprep.subr.bf16.mxu0 %v4057
        %4938 = vmatpush1.bf16.msra.mxu0 %v4056
        %4939 = vmatprep.subr.bf16.mxu0 %v4059
        %4940 = vmatpush1.bf16.msra.mxu0 %v4058
        %4941 = vmatprep.subr.bf16.mxu0 %v4061
        %4942 = vmatpush1.bf16.msra.mxu0 %v4060
        %4943 = vmatprep.subr.bf16.mxu0 %v4063
        %4944 = vmatpush1.bf16.msra.mxu0 %v4062
        %4945 = vmatprep.subr.bf16.mxu0 %v4065
        %4946 = vmatpush1.bf16.msra.mxu0 %v4064
        %4947 = vmatprep.subr.bf16.mxu0 %v4067
        %4948 = vmatpush1.bf16.msra.mxu0 %v4066
        %4949 = vmatprep.subr.bf16.mxu0 %v4069
        %4950 = vmatpush1.bf16.msra.mxu0 %v4068
        %4951 = vmatprep.subr.bf16.mxu0 %v4071
        %4952 = vmatpush1.bf16.msra.mxu0 %v4070
        %4953 = vmatprep.subr.bf16.mxu0 %v4073
        %4954 = vmatpush1.bf16.msra.mxu0 %v4072
        %4955 = vmatprep.mubr.bf16.mxu0 %v2513
        %4956 = vmatmul.mubr.bf16.gmra.mrb[0].mxu0 %v2511
        %v4957 = vpop.f32.mrb[0].mxu0
        %v4958 = vadd.f32 %v4917, %v4957
        %v4959 = vpop.f32.mrb[0].mxu0
        %v4960 = vadd.f32 %v4919, %v4959
        %v4961 = vpop.f32.mrb[0].mxu0
        %v4962 = vpop.f32.mrb[0].mxu0
        %4963 = vdwg.mxu0
        %4964 = vmatprep.subr.bf16.mxu0 %v4075
        %4965 = vmatpush1.bf16.msra.mxu0 %v4074
        %4966 = vmatprep.subr.bf16.mxu0 %v4077
        %4967 = vmatpush1.bf16.msra.mxu0 %v4076
        %4968 = vmatprep.subr.bf16.mxu0 %v4079
        %4969 = vmatpush1.bf16.msra.mxu0 %v4078
        %4970 = vmatprep.subr.bf16.mxu0 %v4081
        %4971 = vmatpush1.bf16.msra.mxu0 %v4080
        %4972 = vmatprep.subr.bf16.mxu0 %v4083
        %4973 = vmatpush1.bf16.msra.mxu0 %v4082
        %4974 = vmatprep.subr.bf16.mxu0 %v4085
        %4975 = vmatpush1.bf16.msra.mxu0 %v4084
        %4976 = vmatprep.subr.bf16.mxu0 %v4087
        %4977 = vmatpush1.bf16.msra.mxu0 %v4086
        %4978 = vmatprep.subr.bf16.mxu0 %v4089
        %4979 = vmatpush1.bf16.msra.mxu0 %v4088
        %4980 = vmatprep.subr.bf16.mxu0 %v4091
        %4981 = vmatpush1.bf16.msra.mxu0 %v4090
        %4982 = vmatprep.subr.bf16.mxu0 %v4093
        %4983 = vmatpush1.bf16.msra.mxu0 %v4092
        %4984 = vmatprep.subr.bf16.mxu0 %v4095
        %4985 = vmatpush1.bf16.msra.mxu0 %v4094
        %4986 = vmatprep.subr.bf16.mxu0 %v4097
        %4987 = vmatpush1.bf16.msra.mxu0 %v4096
        %4988 = vmatprep.subr.bf16.mxu0 %v4099
        %4989 = vmatpush1.bf16.msra.mxu0 %v4098
        %4990 = vmatprep.subr.bf16.mxu0 %v4101
        %4991 = vmatpush1.bf16.msra.mxu0 %v4100
        %4992 = vmatprep.subr.bf16.mxu0 %v4103
        %4993 = vmatpush1.bf16.msra.mxu0 %v4102
        %4994 = vmatprep.subr.bf16.mxu0 %v4105
        %4995 = vmatpush1.bf16.msra.mxu0 %v4104
        %4996 = vmatprep.mubr.bf16.mxu0 %v2510
        %4997 = vmatmul.mubr.bf16.gmra.mrb[0].mxu0 %v2496
        %v4998 = vpop.f32.mrb[0].mxu0
        %v4999 = vadd.f32 %v4958, %v4998
        %v5000 = vpop.f32.mrb[0].mxu0
        %v5001 = vadd.f32 %v4960, %v5000
        %v5002 = vpop.f32.mrb[0].mxu0
        %v5003 = vpop.f32.mrb[0].mxu0
        %5004 = vdwg.mxu0
        %5005 = vmatprep.subr.bf16.mxu0 %v4107
        %5006 = vmatpush1.bf16.msra.mxu0 %v4106
        %5007 = vmatprep.subr.bf16.mxu0 %v4109
        %5008 = vmatpush1.bf16.msra.mxu0 %v4108
        %5009 = vmatprep.subr.bf16.mxu0 %v4111
        %5010 = vmatpush1.bf16.msra.mxu0 %v4110
        %5011 = vmatprep.subr.bf16.mxu0 %v4113
        %5012 = vmatpush1.bf16.msra.mxu0 %v4112
        %5013 = vmatprep.subr.bf16.mxu0 %v4115
        %5014 = vmatpush1.bf16.msra.mxu0 %v4114
        %5015 = vmatprep.subr.bf16.mxu0 %v4117
        %5016 = vmatpush1.bf16.msra.mxu0 %v4116
        %5017 = vmatprep.subr.bf16.mxu0 %v4119
        %5018 = vmatpush1.bf16.msra.mxu0 %v4118
        %5019 = vmatprep.subr.bf16.mxu0 %v4121
        %5020 = vmatpush1.bf16.msra.mxu0 %v4120
        %5021 = vmatprep.subr.bf16.mxu0 %v4123
        %5022 = vmatpush1.bf16.msra.mxu0 %v4122
        %5023 = vmatprep.subr.bf16.mxu0 %v4125
        %5024 = vmatpush1.bf16.msra.mxu0 %v4124
        %5025 = vmatprep.subr.bf16.mxu0 %v4127
        %5026 = vmatpush1.bf16.msra.mxu0 %v4126
        %5027 = vmatprep.subr.bf16.mxu0 %v4129
        %5028 = vmatpush1.bf16.msra.mxu0 %v4128
        %5029 = vmatprep.subr.bf16.mxu0 %v4131
        %5030 = vmatpush1.bf16.msra.mxu0 %v4130
        %5031 = vmatprep.subr.bf16.mxu0 %v4133
        %5032 = vmatpush1.bf16.msra.mxu0 %v4132
        %5033 = vmatprep.subr.bf16.mxu0 %v4135
        %5034 = vmatpush1.bf16.msra.mxu0 %v4134
        %5035 = vmatprep.subr.bf16.mxu0 %v4137
        %5036 = vmatpush1.bf16.msra.mxu0 %v4136
        %5037 = vmatprep.mubr.bf16.mxu0 %v2514
        %5038 = vmatmul.mubr.bf16.gmra.mrb[0].mxu0 %v2512
        %v5039 = vpop.f32.mrb[0].mxu0
        %v5040 = vadd.f32 %v4999, %v5039
        %v5041 = vpop.f32.mrb[0].mxu0
        %v5042 = vadd.f32 %v5001, %v5041
        %v5043 = vpop.f32.mrb[0].mxu0
        %v5044 = vpop.f32.mrb[0].mxu0
        %5045 = vdwg.mxu0
        %5046 = vmatprep.subr.bf16.mxu0 %v4139
        %5047 = vmatpush1.bf16.msra.mxu0 %v4138
        %5048 = vmatprep.subr.bf16.mxu0 %v4141
        %5049 = vmatpush1.bf16.msra.mxu0 %v4140
        %5050 = vmatprep.subr.bf16.mxu0 %v4143
        %5051 = vmatpush1.bf16.msra.mxu0 %v4142
        %5052 = vmatprep.subr.bf16.mxu0 %v4145
        %5053 = vmatpush1.bf16.msra.mxu0 %v4144
        %5054 = vmatprep.subr.bf16.mxu0 %v4147
        %5055 = vmatpush1.bf16.msra.mxu0 %v4146
        %5056 = vmatprep.subr.bf16.mxu0 %v4149
        %5057 = vmatpush1.bf16.msra.mxu0 %v4148
        %5058 = vmatprep.subr.bf16.mxu0 %v4151
        %5059 = vmatpush1.bf16.msra.mxu0 %v4150
        %5060 = vmatprep.subr.bf16.mxu0 %v4153
        %5061 = vmatpush1.bf16.msra.mxu0 %v4152
        %5062 = vmatprep.subr.bf16.mxu0 0
        %5063 = vmatpush1.bf16.msra.mxu0 0
        %5064 = vmatprep.subr.bf16.mxu0 0
        %5065 = vmatpush1.bf16.msra.mxu0 0
        %5066 = vmatprep.subr.bf16.mxu0 0
        %5067 = vmatpush1.bf16.msra.mxu0 0
        %5068 = vmatprep.subr.bf16.mxu0 0
        %5069 = vmatpush1.bf16.msra.mxu0 0
        %5070 = vmatprep.subr.bf16.mxu0 0
        %5071 = vmatpush1.bf16.msra.mxu0 0
        %5072 = vmatprep.subr.bf16.mxu0 0
        %5073 = vmatpush1.bf16.msra.mxu0 0
        %5074 = vmatprep.subr.bf16.mxu0 0
        %5075 = vmatpush1.bf16.msra.mxu0 0
        %5076 = vmatprep.subr.bf16.mxu0 0
        %5077 = vmatpush1.bf16.msra.mxu0 0
        %5078 = vmatprep.mubr.bf16.mxu0 0
        %5079 = vmatmul.mubr.bf16.gmra.mrb[0].mxu0 %v2528
        %v5080 = vpop.f32.mrb[0].mxu0
        %v5081 = vadd.f32 %v5040, %v5080
        %v5082 = vpop.f32.mrb[0].mxu0
        %v5083 = vadd.f32 %v5042, %v5082
        %v5084 = vpop.f32.mrb[0].mxu0
        %v5085 = vpop.f32.mrb[0].mxu0
        %5086 = vdwg.mxu0
        %v5087 = vmax.f32 %v5081, 0.0
        %v5088 = vmax.f32 %v5083, 0.0
        %v5089 = vpack.c.bf16 %v5087, %v5087
        %v5090 = vpack.c.bf16 %v5088, %v5088
        %v5091 = vld [vmem:[#allocation2] sm:$0xff]
        %v5092 = vld [vmem:[#allocation2 + $0x8] sm:$0xff]
        %v5093 = vld [vmem:[%s1939] sm:$0xff]
        %v5094 = vld [vmem:[%s1939 + $0x8] sm:$0xff]
        %v5095 = vld [vmem:[%s1939 + $0x10] sm:$0xff]
        %v5096 = vld [vmem:[%s1939 + $0x18] sm:$0xff]
        %v5097 = vld [vmem:[%s1939 + $0x20] sm:$0xff]
        %v5098 = vld [vmem:[%s1939 + $0x28] sm:$0xff]
        %v5099 = vld [vmem:[%s1939 + $0x30] sm:$0xff]
        %v5100 = vld [vmem:[%s1939 + $0x38] sm:$0xff]
        %v5101 = vld [vmem:[%s1939 + $0x40] sm:$0xff]
        %v5102 = vld [vmem:[%s1939 + $0x48] sm:$0xff]
        %v5103 = vld [vmem:[%s1939 + $0x50] sm:$0xff]
        %v5104 = vld [vmem:[%s1939 + $0x58] sm:$0xff]
        %v5105 = vld [vmem:[%s1939 + $0x60] sm:$0xff]
        %v5106 = vld [vmem:[%s1939 + $0x68] sm:$0xff]
        %v5107 = vld [vmem:[%s1939 + $0x70] sm:$0xff]
        %v5108 = vld [vmem:[%s1939 + $0x78] sm:$0xff]
        %v5109 = vld [vmem:[%s1939 + $0x80] sm:$0xff]
        %v5110 = vld [vmem:[%s1939 + $0x88] sm:$0xff]
        %v5111 = vld [vmem:[%s1939 + $0x90] sm:$0xff]
        %v5112 = vld [vmem:[%s1939 + $0x98] sm:$0xff]
        %v5113 = vld [vmem:[%s1939 + $0xa0] sm:$0xff]
        %v5114 = vld [vmem:[%s1939 + $0xa8] sm:$0xff]
        %v5115 = vld [vmem:[%s1939 + $0xb0] sm:$0xff]
        %v5116 = vld [vmem:[%s1939 + $0xb8] sm:$0xff]
        %v5117 = vld [vmem:[%s1939 + $0xc0] sm:$0xff]
        %v5118 = vld [vmem:[%s1939 + $0xc8] sm:$0xff]
        %v5119 = vld [vmem:[%s1939 + $0xd0] sm:$0xff]
        %v5120 = vld [vmem:[%s1939 + $0xd8] sm:$0xff]
        %v5121 = vld [vmem:[%s1939 + $0xe0] sm:$0xff]
        %v5122 = vld [vmem:[%s1939 + $0xe8] sm:$0xff]
        %v5123 = vld [vmem:[%s1939 + $0xf0] sm:$0xff]
        %v5124 = vld [vmem:[%s1939 + $0xf8] sm:$0xff]
        %v5125 = vld [vmem:[%s1939 + $0x100] sm:$0xff]
        %v5126 = vld [vmem:[%s1939 + $0x108] sm:$0xff]
        %v5127 = vld [vmem:[%s1939 + $0x110] sm:$0xff]
        %v5128 = vld [vmem:[%s1939 + $0x118] sm:$0xff]
        %v5129 = vld [vmem:[%s1939 + $0x120] sm:$0xff]
        %v5130 = vld [vmem:[%s1939 + $0x128] sm:$0xff]
        %v5131 = vld [vmem:[%s1939 + $0x130] sm:$0xff]
        %v5132 = vld [vmem:[%s1939 + $0x138] sm:$0xff]
        %v5133 = vld [vmem:[%s1939 + $0x140] sm:$0xff]
        %v5134 = vld [vmem:[%s1939 + $0x148] sm:$0xff]
        %v5135 = vld [vmem:[%s1939 + $0x150] sm:$0xff]
        %v5136 = vld [vmem:[%s1939 + $0x158] sm:$0xff]
        %v5137 = vld [vmem:[%s1939 + $0x160] sm:$0xff]
        %v5138 = vld [vmem:[%s1939 + $0x168] sm:$0xff]
        %v5139 = vld [vmem:[%s1939 + $0x170] sm:$0xff]
        %v5140 = vld [vmem:[%s1939 + $0x178] sm:$0xff]
        %v5141 = vld [vmem:[%s1939 + $0x180] sm:$0xff]
        %v5142 = vld [vmem:[%s1939 + $0x188] sm:$0xff]
        %v5143 = vld [vmem:[%s1939 + $0x190] sm:$0xff]
        %v5144 = vld [vmem:[%s1939 + $0x198] sm:$0xff]
        %v5145 = vld [vmem:[%s1939 + $0x1a0] sm:$0xff]
        %v5146 = vld [vmem:[%s1939 + $0x1a8] sm:$0xff]
        %v5147 = vld [vmem:[%s1939 + $0x1b0] sm:$0xff]
        %v5148 = vld [vmem:[%s1939 + $0x1b8] sm:$0xff]
        %v5149 = vld [vmem:[%s1939 + $0x1c0] sm:$0xff]
        %v5150 = vld [vmem:[%s1939 + $0x1c8] sm:$0xff]
        %v5151 = vld [vmem:[%s1939 + $0x1d0] sm:$0xff]
        %v5152 = vld [vmem:[%s1939 + $0x1d8] sm:$0xff]
        %v5153 = vld [vmem:[%s1939 + $0x1e0] sm:$0xff]
        %v5154 = vld [vmem:[%s1939 + $0x1e8] sm:$0xff]
        %v5155 = vld [vmem:[%s1939 + $0x1f0] sm:$0xff]
        %v5156 = vld [vmem:[%s1939 + $0x1f8] sm:$0xff]
        %v5157 = vld [vmem:[%s1939 + $0x200] sm:$0xff]
        %v5158 = vld [vmem:[%s1939 + $0x208] sm:$0xff]
        %v5159 = vld [vmem:[%s1939 + $0x210] sm:$0xff]
        %v5160 = vld [vmem:[%s1939 + $0x218] sm:$0xff]
        %v5161 = vld [vmem:[%s1939 + $0x220] sm:$0xff]
        %v5162 = vld [vmem:[%s1939 + $0x228] sm:$0xff]
        %v5163 = vld [vmem:[%s1939 + $0x230] sm:$0xff]
        %v5164 = vld [vmem:[%s1939 + $0x238] sm:$0xff]
        %v5165 = vld [vmem:[%s1939 + $0x240] sm:$0xff]
        %v5166 = vld [vmem:[%s1939 + $0x248] sm:$0xff]
        %v5167 = vld [vmem:[%s1939 + $0x250] sm:$0xff]
        %v5168 = vld [vmem:[%s1939 + $0x258] sm:$0xff]
        %v5169 = vld [vmem:[%s1939 + $0x260] sm:$0xff]
        %v5170 = vld [vmem:[%s1939 + $0x268] sm:$0xff]
        %v5171 = vld [vmem:[%s1939 + $0x270] sm:$0xff]
        %v5172 = vld [vmem:[%s1939 + $0x278] sm:$0xff]
        %v5173 = vld [vmem:[%s1939 + $0x280] sm:$0xff]
        %v5174 = vld [vmem:[%s1939 + $0x288] sm:$0xff]
        %v5175 = vld [vmem:[%s1939 + $0x290] sm:$0xff]
        %v5176 = vld [vmem:[%s1939 + $0x298] sm:$0xff]
        %v5177 = vld [vmem:[%s1939 + $0x2a0] sm:$0xff]
        %v5178 = vld [vmem:[%s1939 + $0x2a8] sm:$0xff]
        %v5179 = vld [vmem:[%s1939 + $0x2b0] sm:$0xff]
        %v5180 = vld [vmem:[%s1939 + $0x2b8] sm:$0xff]
        %v5181 = vld [vmem:[%s1939 + $0x2c0] sm:$0xff]
        %v5182 = vld [vmem:[%s1939 + $0x2c8] sm:$0xff]
        %v5183 = vld [vmem:[%s1939 + $0x2d0] sm:$0xff]
        %v5184 = vld [vmem:[%s1939 + $0x2d8] sm:$0xff]
        %v5185 = vld [vmem:[%s1939 + $0x2e0] sm:$0xff]
        %v5186 = vld [vmem:[%s1939 + $0x2e8] sm:$0xff]
        %v5187 = vld [vmem:[%s1939 + $0x2f0] sm:$0xff]
        %v5188 = vld [vmem:[%s1939 + $0x2f8] sm:$0xff]
        %v5189 = vld [vmem:[%s1939 + $0x300] sm:$0xff]
        %v5190 = vld [vmem:[%s1939 + $0x308] sm:$0xff]
        %v5191 = vld [vmem:[%s1939 + $0x310] sm:$0xff]
        %v5192 = vld [vmem:[%s1939 + $0x318] sm:$0xff]
        %v5193 = vld [vmem:[%s1939 + $0x320] sm:$0xff]
        %v5194 = vld [vmem:[%s1939 + $0x328] sm:$0xff]
        %v5195 = vld [vmem:[%s1939 + $0x330] sm:$0xff]
        %v5196 = vld [vmem:[%s1939 + $0x338] sm:$0xff]
        %v5197 = vld [vmem:[%s1939 + $0x340] sm:$0xff]
        %v5198 = vld [vmem:[%s1939 + $0x348] sm:$0xff]
        %v5199 = vld [vmem:[%s1939 + $0x350] sm:$0xff]
        %v5200 = vld [vmem:[%s1939 + $0x358] sm:$0xff]
        %v5201 = vld [vmem:[%s1939 + $0x360] sm:$0xff]
        %v5202 = vld [vmem:[%s1939 + $0x368] sm:$0xff]
        %v5203 = vld [vmem:[%s1939 + $0x370] sm:$0xff]
        %v5204 = vld [vmem:[%s1939 + $0x378] sm:$0xff]
        %v5205 = vld [vmem:[%s1939 + $0x380] sm:$0xff]
        %v5206 = vld [vmem:[%s1939 + $0x388] sm:$0xff]
        %v5207 = vld [vmem:[%s1939 + $0x390] sm:$0xff]
        %v5208 = vld [vmem:[%s1939 + $0x398] sm:$0xff]
        %v5209 = vld [vmem:[%s1939 + $0x3a0] sm:$0xff]
        %v5210 = vld [vmem:[%s1939 + $0x3a8] sm:$0xff]
        %v5211 = vld [vmem:[%s1939 + $0x3b0] sm:$0xff]
        %v5212 = vld [vmem:[%s1939 + $0x3b8] sm:$0xff]
        %v5213 = vld [vmem:[%s1939 + $0x3c0] sm:$0xff]
        %v5214 = vld [vmem:[%s1939 + $0x3c8] sm:$0xff]
        %v5215 = vld [vmem:[%s1939 + $0x3d0] sm:$0xff]
        %v5216 = vld [vmem:[%s1939 + $0x3d8] sm:$0xff]
        %v5217 = vld [vmem:[%s1939 + $0x3e0] sm:$0xff]
        %v5218 = vld [vmem:[%s1939 + $0x3e8] sm:$0xff]
        %v5219 = vld [vmem:[%s1939 + $0x3f0] sm:$0xff]
        %v5220 = vld [vmem:[%s1939 + $0x3f8] sm:$0xff]
        %v5349 = vunpack.c.l.b16 %v5093
        %v5350 = vunpack.c.h.b16 %v5093
        %v5351 = vunpack.c.l.b16 %v5094
        %v5352 = vunpack.c.h.b16 %v5094
        %v5353 = vunpack.c.l.b16 %v5095
        %v5354 = vunpack.c.h.b16 %v5095
        %v5355 = vunpack.c.l.b16 %v5096
        %v5356 = vunpack.c.h.b16 %v5096
        %v5357 = vunpack.c.l.b16 %v5097
        %v5358 = vunpack.c.h.b16 %v5097
        %v5359 = vunpack.c.l.b16 %v5098
        %v5360 = vunpack.c.h.b16 %v5098
        %v5361 = vunpack.c.l.b16 %v5099
        %v5362 = vunpack.c.h.b16 %v5099
        %v5363 = vunpack.c.l.b16 %v5100
        %v5364 = vunpack.c.h.b16 %v5100
        %v5365 = vunpack.c.l.b16 %v5101
        %v5366 = vunpack.c.h.b16 %v5101
        %v5367 = vunpack.c.l.b16 %v5102
        %v5368 = vunpack.c.h.b16 %v5102
        %v5369 = vunpack.c.l.b16 %v5103
        %v5370 = vunpack.c.h.b16 %v5103
        %v5371 = vunpack.c.l.b16 %v5104
        %v5372 = vunpack.c.h.b16 %v5104
        %v5373 = vunpack.c.l.b16 %v5105
        %v5374 = vunpack.c.h.b16 %v5105
        %v5375 = vunpack.c.l.b16 %v5106
        %v5376 = vunpack.c.h.b16 %v5106
        %v5377 = vunpack.c.l.b16 %v5107
        %v5378 = vunpack.c.h.b16 %v5107
        %v5379 = vunpack.c.l.b16 %v5108
        %v5380 = vunpack.c.h.b16 %v5108
        %v5381 = vunpack.c.l.b16 %v5109
        %v5382 = vunpack.c.h.b16 %v5109
        %v5383 = vunpack.c.l.b16 %v5110
        %v5384 = vunpack.c.h.b16 %v5110
        %v5385 = vunpack.c.l.b16 %v5111
        %v5386 = vunpack.c.h.b16 %v5111
        %v5387 = vunpack.c.l.b16 %v5112
        %v5388 = vunpack.c.h.b16 %v5112
        %v5389 = vunpack.c.l.b16 %v5113
        %v5390 = vunpack.c.h.b16 %v5113
        %v5391 = vunpack.c.l.b16 %v5114
        %v5392 = vunpack.c.h.b16 %v5114
        %v5393 = vunpack.c.l.b16 %v5115
        %v5394 = vunpack.c.h.b16 %v5115
        %v5395 = vunpack.c.l.b16 %v5116
        %v5396 = vunpack.c.h.b16 %v5116
        %v5397 = vunpack.c.l.b16 %v5117
        %v5398 = vunpack.c.h.b16 %v5117
        %v5399 = vunpack.c.l.b16 %v5118
        %v5400 = vunpack.c.h.b16 %v5118
        %v5401 = vunpack.c.l.b16 %v5119
        %v5402 = vunpack.c.h.b16 %v5119
        %v5403 = vunpack.c.l.b16 %v5120
        %v5404 = vunpack.c.h.b16 %v5120
        %v5405 = vunpack.c.l.b16 %v5121
        %v5406 = vunpack.c.h.b16 %v5121
        %v5407 = vunpack.c.l.b16 %v5122
        %v5408 = vunpack.c.h.b16 %v5122
        %v5409 = vunpack.c.l.b16 %v5123
        %v5410 = vunpack.c.h.b16 %v5123
        %v5411 = vunpack.c.l.b16 %v5124
        %v5412 = vunpack.c.h.b16 %v5124
        %v5413 = vunpack.c.l.b16 %v5125
        %v5414 = vunpack.c.h.b16 %v5125
        %v5415 = vunpack.c.l.b16 %v5126
        %v5416 = vunpack.c.h.b16 %v5126
        %v5417 = vunpack.c.l.b16 %v5127
        %v5418 = vunpack.c.h.b16 %v5127
        %v5419 = vunpack.c.l.b16 %v5128
        %v5420 = vunpack.c.h.b16 %v5128
        %v5421 = vunpack.c.l.b16 %v5129
        %v5422 = vunpack.c.h.b16 %v5129
        %v5423 = vunpack.c.l.b16 %v5130
        %v5424 = vunpack.c.h.b16 %v5130
        %v5425 = vunpack.c.l.b16 %v5131
        %v5426 = vunpack.c.h.b16 %v5131
        %v5427 = vunpack.c.l.b16 %v5132
        %v5428 = vunpack.c.h.b16 %v5132
        %v5429 = vunpack.c.l.b16 %v5133
        %v5430 = vunpack.c.h.b16 %v5133
        %v5431 = vunpack.c.l.b16 %v5134
        %v5432 = vunpack.c.h.b16 %v5134
        %v5433 = vunpack.c.l.b16 %v5135
        %v5434 = vunpack.c.h.b16 %v5135
        %v5435 = vunpack.c.l.b16 %v5136
        %v5436 = vunpack.c.h.b16 %v5136
        %v5437 = vunpack.c.l.b16 %v5137
        %v5438 = vunpack.c.h.b16 %v5137
        %v5439 = vunpack.c.l.b16 %v5138
        %v5440 = vunpack.c.h.b16 %v5138
        %v5441 = vunpack.c.l.b16 %v5139
        %v5442 = vunpack.c.h.b16 %v5139
        %v5443 = vunpack.c.l.b16 %v5140
        %v5444 = vunpack.c.h.b16 %v5140
        %v5445 = vunpack.c.l.b16 %v5141
        %v5446 = vunpack.c.h.b16 %v5141
        %v5447 = vunpack.c.l.b16 %v5142
        %v5448 = vunpack.c.h.b16 %v5142
        %v5449 = vunpack.c.l.b16 %v5143
        %v5450 = vunpack.c.h.b16 %v5143
        %v5451 = vunpack.c.l.b16 %v5144
        %v5452 = vunpack.c.h.b16 %v5144
        %v5453 = vunpack.c.l.b16 %v5145
        %v5454 = vunpack.c.h.b16 %v5145
        %v5455 = vunpack.c.l.b16 %v5146
        %v5456 = vunpack.c.h.b16 %v5146
        %v5457 = vunpack.c.l.b16 %v5147
        %v5458 = vunpack.c.h.b16 %v5147
        %v5459 = vunpack.c.l.b16 %v5148
        %v5460 = vunpack.c.h.b16 %v5148
        %v5461 = vunpack.c.l.b16 %v5149
        %v5462 = vunpack.c.h.b16 %v5149
        %v5463 = vunpack.c.l.b16 %v5150
        %v5464 = vunpack.c.h.b16 %v5150
        %v5465 = vunpack.c.l.b16 %v5151
        %v5466 = vunpack.c.h.b16 %v5151
        %v5467 = vunpack.c.l.b16 %v5152
        %v5468 = vunpack.c.h.b16 %v5152
        %v5469 = vunpack.c.l.b16 %v5153
        %v5470 = vunpack.c.h.b16 %v5153
        %v5471 = vunpack.c.l.b16 %v5154
        %v5472 = vunpack.c.h.b16 %v5154
        %v5473 = vunpack.c.l.b16 %v5155
        %v5474 = vunpack.c.h.b16 %v5155
        %v5475 = vunpack.c.l.b16 %v5156
        %v5476 = vunpack.c.h.b16 %v5156
        %v5477 = vunpack.c.l.b16 %v5157
        %v5478 = vunpack.c.h.b16 %v5157
        %v5479 = vunpack.c.l.b16 %v5158
        %v5480 = vunpack.c.h.b16 %v5158
        %v5481 = vunpack.c.l.b16 %v5159
        %v5482 = vunpack.c.h.b16 %v5159
        %v5483 = vunpack.c.l.b16 %v5160
        %v5484 = vunpack.c.h.b16 %v5160
        %v5485 = vunpack.c.l.b16 %v5161
        %v5486 = vunpack.c.h.b16 %v5161
        %v5487 = vunpack.c.l.b16 %v5162
        %v5488 = vunpack.c.h.b16 %v5162
        %v5489 = vunpack.c.l.b16 %v5163
        %v5490 = vunpack.c.h.b16 %v5163
        %v5491 = vunpack.c.l.b16 %v5164
        %v5492 = vunpack.c.h.b16 %v5164
        %v5493 = vunpack.c.l.b16 %v5165
        %v5494 = vunpack.c.h.b16 %v5165
        %v5495 = vunpack.c.l.b16 %v5166
        %v5496 = vunpack.c.h.b16 %v5166
        %v5497 = vunpack.c.l.b16 %v5167
        %v5498 = vunpack.c.h.b16 %v5167
        %v5499 = vunpack.c.l.b16 %v5168
        %v5500 = vunpack.c.h.b16 %v5168
        %v5501 = vunpack.c.l.b16 %v5169
        %v5502 = vunpack.c.h.b16 %v5169
        %v5503 = vunpack.c.l.b16 %v5170
        %v5504 = vunpack.c.h.b16 %v5170
        %v5505 = vunpack.c.l.b16 %v5171
        %v5506 = vunpack.c.h.b16 %v5171
        %v5507 = vunpack.c.l.b16 %v5172
        %v5508 = vunpack.c.h.b16 %v5172
        %v5509 = vunpack.c.l.b16 %v5173
        %v5510 = vunpack.c.h.b16 %v5173
        %v5511 = vunpack.c.l.b16 %v5174
        %v5512 = vunpack.c.h.b16 %v5174
        %v5513 = vunpack.c.l.b16 %v5175
        %v5514 = vunpack.c.h.b16 %v5175
        %v5515 = vunpack.c.l.b16 %v5176
        %v5516 = vunpack.c.h.b16 %v5176
        %v5517 = vunpack.c.l.b16 %v5177
        %v5518 = vunpack.c.h.b16 %v5177
        %v5519 = vunpack.c.l.b16 %v5178
        %v5520 = vunpack.c.h.b16 %v5178
        %v5521 = vunpack.c.l.b16 %v5179
        %v5522 = vunpack.c.h.b16 %v5179
        %v5523 = vunpack.c.l.b16 %v5180
        %v5524 = vunpack.c.h.b16 %v5180
        %v5525 = vunpack.c.l.b16 %v5181
        %v5526 = vunpack.c.h.b16 %v5181
        %v5527 = vunpack.c.l.b16 %v5182
        %v5528 = vunpack.c.h.b16 %v5182
        %v5529 = vunpack.c.l.b16 %v5183
        %v5530 = vunpack.c.h.b16 %v5183
        %v5531 = vunpack.c.l.b16 %v5184
        %v5532 = vunpack.c.h.b16 %v5184
        %v5533 = vunpack.c.l.b16 %v5185
        %v5534 = vunpack.c.h.b16 %v5185
        %v5535 = vunpack.c.l.b16 %v5186
        %v5536 = vunpack.c.h.b16 %v5186
        %v5537 = vunpack.c.l.b16 %v5187
        %v5538 = vunpack.c.h.b16 %v5187
        %v5539 = vunpack.c.l.b16 %v5188
        %v5540 = vunpack.c.h.b16 %v5188
        %v5541 = vunpack.c.l.b16 %v5189
        %v5542 = vunpack.c.h.b16 %v5189
        %v5543 = vunpack.c.l.b16 %v5190
        %v5544 = vunpack.c.h.b16 %v5190
        %v5545 = vunpack.c.l.b16 %v5191
        %v5546 = vunpack.c.h.b16 %v5191
        %v5547 = vunpack.c.l.b16 %v5192
        %v5548 = vunpack.c.h.b16 %v5192
        %v5549 = vunpack.c.l.b16 %v5193
        %v5550 = vunpack.c.h.b16 %v5193
        %v5551 = vunpack.c.l.b16 %v5194
        %v5552 = vunpack.c.h.b16 %v5194
        %v5553 = vunpack.c.l.b16 %v5195
        %v5554 = vunpack.c.h.b16 %v5195
        %v5555 = vunpack.c.l.b16 %v5196
        %v5556 = vunpack.c.h.b16 %v5196
        %v5557 = vunpack.c.l.b16 %v5197
        %v5558 = vunpack.c.h.b16 %v5197
        %v5559 = vunpack.c.l.b16 %v5198
        %v5560 = vunpack.c.h.b16 %v5198
        %v5561 = vunpack.c.l.b16 %v5199
        %v5562 = vunpack.c.h.b16 %v5199
        %v5563 = vunpack.c.l.b16 %v5200
        %v5564 = vunpack.c.h.b16 %v5200
        %v5565 = vunpack.c.l.b16 %v5201
        %v5566 = vunpack.c.h.b16 %v5201
        %v5567 = vunpack.c.l.b16 %v5202
        %v5568 = vunpack.c.h.b16 %v5202
        %v5569 = vunpack.c.l.b16 %v5203
        %v5570 = vunpack.c.h.b16 %v5203
        %v5571 = vunpack.c.l.b16 %v5204
        %v5572 = vunpack.c.h.b16 %v5204
        %v5573 = vunpack.c.l.b16 %v5205
        %v5574 = vunpack.c.h.b16 %v5205
        %v5575 = vunpack.c.l.b16 %v5206
        %v5576 = vunpack.c.h.b16 %v5206
        %v5577 = vunpack.c.l.b16 %v5207
        %v5578 = vunpack.c.h.b16 %v5207
        %v5579 = vunpack.c.l.b16 %v5208
        %v5580 = vunpack.c.h.b16 %v5208
        %v5581 = vunpack.c.l.b16 %v5209
        %v5582 = vunpack.c.h.b16 %v5209
        %v5583 = vunpack.c.l.b16 %v5210
        %v5584 = vunpack.c.h.b16 %v5210
        %v5585 = vunpack.c.l.b16 %v5211
        %v5586 = vunpack.c.h.b16 %v5211
        %v5587 = vunpack.c.l.b16 %v5212
        %v5588 = vunpack.c.h.b16 %v5212
        %v5589 = vunpack.c.l.b16 %v5213
        %v5590 = vunpack.c.h.b16 %v5213
        %v5591 = vunpack.c.l.b16 %v5214
        %v5592 = vunpack.c.h.b16 %v5214
        %v5593 = vunpack.c.l.b16 %v5215
        %v5594 = vunpack.c.h.b16 %v5215
        %v5595 = vunpack.c.l.b16 %v5216
        %v5596 = vunpack.c.h.b16 %v5216
        %v5597 = vunpack.c.l.b16 %v5217
        %v5598 = vunpack.c.h.b16 %v5217
        %v5599 = vunpack.c.l.b16 %v5218
        %v5600 = vunpack.c.h.b16 %v5218
        %v5601 = vunpack.c.l.b16 %v5219
        %v5602 = vunpack.c.h.b16 %v5219
        %v5603 = vunpack.c.l.b16 %v5220
        %v5604 = vunpack.c.h.b16 %v5220
        %v5605 = vpack.c.b16 %v5357, %v5349
        %v5606 = vpack.c.b16 %v5358, %v5350
        %v5607 = vpack.c.b16 %v5359, %v5351
        %v5608 = vpack.c.b16 %v5360, %v5352
        %v5609 = vpack.c.b16 %v5361, %v5353
        %v5610 = vpack.c.b16 %v5362, %v5354
        %v5611 = vpack.c.b16 %v5363, %v5355
        %v5612 = vpack.c.b16 %v5364, %v5356
        %v5613 = vpack.c.b16 %v5373, %v5365
        %v5614 = vpack.c.b16 %v5374, %v5366
        %v5615 = vpack.c.b16 %v5375, %v5367
        %v5616 = vpack.c.b16 %v5376, %v5368
        %v5617 = vpack.c.b16 %v5377, %v5369
        %v5618 = vpack.c.b16 %v5378, %v5370
        %v5619 = vpack.c.b16 %v5379, %v5371
        %v5620 = vpack.c.b16 %v5380, %v5372
        %v5621 = vpack.c.b16 %v5389, %v5381
        %v5622 = vpack.c.b16 %v5390, %v5382
        %v5623 = vpack.c.b16 %v5391, %v5383
        %v5624 = vpack.c.b16 %v5392, %v5384
        %v5625 = vpack.c.b16 %v5393, %v5385
        %v5626 = vpack.c.b16 %v5394, %v5386
        %v5627 = vpack.c.b16 %v5395, %v5387
        %v5628 = vpack.c.b16 %v5396, %v5388
        %v5629 = vpack.c.b16 %v5405, %v5397
        %v5630 = vpack.c.b16 %v5406, %v5398
        %v5631 = vpack.c.b16 %v5407, %v5399
        %v5632 = vpack.c.b16 %v5408, %v5400
        %v5633 = vpack.c.b16 %v5409, %v5401
        %v5634 = vpack.c.b16 %v5410, %v5402
        %v5635 = vpack.c.b16 %v5411, %v5403
        %v5636 = vpack.c.b16 %v5412, %v5404
        %v5637 = vpack.c.b16 %v5421, %v5413
        %v5638 = vpack.c.b16 %v5422, %v5414
        %v5639 = vpack.c.b16 %v5423, %v5415
        %v5640 = vpack.c.b16 %v5424, %v5416
        %v5641 = vpack.c.b16 %v5425, %v5417
        %v5642 = vpack.c.b16 %v5426, %v5418
        %v5643 = vpack.c.b16 %v5427, %v5419
        %v5644 = vpack.c.b16 %v5428, %v5420
        %v5645 = vpack.c.b16 %v5437, %v5429
        %v5646 = vpack.c.b16 %v5438, %v5430
        %v5647 = vpack.c.b16 %v5439, %v5431
        %v5648 = vpack.c.b16 %v5440, %v5432
        %v5649 = vpack.c.b16 %v5441, %v5433
        %v5650 = vpack.c.b16 %v5442, %v5434
        %v5651 = vpack.c.b16 %v5443, %v5435
        %v5652 = vpack.c.b16 %v5444, %v5436
        %v5653 = vpack.c.b16 %v5453, %v5445
        %v5654 = vpack.c.b16 %v5454, %v5446
        %v5655 = vpack.c.b16 %v5455, %v5447
        %v5656 = vpack.c.b16 %v5456, %v5448
        %v5657 = vpack.c.b16 %v5457, %v5449
        %v5658 = vpack.c.b16 %v5458, %v5450
        %v5659 = vpack.c.b16 %v5459, %v5451
        %v5660 = vpack.c.b16 %v5460, %v5452
        %v5661 = vpack.c.b16 %v5469, %v5461
        %v5662 = vpack.c.b16 %v5470, %v5462
        %v5663 = vpack.c.b16 %v5471, %v5463
        %v5664 = vpack.c.b16 %v5472, %v5464
        %v5665 = vpack.c.b16 %v5473, %v5465
        %v5666 = vpack.c.b16 %v5474, %v5466
        %v5667 = vpack.c.b16 %v5475, %v5467
        %v5668 = vpack.c.b16 %v5476, %v5468
        %v5669 = vpack.c.b16 %v5485, %v5477
        %v5670 = vpack.c.b16 %v5486, %v5478
        %v5671 = vpack.c.b16 %v5487, %v5479
        %v5672 = vpack.c.b16 %v5488, %v5480
        %v5673 = vpack.c.b16 %v5489, %v5481
        %v5674 = vpack.c.b16 %v5490, %v5482
        %v5675 = vpack.c.b16 %v5491, %v5483
        %v5676 = vpack.c.b16 %v5492, %v5484
        %v5677 = vpack.c.b16 %v5501, %v5493
        %v5678 = vpack.c.b16 %v5502, %v5494
        %v5679 = vpack.c.b16 %v5503, %v5495
        %v5680 = vpack.c.b16 %v5504, %v5496
        %v5681 = vpack.c.b16 %v5505, %v5497
        %v5682 = vpack.c.b16 %v5506, %v5498
        %v5683 = vpack.c.b16 %v5507, %v5499
        %v5684 = vpack.c.b16 %v5508, %v5500
        %v5685 = vpack.c.b16 %v5517, %v5509
        %v5686 = vpack.c.b16 %v5518, %v5510
        %v5687 = vpack.c.b16 %v5519, %v5511
        %v5688 = vpack.c.b16 %v5520, %v5512
        %v5689 = vpack.c.b16 %v5521, %v5513
        %v5690 = vpack.c.b16 %v5522, %v5514
        %v5691 = vpack.c.b16 %v5523, %v5515
        %v5692 = vpack.c.b16 %v5524, %v5516
        %v5693 = vpack.c.b16 %v5533, %v5525
        %v5694 = vpack.c.b16 %v5534, %v5526
        %v5695 = vpack.c.b16 %v5535, %v5527
        %v5696 = vpack.c.b16 %v5536, %v5528
        %v5697 = vpack.c.b16 %v5537, %v5529
        %v5698 = vpack.c.b16 %v5538, %v5530
        %v5699 = vpack.c.b16 %v5539, %v5531
        %v5700 = vpack.c.b16 %v5540, %v5532
        %v5701 = vpack.c.b16 %v5549, %v5541
        %v5702 = vpack.c.b16 %v5550, %v5542
        %v5703 = vpack.c.b16 %v5551, %v5543
        %v5704 = vpack.c.b16 %v5552, %v5544
        %v5705 = vpack.c.b16 %v5553, %v5545
        %v5706 = vpack.c.b16 %v5554, %v5546
        %v5707 = vpack.c.b16 %v5555, %v5547
        %v5708 = vpack.c.b16 %v5556, %v5548
        %v5709 = vpack.c.b16 %v5565, %v5557
        %v5710 = vpack.c.b16 %v5566, %v5558
        %v5711 = vpack.c.b16 %v5567, %v5559
        %v5712 = vpack.c.b16 %v5568, %v5560
        %v5713 = vpack.c.b16 %v5569, %v5561
        %v5714 = vpack.c.b16 %v5570, %v5562
        %v5715 = vpack.c.b16 %v5571, %v5563
        %v5716 = vpack.c.b16 %v5572, %v5564
        %v5717 = vpack.c.b16 %v5581, %v5573
        %v5718 = vpack.c.b16 %v5582, %v5574
        %v5719 = vpack.c.b16 %v5583, %v5575
        %v5720 = vpack.c.b16 %v5584, %v5576
        %v5721 = vpack.c.b16 %v5585, %v5577
        %v5722 = vpack.c.b16 %v5586, %v5578
        %v5723 = vpack.c.b16 %v5587, %v5579
        %v5724 = vpack.c.b16 %v5588, %v5580
        %v5725 = vpack.c.b16 %v5597, %v5589
        %v5726 = vpack.c.b16 %v5598, %v5590
        %v5727 = vpack.c.b16 %v5599, %v5591
        %v5728 = vpack.c.b16 %v5600, %v5592
        %v5729 = vpack.c.b16 %v5601, %v5593
        %v5730 = vpack.c.b16 %v5602, %v5594
        %v5731 = vpack.c.b16 %v5603, %v5595
        %v5732 = vpack.c.b16 %v5604, %v5596
        %5861 = vmatprep.subr.bf16.mxu0 %v5606
        %5862 = vmatpush1.bf16.msra.mxu0 %v5605
        %5863 = vmatprep.subr.bf16.mxu0 %v5614
        %5864 = vmatpush1.bf16.msra.mxu0 %v5613
        %5865 = vmatprep.subr.bf16.mxu0 %v5622
        %5866 = vmatpush1.bf16.msra.mxu0 %v5621
        %5867 = vmatprep.subr.bf16.mxu0 %v5630
        %5868 = vmatpush1.bf16.msra.mxu0 %v5629
        %5869 = vmatprep.subr.bf16.mxu0 %v5638
        %5870 = vmatpush1.bf16.msra.mxu0 %v5637
        %5871 = vmatprep.subr.bf16.mxu0 %v5646
        %5872 = vmatpush1.bf16.msra.mxu0 %v5645
        %5873 = vmatprep.subr.bf16.mxu0 %v5654
        %5874 = vmatpush1.bf16.msra.mxu0 %v5653
        %5875 = vmatprep.subr.bf16.mxu0 %v5662
        %5876 = vmatpush1.bf16.msra.mxu0 %v5661
        %5877 = vmatprep.subr.bf16.mxu0 %v5670
        %5878 = vmatpush1.bf16.msra.mxu0 %v5669
        %5879 = vmatprep.subr.bf16.mxu0 %v5678
        %5880 = vmatpush1.bf16.msra.mxu0 %v5677
        %5881 = vmatprep.subr.bf16.mxu0 %v5686
        %5882 = vmatpush1.bf16.msra.mxu0 %v5685
        %5883 = vmatprep.subr.bf16.mxu0 %v5694
        %5884 = vmatpush1.bf16.msra.mxu0 %v5693
        %5885 = vmatprep.subr.bf16.mxu0 %v5702
        %5886 = vmatpush1.bf16.msra.mxu0 %v5701
        %5887 = vmatprep.subr.bf16.mxu0 %v5710
        %5888 = vmatpush1.bf16.msra.mxu0 %v5709
        %5889 = vmatprep.subr.bf16.mxu0 %v5718
        %5890 = vmatpush1.bf16.msra.mxu0 %v5717
        %5891 = vmatprep.subr.bf16.mxu0 %v5726
        %5892 = vmatpush1.bf16.msra.mxu0 %v5725
        %5893 = vmatprep.mubr.bf16.mxu0 %v5090
        %5894 = vmatmul.mubr.bf16.gmra.mrb[0].mxu0 %v5089
        %v5895 = vpop.f32.mrb[0].mxu0
        %v5896 = vadd.f32 0.0, %v5895
        %v5897 = vpop.f32.mrb[0].mxu0
        %v5898 = vadd.f32 0.0, %v5897
        %v5899 = vpop.f32.mrb[0].mxu0
        %v5900 = vpop.f32.mrb[0].mxu0
        %5901 = vdwg.mxu0
        %5902 = vmatprep.subr.bf16.mxu0 %v5608
        %5903 = vmatpush1.bf16.msra.mxu0 %v5607
        %5904 = vmatprep.subr.bf16.mxu0 %v5616
        %5905 = vmatpush1.bf16.msra.mxu0 %v5615
        %5906 = vmatprep.subr.bf16.mxu0 %v5624
        %5907 = vmatpush1.bf16.msra.mxu0 %v5623
        %5908 = vmatprep.subr.bf16.mxu0 %v5632
        %5909 = vmatpush1.bf16.msra.mxu0 %v5631
        %5910 = vmatprep.subr.bf16.mxu0 %v5640
        %5911 = vmatpush1.bf16.msra.mxu0 %v5639
        %5912 = vmatprep.subr.bf16.mxu0 %v5648
        %5913 = vmatpush1.bf16.msra.mxu0 %v5647
        %5914 = vmatprep.subr.bf16.mxu0 %v5656
        %5915 = vmatpush1.bf16.msra.mxu0 %v5655
        %5916 = vmatprep.subr.bf16.mxu0 %v5664
        %5917 = vmatpush1.bf16.msra.mxu0 %v5663
        %5918 = vmatprep.subr.bf16.mxu0 %v5672
        %5919 = vmatpush1.bf16.msra.mxu0 %v5671
        %5920 = vmatprep.subr.bf16.mxu0 %v5680
        %5921 = vmatpush1.bf16.msra.mxu0 %v5679
        %5922 = vmatprep.subr.bf16.mxu0 %v5688
        %5923 = vmatpush1.bf16.msra.mxu0 %v5687
        %5924 = vmatprep.subr.bf16.mxu0 %v5696
        %5925 = vmatpush1.bf16.msra.mxu0 %v5695
        %5926 = vmatprep.subr.bf16.mxu0 %v5704
        %5927 = vmatpush1.bf16.msra.mxu0 %v5703
        %5928 = vmatprep.subr.bf16.mxu0 %v5712
        %5929 = vmatpush1.bf16.msra.mxu0 %v5711
        %5930 = vmatprep.subr.bf16.mxu0 %v5720
        %5931 = vmatpush1.bf16.msra.mxu0 %v5719
        %5932 = vmatprep.subr.bf16.mxu0 %v5728
        %5933 = vmatpush1.bf16.msra.mxu0 %v5727
        %5934 = vmatprep.mubr.bf16.mxu0 %v5090
        %5935 = vmatmul.mubr.bf16.gmra.mrb[0].mxu0 %v5089
        %v5936 = vpop.f32.mrb[0].mxu0
        %v5937 = vadd.f32 0.0, %v5936
        %v5938 = vpop.f32.mrb[0].mxu0
        %v5939 = vadd.f32 0.0, %v5938
        %v5940 = vpop.f32.mrb[0].mxu0
        %v5941 = vpop.f32.mrb[0].mxu0
        %5942 = vdwg.mxu0
        %5943 = vmatprep.subr.bf16.mxu0 %v5610
        %5944 = vmatpush1.bf16.msra.mxu0 %v5609
        %5945 = vmatprep.subr.bf16.mxu0 %v5618
        %5946 = vmatpush1.bf16.msra.mxu0 %v5617
        %5947 = vmatprep.subr.bf16.mxu0 %v5626
        %5948 = vmatpush1.bf16.msra.mxu0 %v5625
        %5949 = vmatprep.subr.bf16.mxu0 %v5634
        %5950 = vmatpush1.bf16.msra.mxu0 %v5633
        %5951 = vmatprep.subr.bf16.mxu0 %v5642
        %5952 = vmatpush1.bf16.msra.mxu0 %v5641
        %5953 = vmatprep.subr.bf16.mxu0 %v5650
        %5954 = vmatpush1.bf16.msra.mxu0 %v5649
        %5955 = vmatprep.subr.bf16.mxu0 %v5658
        %5956 = vmatpush1.bf16.msra.mxu0 %v5657
        %5957 = vmatprep.subr.bf16.mxu0 %v5666
        %5958 = vmatpush1.bf16.msra.mxu0 %v5665
        %5959 = vmatprep.subr.bf16.mxu0 %v5674
        %5960 = vmatpush1.bf16.msra.mxu0 %v5673
        %5961 = vmatprep.subr.bf16.mxu0 %v5682
        %5962 = vmatpush1.bf16.msra.mxu0 %v5681
        %5963 = vmatprep.subr.bf16.mxu0 %v5690
        %5964 = vmatpush1.bf16.msra.mxu0 %v5689
        %5965 = vmatprep.subr.bf16.mxu0 %v5698
        %5966 = vmatpush1.bf16.msra.mxu0 %v5697
        %5967 = vmatprep.subr.bf16.mxu0 %v5706
        %5968 = vmatpush1.bf16.msra.mxu0 %v5705
        %5969 = vmatprep.subr.bf16.mxu0 %v5714
        %5970 = vmatpush1.bf16.msra.mxu0 %v5713
        %5971 = vmatprep.subr.bf16.mxu0 %v5722
        %5972 = vmatpush1.bf16.msra.mxu0 %v5721
        %5973 = vmatprep.subr.bf16.mxu0 %v5730
        %5974 = vmatpush1.bf16.msra.mxu0 %v5729
        %5975 = vmatprep.mubr.bf16.mxu0 %v5090
        %5976 = vmatmul.mubr.bf16.gmra.mrb[0].mxu0 %v5089
        %v5977 = vpop.f32.mrb[0].mxu0
        %v5978 = vadd.f32 0.0, %v5977
        %v5979 = vpop.f32.mrb[0].mxu0
        %v5980 = vadd.f32 0.0, %v5979
        %v5981 = vpop.f32.mrb[0].mxu0
        %v5982 = vpop.f32.mrb[0].mxu0
        %5983 = vdwg.mxu0
        %5984 = vmatprep.subr.bf16.mxu0 %v5612
        %5985 = vmatpush1.bf16.msra.mxu0 %v5611
        %5986 = vmatprep.subr.bf16.mxu0 %v5620
        %5987 = vmatpush1.bf16.msra.mxu0 %v5619
        %5988 = vmatprep.subr.bf16.mxu0 %v5628
        %5989 = vmatpush1.bf16.msra.mxu0 %v5627
        %5990 = vmatprep.subr.bf16.mxu0 %v5636
        %5991 = vmatpush1.bf16.msra.mxu0 %v5635
        %5992 = vmatprep.subr.bf16.mxu0 %v5644
        %5993 = vmatpush1.bf16.msra.mxu0 %v5643
        %5994 = vmatprep.subr.bf16.mxu0 %v5652
        %5995 = vmatpush1.bf16.msra.mxu0 %v5651
        %5996 = vmatprep.subr.bf16.mxu0 %v5660
        %5997 = vmatpush1.bf16.msra.mxu0 %v5659
        %5998 = vmatprep.subr.bf16.mxu0 %v5668
        %5999 = vmatpush1.bf16.msra.mxu0 %v5667
        %6000 = vmatprep.subr.bf16.mxu0 %v5676
        %6001 = vmatpush1.bf16.msra.mxu0 %v5675
        %6002 = vmatprep.subr.bf16.mxu0 %v5684
        %6003 = vmatpush1.bf16.msra.mxu0 %v5683
        %6004 = vmatprep.subr.bf16.mxu0 %v5692
        %6005 = vmatpush1.bf16.msra.mxu0 %v5691
        %6006 = vmatprep.subr.bf16.mxu0 %v5700
        %6007 = vmatpush1.bf16.msra.mxu0 %v5699
        %6008 = vmatprep.subr.bf16.mxu0 %v5708
        %6009 = vmatpush1.bf16.msra.mxu0 %v5707
        %6010 = vmatprep.subr.bf16.mxu0 %v5716
        %6011 = vmatpush1.bf16.msra.mxu0 %v5715
        %6012 = vmatprep.subr.bf16.mxu0 %v5724
        %6013 = vmatpush1.bf16.msra.mxu0 %v5723
        %6014 = vmatprep.subr.bf16.mxu0 %v5732
        %6015 = vmatpush1.bf16.msra.mxu0 %v5731
        %6016 = vmatprep.mubr.bf16.mxu0 %v5090
        %6017 = vmatmul.mubr.bf16.gmra.mrb[0].mxu0 %v5089
        %v6018 = vpop.f32.mrb[0].mxu0
        %v6019 = vadd.f32 0.0, %v6018
        %v6020 = vpop.f32.mrb[0].mxu0
        %v6021 = vadd.f32 0.0, %v6020
        %v6022 = vpop.f32.mrb[0].mxu0
        %v6023 = vpop.f32.mrb[0].mxu0
        %6024 = vdwg.mxu0
        %v6033 = vcombine.low %v5896, %v5898
        %v6034 = vcombine.low %v5937, %v5939
        %v6036 = vunpack.c.l.s4 1983009808
        %v6037 = vunpack.c.0.s8 %v6036
        %v6038 = vlaneseq
        %v6039 = vshrl.u32 %v6038, 7
        %v6040 = vsub.s32 %v6037, %v6039
        %v6041 = vrot.slane %v6033, %v6040
        %v6043 = vunpack.c.l.s4 1983009808
        %v6044 = vunpack.c.0.s8 %v6043
        %v6045 = vlaneseq
        %v6046 = vshrl.u32 %v6045, 7
        %v6047 = vsub.s32 %v6044, %v6046
        %v6048 = vrot.slane %v6034, %v6047
        %v6049 = vcombine.low %v6041, %v6048
        %v6050 = vcombine.low %v5978, %v5980
        %v6051 = vcombine.low %v6019, %v6021
        %v6053 = vunpack.c.l.s4 1983009808
        %v6054 = vunpack.c.0.s8 %v6053
        %v6055 = vlaneseq
        %v6056 = vshrl.u32 %v6055, 7
        %v6057 = vsub.s32 %v6054, %v6056
        %v6058 = vrot.slane %v6050, %v6057
        %v6060 = vunpack.c.l.s4 1983009808
        %v6061 = vunpack.c.0.s8 %v6060
        %v6062 = vlaneseq
        %v6063 = vshrl.u32 %v6062, 7
        %v6064 = vsub.s32 %v6061, %v6063
        %v6065 = vrot.slane %v6051, %v6064
        %v6066 = vcombine.low %v6058, %v6065
        %v6069 = vadd.f32 %v5091, %v6049
        %v6070 = vadd.f32 %v5092, %v6066
        %6071 = vst [vmem:[#allocation2] sm:$0xff] %v6069
        %6072 = vst [vmem:[#allocation2 + $0x8] sm:$0xff] %v6070
        %p6073 = scmp.eq.s32.totalorder %s19, 3
        // Predicated region
        $region91: #{convnet_forward.5} parent=81 // pred_check
          %p6074 = pneg %p6073
        $region92: #{convnet_forward.5} parent=81 // pred_check_branch
          %6076 = sbr.rel (%p6074) target = $region94
        $region93: #{convnet_forward.5} parent=81 // pred_region
          %v6077 = vld [vmem:[#allocation2] sm:$0xff]
          %v6078 = vld [vmem:[#allocation2 + $0x8] sm:$0xff]
          %v6079 = vld [vmem:[%s4] sm:$0xff]
          %v6081 = vlaneseq
          %v6082 = vshrl.u32 %v6081, 7
          %v6083 = vsub.s32 0, %v6082
          %v6084 = vrot.slane %v6079, %v6083
          %v6085 = vlaneseq
          %v6086 = vshrl.u32 %v6085, 7
          %v6087 = vsub.s32 1, %v6086
          %v6088 = vrot.slane %v6079, %v6087
          %v6089 = vlaneseq
          %v6090 = vshrl.u32 %v6089, 7
          %v6091 = vsub.s32 2, %v6090
          %v6092 = vrot.slane %v6079, %v6091
          %v6093 = vlaneseq
          %v6094 = vshrl.u32 %v6093, 7
          %v6095 = vsub.s32 3, %v6094
          %v6096 = vrot.slane %v6079, %v6095
          %v6097 = vlaneseq
          %v6098 = vshrl.u32 %v6097, 7
          %v6099 = vsub.s32 4, %v6098
          %v6100 = vrot.slane %v6079, %v6099
          %v6101 = vlaneseq
          %v6102 = vshrl.u32 %v6101, 7
          %v6103 = vsub.s32 5, %v6102
          %v6104 = vrot.slane %v6079, %v6103
          %v6105 = vlaneseq
          %v6106 = vshrl.u32 %v6105, 7
          %v6107 = vsub.s32 6, %v6106
          %v6108 = vrot.slane %v6079, %v6107
          %v6109 = vlaneseq
          %v6110 = vshrl.u32 %v6109, 7
          %v6111 = vsub.s32 7, %v6110
          %v6112 = vrot.slane %v6079, %v6111
          %v6113 = vcombine.low %v6084, %v6088
          %v6114 = vcombine.low %v6092, %v6096
          %v6116 = vunpack.c.l.s4 1983009808
          %v6117 = vunpack.c.0.s8 %v6116
          %v6118 = vlaneseq
          %v6119 = vshrl.u32 %v6118, 7
          %v6120 = vsub.s32 %v6117, %v6119
          %v6121 = vrot.slane %v6113, %v6120
          %v6123 = vunpack.c.l.s4 1983009808
          %v6124 = vunpack.c.0.s8 %v6123
          %v6125 = vlaneseq
          %v6126 = vshrl.u32 %v6125, 7
          %v6127 = vsub.s32 %v6124, %v6126
          %v6128 = vrot.slane %v6114, %v6127
          %v6129 = vcombine.low %v6121, %v6128
          %v6130 = vcombine.low %v6100, %v6104
          %v6131 = vcombine.low %v6108, %v6112
          %v6133 = vunpack.c.l.s4 1983009808
          %v6134 = vunpack.c.0.s8 %v6133
          %v6135 = vlaneseq
          %v6136 = vshrl.u32 %v6135, 7
          %v6137 = vsub.s32 %v6134, %v6136
          %v6138 = vrot.slane %v6130, %v6137
          %v6140 = vunpack.c.l.s4 1983009808
          %v6141 = vunpack.c.0.s8 %v6140
          %v6142 = vlaneseq
          %v6143 = vshrl.u32 %v6142, 7
          %v6144 = vsub.s32 %v6141, %v6143
          %v6145 = vrot.slane %v6131, %v6144
          %v6146 = vcombine.low %v6138, %v6145
          %v6149 = vadd.f32 %v6077, %v6129
          %v6150 = vadd.f32 %v6078, %v6146
          %v6151 = vmax.f32 %v6149, 0.0
          %v6152 = vmax.f32 %v6150, 0.0
          %v6155 = vcombine.high %v6151, %v6151
          %v6157 = vunpack.c.l.s4 1983009808
          %v6158 = vunpack.c.0.s8 %v6157
          %v6159 = vlaneseq
          %v6160 = vshrl.u32 %v6159, 7
          %v6161 = vsub.s32 %v6158, %v6160
          %v6162 = vrot.slane %v6151, %v6161
          %v6164 = vunpack.c.l.s4 1983009808
          %v6165 = vunpack.c.0.s8 %v6164
          %v6166 = vlaneseq
          %v6167 = vshrl.u32 %v6166, 7
          %v6168 = vsub.s32 %v6165, %v6167
          %v6169 = vrot.slane %v6155, %v6168
          %v6170 = vcombine.high %v6162, %v6162
          %v6171 = vcombine.high %v6169, %v6169
          %v6172 = vcombine.high %v6152, %v6152
          %v6174 = vunpack.c.l.s4 1983009808
          %v6175 = vunpack.c.0.s8 %v6174
          %v6176 = vlaneseq
          %v6177 = vshrl.u32 %v6176, 7
          %v6178 = vsub.s32 %v6175, %v6177
          %v6179 = vrot.slane %v6152, %v6178
          %v6181 = vunpack.c.l.s4 1983009808
          %v6182 = vunpack.c.0.s8 %v6181
          %v6183 = vlaneseq
          %v6184 = vshrl.u32 %v6183, 7
          %v6185 = vsub.s32 %v6182, %v6184
          %v6186 = vrot.slane %v6172, %v6185
          %v6187 = vcombine.high %v6179, %v6179
          %v6188 = vcombine.high %v6186, %v6186
          %v6197 = vpack.c.bf16 %v6162, %v6162
          %v6198 = vpack.c.bf16 %v6170, %v6170
          %v6199 = vpack.c.bf16 %v6169, %v6169
          %v6200 = vpack.c.bf16 %v6171, %v6171
          %v6201 = vpack.c.bf16 %v6179, %v6179
          %v6202 = vpack.c.bf16 %v6187, %v6187
          %v6203 = vpack.c.bf16 %v6186, %v6186
          %v6204 = vpack.c.bf16 %v6188, %v6188
          %v6205 = vld [vmem:[%s5] sm:$0xf]
          %v6206 = vld [vmem:[%s5 + $0x4] sm:$0xf]
          %v6207 = vld [vmem:[%s5 + $0x8] sm:$0xf]
          %v6208 = vld [vmem:[%s5 + $0xc] sm:$0xf]
          %v6209 = vld [vmem:[%s5 + $0x10] sm:$0xf]
          %v6210 = vld [vmem:[%s5 + $0x14] sm:$0xf]
          %v6211 = vld [vmem:[%s5 + $0x18] sm:$0xf]
          %v6212 = vld [vmem:[%s5 + $0x1c] sm:$0xf]
          %v6213 = vld [vmem:[%s5 + $0x20] sm:$0xf]
          %v6214 = vld [vmem:[%s5 + $0x24] sm:$0xf]
          %v6215 = vld [vmem:[%s5 + $0x28] sm:$0xf]
          %v6216 = vld [vmem:[%s5 + $0x2c] sm:$0xf]
          %v6217 = vld [vmem:[%s5 + $0x30] sm:$0xf]
          %v6218 = vld [vmem:[%s5 + $0x34] sm:$0xf]
          %v6219 = vld [vmem:[%s5 + $0x38] sm:$0xf]
          %v6220 = vld [vmem:[%s5 + $0x3c] sm:$0xf]
          %v6221 = vld [vmem:[%s5 + $0x40] sm:$0xf]
          %v6222 = vld [vmem:[%s5 + $0x44] sm:$0xf]
          %v6223 = vld [vmem:[%s5 + $0x48] sm:$0xf]
          %v6224 = vld [vmem:[%s5 + $0x4c] sm:$0xf]
          %v6225 = vld [vmem:[%s5 + $0x50] sm:$0xf]
          %v6226 = vld [vmem:[%s5 + $0x54] sm:$0xf]
          %v6227 = vld [vmem:[%s5 + $0x58] sm:$0xf]
          %v6228 = vld [vmem:[%s5 + $0x5c] sm:$0xf]
          %v6229 = vld [vmem:[%s5 + $0x60] sm:$0xf]
          %v6230 = vld [vmem:[%s5 + $0x64] sm:$0xf]
          %v6231 = vld [vmem:[%s5 + $0x68] sm:$0xf]
          %v6232 = vld [vmem:[%s5 + $0x6c] sm:$0xf]
          %v6233 = vld [vmem:[%s5 + $0x70] sm:$0xf]
          %v6234 = vld [vmem:[%s5 + $0x74] sm:$0xf]
          %v6235 = vld [vmem:[%s5 + $0x78] sm:$0xf]
          %v6236 = vld [vmem:[%s5 + $0x7c] sm:$0xf]
          %v6237 = vld [vmem:[%s5 + $0x80] sm:$0xf]
          %v6238 = vld [vmem:[%s5 + $0x84] sm:$0xf]
          %v6239 = vld [vmem:[%s5 + $0x88] sm:$0xf]
          %v6240 = vld [vmem:[%s5 + $0x8c] sm:$0xf]
          %v6241 = vld [vmem:[%s5 + $0x90] sm:$0xf]
          %v6242 = vld [vmem:[%s5 + $0x94] sm:$0xf]
          %v6243 = vld [vmem:[%s5 + $0x98] sm:$0xf]
          %v6244 = vld [vmem:[%s5 + $0x9c] sm:$0xf]
          %v6245 = vld [vmem:[%s5 + $0xa0] sm:$0xf]
          %v6246 = vld [vmem:[%s5 + $0xa4] sm:$0xf]
          %v6247 = vld [vmem:[%s5 + $0xa8] sm:$0xf]
          %v6248 = vld [vmem:[%s5 + $0xac] sm:$0xf]
          %v6249 = vld [vmem:[%s5 + $0xb0] sm:$0xf]
          %v6250 = vld [vmem:[%s5 + $0xb4] sm:$0xf]
          %v6251 = vld [vmem:[%s5 + $0xb8] sm:$0xf]
          %v6252 = vld [vmem:[%s5 + $0xbc] sm:$0xf]
          %v6253 = vld [vmem:[%s5 + $0xc0] sm:$0xf]
          %v6254 = vld [vmem:[%s5 + $0xc4] sm:$0xf]
          %v6255 = vld [vmem:[%s5 + $0xc8] sm:$0xf]
          %v6256 = vld [vmem:[%s5 + $0xcc] sm:$0xf]
          %v6257 = vld [vmem:[%s5 + $0xd0] sm:$0xf]
          %v6258 = vld [vmem:[%s5 + $0xd4] sm:$0xf]
          %v6259 = vld [vmem:[%s5 + $0xd8] sm:$0xf]
          %v6260 = vld [vmem:[%s5 + $0xdc] sm:$0xf]
          %v6261 = vld [vmem:[%s5 + $0xe0] sm:$0xf]
          %v6262 = vld [vmem:[%s5 + $0xe4] sm:$0xf]
          %v6263 = vld [vmem:[%s5 + $0xe8] sm:$0xf]
          %v6264 = vld [vmem:[%s5 + $0xec] sm:$0xf]
          %v6265 = vld [vmem:[%s5 + $0xf0] sm:$0xf]
          %v6266 = vld [vmem:[%s5 + $0xf4] sm:$0xf]
          %v6267 = vld [vmem:[%s5 + $0xf8] sm:$0xf]
          %v6268 = vld [vmem:[%s5 + $0xfc] sm:$0xf]
          %v6269 = vld [vmem:[%s5 + $0x100] sm:$0xf]
          %v6270 = vld [vmem:[%s5 + $0x104] sm:$0xf]
          %v6271 = vld [vmem:[%s5 + $0x108] sm:$0xf]
          %v6272 = vld [vmem:[%s5 + $0x10c] sm:$0xf]
          %v6273 = vld [vmem:[%s5 + $0x110] sm:$0xf]
          %v6274 = vld [vmem:[%s5 + $0x114] sm:$0xf]
          %v6275 = vld [vmem:[%s5 + $0x118] sm:$0xf]
          %v6276 = vld [vmem:[%s5 + $0x11c] sm:$0xf]
          %v6277 = vld [vmem:[%s5 + $0x120] sm:$0xf]
          %v6278 = vld [vmem:[%s5 + $0x124] sm:$0xf]
          %v6279 = vld [vmem:[%s5 + $0x128] sm:$0xf]
          %v6280 = vld [vmem:[%s5 + $0x12c] sm:$0xf]
          %v6281 = vld [vmem:[%s5 + $0x130] sm:$0xf]
          %v6282 = vld [vmem:[%s5 + $0x134] sm:$0xf]
          %v6283 = vld [vmem:[%s5 + $0x138] sm:$0xf]
          %v6284 = vld [vmem:[%s5 + $0x13c] sm:$0xf]
          %v6285 = vld [vmem:[%s5 + $0x140] sm:$0xf]
          %v6286 = vld [vmem:[%s5 + $0x144] sm:$0xf]
          %v6287 = vld [vmem:[%s5 + $0x148] sm:$0xf]
          %v6288 = vld [vmem:[%s5 + $0x14c] sm:$0xf]
          %v6289 = vld [vmem:[%s5 + $0x150] sm:$0xf]
          %v6290 = vld [vmem:[%s5 + $0x154] sm:$0xf]
          %v6291 = vld [vmem:[%s5 + $0x158] sm:$0xf]
          %v6292 = vld [vmem:[%s5 + $0x15c] sm:$0xf]
          %v6293 = vld [vmem:[%s5 + $0x160] sm:$0xf]
          %v6294 = vld [vmem:[%s5 + $0x164] sm:$0xf]
          %v6295 = vld [vmem:[%s5 + $0x168] sm:$0xf]
          %v6296 = vld [vmem:[%s5 + $0x16c] sm:$0xf]
          %v6297 = vld [vmem:[%s5 + $0x170] sm:$0xf]
          %v6298 = vld [vmem:[%s5 + $0x174] sm:$0xf]
          %v6299 = vld [vmem:[%s5 + $0x178] sm:$0xf]
          %v6300 = vld [vmem:[%s5 + $0x17c] sm:$0xf]
          %v6301 = vld [vmem:[%s5 + $0x180] sm:$0xf]
          %v6302 = vld [vmem:[%s5 + $0x184] sm:$0xf]
          %v6303 = vld [vmem:[%s5 + $0x188] sm:$0xf]
          %v6304 = vld [vmem:[%s5 + $0x18c] sm:$0xf]
          %v6305 = vld [vmem:[%s5 + $0x190] sm:$0xf]
          %v6306 = vld [vmem:[%s5 + $0x194] sm:$0xf]
          %v6307 = vld [vmem:[%s5 + $0x198] sm:$0xf]
          %v6308 = vld [vmem:[%s5 + $0x19c] sm:$0xf]
          %v6309 = vld [vmem:[%s5 + $0x1a0] sm:$0xf]
          %v6310 = vld [vmem:[%s5 + $0x1a4] sm:$0xf]
          %v6311 = vld [vmem:[%s5 + $0x1a8] sm:$0xf]
          %v6312 = vld [vmem:[%s5 + $0x1ac] sm:$0xf]
          %v6313 = vld [vmem:[%s5 + $0x1b0] sm:$0xf]
          %v6314 = vld [vmem:[%s5 + $0x1b4] sm:$0xf]
          %v6315 = vld [vmem:[%s5 + $0x1b8] sm:$0xf]
          %v6316 = vld [vmem:[%s5 + $0x1bc] sm:$0xf]
          %v6317 = vld [vmem:[%s5 + $0x1c0] sm:$0xf]
          %v6318 = vld [vmem:[%s5 + $0x1c4] sm:$0xf]
          %v6319 = vld [vmem:[%s5 + $0x1c8] sm:$0xf]
          %v6320 = vld [vmem:[%s5 + $0x1cc] sm:$0xf]
          %v6321 = vld [vmem:[%s5 + $0x1d0] sm:$0xf]
          %v6322 = vld [vmem:[%s5 + $0x1d4] sm:$0xf]
          %v6323 = vld [vmem:[%s5 + $0x1d8] sm:$0xf]
          %v6324 = vld [vmem:[%s5 + $0x1dc] sm:$0xf]
          %v6325 = vld [vmem:[%s5 + $0x1e0] sm:$0xf]
          %v6326 = vld [vmem:[%s5 + $0x1e4] sm:$0xf]
          %v6327 = vld [vmem:[%s5 + $0x1e8] sm:$0xf]
          %v6328 = vld [vmem:[%s5 + $0x1ec] sm:$0xf]
          %v6329 = vld [vmem:[%s5 + $0x1f0] sm:$0xf]
          %v6330 = vld [vmem:[%s5 + $0x1f4] sm:$0xf]
          %v6331 = vld [vmem:[%s5 + $0x1f8] sm:$0xf]
          %v6332 = vld [vmem:[%s5 + $0x1fc] sm:$0xf]
          %v6333 = vld [vmem:[%s6] sm:$0x1]
          %v6335 = vlaneseq
          %v6336 = vshrl.u32 %v6335, 7
          %v6337 = vsub.s32 0, %v6336
          %v6338 = vrot.slane %v6333, %v6337
          %v6468 = vunpack.c.l.b16 %v6205
          %v6469 = vunpack.c.l.b16 %v6206
          %v6470 = vunpack.c.l.b16 %v6207
          %v6471 = vunpack.c.l.b16 %v6208
          %v6472 = vunpack.c.l.b16 %v6209
          %v6473 = vunpack.c.l.b16 %v6210
          %v6474 = vunpack.c.l.b16 %v6211
          %v6475 = vunpack.c.l.b16 %v6212
          %v6476 = vunpack.c.l.b16 %v6213
          %v6477 = vunpack.c.l.b16 %v6214
          %v6478 = vunpack.c.l.b16 %v6215
          %v6479 = vunpack.c.l.b16 %v6216
          %v6480 = vunpack.c.l.b16 %v6217
          %v6481 = vunpack.c.l.b16 %v6218
          %v6482 = vunpack.c.l.b16 %v6219
          %v6483 = vunpack.c.l.b16 %v6220
          %v6484 = vunpack.c.l.b16 %v6221
          %v6485 = vunpack.c.l.b16 %v6222
          %v6486 = vunpack.c.l.b16 %v6223
          %v6487 = vunpack.c.l.b16 %v6224
          %v6488 = vunpack.c.l.b16 %v6225
          %v6489 = vunpack.c.l.b16 %v6226
          %v6490 = vunpack.c.l.b16 %v6227
          %v6491 = vunpack.c.l.b16 %v6228
          %v6492 = vunpack.c.l.b16 %v6229
          %v6493 = vunpack.c.l.b16 %v6230
          %v6494 = vunpack.c.l.b16 %v6231
          %v6495 = vunpack.c.l.b16 %v6232
          %v6496 = vunpack.c.l.b16 %v6233
          %v6497 = vunpack.c.l.b16 %v6234
          %v6498 = vunpack.c.l.b16 %v6235
          %v6499 = vunpack.c.l.b16 %v6236
          %v6500 = vunpack.c.l.b16 %v6237
          %v6501 = vunpack.c.l.b16 %v6238
          %v6502 = vunpack.c.l.b16 %v6239
          %v6503 = vunpack.c.l.b16 %v6240
          %v6504 = vunpack.c.l.b16 %v6241
          %v6505 = vunpack.c.l.b16 %v6242
          %v6506 = vunpack.c.l.b16 %v6243
          %v6507 = vunpack.c.l.b16 %v6244
          %v6508 = vunpack.c.l.b16 %v6245
          %v6509 = vunpack.c.l.b16 %v6246
          %v6510 = vunpack.c.l.b16 %v6247
          %v6511 = vunpack.c.l.b16 %v6248
          %v6512 = vunpack.c.l.b16 %v6249
          %v6513 = vunpack.c.l.b16 %v6250
          %v6514 = vunpack.c.l.b16 %v6251
          %v6515 = vunpack.c.l.b16 %v6252
          %v6516 = vunpack.c.l.b16 %v6253
          %v6517 = vunpack.c.l.b16 %v6254
          %v6518 = vunpack.c.l.b16 %v6255
          %v6519 = vunpack.c.l.b16 %v6256
          %v6520 = vunpack.c.l.b16 %v6257
          %v6521 = vunpack.c.l.b16 %v6258
          %v6522 = vunpack.c.l.b16 %v6259
          %v6523 = vunpack.c.l.b16 %v6260
          %v6524 = vunpack.c.l.b16 %v6261
          %v6525 = vunpack.c.l.b16 %v6262
          %v6526 = vunpack.c.l.b16 %v6263
          %v6527 = vunpack.c.l.b16 %v6264
          %v6528 = vunpack.c.l.b16 %v6265
          %v6529 = vunpack.c.l.b16 %v6266
          %v6530 = vunpack.c.l.b16 %v6267
          %v6531 = vunpack.c.l.b16 %v6268
          %v6532 = vunpack.c.l.b16 %v6269
          %v6533 = vunpack.c.l.b16 %v6270
          %v6534 = vunpack.c.l.b16 %v6271
          %v6535 = vunpack.c.l.b16 %v6272
          %v6536 = vunpack.c.l.b16 %v6273
          %v6537 = vunpack.c.l.b16 %v6274
          %v6538 = vunpack.c.l.b16 %v6275
          %v6539 = vunpack.c.l.b16 %v6276
          %v6540 = vunpack.c.l.b16 %v6277
          %v6541 = vunpack.c.l.b16 %v6278
          %v6542 = vunpack.c.l.b16 %v6279
          %v6543 = vunpack.c.l.b16 %v6280
          %v6544 = vunpack.c.l.b16 %v6281
          %v6545 = vunpack.c.l.b16 %v6282
          %v6546 = vunpack.c.l.b16 %v6283
          %v6547 = vunpack.c.l.b16 %v6284
          %v6548 = vunpack.c.l.b16 %v6285
          %v6549 = vunpack.c.l.b16 %v6286
          %v6550 = vunpack.c.l.b16 %v6287
          %v6551 = vunpack.c.l.b16 %v6288
          %v6552 = vunpack.c.l.b16 %v6289
          %v6553 = vunpack.c.l.b16 %v6290
          %v6554 = vunpack.c.l.b16 %v6291
          %v6555 = vunpack.c.l.b16 %v6292
          %v6556 = vunpack.c.l.b16 %v6293
          %v6557 = vunpack.c.l.b16 %v6294
          %v6558 = vunpack.c.l.b16 %v6295
          %v6559 = vunpack.c.l.b16 %v6296
          %v6560 = vunpack.c.l.b16 %v6297
          %v6561 = vunpack.c.l.b16 %v6298
          %v6562 = vunpack.c.l.b16 %v6299
          %v6563 = vunpack.c.l.b16 %v6300
          %v6564 = vunpack.c.l.b16 %v6301
          %v6565 = vunpack.c.l.b16 %v6302
          %v6566 = vunpack.c.l.b16 %v6303
          %v6567 = vunpack.c.l.b16 %v6304
          %v6568 = vunpack.c.l.b16 %v6305
          %v6569 = vunpack.c.l.b16 %v6306
          %v6570 = vunpack.c.l.b16 %v6307
          %v6571 = vunpack.c.l.b16 %v6308
          %v6572 = vunpack.c.l.b16 %v6309
          %v6573 = vunpack.c.l.b16 %v6310
          %v6574 = vunpack.c.l.b16 %v6311
          %v6575 = vunpack.c.l.b16 %v6312
          %v6576 = vunpack.c.l.b16 %v6313
          %v6577 = vunpack.c.l.b16 %v6314
          %v6578 = vunpack.c.l.b16 %v6315
          %v6579 = vunpack.c.l.b16 %v6316
          %v6580 = vunpack.c.l.b16 %v6317
          %v6581 = vunpack.c.l.b16 %v6318
          %v6582 = vunpack.c.l.b16 %v6319
          %v6583 = vunpack.c.l.b16 %v6320
          %v6584 = vunpack.c.l.b16 %v6321
          %v6585 = vunpack.c.l.b16 %v6322
          %v6586 = vunpack.c.l.b16 %v6323
          %v6587 = vunpack.c.l.b16 %v6324
          %v6588 = vunpack.c.l.b16 %v6325
          %v6589 = vunpack.c.l.b16 %v6326
          %v6590 = vunpack.c.l.b16 %v6327
          %v6591 = vunpack.c.l.b16 %v6328
          %v6592 = vunpack.c.l.b16 %v6329
          %v6593 = vunpack.c.l.b16 %v6330
          %v6594 = vunpack.c.l.b16 %v6331
          %v6595 = vunpack.c.l.b16 %v6332
          %v6596 = vpack.c.b16 %v6469, %v6468
          %v6597 = vpack.c.b16 %v6471, %v6470
          %v6598 = vpack.c.b16 %v6473, %v6472
          %v6599 = vpack.c.b16 %v6475, %v6474
          %v6600 = vpack.c.b16 %v6477, %v6476
          %v6601 = vpack.c.b16 %v6479, %v6478
          %v6602 = vpack.c.b16 %v6481, %v6480
          %v6603 = vpack.c.b16 %v6483, %v6482
          %v6604 = vpack.c.b16 %v6485, %v6484
          %v6605 = vpack.c.b16 %v6487, %v6486
          %v6606 = vpack.c.b16 %v6489, %v6488
          %v6607 = vpack.c.b16 %v6491, %v6490
          %v6608 = vpack.c.b16 %v6493, %v6492
          %v6609 = vpack.c.b16 %v6495, %v6494
          %v6610 = vpack.c.b16 %v6497, %v6496
          %v6611 = vpack.c.b16 %v6499, %v6498
          %v6612 = vpack.c.b16 %v6501, %v6500
          %v6613 = vpack.c.b16 %v6503, %v6502
          %v6614 = vpack.c.b16 %v6505, %v6504
          %v6615 = vpack.c.b16 %v6507, %v6506
          %v6616 = vpack.c.b16 %v6509, %v6508
          %v6617 = vpack.c.b16 %v6511, %v6510
          %v6618 = vpack.c.b16 %v6513, %v6512
          %v6619 = vpack.c.b16 %v6515, %v6514
          %v6620 = vpack.c.b16 %v6517, %v6516
          %v6621 = vpack.c.b16 %v6519, %v6518
          %v6622 = vpack.c.b16 %v6521, %v6520
          %v6623 = vpack.c.b16 %v6523, %v6522
          %v6624 = vpack.c.b16 %v6525, %v6524
          %v6625 = vpack.c.b16 %v6527, %v6526
          %v6626 = vpack.c.b16 %v6529, %v6528
          %v6627 = vpack.c.b16 %v6531, %v6530
          %v6628 = vpack.c.b16 %v6533, %v6532
          %v6629 = vpack.c.b16 %v6535, %v6534
          %v6630 = vpack.c.b16 %v6537, %v6536
          %v6631 = vpack.c.b16 %v6539, %v6538
          %v6632 = vpack.c.b16 %v6541, %v6540
          %v6633 = vpack.c.b16 %v6543, %v6542
          %v6634 = vpack.c.b16 %v6545, %v6544
          %v6635 = vpack.c.b16 %v6547, %v6546
          %v6636 = vpack.c.b16 %v6549, %v6548
          %v6637 = vpack.c.b16 %v6551, %v6550
          %v6638 = vpack.c.b16 %v6553, %v6552
          %v6639 = vpack.c.b16 %v6555, %v6554
          %v6640 = vpack.c.b16 %v6557, %v6556
          %v6641 = vpack.c.b16 %v6559, %v6558
          %v6642 = vpack.c.b16 %v6561, %v6560
          %v6643 = vpack.c.b16 %v6563, %v6562
          %v6644 = vpack.c.b16 %v6565, %v6564
          %v6645 = vpack.c.b16 %v6567, %v6566
          %v6646 = vpack.c.b16 %v6569, %v6568
          %v6647 = vpack.c.b16 %v6571, %v6570
          %v6648 = vpack.c.b16 %v6573, %v6572
          %v6649 = vpack.c.b16 %v6575, %v6574
          %v6650 = vpack.c.b16 %v6577, %v6576
          %v6651 = vpack.c.b16 %v6579, %v6578
          %v6652 = vpack.c.b16 %v6581, %v6580
          %v6653 = vpack.c.b16 %v6583, %v6582
          %v6654 = vpack.c.b16 %v6585, %v6584
          %v6655 = vpack.c.b16 %v6587, %v6586
          %v6656 = vpack.c.b16 %v6589, %v6588
          %v6657 = vpack.c.b16 %v6591, %v6590
          %v6658 = vpack.c.b16 %v6593, %v6592
          %v6659 = vpack.c.b16 %v6595, %v6594
          %6724 = vmatprep.subr.bf16.mxu0 0
          %6725 = vmatpush1.bf16.msra.mxu0 %v6596
          %6726 = vmatprep.subr.bf16.mxu0 0
          %6727 = vmatpush1.bf16.msra.mxu0 %v6597
          %6728 = vmatprep.subr.bf16.mxu0 0
          %6729 = vmatpush1.bf16.msra.mxu0 %v6598
          %6730 = vmatprep.subr.bf16.mxu0 0
          %6731 = vmatpush1.bf16.msra.mxu0 %v6599
          %6732 = vmatprep.subr.bf16.mxu0 0
          %6733 = vmatpush1.bf16.msra.mxu0 %v6600
          %6734 = vmatprep.subr.bf16.mxu0 0
          %6735 = vmatpush1.bf16.msra.mxu0 %v6601
          %6736 = vmatprep.subr.bf16.mxu0 0
          %6737 = vmatpush1.bf16.msra.mxu0 %v6602
          %6738 = vmatprep.subr.bf16.mxu0 0
          %6739 = vmatpush1.bf16.msra.mxu0 %v6603
          %6740 = vmatprep.subr.bf16.mxu0 0
          %6741 = vmatpush1.bf16.msra.mxu0 %v6604
          %6742 = vmatprep.subr.bf16.mxu0 0
          %6743 = vmatpush1.bf16.msra.mxu0 %v6605
          %6744 = vmatprep.subr.bf16.mxu0 0
          %6745 = vmatpush1.bf16.msra.mxu0 %v6606
          %6746 = vmatprep.subr.bf16.mxu0 0
          %6747 = vmatpush1.bf16.msra.mxu0 %v6607
          %6748 = vmatprep.subr.bf16.mxu0 0
          %6749 = vmatpush1.bf16.msra.mxu0 %v6608
          %6750 = vmatprep.subr.bf16.mxu0 0
          %6751 = vmatpush1.bf16.msra.mxu0 %v6609
          %6752 = vmatprep.subr.bf16.mxu0 0
          %6753 = vmatpush1.bf16.msra.mxu0 %v6610
          %6754 = vmatprep.subr.bf16.mxu0 0
          %6755 = vmatpush1.bf16.msra.mxu0 %v6611
          %6756 = vmatprep.mubr.bf16.mxu0 %v6198
          %6757 = vmatmul.mubr.bf16.gmra.mrb[0].mxu0 %v6197
          %v6758 = vpop.f32.mrb[0].mxu0
          %v6759 = vadd.f32 %v6338, %v6758
          %v6760 = vpop.f32.mrb[0].mxu0
          %v6761 = vpop.f32.mrb[0].mxu0
          %v6762 = vpop.f32.mrb[0].mxu0
          %6763 = vdwg.mxu0
          %6764 = vmatprep.subr.bf16.mxu0 0
          %6765 = vmatpush1.bf16.msra.mxu0 %v6612
          %6766 = vmatprep.subr.bf16.mxu0 0
          %6767 = vmatpush1.bf16.msra.mxu0 %v6613
          %6768 = vmatprep.subr.bf16.mxu0 0
          %6769 = vmatpush1.bf16.msra.mxu0 %v6614
          %6770 = vmatprep.subr.bf16.mxu0 0
          %6771 = vmatpush1.bf16.msra.mxu0 %v6615
          %6772 = vmatprep.subr.bf16.mxu0 0
          %6773 = vmatpush1.bf16.msra.mxu0 %v6616
          %6774 = vmatprep.subr.bf16.mxu0 0
          %6775 = vmatpush1.bf16.msra.mxu0 %v6617
          %6776 = vmatprep.subr.bf16.mxu0 0
          %6777 = vmatpush1.bf16.msra.mxu0 %v6618
          %6778 = vmatprep.subr.bf16.mxu0 0
          %6779 = vmatpush1.bf16.msra.mxu0 %v6619
          %6780 = vmatprep.subr.bf16.mxu0 0
          %6781 = vmatpush1.bf16.msra.mxu0 %v6620
          %6782 = vmatprep.subr.bf16.mxu0 0
          %6783 = vmatpush1.bf16.msra.mxu0 %v6621
          %6784 = vmatprep.subr.bf16.mxu0 0
          %6785 = vmatpush1.bf16.msra.mxu0 %v6622
          %6786 = vmatprep.subr.bf16.mxu0 0
          %6787 = vmatpush1.bf16.msra.mxu0 %v6623
          %6788 = vmatprep.subr.bf16.mxu0 0
          %6789 = vmatpush1.bf16.msra.mxu0 %v6624
          %6790 = vmatprep.subr.bf16.mxu0 0
          %6791 = vmatpush1.bf16.msra.mxu0 %v6625
          %6792 = vmatprep.subr.bf16.mxu0 0
          %6793 = vmatpush1.bf16.msra.mxu0 %v6626
          %6794 = vmatprep.subr.bf16.mxu0 0
          %6795 = vmatpush1.bf16.msra.mxu0 %v6627
          %6796 = vmatprep.mubr.bf16.mxu0 %v6200
          %6797 = vmatmul.mubr.bf16.gmra.mrb[0].mxu0 %v6199
          %v6798 = vpop.f32.mrb[0].mxu0
          %v6799 = vadd.f32 %v6759, %v6798
          %v6800 = vpop.f32.mrb[0].mxu0
          %v6801 = vpop.f32.mrb[0].mxu0
          %v6802 = vpop.f32.mrb[0].mxu0
          %6803 = vdwg.mxu0
          %6804 = vmatprep.subr.bf16.mxu0 0
          %6805 = vmatpush1.bf16.msra.mxu0 %v6628
          %6806 = vmatprep.subr.bf16.mxu0 0
          %6807 = vmatpush1.bf16.msra.mxu0 %v6629
          %6808 = vmatprep.subr.bf16.mxu0 0
          %6809 = vmatpush1.bf16.msra.mxu0 %v6630
          %6810 = vmatprep.subr.bf16.mxu0 0
          %6811 = vmatpush1.bf16.msra.mxu0 %v6631
          %6812 = vmatprep.subr.bf16.mxu0 0
          %6813 = vmatpush1.bf16.msra.mxu0 %v6632
          %6814 = vmatprep.subr.bf16.mxu0 0
          %6815 = vmatpush1.bf16.msra.mxu0 %v6633
          %6816 = vmatprep.subr.bf16.mxu0 0
          %6817 = vmatpush1.bf16.msra.mxu0 %v6634
          %6818 = vmatprep.subr.bf16.mxu0 0
          %6819 = vmatpush1.bf16.msra.mxu0 %v6635
          %6820 = vmatprep.subr.bf16.mxu0 0
          %6821 = vmatpush1.bf16.msra.mxu0 %v6636
          %6822 = vmatprep.subr.bf16.mxu0 0
          %6823 = vmatpush1.bf16.msra.mxu0 %v6637
          %6824 = vmatprep.subr.bf16.mxu0 0
          %6825 = vmatpush1.bf16.msra.mxu0 %v6638
          %6826 = vmatprep.subr.bf16.mxu0 0
          %6827 = vmatpush1.bf16.msra.mxu0 %v6639
          %6828 = vmatprep.subr.bf16.mxu0 0
          %6829 = vmatpush1.bf16.msra.mxu0 %v6640
          %6830 = vmatprep.subr.bf16.mxu0 0
          %6831 = vmatpush1.bf16.msra.mxu0 %v6641
          %6832 = vmatprep.subr.bf16.mxu0 0
          %6833 = vmatpush1.bf16.msra.mxu0 %v6642
          %6834 = vmatprep.subr.bf16.mxu0 0
          %6835 = vmatpush1.bf16.msra.mxu0 %v6643
          %6836 = vmatprep.mubr.bf16.mxu0 %v6202
          %6837 = vmatmul.mubr.bf16.gmra.mrb[0].mxu0 %v6201
          %v6838 = vpop.f32.mrb[0].mxu0
          %v6839 = vadd.f32 %v6799, %v6838
          %v6840 = vpop.f32.mrb[0].mxu0
          %v6841 = vpop.f32.mrb[0].mxu0
          %v6842 = vpop.f32.mrb[0].mxu0
          %6843 = vdwg.mxu0
          %6844 = vmatprep.subr.bf16.mxu0 0
          %6845 = vmatpush1.bf16.msra.mxu0 %v6644
          %6846 = vmatprep.subr.bf16.mxu0 0
          %6847 = vmatpush1.bf16.msra.mxu0 %v6645
          %6848 = vmatprep.subr.bf16.mxu0 0
          %6849 = vmatpush1.bf16.msra.mxu0 %v6646
          %6850 = vmatprep.subr.bf16.mxu0 0
          %6851 = vmatpush1.bf16.msra.mxu0 %v6647
          %6852 = vmatprep.subr.bf16.mxu0 0
          %6853 = vmatpush1.bf16.msra.mxu0 %v6648
          %6854 = vmatprep.subr.bf16.mxu0 0
          %6855 = vmatpush1.bf16.msra.mxu0 %v6649
          %6856 = vmatprep.subr.bf16.mxu0 0
          %6857 = vmatpush1.bf16.msra.mxu0 %v6650
          %6858 = vmatprep.subr.bf16.mxu0 0
          %6859 = vmatpush1.bf16.msra.mxu0 %v6651
          %6860 = vmatprep.subr.bf16.mxu0 0
          %6861 = vmatpush1.bf16.msra.mxu0 %v6652
          %6862 = vmatprep.subr.bf16.mxu0 0
          %6863 = vmatpush1.bf16.msra.mxu0 %v6653
          %6864 = vmatprep.subr.bf16.mxu0 0
          %6865 = vmatpush1.bf16.msra.mxu0 %v6654
          %6866 = vmatprep.subr.bf16.mxu0 0
          %6867 = vmatpush1.bf16.msra.mxu0 %v6655
          %6868 = vmatprep.subr.bf16.mxu0 0
          %6869 = vmatpush1.bf16.msra.mxu0 %v6656
          %6870 = vmatprep.subr.bf16.mxu0 0
          %6871 = vmatpush1.bf16.msra.mxu0 %v6657
          %6872 = vmatprep.subr.bf16.mxu0 0
          %6873 = vmatpush1.bf16.msra.mxu0 %v6658
          %6874 = vmatprep.subr.bf16.mxu0 0
          %6875 = vmatpush1.bf16.msra.mxu0 %v6659
          %6876 = vmatprep.mubr.bf16.mxu0 %v6204
          %6877 = vmatmul.mubr.bf16.gmra.mrb[0].mxu0 %v6203
          %v6878 = vpop.f32.mrb[0].mxu0
          %v6879 = vadd.f32 %v6839, %v6878
          %v6880 = vpop.f32.mrb[0].mxu0
          %v6881 = vpop.f32.mrb[0].mxu0
          %v6882 = vpop.f32.mrb[0].mxu0
          %6883 = vdwg.mxu0
          %6884 = vst [vmem:[#allocation4] sm:$0x3] %v6879
        $region94: #{convnet_forward.5} parent=81 // pred_fallthru
          _
        // Predicated region
        $region95: #{convnet_forward.5} parent=81 // pred_check
          %p6885 = pneg %p194
        $region96: #{convnet_forward.5} parent=81 // pred_check_branch
          %6887 = sbr.rel (%p6885) target = $region98
        $region97: #{convnet_forward.5} parent=81 // pred_region
          %s6889 = ssub.s32 32, 32
          %6890 = vsyncadd [#allocation5], %s6889
          %s6892 = sshll.u32 [#allocation4], 4
          %s6893 = int_to_ptr.vmem [resolvable:$true] %s6892
          %6895 = dma.vmem_to_hbm [thread:$0]  %s6893, 32, %s7, [#allocation5]
        $region98: #{convnet_forward.5} parent=81 // pred_fallthru
          _
        // Predicated region
        $region99: #{convnet_forward.5} parent=81 // pred_check
          %p6896 = pneg %p194
        $region100: #{convnet_forward.5} parent=81 // pred_check_branch
          %6898 = sbr.rel (%p6896) target = $region102
        $region101: #{convnet_forward.5} parent=81 // pred_region
          %6899 = dma.done [#allocation5], 32
        $region102: #{convnet_forward.5} parent=81 // pred_fallthru
          _
      $region82: #{convnet_forward.5} parent=5 // pred_fallthru
        _
      %p6900 = scmp.le.s32.totalorder 2, %s14
      // Predicated region
      $region103: #{convnet_forward.5} parent=5 // pred_check
        %p6901 = pneg %p6900
      $region104: #{convnet_forward.5} parent=5 // pred_check_branch
        %6903 = sbr.rel (%p6901) target = $region106
      $region105: #{convnet_forward.5} parent=5 // pred_region
        %s6904 = ssub.s32 %s14, 2
      $region106: #{convnet_forward.5} parent=5 // pred_fallthru
        _
    $region6: #{convnet_forward.5} parent=1 // loop_footer
      %s18 = sadd.s32 1, %s14
    $region7: #{convnet_forward.5} parent=1 // loop_footer_branch
      %13 = sbr.rel target = $region3
    $region8: #{convnet_forward.5} parent=1 // loop_exit
      _
    %6905 = vsyncpa [#allocation5], 1
    %s6906 = scalar_lea.sflag [#allocation5], 1
    %6907 = vsyncpa %s6906, 1

</llo_original>
